<compile_context>
chip_gen: v7x
topology: tpu7x:2x2x1
jax: 0.10.0
libtpu: 0.0.40
codegen_flags: <defaults>
</compile_context>

<pallas_src>
import functools

import jax
import jax.numpy as jnp
from jax.experimental import pallas as pl
from jax.experimental.pallas import tpu as pltpu

LAMD_NOOBJ = 0.25
LAMD_OBJ = 2.0
LAMD_COORD = 0.5
LAMB_CLASS = 2.0


# ----------------------------------------------------------------------------
# Pallas kernel
# ----------------------------------------------------------------------------
def _yolo_loss_kernel(grid_res, n_total, tn, num_anchors, num_classes,
                      pred_ref, tgt_ref, clsw_ref, anch_ref, out_ref, acc_ref):
    step = pl.program_id(0)
    nsteps = pl.num_programs(0)

    @pl.when(step == 0)
    def _init():
        acc_ref[...] = jnp.zeros_like(acc_ref)

    pred = pred_ref[...].astype(jnp.float32)        # (TN, 5+C) raw logits
    tgt = tgt_ref[...]                              # (TN, 8)
    clsw = clsw_ref[...]                            # (1, C)

    t_obj = tgt[:, 0:1]                             # class value (0 == no obj)
    t_box = tgt[:, 1:5]                             # xc, yc, w, h
    cxy = tgt[:, 5:7]                               # cell x, cell y
    anc = tgt[:, 7:8]                               # anchor index (as float)

    has = (t_obj != 0.0).astype(jnp.float32)
    no = 1.0 - has
    if (n_total % tn) != 0:                         # mask padded tail rows
        rows = step * tn + jax.lax.broadcasted_iota(jnp.int32, (tn, 1), 0)
        v = (rows < n_total).astype(jnp.float32)
        has = has * v
        no = no * v

    # One shared exp pass over every feature column:
    #   cols 0,1 -> exp(-z)   (for sigmoid)
    #   cols 2,3 -> exp(z)    (for w/h)
    #   cols 4.. -> exp(-|z|) (for stable BCE-with-logits)
    col = jax.lax.broadcasted_iota(jnp.int32, (1, 5 + num_classes), 1)
    is_wh = (col >= 2) & (col <= 3)
    m1 = jnp.where(is_wh, 1.0, -1.0)
    m2 = jnp.where(col >= 2, 1.0, -1.0)
    e = jnp.exp(jnp.minimum(pred * m1, pred * m2))

    gr = grid_res
    sig01 = 1.0 / (1.0 + e[:, 0:2])                 # sigmoid(z0), sigmoid(z1)
    p01 = gr * sig01 + gr * cxy                     # predicted xc, yc

    # anchor width / height from SMEM table, selected by per-row anchor index
    aw = jnp.zeros_like(anc)
    ah = jnp.zeros_like(anc)
    for ai in range(num_anchors):
        sel = anc == float(ai)
        aw = jnp.where(sel, anch_ref[ai, 0], aw)
        ah = jnp.where(sel, anch_ref[ai, 1], ah)
    p_w = e[:, 2:3] * aw
    p_h = e[:, 3:4] * ah

    d01 = has * p01 - t_box[:, 0:2]
    d2 = has * p_w - t_box[:, 2:3]
    d3 = has * p_h - t_box[:, 3:4]
    bb_row = LAMD_COORD * (jnp.sum(d01 * d01, axis=1, keepdims=True)
                           + d2 * d2 + d3 * d3)

    # log(1 + exp(-|z|)) for confidence + class columns, one pass
    lg = jnp.log(1.0 + e[:, 4:])                    # (TN, 1+C)

    # confidence losses (BCE-with-logits, clamped at 100 to mirror nn.BCELoss)
    z_cf = pred[:, 4:5]
    sp_pos = jnp.maximum(z_cf, 0.0) + lg[:, 0:1]    # softplus(z)  = -log(1-sig)
    sp_neg = sp_pos - z_cf                          # softplus(-z) = -log(sig)
    hol_row = LAMD_OBJ * has * jnp.minimum(sp_neg, 100.0)
    nol_row = LAMD_NOOBJ * (no * jnp.minimum(sp_pos, 100.0) + has * 100.0)

    # class loss: one-hot built in-kernel from (t_obj - 1) vs lane iota
    z_cls = pred[:, 5:]
    lane = jax.lax.broadcasted_iota(
        jnp.int32, (tn, num_classes), 1).astype(jnp.float32)
    onehot = (lane == (t_obj - 1.0)).astype(jnp.float32)
    bce = jnp.minimum(
        jnp.maximum(z_cls, 0.0) - z_cls * onehot + lg[:, 1:], 100.0)
    cl_row = (LAMB_CLASS * has) * jnp.sum(clsw * bce, axis=1, keepdims=True)

    # per-row partial sums, reduced only in the epilogue
    acc_ref[:, 0:1] += bb_row
    acc_ref[:, 1:2] += hol_row
    acc_ref[:, 2:3] += nol_row
    acc_ref[:, 3:4] += cl_row
    acc_ref[:, 4:5] += has

    @pl.when(step == nsteps - 1)
    def _finish():
        out_ref[0] = jnp.sum(acc_ref[:, 0:1])
        out_ref[1] = jnp.sum(acc_ref[:, 1:2])
        out_ref[2] = jnp.sum(acc_ref[:, 2:3])
        out_ref[3] = jnp.sum(acc_ref[:, 3:4])
        out_ref[4] = jnp.sum(acc_ref[:, 4:5])
        out_ref[5] = jnp.float32(0.0)
        out_ref[6] = jnp.float32(0.0)
        out_ref[7] = jnp.float32(0.0)


# ----------------------------------------------------------------------------
# JAX glue shared by kernel wrapper and reference
# ----------------------------------------------------------------------------
def _transform_targets(targets, scale, batch, num_anchors, grid, num_classes,
                       need_onehot):
    bt, t_sz, _ = targets.shape
    tf = targets.astype(jnp.float32)
    sel = (targets[:, :, 0] != 0) & (targets[:, :, 5] == scale)
    # invalid rows get an out-of-bounds anchor index -> dropped by scatter
    a_idx = jnp.where(sel, targets[:, :, 6].astype(jnp.int32), num_anchors)
    xg = targets[:, :, 7].astype(jnp.int32)
    yg = targets[:, :, 8].astype(jnp.int32)
    b_idx = jnp.broadcast_to(jnp.arange(bt)[:, None], (bt, t_sz))

    dense = jnp.zeros((batch, num_anchors, grid, grid, 5), jnp.float32)
    dense = dense.at[b_idx, a_idx, yg, xg].set(tf[:, :, :5], mode='drop')

    onehot = None
    if need_onehot:
        cls_idx = targets[:, :, 0].astype(jnp.int32) - 1
        onehot = jnp.zeros((batch, num_anchors, grid, grid, num_classes),
                           jnp.float32)
        onehot = onehot.at[b_idx, a_idx, yg, xg, cls_idx].set(1.0, mode='drop')
    return dense, onehot


def _class_weights(class_weights):
    wsum = jnp.sum(class_weights)
    clsw = 1.0 / (class_weights / wsum) / 90.0     # "/90" hard-coded as in torch
    return jnp.where(jnp.isinf(clsw), 1.0, clsw).astype(jnp.float32)


# ----------------------------------------------------------------------------
# Pallas wrapper
# ----------------------------------------------------------------------------
def yolo_v3_loss_pallas(predictions, targets, anchors, grids, resolution,
                        num_classes, class_weights, tile_rows=4096):
    b, a, g, _, f = predictions.shape
    c = num_classes
    assert f == 5 + c
    scale = grids.index(g)                 # static (shape-derived)
    grid_res = resolution // g
    n = b * a * g * g

    dense, _ = _transform_targets(targets, scale, b, a, g, c,
                                  need_onehot=False)

    # packed per-row target/base stream: [obj, xc, yc, w, h, cx, cy, anchor_id]
    ys, xs = jnp.meshgrid(jnp.arange(g, dtype=jnp.float32),
                          jnp.arange(g, dtype=jnp.float32), indexing='ij')
    cx = jnp.broadcast_to(xs[None, None], (b, a, g, g)).reshape(n, 1)
    cy = jnp.broadcast_to(ys[None, None], (b, a, g, g)).reshape(n, 1)
    anc = jnp.broadcast_to(
        jnp.arange(a, dtype=jnp.float32)[None, :, None, None],
        (b, a, g, g)).reshape(n, 1)
    tgtaux = jnp.concatenate([dense.reshape(n, 5), cx, cy, anc], axis=1)

    preds2 = predictions.reshape(n, f)                      # no split / no cast
    clsw = _class_weights(class_weights)[None, :]           # (1, C)
    anchors_wh = anchors[scale].astype(jnp.float32)         # (A, 2) -> SMEM

    tn = min(int(tile_rows), ((n + 7) // 8) * 8)
    tn = max(8, (tn // 8) * 8)
    n_pad = ((n + tn - 1) // tn) * tn
    if n_pad != n:
        preds2 = jnp.pad(preds2, ((0, n_pad - n), (0, 0)))
        tgtaux = jnp.pad(tgtaux, ((0, n_pad - n), (0, 0)))
    num_tiles = n_pad // tn

    kernel = functools.partial(_yolo_loss_kernel, float(grid_res), n, tn,
                               int(a), c)
    sums = pl.pallas_call(
        kernel,
        out_shape=jax.ShapeDtypeStruct((8,), jnp.float32),
        grid_spec=pltpu.PrefetchScalarGridSpec(
            num_scalar_prefetch=0,
            grid=(num_tiles,),
            in_specs=[
                pl.BlockSpec((tn, f), lambda i: (i, 0)),
                pl.BlockSpec((tn, 8), lambda i: (i, 0)),
                pl.BlockSpec((1, c), lambda i: (0, 0)),
                pl.BlockSpec(memory_space=pltpu.MemorySpace.SMEM),
            ],
            out_specs=pl.BlockSpec(memory_space=pltpu.MemorySpace.SMEM),
            scratch_shapes=[pltpu.VMEM((tn, 8), jnp.float32)],
        ),
        compiler_params=pltpu.CompilerParams(
            dimension_semantics=("arbitrary",)),
    )(preds2, tgtaux, clsw, anchors_wh)

    n_f = jnp.float32(n)
    has_cnt = sums[4]
    no_cnt = n_f - has_cnt
    has_c = jnp.maximum(has_cnt, 1.0)
    no_c = jnp.maximum(no_cnt, 1.0)
    loss = (sums[0] + sums[1] + sums[2] + sums[3]) / n_f
    bb_loss = sums[0] / has_c
    has_object_loss = sums[1] / has_c
    no_object_loss = sums[2] / no_c
    class_loss = sums[3] / has_c
    return loss, bb_loss, has_object_loss, no_object_loss, class_loss


# ----------------------------------------------------------------------------
# Pure-JAX reference of the PyTorch forward (for validation)
# ----------------------------------------------------------------------------
def _bce_ref(x, y):
    # PyTorch nn.BCELoss semantics: each log term clamped at -100.
    lx = jnp.maximum(jnp.log(x), -100.0)
    l1x = jnp.maximum(jnp.log(1.0 - x), -100.0)
    return -(y * lx + (1.0 - y) * l1x)


def yolo_v3_loss_reference(predictions, targets, anchors, grids, resolution,
                           num_classes, class_weights):
    b, a, g, _, _ = predictions.shape
    c = num_classes
    scale = grids.index(g)
    gr = float(resolution // g)
    dense, onehot = _transform_targets(targets, scale, b, a, g, c,
                                       need_onehot=True)
    t_obj, t_xc, t_yc, t_w, t_h = (dense[..., 0], dense[..., 1], dense[..., 2],
                                   dense[..., 3], dense[..., 4])
    ys, xs = jnp.meshgrid(jnp.arange(g, dtype=jnp.float32),
                          jnp.arange(g, dtype=jnp.float32), indexing='ij')
    cx = xs[None, None]
    cy = ys[None, None]
    aw = anchors[scale, :, 0].astype(jnp.float32)[None, :, None, None]
    ah = anchors[scale, :, 1].astype(jnp.float32)[None, :, None, None]
    clsw = _class_weights(class_weights)

    p = predictions.astype(jnp.float32)
    p_xc = gr * jax.nn.sigmoid(p[..., 0]) + gr * cx
    p_yc = gr * jax.nn.sigmoid(p[..., 1]) + gr * cy
    p_w = jnp.exp(p[..., 2]) * aw
    p_h = jnp.exp(p[..., 3]) * ah
    p_cf = jax.nn.sigmoid(p[..., 4])
    p_cls = jax.nn.sigmoid(p[..., 5:])

    has = (t_obj != 0).astype(jnp.float32)
    no = (t_obj == 0).astype(jnp.float32)
    bb = LAMD_COORD * ((has * p_xc - t_xc) ** 2 + (has * p_yc - t_yc) ** 2 +
                       (has * p_w - t_w) ** 2 + (has * p_h - t_h) ** 2)
    hol = LAMD_OBJ * _bce_ref(has * p_cf, has)
    nol = LAMD_NOOBJ * _bce_ref(no * p_cf, has)
    cl = has * LAMB_CLASS * jnp.sum(clsw * _bce_ref(p_cls, onehot), axis=-1)
    total = bb + hol + nol + cl
    has_cnt = jnp.maximum(jnp.sum(has), 1.0)
    no_cnt = jnp.maximum(jnp.sum(no), 1.0)
    return (jnp.mean(total), jnp.sum(bb) / has_cnt, jnp.sum(hol) / has_cnt,
            jnp.sum(nol) / no_cnt, jnp.sum(cl) / has_cnt)


# ----------------------------------------------------------------------------
# Demo / self-test
# ----------------------------------------------------------------------------
if __name__ == "__main__":
    key = jax.random.PRNGKey(0)
    B, A, G, C = 2, 3, 8, 16          # batch=2, 3 anchors, 8x8 grid, 16 classes
    F = 5 + C
    RES = 64
    GRIDS = [8, 16, 32]
    T = 8                             # targets per image

    anchors = jnp.array([[[10, 13], [16, 30], [33, 23]],
                         [[30, 61], [62, 45], [59, 119]],
                         [[116, 90], [156, 198], [373, 326]]], jnp.float32)
    class_weights = jnp.arange(1, C + 1, dtype=jnp.float32)  # stand-in WEIGHTS

    k_p, k_c, k_x, k_y, k_w, k_h, k_s, k_a = jax.random.split(key, 8)
    predictions = jax.random.normal(k_p, (B, A, G, G, F), jnp.float32)

    cls = jax.random.randint(k_c, (B, T), 0, C + 1).astype(jnp.float32)
    xc = jax.random.uniform(k_x, (B, T), minval=0.0, maxval=float(RES))
    yc = jax.random.uniform(k_y, (B, T), minval=0.0, maxval=float(RES))
    ww = jax.random.uniform(k_w, (B, T), minval=4.0, maxval=40.0)
    hh = jax.random.uniform(k_h, (B, T), minval=4.0, maxval=40.0)
    sc = jax.random.randint(k_s, (B, T), 0, len(GRIDS)).astype(jnp.float32)
    an = jax.random.randint(k_a, (B, T), 0, A).astype(jnp.float32)
    xg = jnp.clip(jnp.floor(xc / (RES // G)), 0, G - 1)
    yg = jnp.clip(jnp.floor(yc / (RES // G)), 0, G - 1)
    targets = jnp.stack([cls, xc, yc, ww, hh, sc, an, xg, yg], axis=-1)

    out = yolo_v3_loss_pallas(predictions, targets, anchors, GRIDS, RES, C,
                              class_weights)
    out = jax.block_until_ready(out)

    ref = yolo_v3_loss_reference(predictions, targets, anchors, GRIDS, RES, C,
                                 class_weights)
    for o, r in zip(out, ref):
        ov, rv = float(o), float(r)
        assert abs(ov - rv) <= 1e-3 * max(1.0, abs(rv)), (ov, rv)

    print("KERNEL_OK")
</pallas_src>

<mosaic_0001>
module attributes {stable_mosaic.version = 11 : i64} {
  func.func @_yolo_loss_kernel(%arg0: i32, %arg1: memref<384x21xf32, #tpu.memory_space<vmem>>, %arg2: memref<384x8xf32, #tpu.memory_space<vmem>>, %arg3: memref<1x16xf32, #tpu.memory_space<vmem>>, %arg4: memref<3x2xf32, #tpu.memory_space<smem>>, %arg5: memref<8xf32, #tpu.memory_space<smem>>, %arg6: memref<384x8xf32, #tpu.memory_space<vmem>>) attributes {dimension_semantics = [#tpu.dimension_semantics<arbitrary>], iteration_bounds = array<i64: 1>, scalar_prefetch = 0 : i64, scratch_operands = 1 : i64, tpu.core_type = #tpu.core_type<tc>, window_params = [{transform_indices = @transform_0, window_bounds = array<i64: 384, 21>}, {transform_indices = @transform_1, window_bounds = array<i64: 384, 8>}, {pipeline_mode = #tpu.pipeline_mode<synchronous>, transform_indices = @transform_2, window_bounds = array<i64: 1, 16>}, {transform_indices = @transform_3, window_bounds = array<i64: 3, 2>}, {transform_indices = @transform_4, window_bounds = array<i64: 8>}]} {
    %c0_i32 = arith.constant 0 : i32
    %0 = arith.cmpi eq, %arg0, %c0_i32 : i32
    %1 = arith.extui %0 : i1 to i32
    %c0_i32_0 = arith.constant 0 : i32
    %2 = arith.cmpi ne, %1, %c0_i32_0 : i32
    scf.if %2 {
      %cst_65 = arith.constant 0.000000e+00 : f32
      %160 = vector.broadcast %cst_65 : f32 to vector<384x8xf32>
      %c0_66 = arith.constant 0 : index
      %c0_67 = arith.constant 0 : index
      %161 = vector.load %arg6[%c0_66, %c0_67] : memref<384x8xf32, #tpu.memory_space<vmem>>, vector<384x8xf32>
      tpu.vector_store %arg6[%c0_66, %c0_67], %160 {strides = array<i32>} : memref<384x8xf32, #tpu.memory_space<vmem>>, vector<384x8xf32>,
    } else {
    }
    %c0 = arith.constant 0 : index
    %c0_1 = arith.constant 0 : index
    %3 = vector.load %arg1[%c0, %c0_1] : memref<384x21xf32, #tpu.memory_space<vmem>>, vector<384x21xf32>
    %c0_2 = arith.constant 0 : index
    %c0_3 = arith.constant 0 : index
    %4 = vector.load %arg2[%c0_2, %c0_3] : memref<384x8xf32, #tpu.memory_space<vmem>>, vector<384x8xf32>
    %c0_4 = arith.constant 0 : index
    %c0_5 = arith.constant 0 : index
    %5 = vector.load %arg3[%c0_4, %c0_5] : memref<1x16xf32, #tpu.memory_space<vmem>>, vector<1x16xf32>
    %6 = vector.extract_strided_slice %4 {offsets = [0, 0], sizes = [384, 1], strides = [1, 1]} : vector<384x8xf32> to vector<384x1xf32>
    %7 = vector.extract_strided_slice %4 {offsets = [0, 1], sizes = [384, 4], strides = [1, 1]} : vector<384x8xf32> to vector<384x4xf32>
    %8 = vector.extract_strided_slice %4 {offsets = [0, 5], sizes = [384, 2], strides = [1, 1]} : vector<384x8xf32> to vector<384x2xf32>
    %9 = vector.extract_strided_slice %4 {offsets = [0, 7], sizes = [384, 1], strides = [1, 1]} : vector<384x8xf32> to vector<384x1xf32>
    %cst = arith.constant 0.000000e+00 : f32
    %10 = vector.broadcast %cst : f32 to vector<384x1xf32>
    %11 = arith.cmpf one, %6, %10 : vector<384x1xf32>
    %12 = arith.extui %11 : vector<384x1xi1> to vector<384x1xi32>
    %13 = arith.sitofp %12 : vector<384x1xi32> to vector<384x1xf32>
    %cst_6 = arith.constant 1.000000e+00 : f32
    %14 = vector.broadcast %cst_6 : f32 to vector<384x1xf32>
    %15 = arith.subf %14, %13 : vector<384x1xf32>
    %16 = tpu.iota {dimensions = array<i32: 1>} : vector<1x21xi32>
    %c2_i32 = arith.constant 2 : i32
    %17 = vector.broadcast %c2_i32 : i32 to vector<1x21xi32>
    %18 = arith.cmpi sge, %16, %17 : vector<1x21xi32>
    %c3_i32 = arith.constant 3 : i32
    %19 = vector.broadcast %c3_i32 : i32 to vector<1x21xi32>
    %20 = arith.cmpi sle, %16, %19 : vector<1x21xi32>
    %21 = arith.andi %18, %20 : vector<1x21xi1>
    %cst_7 = arith.constant 1.000000e+00 : f32
    %cst_8 = arith.constant -1.000000e+00 : f32
    %22 = vector.broadcast %cst_7 : f32 to vector<1x21xf32>
    %23 = vector.broadcast %cst_8 : f32 to vector<1x21xf32>
    %24 = arith.select %21, %22, %23 : vector<1x21xi1>, vector<1x21xf32>
    %c2_i32_9 = arith.constant 2 : i32
    %25 = vector.broadcast %c2_i32_9 : i32 to vector<1x21xi32>
    %26 = arith.cmpi sge, %16, %25 : vector<1x21xi32>
    %cst_10 = arith.constant 1.000000e+00 : f32
    %cst_11 = arith.constant -1.000000e+00 : f32
    %27 = vector.broadcast %cst_10 : f32 to vector<1x21xf32>
    %28 = vector.broadcast %cst_11 : f32 to vector<1x21xf32>
    %29 = arith.select %26, %27, %28 : vector<1x21xi1>, vector<1x21xf32>
    %30 = vector.broadcast %24 : vector<1x21xf32> to vector<384x21xf32>
    %31 = arith.mulf %3, %30 : vector<384x21xf32>
    %32 = vector.broadcast %29 : vector<1x21xf32> to vector<384x21xf32>
    %33 = arith.mulf %3, %32 : vector<384x21xf32>
    %34 = arith.minimumf %31, %33 : vector<384x21xf32>
    %35 = math.exp %34 : vector<384x21xf32>
    %36 = vector.extract_strided_slice %35 {offsets = [0, 0], sizes = [384, 2], strides = [1, 1]} : vector<384x21xf32> to vector<384x2xf32>
    %cst_12 = arith.constant 1.000000e+00 : f32
    %37 = vector.broadcast %cst_12 : f32 to vector<384x2xf32>
    %38 = arith.addf %37, %36 : vector<384x2xf32>
    %cst_13 = arith.constant 1.000000e+00 : f32
    %39 = vector.broadcast %cst_13 : f32 to vector<384x2xf32>
    %40 = arith.divf %39, %38 : vector<384x2xf32>
    %cst_14 = arith.constant 8.000000e+00 : f32
    %41 = vector.broadcast %cst_14 : f32 to vector<384x2xf32>
    %42 = arith.mulf %41, %40 : vector<384x2xf32>
    %cst_15 = arith.constant 8.000000e+00 : f32
    %43 = vector.broadcast %cst_15 : f32 to vector<384x2xf32>
    %44 = arith.mulf %43, %8 : vector<384x2xf32>
    %45 = arith.addf %42, %44 : vector<384x2xf32>
    %cst_16 = arith.constant 0.000000e+00 : f32
    %46 = vector.broadcast %cst_16 : f32 to vector<384x1xf32>
    %cst_17 = arith.constant 0.000000e+00 : f32
    %47 = vector.broadcast %cst_17 : f32 to vector<384x1xf32>
    %cst_18 = arith.constant 0.000000e+00 : f32
    %48 = vector.broadcast %cst_18 : f32 to vector<384x1xf32>
    %49 = arith.cmpf oeq, %9, %48 : vector<384x1xf32>
    %c0_19 = arith.constant 0 : index
    %c0_20 = arith.constant 0 : index
    %50 = memref.load %arg4[%c0_19, %c0_20] : memref<3x2xf32, #tpu.memory_space<smem>>
    %51 = vector.broadcast %50 : f32 to vector<384x1xf32>
    %52 = arith.select %49, %51, %46 : vector<384x1xi1>, vector<384x1xf32>
    %c0_21 = arith.constant 0 : index
    %c1 = arith.constant 1 : index
    %53 = memref.load %arg4[%c0_21, %c1] : memref<3x2xf32, #tpu.memory_space<smem>>
    %54 = vector.broadcast %53 : f32 to vector<384x1xf32>
    %55 = arith.select %49, %54, %47 : vector<384x1xi1>, vector<384x1xf32>
    %cst_22 = arith.constant 1.000000e+00 : f32
    %56 = vector.broadcast %cst_22 : f32 to vector<384x1xf32>
    %57 = arith.cmpf oeq, %9, %56 : vector<384x1xf32>
    %c1_23 = arith.constant 1 : index
    %c0_24 = arith.constant 0 : index
    %58 = memref.load %arg4[%c1_23, %c0_24] : memref<3x2xf32, #tpu.memory_space<smem>>
    %59 = vector.broadcast %58 : f32 to vector<384x1xf32>
    %60 = arith.select %57, %59, %52 : vector<384x1xi1>, vector<384x1xf32>
    %c1_25 = arith.constant 1 : index
    %c1_26 = arith.constant 1 : index
    %61 = memref.load %arg4[%c1_25, %c1_26] : memref<3x2xf32, #tpu.memory_space<smem>>
    %62 = vector.broadcast %61 : f32 to vector<384x1xf32>
    %63 = arith.select %57, %62, %55 : vector<384x1xi1>, vector<384x1xf32>
    %cst_27 = arith.constant 2.000000e+00 : f32
    %64 = vector.broadcast %cst_27 : f32 to vector<384x1xf32>
    %65 = arith.cmpf oeq, %9, %64 : vector<384x1xf32>
    %c2 = arith.constant 2 : index
    %c0_28 = arith.constant 0 : index
    %66 = memref.load %arg4[%c2, %c0_28] : memref<3x2xf32, #tpu.memory_space<smem>>
    %67 = vector.broadcast %66 : f32 to vector<384x1xf32>
    %68 = arith.select %65, %67, %60 : vector<384x1xi1>, vector<384x1xf32>
    %c2_29 = arith.constant 2 : index
    %c1_30 = arith.constant 1 : index
    %69 = memref.load %arg4[%c2_29, %c1_30] : memref<3x2xf32, #tpu.memory_space<smem>>
    %70 = vector.broadcast %69 : f32 to vector<384x1xf32>
    %71 = arith.select %65, %70, %63 : vector<384x1xi1>, vector<384x1xf32>
    %72 = vector.extract_strided_slice %35 {offsets = [0, 2], sizes = [384, 1], strides = [1, 1]} : vector<384x21xf32> to vector<384x1xf32>
    %73 = arith.mulf %72, %68 : vector<384x1xf32>
    %74 = vector.extract_strided_slice %35 {offsets = [0, 3], sizes = [384, 1], strides = [1, 1]} : vector<384x21xf32> to vector<384x1xf32>
    %75 = arith.mulf %74, %71 : vector<384x1xf32>
    %76 = vector.broadcast %13 : vector<384x1xf32> to vector<384x2xf32>
    %77 = arith.mulf %76, %45 : vector<384x2xf32>
    %78 = vector.extract_strided_slice %7 {offsets = [0, 0], sizes = [384, 2], strides = [1, 1]} : vector<384x4xf32> to vector<384x2xf32>
    %79 = arith.subf %77, %78 : vector<384x2xf32>
    %80 = arith.mulf %13, %73 : vector<384x1xf32>
    %81 = vector.extract_strided_slice %7 {offsets = [0, 2], sizes = [384, 1], strides = [1, 1]} : vector<384x4xf32> to vector<384x1xf32>
    %82 = arith.subf %80, %81 : vector<384x1xf32>
    %83 = arith.mulf %13, %75 : vector<384x1xf32>
    %84 = vector.extract_strided_slice %7 {offsets = [0, 3], sizes = [384, 1], strides = [1, 1]} : vector<384x4xf32> to vector<384x1xf32>
    %85 = arith.subf %83, %84 : vector<384x1xf32>
    %86 = arith.mulf %79, %79 : vector<384x2xf32>
    %cst_31 = arith.constant dense<0.000000e+00> : vector<384xf32>
    %87 = vector.multi_reduction <add>, %86, %cst_31 [1] : vector<384x2xf32> to vector<384xf32>
    %88 = vector.shape_cast %87 : vector<384xf32> to vector<384x1xf32>
    %89 = arith.mulf %82, %82 : vector<384x1xf32>
    %90 = arith.addf %88, %89 : vector<384x1xf32>
    %91 = arith.mulf %85, %85 : vector<384x1xf32>
    %92 = arith.addf %90, %91 : vector<384x1xf32>
    %cst_32 = arith.constant 5.000000e-01 : f32
    %93 = vector.broadcast %cst_32 : f32 to vector<384x1xf32>
    %94 = arith.mulf %93, %92 : vector<384x1xf32>
    %95 = vector.extract_strided_slice %35 {offsets = [0, 4], sizes = [384, 17], strides = [1, 1]} : vector<384x21xf32> to vector<384x17xf32>
    %cst_33 = arith.constant 1.000000e+00 : f32
    %96 = vector.broadcast %cst_33 : f32 to vector<384x17xf32>
    %97 = arith.addf %96, %95 : vector<384x17xf32>
    %98 = math.log %97 : vector<384x17xf32>
    %99 = vector.extract_strided_slice %3 {offsets = [0, 4], sizes = [384, 1], strides = [1, 1]} : vector<384x21xf32> to vector<384x1xf32>
    %cst_34 = arith.constant 0.000000e+00 : f32
    %100 = vector.broadcast %cst_34 : f32 to vector<384x1xf32>
    %101 = arith.maximumf %99, %100 : vector<384x1xf32>
    %102 = vector.extract_strided_slice %98 {offsets = [0, 0], sizes = [384, 1], strides = [1, 1]} : vector<384x17xf32> to vector<384x1xf32>
    %103 = arith.addf %101, %102 : vector<384x1xf32>
    %104 = arith.subf %103, %99 : vector<384x1xf32>
    %cst_35 = arith.constant 2.000000e+00 : f32
    %105 = vector.broadcast %cst_35 : f32 to vector<384x1xf32>
    %106 = arith.mulf %105, %13 : vector<384x1xf32>
    %cst_36 = arith.constant 1.000000e+02 : f32
    %107 = vector.broadcast %cst_36 : f32 to vector<384x1xf32>
    %108 = arith.minimumf %104, %107 : vector<384x1xf32>
    %109 = arith.mulf %106, %108 : vector<384x1xf32>
    %cst_37 = arith.constant 1.000000e+02 : f32
    %110 = vector.broadcast %cst_37 : f32 to vector<384x1xf32>
    %111 = arith.minimumf %103, %110 : vector<384x1xf32>
    %112 = arith.mulf %15, %111 : vector<384x1xf32>
    %cst_38 = arith.constant 1.000000e+02 : f32
    %113 = vector.broadcast %cst_38 : f32 to vector<384x1xf32>
    %114 = arith.mulf %13, %113 : vector<384x1xf32>
    %115 = arith.addf %112, %114 : vector<384x1xf32>
    %cst_39 = arith.constant 2.500000e-01 : f32
    %116 = vector.broadcast %cst_39 : f32 to vector<384x1xf32>
    %117 = arith.mulf %116, %115 : vector<384x1xf32>
    %118 = vector.extract_strided_slice %3 {offsets = [0, 5], sizes = [384, 16], strides = [1, 1]} : vector<384x21xf32> to vector<384x16xf32>
    %119 = tpu.iota {dimensions = array<i32: 1>} : vector<384x16xi32>
    %120 = arith.sitofp %119 : vector<384x16xi32> to vector<384x16xf32>
    %cst_40 = arith.constant 1.000000e+00 : f32
    %121 = vector.broadcast %cst_40 : f32 to vector<384x1xf32>
    %122 = arith.subf %6, %121 : vector<384x1xf32>
    %123 = vector.broadcast %122 : vector<384x1xf32> to vector<384x16xf32>
    %124 = arith.cmpf oeq, %120, %123 : vector<384x16xf32>
    %125 = arith.extui %124 : vector<384x16xi1> to vector<384x16xi32>
    %126 = arith.sitofp %125 : vector<384x16xi32> to vector<384x16xf32>
    %cst_41 = arith.constant 0.000000e+00 : f32
    %127 = vector.broadcast %cst_41 : f32 to vector<384x16xf32>
    %128 = arith.maximumf %118, %127 : vector<384x16xf32>
    %129 = arith.mulf %118, %126 : vector<384x16xf32>
    %130 = arith.subf %128, %129 : vector<384x16xf32>
    %131 = vector.extract_strided_slice %98 {offsets = [0, 1], sizes = [384, 16], strides = [1, 1]} : vector<384x17xf32> to vector<384x16xf32>
    %132 = arith.addf %130, %131 : vector<384x16xf32>
    %cst_42 = arith.constant 1.000000e+02 : f32
    %133 = vector.broadcast %cst_42 : f32 to vector<384x16xf32>
    %134 = arith.minimumf %132, %133 : vector<384x16xf32>
    %cst_43 = arith.constant 2.000000e+00 : f32
    %135 = vector.broadcast %cst_43 : f32 to vector<384x1xf32>
    %136 = arith.mulf %135, %13 : vector<384x1xf32>
    %137 = vector.broadcast %5 : vector<1x16xf32> to vector<384x16xf32>
    %138 = arith.mulf %137, %134 : vector<384x16xf32>
    %cst_44 = arith.constant dense<0.000000e+00> : vector<384xf32>
    %139 = vector.multi_reduction <add>, %138, %cst_44 [1] : vector<384x16xf32> to vector<384xf32>
    %140 = vector.shape_cast %139 : vector<384xf32> to vector<384x1xf32>
    %141 = arith.mulf %136, %140 : vector<384x1xf32>
    %c0_45 = arith.constant 0 : index
    %c0_46 = arith.constant 0 : index
    %142 = vector.load %arg6[%c0_45, %c0_46] : memref<384x8xf32, #tpu.memory_space<vmem>>, vector<384x1xf32>
    %143 = arith.addf %142, %94 : vector<384x1xf32>
    %c0_47 = arith.constant 0 : index
    %c0_48 = arith.constant 0 : index
    %144 = vector.load %arg6[%c0_47, %c0_48] : memref<384x8xf32, #tpu.memory_space<vmem>>, vector<384x1xf32>
    tpu.vector_store %arg6[%c0_47, %c0_48], %143 {strides = array<i32>} : memref<384x8xf32, #tpu.memory_space<vmem>>, vector<384x1xf32>,
    %c0_49 = arith.constant 0 : index
    %c1_50 = arith.constant 1 : index
    %145 = vector.load %arg6[%c0_49, %c1_50] : memref<384x8xf32, #tpu.memory_space<vmem>>, vector<384x1xf32>
    %146 = arith.addf %145, %109 : vector<384x1xf32>
    %c0_51 = arith.constant 0 : index
    %c1_52 = arith.constant 1 : index
    %147 = vector.load %arg6[%c0_51, %c1_52] : memref<384x8xf32, #tpu.memory_space<vmem>>, vector<384x1xf32>
    tpu.vector_store %arg6[%c0_51, %c1_52], %146 {strides = array<i32>} : memref<384x8xf32, #tpu.memory_space<vmem>>, vector<384x1xf32>,
    %c0_53 = arith.constant 0 : index
    %c2_54 = arith.constant 2 : index
    %148 = vector.load %arg6[%c0_53, %c2_54] : memref<384x8xf32, #tpu.memory_space<vmem>>, vector<384x1xf32>
    %149 = arith.addf %148, %117 : vector<384x1xf32>
    %c0_55 = arith.constant 0 : index
    %c2_56 = arith.constant 2 : index
    %150 = vector.load %arg6[%c0_55, %c2_56] : memref<384x8xf32, #tpu.memory_space<vmem>>, vector<384x1xf32>
    tpu.vector_store %arg6[%c0_55, %c2_56], %149 {strides = array<i32>} : memref<384x8xf32, #tpu.memory_space<vmem>>, vector<384x1xf32>,
    %c0_57 = arith.constant 0 : index
    %c3 = arith.constant 3 : index
    %151 = vector.load %arg6[%c0_57, %c3] : memref<384x8xf32, #tpu.memory_space<vmem>>, vector<384x1xf32>
    %152 = arith.addf %151, %141 : vector<384x1xf32>
    %c0_58 = arith.constant 0 : index
    %c3_59 = arith.constant 3 : index
    %153 = vector.load %arg6[%c0_58, %c3_59] : memref<384x8xf32, #tpu.memory_space<vmem>>, vector<384x1xf32>
    tpu.vector_store %arg6[%c0_58, %c3_59], %152 {strides = array<i32>} : memref<384x8xf32, #tpu.memory_space<vmem>>, vector<384x1xf32>,
    %c0_60 = arith.constant 0 : index
    %c4 = arith.constant 4 : index
    %154 = vector.load %arg6[%c0_60, %c4] : memref<384x8xf32, #tpu.memory_space<vmem>>, vector<384x1xf32>
    %155 = arith.addf %154, %13 : vector<384x1xf32>
    %c0_61 = arith.constant 0 : index
    %c4_62 = arith.constant 4 : index
    %156 = vector.load %arg6[%c0_61, %c4_62] : memref<384x8xf32, #tpu.memory_space<vmem>>, vector<384x1xf32>
    tpu.vector_store %arg6[%c0_61, %c4_62], %155 {strides = array<i32>} : memref<384x8xf32, #tpu.memory_space<vmem>>, vector<384x1xf32>,
    %c0_i32_63 = arith.constant 0 : i32
    %157 = arith.cmpi eq, %arg0, %c0_i32_63 : i32
    %158 = arith.extui %157 : i1 to i32
    %c0_i32_64 = arith.constant 0 : i32
    %159 = arith.cmpi ne, %158, %c0_i32_64 : i32
    scf.if %159 {
      %c0_65 = arith.constant 0 : index
      %c0_66 = arith.constant 0 : index
      %160 = vector.load %arg6[%c0_65, %c0_66] : memref<384x8xf32, #tpu.memory_space<vmem>>, vector<384x1xf32>
      %161 = vector.shape_cast %160 : vector<384x1xf32> to vector<1x384x1xf32>
      %cst_67 = arith.constant dense<0.000000e+00> : vector<1xf32>
      %162 = vector.multi_reduction <add>, %161, %cst_67 [1, 2] : vector<1x384x1xf32> to vector<1xf32>
      %163 = vector.shape_cast %162 : vector<1xf32> to vector<1x1x1xf32>
      %164 = vector.extract %163[0, 0, 0] : f32 from vector<1x1x1xf32>
      %c0_68 = arith.constant 0 : index
      %165 = memref.load %arg5[%c0_68] : memref<8xf32, #tpu.memory_space<smem>>
      memref.store %164, %arg5[%c0_68] : memref<8xf32, #tpu.memory_space<smem>>
      %c0_69 = arith.constant 0 : index
      %c1_70 = arith.constant 1 : index
      %166 = vector.load %arg6[%c0_69, %c1_70] : memref<384x8xf32, #tpu.memory_space<vmem>>, vector<384x1xf32>
      %167 = vector.shape_cast %166 : vector<384x1xf32> to vector<1x384x1xf32>
      %cst_71 = arith.constant dense<0.000000e+00> : vector<1xf32>
      %168 = vector.multi_reduction <add>, %167, %cst_71 [1, 2] : vector<1x384x1xf32> to vector<1xf32>
      %169 = vector.shape_cast %168 : vector<1xf32> to vector<1x1x1xf32>
      %170 = vector.extract %169[0, 0, 0] : f32 from vector<1x1x1xf32>
      %c1_72 = arith.constant 1 : index
      %171 = memref.load %arg5[%c1_72] : memref<8xf32, #tpu.memory_space<smem>>
      memref.store %170, %arg5[%c1_72] : memref<8xf32, #tpu.memory_space<smem>>
      %c0_73 = arith.constant 0 : index
      %c2_74 = arith.constant 2 : index
      %172 = vector.load %arg6[%c0_73, %c2_74] : memref<384x8xf32, #tpu.memory_space<vmem>>, vector<384x1xf32>
      %173 = vector.shape_cast %172 : vector<384x1xf32> to vector<1x384x1xf32>
      %cst_75 = arith.constant dense<0.000000e+00> : vector<1xf32>
      %174 = vector.multi_reduction <add>, %173, %cst_75 [1, 2] : vector<1x384x1xf32> to vector<1xf32>
      %175 = vector.shape_cast %174 : vector<1xf32> to vector<1x1x1xf32>
      %176 = vector.extract %175[0, 0, 0] : f32 from vector<1x1x1xf32>
      %c2_76 = arith.constant 2 : index
      %177 = memref.load %arg5[%c2_76] : memref<8xf32, #tpu.memory_space<smem>>
      memref.store %176, %arg5[%c2_76] : memref<8xf32, #tpu.memory_space<smem>>
      %c0_77 = arith.constant 0 : index
      %c3_78 = arith.constant 3 : index
      %178 = vector.load %arg6[%c0_77, %c3_78] : memref<384x8xf32, #tpu.memory_space<vmem>>, vector<384x1xf32>
      %179 = vector.shape_cast %178 : vector<384x1xf32> to vector<1x384x1xf32>
      %cst_79 = arith.constant dense<0.000000e+00> : vector<1xf32>
      %180 = vector.multi_reduction <add>, %179, %cst_79 [1, 2] : vector<1x384x1xf32> to vector<1xf32>
      %181 = vector.shape_cast %180 : vector<1xf32> to vector<1x1x1xf32>
      %182 = vector.extract %181[0, 0, 0] : f32 from vector<1x1x1xf32>
      %c3_80 = arith.constant 3 : index
      %183 = memref.load %arg5[%c3_80] : memref<8xf32, #tpu.memory_space<smem>>
      memref.store %182, %arg5[%c3_80] : memref<8xf32, #tpu.memory_space<smem>>
      %c0_81 = arith.constant 0 : index
      %c4_82 = arith.constant 4 : index
      %184 = vector.load %arg6[%c0_81, %c4_82] : memref<384x8xf32, #tpu.memory_space<vmem>>, vector<384x1xf32>
      %185 = vector.shape_cast %184 : vector<384x1xf32> to vector<1x384x1xf32>
      %cst_83 = arith.constant dense<0.000000e+00> : vector<1xf32>
      %186 = vector.multi_reduction <add>, %185, %cst_83 [1, 2] : vector<1x384x1xf32> to vector<1xf32>
      %187 = vector.shape_cast %186 : vector<1xf32> to vector<1x1x1xf32>
      %188 = vector.extract %187[0, 0, 0] : f32 from vector<1x1x1xf32>
      %c4_84 = arith.constant 4 : index
      %189 = memref.load %arg5[%c4_84] : memref<8xf32, #tpu.memory_space<smem>>
      memref.store %188, %arg5[%c4_84] : memref<8xf32, #tpu.memory_space<smem>>
      %cst_85 = arith.constant 0.000000e+00 : f32
      %c5 = arith.constant 5 : index
      %190 = memref.load %arg5[%c5] : memref<8xf32, #tpu.memory_space<smem>>
      memref.store %cst_85, %arg5[%c5] : memref<8xf32, #tpu.memory_space<smem>>
      %cst_86 = arith.constant 0.000000e+00 : f32
      %c6 = arith.constant 6 : index
      %191 = memref.load %arg5[%c6] : memref<8xf32, #tpu.memory_space<smem>>
      memref.store %cst_86, %arg5[%c6] : memref<8xf32, #tpu.memory_space<smem>>
      %cst_87 = arith.constant 0.000000e+00 : f32
      %c7 = arith.constant 7 : index
      %192 = memref.load %arg5[%c7] : memref<8xf32, #tpu.memory_space<smem>>
      memref.store %cst_87, %arg5[%c7] : memref<8xf32, #tpu.memory_space<smem>>
    } else {
    }
    return
  }
  func.func @transform_0(%arg0: i32) -> (i32, i32) {
    %c0_i32 = arith.constant 0 : i32
    %c0_i32_0 = arith.constant 0 : i32
    return %arg0, %c0_i32 : i32, i32
  }
  func.func @transform_1(%arg0: i32) -> (i32, i32) {
    %c0_i32 = arith.constant 0 : i32
    %c0_i32_0 = arith.constant 0 : i32
    return %arg0, %c0_i32 : i32, i32
  }
  func.func @transform_2(%arg0: i32) -> (i32, i32) {
    %c0_i32 = arith.constant 0 : i32
    %c0_i32_0 = arith.constant 0 : i32
    %c0_i32_1 = arith.constant 0 : i32
    return %c0_i32, %c0_i32_0 : i32, i32
  }
  func.func @transform_3(%arg0: i32) -> (i32, i32) {
    %c0_i32 = arith.constant 0 : i32
    %c0_i32_0 = arith.constant 0 : i32
    %c0_i32_1 = arith.constant 0 : i32
    return %c0_i32, %c0_i32_0 : i32, i32
  }
  func.func @transform_4(%arg0: i32) -> i32 {
    %c0_i32 = arith.constant 0 : i32
    %c0_i32_0 = arith.constant 0 : i32
    return %c0_i32 : i32
  }
}

</mosaic_0001>

<llo_original>
// kernel: tpu_custom_call.1
$region0: #{tpu_custom_call.1}
  #allocation0 [shape = 'u32[]', space=smem, size = 0x4, offset = 0x4, fixed_abs, tag = 'smem constant byte address 0x4 - core index']
  #allocation1 [shape = 'u32[144,128]{1,0:T(1,128)}', space=vmem, size = 0x12000, scoped, tag = 'internal scratch']
  #allocation2 [shape = 'f32[384,8]{1,0:T(8,128)}', space=vmem, size = 0x30000, scoped, tag = 'scratch operand']
  %s0 = inlined_call_operand.vmem [shape: f32[384,21], index: 0, kind: input, shape index: {}]
  %s1 = inlined_call_operand.vmem [shape: f32[384,8], index: 1, kind: input, shape index: {}]
  %s2 = inlined_call_operand.vmem [shape: f32[1,16], index: 2, kind: input, shape index: {}]
  %s3 = inlined_call_operand.vmem [shape: f32[3,2], index: 3, kind: input, shape index: {}]
  %s4 = inlined_call_operand.hbm [shape: f32[8], index: 4, kind: output, shape index: {}]
  %s5 = sld [smem:[#allocation0]]
  $region38: #{tpu_custom_call.1} parent=0
    _
  %s7 = ssub.s32 1, %s5
  %s8 = scalar_select 0, %s7, %s5
  $region1: #{tpu_custom_call.1} parent=0
    #allocation3 [shape = 'u8[2048]{0}', space=smem, size = 0x800, scoped, tag = 'input window, operand 3, single buffered']
    #allocation4 [shape = 's32[1]{0}', space=sflag, size = 0x4, scoped, tag = 'scoped memory for tpu_custom_call.1']
    #allocation5 [shape = 's32[1]{0}', space=sflag, size = 0x4, scoped, tag = 'scoped memory for tpu_custom_call.1']
    #allocation6 [shape = 'u8[512]{0}', space=smem, size = 0x200, scoped, tag = 'output window, operand 0, single buffered']
    %9 = vsyncpa [#allocation5], 0
    %10 = vsyncpa [#allocation4], 0
    // Predicated region
    $region2: #{tpu_custom_call.1} parent=1 // pred_check
      _
    $region3: #{tpu_custom_call.1} parent=1 // pred_check_branch
      %12 = sbr.rel (0) target = $region5
    $region4: #{tpu_custom_call.1} parent=1 // pred_region
      _
    $region5: #{tpu_custom_call.1} parent=1 // pred_fallthru
      _
    // Predicated region
    $region6: #{tpu_custom_call.1} parent=1 // pred_check
      _
    $region7: #{tpu_custom_call.1} parent=1 // pred_check_branch
      %14 = sbr.rel (0) target = $region9
    $region8: #{tpu_custom_call.1} parent=1 // pred_region
      _
    $region9: #{tpu_custom_call.1} parent=1 // pred_fallthru
      _
    // Predicated region
    $region10: #{tpu_custom_call.1} parent=1 // pred_check
      _
    $region11: #{tpu_custom_call.1} parent=1 // pred_check_branch
      %16 = sbr.rel (0) target = $region13
    $region12: #{tpu_custom_call.1} parent=1 // pred_region
      _
    $region13: #{tpu_custom_call.1} parent=1 // pred_fallthru
      _
    // Predicated region
    $region14: #{tpu_custom_call.1} parent=1 // pred_check
      _
    $region15: #{tpu_custom_call.1} parent=1 // pred_check_branch
      %18 = sbr.rel (0) target = $region17
    $region16: #{tpu_custom_call.1} parent=1 // pred_region
      %s20 = ssub.s32 64, 64
      %21 = vsyncadd [#allocation5], %s20
      %s23 = sshll.u32 %s3, 4
      %s24 = int_to_ptr.vmem [resolvable:$true] %s23
      %26 = dma.vmem_to_smem %s24, 64, [#allocation3], [#allocation5]
    $region17: #{tpu_custom_call.1} parent=1 // pred_fallthru
      _
    // Predicated region
    $region18: #{tpu_custom_call.1} parent=1 // pred_check
      _
    $region19: #{tpu_custom_call.1} parent=1 // pred_check_branch
      %28 = sbr.rel (0) target = $region21
    $region20: #{tpu_custom_call.1} parent=1 // pred_region
      %29 = dma.done [#allocation5], 64
    $region21: #{tpu_custom_call.1} parent=1 // pred_fallthru
      _
    %30 = sfence
    %p31 = scmp.eq.s32.totalorder 0, 0
    // Predicated region
    $region22: #{tpu_custom_call.1} parent=1 // pred_check
      %p32 = pneg %p31
    $region23: #{tpu_custom_call.1} parent=1 // pred_check_branch
      %34 = sbr.rel (%p32) target = $region25
    $region24: #{tpu_custom_call.1} parent=1 // pred_region
      %vm35 = vcmask 64512
      %36 = vst.msk [vmem:[#allocation2] sm:$0xff] %vm35, 0.0
      %37 = vst.msk [vmem:[#allocation2 + $0x8] sm:$0xff] %vm35, 0.0
      %38 = vst.msk [vmem:[#allocation2 + $0x10] sm:$0xff] %vm35, 0.0
      %39 = vst.msk [vmem:[#allocation2 + $0x18] sm:$0xff] %vm35, 0.0
      %40 = vst.msk [vmem:[#allocation2 + $0x20] sm:$0xff] %vm35, 0.0
      %41 = vst.msk [vmem:[#allocation2 + $0x28] sm:$0xff] %vm35, 0.0
      %42 = vst.msk [vmem:[#allocation2 + $0x30] sm:$0xff] %vm35, 0.0
      %43 = vst.msk [vmem:[#allocation2 + $0x38] sm:$0xff] %vm35, 0.0
      %44 = vst.msk [vmem:[#allocation2 + $0x40] sm:$0xff] %vm35, 0.0
      %45 = vst.msk [vmem:[#allocation2 + $0x48] sm:$0xff] %vm35, 0.0
      %46 = vst.msk [vmem:[#allocation2 + $0x50] sm:$0xff] %vm35, 0.0
      %47 = vst.msk [vmem:[#allocation2 + $0x58] sm:$0xff] %vm35, 0.0
      %48 = vst.msk [vmem:[#allocation2 + $0x60] sm:$0xff] %vm35, 0.0
      %49 = vst.msk [vmem:[#allocation2 + $0x68] sm:$0xff] %vm35, 0.0
      %50 = vst.msk [vmem:[#allocation2 + $0x70] sm:$0xff] %vm35, 0.0
      %51 = vst.msk [vmem:[#allocation2 + $0x78] sm:$0xff] %vm35, 0.0
      %52 = vst.msk [vmem:[#allocation2 + $0x80] sm:$0xff] %vm35, 0.0
      %53 = vst.msk [vmem:[#allocation2 + $0x88] sm:$0xff] %vm35, 0.0
      %54 = vst.msk [vmem:[#allocation2 + $0x90] sm:$0xff] %vm35, 0.0
      %55 = vst.msk [vmem:[#allocation2 + $0x98] sm:$0xff] %vm35, 0.0
      %56 = vst.msk [vmem:[#allocation2 + $0xa0] sm:$0xff] %vm35, 0.0
      %57 = vst.msk [vmem:[#allocation2 + $0xa8] sm:$0xff] %vm35, 0.0
      %58 = vst.msk [vmem:[#allocation2 + $0xb0] sm:$0xff] %vm35, 0.0
      %59 = vst.msk [vmem:[#allocation2 + $0xb8] sm:$0xff] %vm35, 0.0
      %60 = vst.msk [vmem:[#allocation2 + $0xc0] sm:$0xff] %vm35, 0.0
      %61 = vst.msk [vmem:[#allocation2 + $0xc8] sm:$0xff] %vm35, 0.0
      %62 = vst.msk [vmem:[#allocation2 + $0xd0] sm:$0xff] %vm35, 0.0
      %63 = vst.msk [vmem:[#allocation2 + $0xd8] sm:$0xff] %vm35, 0.0
      %64 = vst.msk [vmem:[#allocation2 + $0xe0] sm:$0xff] %vm35, 0.0
      %65 = vst.msk [vmem:[#allocation2 + $0xe8] sm:$0xff] %vm35, 0.0
      %66 = vst.msk [vmem:[#allocation2 + $0xf0] sm:$0xff] %vm35, 0.0
      %67 = vst.msk [vmem:[#allocation2 + $0xf8] sm:$0xff] %vm35, 0.0
      %68 = vst.msk [vmem:[#allocation2 + $0x100] sm:$0xff] %vm35, 0.0
      %69 = vst.msk [vmem:[#allocation2 + $0x108] sm:$0xff] %vm35, 0.0
      %70 = vst.msk [vmem:[#allocation2 + $0x110] sm:$0xff] %vm35, 0.0
      %71 = vst.msk [vmem:[#allocation2 + $0x118] sm:$0xff] %vm35, 0.0
      %72 = vst.msk [vmem:[#allocation2 + $0x120] sm:$0xff] %vm35, 0.0
      %73 = vst.msk [vmem:[#allocation2 + $0x128] sm:$0xff] %vm35, 0.0
      %74 = vst.msk [vmem:[#allocation2 + $0x130] sm:$0xff] %vm35, 0.0
      %75 = vst.msk [vmem:[#allocation2 + $0x138] sm:$0xff] %vm35, 0.0
      %76 = vst.msk [vmem:[#allocation2 + $0x140] sm:$0xff] %vm35, 0.0
      %77 = vst.msk [vmem:[#allocation2 + $0x148] sm:$0xff] %vm35, 0.0
      %78 = vst.msk [vmem:[#allocation2 + $0x150] sm:$0xff] %vm35, 0.0
      %79 = vst.msk [vmem:[#allocation2 + $0x158] sm:$0xff] %vm35, 0.0
      %80 = vst.msk [vmem:[#allocation2 + $0x160] sm:$0xff] %vm35, 0.0
      %81 = vst.msk [vmem:[#allocation2 + $0x168] sm:$0xff] %vm35, 0.0
      %82 = vst.msk [vmem:[#allocation2 + $0x170] sm:$0xff] %vm35, 0.0
      %83 = vst.msk [vmem:[#allocation2 + $0x178] sm:$0xff] %vm35, 0.0
    $region25: #{tpu_custom_call.1} parent=1 // pred_fallthru
      _
    %v84 = vld [vmem:[%s0] sm:$0xff]
    %v85 = vld [vmem:[%s0 + $0x8] sm:$0xff]
    %v86 = vld [vmem:[%s0 + $0x10] sm:$0xff]
    %v87 = vld [vmem:[%s0 + $0x18] sm:$0xff]
    %v88 = vld [vmem:[%s0 + $0x20] sm:$0xff]
    %v89 = vld [vmem:[%s0 + $0x28] sm:$0xff]
    %v90 = vld [vmem:[%s0 + $0x30] sm:$0xff]
    %v91 = vld [vmem:[%s0 + $0x38] sm:$0xff]
    %v92 = vld [vmem:[%s0 + $0x40] sm:$0xff]
    %v93 = vld [vmem:[%s0 + $0x48] sm:$0xff]
    %v94 = vld [vmem:[%s0 + $0x50] sm:$0xff]
    %v95 = vld [vmem:[%s0 + $0x58] sm:$0xff]
    %v96 = vld [vmem:[%s0 + $0x60] sm:$0xff]
    %v97 = vld [vmem:[%s0 + $0x68] sm:$0xff]
    %v98 = vld [vmem:[%s0 + $0x70] sm:$0xff]
    %v99 = vld [vmem:[%s0 + $0x78] sm:$0xff]
    %v100 = vld [vmem:[%s0 + $0x80] sm:$0xff]
    %v101 = vld [vmem:[%s0 + $0x88] sm:$0xff]
    %v102 = vld [vmem:[%s0 + $0x90] sm:$0xff]
    %v103 = vld [vmem:[%s0 + $0x98] sm:$0xff]
    %v104 = vld [vmem:[%s0 + $0xa0] sm:$0xff]
    %v105 = vld [vmem:[%s0 + $0xa8] sm:$0xff]
    %v106 = vld [vmem:[%s0 + $0xb0] sm:$0xff]
    %v107 = vld [vmem:[%s0 + $0xb8] sm:$0xff]
    %v108 = vld [vmem:[%s0 + $0xc0] sm:$0xff]
    %v109 = vld [vmem:[%s0 + $0xc8] sm:$0xff]
    %v110 = vld [vmem:[%s0 + $0xd0] sm:$0xff]
    %v111 = vld [vmem:[%s0 + $0xd8] sm:$0xff]
    %v112 = vld [vmem:[%s0 + $0xe0] sm:$0xff]
    %v113 = vld [vmem:[%s0 + $0xe8] sm:$0xff]
    %v114 = vld [vmem:[%s0 + $0xf0] sm:$0xff]
    %v115 = vld [vmem:[%s0 + $0xf8] sm:$0xff]
    %v116 = vld [vmem:[%s0 + $0x100] sm:$0xff]
    %v117 = vld [vmem:[%s0 + $0x108] sm:$0xff]
    %v118 = vld [vmem:[%s0 + $0x110] sm:$0xff]
    %v119 = vld [vmem:[%s0 + $0x118] sm:$0xff]
    %v120 = vld [vmem:[%s0 + $0x120] sm:$0xff]
    %v121 = vld [vmem:[%s0 + $0x128] sm:$0xff]
    %v122 = vld [vmem:[%s0 + $0x130] sm:$0xff]
    %v123 = vld [vmem:[%s0 + $0x138] sm:$0xff]
    %v124 = vld [vmem:[%s0 + $0x140] sm:$0xff]
    %v125 = vld [vmem:[%s0 + $0x148] sm:$0xff]
    %v126 = vld [vmem:[%s0 + $0x150] sm:$0xff]
    %v127 = vld [vmem:[%s0 + $0x158] sm:$0xff]
    %v128 = vld [vmem:[%s0 + $0x160] sm:$0xff]
    %v129 = vld [vmem:[%s0 + $0x168] sm:$0xff]
    %v130 = vld [vmem:[%s0 + $0x170] sm:$0xff]
    %v131 = vld [vmem:[%s0 + $0x178] sm:$0xff]
    %v132 = vld [vmem:[%s1] sm:$0xff]
    %v133 = vld [vmem:[%s1 + $0x8] sm:$0xff]
    %v134 = vld [vmem:[%s1 + $0x10] sm:$0xff]
    %v135 = vld [vmem:[%s1 + $0x18] sm:$0xff]
    %v136 = vld [vmem:[%s1 + $0x20] sm:$0xff]
    %v137 = vld [vmem:[%s1 + $0x28] sm:$0xff]
    %v138 = vld [vmem:[%s1 + $0x30] sm:$0xff]
    %v139 = vld [vmem:[%s1 + $0x38] sm:$0xff]
    %v140 = vld [vmem:[%s1 + $0x40] sm:$0xff]
    %v141 = vld [vmem:[%s1 + $0x48] sm:$0xff]
    %v142 = vld [vmem:[%s1 + $0x50] sm:$0xff]
    %v143 = vld [vmem:[%s1 + $0x58] sm:$0xff]
    %v144 = vld [vmem:[%s1 + $0x60] sm:$0xff]
    %v145 = vld [vmem:[%s1 + $0x68] sm:$0xff]
    %v146 = vld [vmem:[%s1 + $0x70] sm:$0xff]
    %v147 = vld [vmem:[%s1 + $0x78] sm:$0xff]
    %v148 = vld [vmem:[%s1 + $0x80] sm:$0xff]
    %v149 = vld [vmem:[%s1 + $0x88] sm:$0xff]
    %v150 = vld [vmem:[%s1 + $0x90] sm:$0xff]
    %v151 = vld [vmem:[%s1 + $0x98] sm:$0xff]
    %v152 = vld [vmem:[%s1 + $0xa0] sm:$0xff]
    %v153 = vld [vmem:[%s1 + $0xa8] sm:$0xff]
    %v154 = vld [vmem:[%s1 + $0xb0] sm:$0xff]
    %v155 = vld [vmem:[%s1 + $0xb8] sm:$0xff]
    %v156 = vld [vmem:[%s1 + $0xc0] sm:$0xff]
    %v157 = vld [vmem:[%s1 + $0xc8] sm:$0xff]
    %v158 = vld [vmem:[%s1 + $0xd0] sm:$0xff]
    %v159 = vld [vmem:[%s1 + $0xd8] sm:$0xff]
    %v160 = vld [vmem:[%s1 + $0xe0] sm:$0xff]
    %v161 = vld [vmem:[%s1 + $0xe8] sm:$0xff]
    %v162 = vld [vmem:[%s1 + $0xf0] sm:$0xff]
    %v163 = vld [vmem:[%s1 + $0xf8] sm:$0xff]
    %v164 = vld [vmem:[%s1 + $0x100] sm:$0xff]
    %v165 = vld [vmem:[%s1 + $0x108] sm:$0xff]
    %v166 = vld [vmem:[%s1 + $0x110] sm:$0xff]
    %v167 = vld [vmem:[%s1 + $0x118] sm:$0xff]
    %v168 = vld [vmem:[%s1 + $0x120] sm:$0xff]
    %v169 = vld [vmem:[%s1 + $0x128] sm:$0xff]
    %v170 = vld [vmem:[%s1 + $0x130] sm:$0xff]
    %v171 = vld [vmem:[%s1 + $0x138] sm:$0xff]
    %v172 = vld [vmem:[%s1 + $0x140] sm:$0xff]
    %v173 = vld [vmem:[%s1 + $0x148] sm:$0xff]
    %v174 = vld [vmem:[%s1 + $0x150] sm:$0xff]
    %v175 = vld [vmem:[%s1 + $0x158] sm:$0xff]
    %v176 = vld [vmem:[%s1 + $0x160] sm:$0xff]
    %v177 = vld [vmem:[%s1 + $0x168] sm:$0xff]
    %v178 = vld [vmem:[%s1 + $0x170] sm:$0xff]
    %v179 = vld [vmem:[%s1 + $0x178] sm:$0xff]
    %v180 = vld [vmem:[%s2] sm:$0x1]
    %vm181 = vcmp.ne.f32.partialorder %v132, 0.0
    %vm182 = vcmp.ne.f32.partialorder %v133, 0.0
    %vm183 = vcmp.ne.f32.partialorder %v134, 0.0
    %vm184 = vcmp.ne.f32.partialorder %v135, 0.0
    %vm185 = vcmp.ne.f32.partialorder %v136, 0.0
    %vm186 = vcmp.ne.f32.partialorder %v137, 0.0
    %vm187 = vcmp.ne.f32.partialorder %v138, 0.0
    %vm188 = vcmp.ne.f32.partialorder %v139, 0.0
    %vm189 = vcmp.ne.f32.partialorder %v140, 0.0
    %vm190 = vcmp.ne.f32.partialorder %v141, 0.0
    %vm191 = vcmp.ne.f32.partialorder %v142, 0.0
    %vm192 = vcmp.ne.f32.partialorder %v143, 0.0
    %vm193 = vcmp.ne.f32.partialorder %v144, 0.0
    %vm194 = vcmp.ne.f32.partialorder %v145, 0.0
    %vm195 = vcmp.ne.f32.partialorder %v146, 0.0
    %vm196 = vcmp.ne.f32.partialorder %v147, 0.0
    %vm197 = vcmp.ne.f32.partialorder %v148, 0.0
    %vm198 = vcmp.ne.f32.partialorder %v149, 0.0
    %vm199 = vcmp.ne.f32.partialorder %v150, 0.0
    %vm200 = vcmp.ne.f32.partialorder %v151, 0.0
    %vm201 = vcmp.ne.f32.partialorder %v152, 0.0
    %vm202 = vcmp.ne.f32.partialorder %v153, 0.0
    %vm203 = vcmp.ne.f32.partialorder %v154, 0.0
    %vm204 = vcmp.ne.f32.partialorder %v155, 0.0
    %vm205 = vcmp.ne.f32.partialorder %v156, 0.0
    %vm206 = vcmp.ne.f32.partialorder %v157, 0.0
    %vm207 = vcmp.ne.f32.partialorder %v158, 0.0
    %vm208 = vcmp.ne.f32.partialorder %v159, 0.0
    %vm209 = vcmp.ne.f32.partialorder %v160, 0.0
    %vm210 = vcmp.ne.f32.partialorder %v161, 0.0
    %vm211 = vcmp.ne.f32.partialorder %v162, 0.0
    %vm212 = vcmp.ne.f32.partialorder %v163, 0.0
    %vm213 = vcmp.ne.f32.partialorder %v164, 0.0
    %vm214 = vcmp.ne.f32.partialorder %v165, 0.0
    %vm215 = vcmp.ne.f32.partialorder %v166, 0.0
    %vm216 = vcmp.ne.f32.partialorder %v167, 0.0
    %vm217 = vcmp.ne.f32.partialorder %v168, 0.0
    %vm218 = vcmp.ne.f32.partialorder %v169, 0.0
    %vm219 = vcmp.ne.f32.partialorder %v170, 0.0
    %vm220 = vcmp.ne.f32.partialorder %v171, 0.0
    %vm221 = vcmp.ne.f32.partialorder %v172, 0.0
    %vm222 = vcmp.ne.f32.partialorder %v173, 0.0
    %vm223 = vcmp.ne.f32.partialorder %v174, 0.0
    %vm224 = vcmp.ne.f32.partialorder %v175, 0.0
    %vm225 = vcmp.ne.f32.partialorder %v176, 0.0
    %vm226 = vcmp.ne.f32.partialorder %v177, 0.0
    %vm227 = vcmp.ne.f32.partialorder %v178, 0.0
    %vm228 = vcmp.ne.f32.partialorder %v179, 0.0
    %v229 = vsel %vm181, 1, 0
    %v230 = vsel %vm182, 1, 0
    %v231 = vsel %vm183, 1, 0
    %v232 = vsel %vm184, 1, 0
    %v233 = vsel %vm185, 1, 0
    %v234 = vsel %vm186, 1, 0
    %v235 = vsel %vm187, 1, 0
    %v236 = vsel %vm188, 1, 0
    %v237 = vsel %vm189, 1, 0
    %v238 = vsel %vm190, 1, 0
    %v239 = vsel %vm191, 1, 0
    %v240 = vsel %vm192, 1, 0
    %v241 = vsel %vm193, 1, 0
    %v242 = vsel %vm194, 1, 0
    %v243 = vsel %vm195, 1, 0
    %v244 = vsel %vm196, 1, 0
    %v245 = vsel %vm197, 1, 0
    %v246 = vsel %vm198, 1, 0
    %v247 = vsel %vm199, 1, 0
    %v248 = vsel %vm200, 1, 0
    %v249 = vsel %vm201, 1, 0
    %v250 = vsel %vm202, 1, 0
    %v251 = vsel %vm203, 1, 0
    %v252 = vsel %vm204, 1, 0
    %v253 = vsel %vm205, 1, 0
    %v254 = vsel %vm206, 1, 0
    %v255 = vsel %vm207, 1, 0
    %v256 = vsel %vm208, 1, 0
    %v257 = vsel %vm209, 1, 0
    %v258 = vsel %vm210, 1, 0
    %v259 = vsel %vm211, 1, 0
    %v260 = vsel %vm212, 1, 0
    %v261 = vsel %vm213, 1, 0
    %v262 = vsel %vm214, 1, 0
    %v263 = vsel %vm215, 1, 0
    %v264 = vsel %vm216, 1, 0
    %v265 = vsel %vm217, 1, 0
    %v266 = vsel %vm218, 1, 0
    %v267 = vsel %vm219, 1, 0
    %v268 = vsel %vm220, 1, 0
    %v269 = vsel %vm221, 1, 0
    %v270 = vsel %vm222, 1, 0
    %v271 = vsel %vm223, 1, 0
    %v272 = vsel %vm224, 1, 0
    %v273 = vsel %vm225, 1, 0
    %v274 = vsel %vm226, 1, 0
    %v275 = vsel %vm227, 1, 0
    %v276 = vsel %vm228, 1, 0
    %v277 = vcvt.s32.f32 %v229
    %v278 = vcvt.s32.f32 %v230
    %v279 = vcvt.s32.f32 %v231
    %v280 = vcvt.s32.f32 %v232
    %v281 = vcvt.s32.f32 %v233
    %v282 = vcvt.s32.f32 %v234
    %v283 = vcvt.s32.f32 %v235
    %v284 = vcvt.s32.f32 %v236
    %v285 = vcvt.s32.f32 %v237
    %v286 = vcvt.s32.f32 %v238
    %v287 = vcvt.s32.f32 %v239
    %v288 = vcvt.s32.f32 %v240
    %v289 = vcvt.s32.f32 %v241
    %v290 = vcvt.s32.f32 %v242
    %v291 = vcvt.s32.f32 %v243
    %v292 = vcvt.s32.f32 %v244
    %v293 = vcvt.s32.f32 %v245
    %v294 = vcvt.s32.f32 %v246
    %v295 = vcvt.s32.f32 %v247
    %v296 = vcvt.s32.f32 %v248
    %v297 = vcvt.s32.f32 %v249
    %v298 = vcvt.s32.f32 %v250
    %v299 = vcvt.s32.f32 %v251
    %v300 = vcvt.s32.f32 %v252
    %v301 = vcvt.s32.f32 %v253
    %v302 = vcvt.s32.f32 %v254
    %v303 = vcvt.s32.f32 %v255
    %v304 = vcvt.s32.f32 %v256
    %v305 = vcvt.s32.f32 %v257
    %v306 = vcvt.s32.f32 %v258
    %v307 = vcvt.s32.f32 %v259
    %v308 = vcvt.s32.f32 %v260
    %v309 = vcvt.s32.f32 %v261
    %v310 = vcvt.s32.f32 %v262
    %v311 = vcvt.s32.f32 %v263
    %v312 = vcvt.s32.f32 %v264
    %v313 = vcvt.s32.f32 %v265
    %v314 = vcvt.s32.f32 %v266
    %v315 = vcvt.s32.f32 %v267
    %v316 = vcvt.s32.f32 %v268
    %v317 = vcvt.s32.f32 %v269
    %v318 = vcvt.s32.f32 %v270
    %v319 = vcvt.s32.f32 %v271
    %v320 = vcvt.s32.f32 %v272
    %v321 = vcvt.s32.f32 %v273
    %v322 = vcvt.s32.f32 %v274
    %v323 = vcvt.s32.f32 %v275
    %v324 = vcvt.s32.f32 %v276
    %v325 = vsub.f32 1.0, %v277
    %v326 = vsub.f32 1.0, %v278
    %v327 = vsub.f32 1.0, %v279
    %v328 = vsub.f32 1.0, %v280
    %v329 = vsub.f32 1.0, %v281
    %v330 = vsub.f32 1.0, %v282
    %v331 = vsub.f32 1.0, %v283
    %v332 = vsub.f32 1.0, %v284
    %v333 = vsub.f32 1.0, %v285
    %v334 = vsub.f32 1.0, %v286
    %v335 = vsub.f32 1.0, %v287
    %v336 = vsub.f32 1.0, %v288
    %v337 = vsub.f32 1.0, %v289
    %v338 = vsub.f32 1.0, %v290
    %v339 = vsub.f32 1.0, %v291
    %v340 = vsub.f32 1.0, %v292
    %v341 = vsub.f32 1.0, %v293
    %v342 = vsub.f32 1.0, %v294
    %v343 = vsub.f32 1.0, %v295
    %v344 = vsub.f32 1.0, %v296
    %v345 = vsub.f32 1.0, %v297
    %v346 = vsub.f32 1.0, %v298
    %v347 = vsub.f32 1.0, %v299
    %v348 = vsub.f32 1.0, %v300
    %v349 = vsub.f32 1.0, %v301
    %v350 = vsub.f32 1.0, %v302
    %v351 = vsub.f32 1.0, %v303
    %v352 = vsub.f32 1.0, %v304
    %v353 = vsub.f32 1.0, %v305
    %v354 = vsub.f32 1.0, %v306
    %v355 = vsub.f32 1.0, %v307
    %v356 = vsub.f32 1.0, %v308
    %v357 = vsub.f32 1.0, %v309
    %v358 = vsub.f32 1.0, %v310
    %v359 = vsub.f32 1.0, %v311
    %v360 = vsub.f32 1.0, %v312
    %v361 = vsub.f32 1.0, %v313
    %v362 = vsub.f32 1.0, %v314
    %v363 = vsub.f32 1.0, %v315
    %v364 = vsub.f32 1.0, %v316
    %v365 = vsub.f32 1.0, %v317
    %v366 = vsub.f32 1.0, %v318
    %v367 = vsub.f32 1.0, %v319
    %v368 = vsub.f32 1.0, %v320
    %v369 = vsub.f32 1.0, %v321
    %v370 = vsub.f32 1.0, %v322
    %v371 = vsub.f32 1.0, %v323
    %v372 = vsub.f32 1.0, %v324
    %v373 = vlaneseq
    %v374 = vand.u32 %v373, 127
    %vm375 = vcmp.ge.s32.totalorder %v374, 2
    %vm376 = vcmp.le.s32.totalorder %v374, 3
    %vm377 = vmand %vm375, %vm376
    %v378 = vsel %vm377, 1.0, -1.0
    %v379 = vsel %vm375, 1.0, -1.0
    %v380 = vmul.f32 %v84, %v378
    %v381 = vmul.f32 %v85, %v378
    %v382 = vmul.f32 %v86, %v378
    %v383 = vmul.f32 %v87, %v378
    %v384 = vmul.f32 %v88, %v378
    %v385 = vmul.f32 %v89, %v378
    %v386 = vmul.f32 %v90, %v378
    %v387 = vmul.f32 %v91, %v378
    %v388 = vmul.f32 %v92, %v378
    %v389 = vmul.f32 %v93, %v378
    %v390 = vmul.f32 %v94, %v378
    %v391 = vmul.f32 %v95, %v378
    %v392 = vmul.f32 %v96, %v378
    %v393 = vmul.f32 %v97, %v378
    %v394 = vmul.f32 %v98, %v378
    %v395 = vmul.f32 %v99, %v378
    %v396 = vmul.f32 %v100, %v378
    %v397 = vmul.f32 %v101, %v378
    %v398 = vmul.f32 %v102, %v378
    %v399 = vmul.f32 %v103, %v378
    %v400 = vmul.f32 %v104, %v378
    %v401 = vmul.f32 %v105, %v378
    %v402 = vmul.f32 %v106, %v378
    %v403 = vmul.f32 %v107, %v378
    %v404 = vmul.f32 %v108, %v378
    %v405 = vmul.f32 %v109, %v378
    %v406 = vmul.f32 %v110, %v378
    %v407 = vmul.f32 %v111, %v378
    %v408 = vmul.f32 %v112, %v378
    %v409 = vmul.f32 %v113, %v378
    %v410 = vmul.f32 %v114, %v378
    %v411 = vmul.f32 %v115, %v378
    %v412 = vmul.f32 %v116, %v378
    %v413 = vmul.f32 %v117, %v378
    %v414 = vmul.f32 %v118, %v378
    %v415 = vmul.f32 %v119, %v378
    %v416 = vmul.f32 %v120, %v378
    %v417 = vmul.f32 %v121, %v378
    %v418 = vmul.f32 %v122, %v378
    %v419 = vmul.f32 %v123, %v378
    %v420 = vmul.f32 %v124, %v378
    %v421 = vmul.f32 %v125, %v378
    %v422 = vmul.f32 %v126, %v378
    %v423 = vmul.f32 %v127, %v378
    %v424 = vmul.f32 %v128, %v378
    %v425 = vmul.f32 %v129, %v378
    %v426 = vmul.f32 %v130, %v378
    %v427 = vmul.f32 %v131, %v378
    %v428 = vmul.f32 %v84, %v379
    %v429 = vmul.f32 %v85, %v379
    %v430 = vmul.f32 %v86, %v379
    %v431 = vmul.f32 %v87, %v379
    %v432 = vmul.f32 %v88, %v379
    %v433 = vmul.f32 %v89, %v379
    %v434 = vmul.f32 %v90, %v379
    %v435 = vmul.f32 %v91, %v379
    %v436 = vmul.f32 %v92, %v379
    %v437 = vmul.f32 %v93, %v379
    %v438 = vmul.f32 %v94, %v379
    %v439 = vmul.f32 %v95, %v379
    %v440 = vmul.f32 %v96, %v379
    %v441 = vmul.f32 %v97, %v379
    %v442 = vmul.f32 %v98, %v379
    %v443 = vmul.f32 %v99, %v379
    %v444 = vmul.f32 %v100, %v379
    %v445 = vmul.f32 %v101, %v379
    %v446 = vmul.f32 %v102, %v379
    %v447 = vmul.f32 %v103, %v379
    %v448 = vmul.f32 %v104, %v379
    %v449 = vmul.f32 %v105, %v379
    %v450 = vmul.f32 %v106, %v379
    %v451 = vmul.f32 %v107, %v379
    %v452 = vmul.f32 %v108, %v379
    %v453 = vmul.f32 %v109, %v379
    %v454 = vmul.f32 %v110, %v379
    %v455 = vmul.f32 %v111, %v379
    %v456 = vmul.f32 %v112, %v379
    %v457 = vmul.f32 %v113, %v379
    %v458 = vmul.f32 %v114, %v379
    %v459 = vmul.f32 %v115, %v379
    %v460 = vmul.f32 %v116, %v379
    %v461 = vmul.f32 %v117, %v379
    %v462 = vmul.f32 %v118, %v379
    %v463 = vmul.f32 %v119, %v379
    %v464 = vmul.f32 %v120, %v379
    %v465 = vmul.f32 %v121, %v379
    %v466 = vmul.f32 %v122, %v379
    %v467 = vmul.f32 %v123, %v379
    %v468 = vmul.f32 %v124, %v379
    %v469 = vmul.f32 %v125, %v379
    %v470 = vmul.f32 %v126, %v379
    %v471 = vmul.f32 %v127, %v379
    %v472 = vmul.f32 %v128, %v379
    %v473 = vmul.f32 %v129, %v379
    %v474 = vmul.f32 %v130, %v379
    %v475 = vmul.f32 %v131, %v379
    %v476 = vmin.f32 %v380, %v428
    %v477 = vmin.f32 %v381, %v429
    %v478 = vmin.f32 %v382, %v430
    %v479 = vmin.f32 %v383, %v431
    %v480 = vmin.f32 %v384, %v432
    %v481 = vmin.f32 %v385, %v433
    %v482 = vmin.f32 %v386, %v434
    %v483 = vmin.f32 %v387, %v435
    %v484 = vmin.f32 %v388, %v436
    %v485 = vmin.f32 %v389, %v437
    %v486 = vmin.f32 %v390, %v438
    %v487 = vmin.f32 %v391, %v439
    %v488 = vmin.f32 %v392, %v440
    %v489 = vmin.f32 %v393, %v441
    %v490 = vmin.f32 %v394, %v442
    %v491 = vmin.f32 %v395, %v443
    %v492 = vmin.f32 %v396, %v444
    %v493 = vmin.f32 %v397, %v445
    %v494 = vmin.f32 %v398, %v446
    %v495 = vmin.f32 %v399, %v447
    %v496 = vmin.f32 %v400, %v448
    %v497 = vmin.f32 %v401, %v449
    %v498 = vmin.f32 %v402, %v450
    %v499 = vmin.f32 %v403, %v451
    %v500 = vmin.f32 %v404, %v452
    %v501 = vmin.f32 %v405, %v453
    %v502 = vmin.f32 %v406, %v454
    %v503 = vmin.f32 %v407, %v455
    %v504 = vmin.f32 %v408, %v456
    %v505 = vmin.f32 %v409, %v457
    %v506 = vmin.f32 %v410, %v458
    %v507 = vmin.f32 %v411, %v459
    %v508 = vmin.f32 %v412, %v460
    %v509 = vmin.f32 %v413, %v461
    %v510 = vmin.f32 %v414, %v462
    %v511 = vmin.f32 %v415, %v463
    %v512 = vmin.f32 %v416, %v464
    %v513 = vmin.f32 %v417, %v465
    %v514 = vmin.f32 %v418, %v466
    %v515 = vmin.f32 %v419, %v467
    %v516 = vmin.f32 %v420, %v468
    %v517 = vmin.f32 %v421, %v469
    %v518 = vmin.f32 %v422, %v470
    %v519 = vmin.f32 %v423, %v471
    %v520 = vmin.f32 %v424, %v472
    %v521 = vmin.f32 %v425, %v473
    %v522 = vmin.f32 %v426, %v474
    %v523 = vmin.f32 %v427, %v475
    %v524 = vmul.f32 %v476, 1.442695
    %v525 = vpow.pop %v524
    %v526 = vmul.f32 %v477, 1.442695
    %v527 = vpow.pop %v526
    %v528 = vmul.f32 %v478, 1.442695
    %v529 = vpow.pop %v528
    %v530 = vmul.f32 %v479, 1.442695
    %v531 = vpow.pop %v530
    %v532 = vmul.f32 %v480, 1.442695
    %v533 = vpow.pop %v532
    %v534 = vmul.f32 %v481, 1.442695
    %v535 = vpow.pop %v534
    %v536 = vmul.f32 %v482, 1.442695
    %v537 = vpow.pop %v536
    %v538 = vmul.f32 %v483, 1.442695
    %v539 = vpow.pop %v538
    %v540 = vmul.f32 %v484, 1.442695
    %v541 = vpow.pop %v540
    %v542 = vmul.f32 %v485, 1.442695
    %v543 = vpow.pop %v542
    %v544 = vmul.f32 %v486, 1.442695
    %v545 = vpow.pop %v544
    %v546 = vmul.f32 %v487, 1.442695
    %v547 = vpow.pop %v546
    %v548 = vmul.f32 %v488, 1.442695
    %v549 = vpow.pop %v548
    %v550 = vmul.f32 %v489, 1.442695
    %v551 = vpow.pop %v550
    %v552 = vmul.f32 %v490, 1.442695
    %v553 = vpow.pop %v552
    %v554 = vmul.f32 %v491, 1.442695
    %v555 = vpow.pop %v554
    %v556 = vmul.f32 %v492, 1.442695
    %v557 = vpow.pop %v556
    %v558 = vmul.f32 %v493, 1.442695
    %v559 = vpow.pop %v558
    %v560 = vmul.f32 %v494, 1.442695
    %v561 = vpow.pop %v560
    %v562 = vmul.f32 %v495, 1.442695
    %v563 = vpow.pop %v562
    %v564 = vmul.f32 %v496, 1.442695
    %v565 = vpow.pop %v564
    %v566 = vmul.f32 %v497, 1.442695
    %v567 = vpow.pop %v566
    %v568 = vmul.f32 %v498, 1.442695
    %v569 = vpow.pop %v568
    %v570 = vmul.f32 %v499, 1.442695
    %v571 = vpow.pop %v570
    %v572 = vmul.f32 %v500, 1.442695
    %v573 = vpow.pop %v572
    %v574 = vmul.f32 %v501, 1.442695
    %v575 = vpow.pop %v574
    %v576 = vmul.f32 %v502, 1.442695
    %v577 = vpow.pop %v576
    %v578 = vmul.f32 %v503, 1.442695
    %v579 = vpow.pop %v578
    %v580 = vmul.f32 %v504, 1.442695
    %v581 = vpow.pop %v580
    %v582 = vmul.f32 %v505, 1.442695
    %v583 = vpow.pop %v582
    %v584 = vmul.f32 %v506, 1.442695
    %v585 = vpow.pop %v584
    %v586 = vmul.f32 %v507, 1.442695
    %v587 = vpow.pop %v586
    %v588 = vmul.f32 %v508, 1.442695
    %v589 = vpow.pop %v588
    %v590 = vmul.f32 %v509, 1.442695
    %v591 = vpow.pop %v590
    %v592 = vmul.f32 %v510, 1.442695
    %v593 = vpow.pop %v592
    %v594 = vmul.f32 %v511, 1.442695
    %v595 = vpow.pop %v594
    %v596 = vmul.f32 %v512, 1.442695
    %v597 = vpow.pop %v596
    %v598 = vmul.f32 %v513, 1.442695
    %v599 = vpow.pop %v598
    %v600 = vmul.f32 %v514, 1.442695
    %v601 = vpow.pop %v600
    %v602 = vmul.f32 %v515, 1.442695
    %v603 = vpow.pop %v602
    %v604 = vmul.f32 %v516, 1.442695
    %v605 = vpow.pop %v604
    %v606 = vmul.f32 %v517, 1.442695
    %v607 = vpow.pop %v606
    %v608 = vmul.f32 %v518, 1.442695
    %v609 = vpow.pop %v608
    %v610 = vmul.f32 %v519, 1.442695
    %v611 = vpow.pop %v610
    %v612 = vmul.f32 %v520, 1.442695
    %v613 = vpow.pop %v612
    %v614 = vmul.f32 %v521, 1.442695
    %v615 = vpow.pop %v614
    %v616 = vmul.f32 %v522, 1.442695
    %v617 = vpow.pop %v616
    %v618 = vmul.f32 %v523, 1.442695
    %v619 = vpow.pop %v618
    %v620 = vadd.f32 %v525, 1.0
    %v621 = vadd.f32 %v527, 1.0
    %v622 = vadd.f32 %v529, 1.0
    %v623 = vadd.f32 %v531, 1.0
    %v624 = vadd.f32 %v533, 1.0
    %v625 = vadd.f32 %v535, 1.0
    %v626 = vadd.f32 %v537, 1.0
    %v627 = vadd.f32 %v539, 1.0
    %v628 = vadd.f32 %v541, 1.0
    %v629 = vadd.f32 %v543, 1.0
    %v630 = vadd.f32 %v545, 1.0
    %v631 = vadd.f32 %v547, 1.0
    %v632 = vadd.f32 %v549, 1.0
    %v633 = vadd.f32 %v551, 1.0
    %v634 = vadd.f32 %v553, 1.0
    %v635 = vadd.f32 %v555, 1.0
    %v636 = vadd.f32 %v557, 1.0
    %v637 = vadd.f32 %v559, 1.0
    %v638 = vadd.f32 %v561, 1.0
    %v639 = vadd.f32 %v563, 1.0
    %v640 = vadd.f32 %v565, 1.0
    %v641 = vadd.f32 %v567, 1.0
    %v642 = vadd.f32 %v569, 1.0
    %v643 = vadd.f32 %v571, 1.0
    %v644 = vadd.f32 %v573, 1.0
    %v645 = vadd.f32 %v575, 1.0
    %v646 = vadd.f32 %v577, 1.0
    %v647 = vadd.f32 %v579, 1.0
    %v648 = vadd.f32 %v581, 1.0
    %v649 = vadd.f32 %v583, 1.0
    %v650 = vadd.f32 %v585, 1.0
    %v651 = vadd.f32 %v587, 1.0
    %v652 = vadd.f32 %v589, 1.0
    %v653 = vadd.f32 %v591, 1.0
    %v654 = vadd.f32 %v593, 1.0
    %v655 = vadd.f32 %v595, 1.0
    %v656 = vadd.f32 %v597, 1.0
    %v657 = vadd.f32 %v599, 1.0
    %v658 = vadd.f32 %v601, 1.0
    %v659 = vadd.f32 %v603, 1.0
    %v660 = vadd.f32 %v605, 1.0
    %v661 = vadd.f32 %v607, 1.0
    %v662 = vadd.f32 %v609, 1.0
    %v663 = vadd.f32 %v611, 1.0
    %v664 = vadd.f32 %v613, 1.0
    %v665 = vadd.f32 %v615, 1.0
    %v666 = vadd.f32 %v617, 1.0
    %v667 = vadd.f32 %v619, 1.0
    %v668 = vrcp.pop %v620
    %v669 = vmul.f32 1.0, %v668
    %v670 = vrcp.pop %v621
    %v671 = vmul.f32 1.0, %v670
    %v672 = vrcp.pop %v622
    %v673 = vmul.f32 1.0, %v672
    %v674 = vrcp.pop %v623
    %v675 = vmul.f32 1.0, %v674
    %v676 = vrcp.pop %v624
    %v677 = vmul.f32 1.0, %v676
    %v678 = vrcp.pop %v625
    %v679 = vmul.f32 1.0, %v678
    %v680 = vrcp.pop %v626
    %v681 = vmul.f32 1.0, %v680
    %v682 = vrcp.pop %v627
    %v683 = vmul.f32 1.0, %v682
    %v684 = vrcp.pop %v628
    %v685 = vmul.f32 1.0, %v684
    %v686 = vrcp.pop %v629
    %v687 = vmul.f32 1.0, %v686
    %v688 = vrcp.pop %v630
    %v689 = vmul.f32 1.0, %v688
    %v690 = vrcp.pop %v631
    %v691 = vmul.f32 1.0, %v690
    %v692 = vrcp.pop %v632
    %v693 = vmul.f32 1.0, %v692
    %v694 = vrcp.pop %v633
    %v695 = vmul.f32 1.0, %v694
    %v696 = vrcp.pop %v634
    %v697 = vmul.f32 1.0, %v696
    %v698 = vrcp.pop %v635
    %v699 = vmul.f32 1.0, %v698
    %v700 = vrcp.pop %v636
    %v701 = vmul.f32 1.0, %v700
    %v702 = vrcp.pop %v637
    %v703 = vmul.f32 1.0, %v702
    %v704 = vrcp.pop %v638
    %v705 = vmul.f32 1.0, %v704
    %v706 = vrcp.pop %v639
    %v707 = vmul.f32 1.0, %v706
    %v708 = vrcp.pop %v640
    %v709 = vmul.f32 1.0, %v708
    %v710 = vrcp.pop %v641
    %v711 = vmul.f32 1.0, %v710
    %v712 = vrcp.pop %v642
    %v713 = vmul.f32 1.0, %v712
    %v714 = vrcp.pop %v643
    %v715 = vmul.f32 1.0, %v714
    %v716 = vrcp.pop %v644
    %v717 = vmul.f32 1.0, %v716
    %v718 = vrcp.pop %v645
    %v719 = vmul.f32 1.0, %v718
    %v720 = vrcp.pop %v646
    %v721 = vmul.f32 1.0, %v720
    %v722 = vrcp.pop %v647
    %v723 = vmul.f32 1.0, %v722
    %v724 = vrcp.pop %v648
    %v725 = vmul.f32 1.0, %v724
    %v726 = vrcp.pop %v649
    %v727 = vmul.f32 1.0, %v726
    %v728 = vrcp.pop %v650
    %v729 = vmul.f32 1.0, %v728
    %v730 = vrcp.pop %v651
    %v731 = vmul.f32 1.0, %v730
    %v732 = vrcp.pop %v652
    %v733 = vmul.f32 1.0, %v732
    %v734 = vrcp.pop %v653
    %v735 = vmul.f32 1.0, %v734
    %v736 = vrcp.pop %v654
    %v737 = vmul.f32 1.0, %v736
    %v738 = vrcp.pop %v655
    %v739 = vmul.f32 1.0, %v738
    %v740 = vrcp.pop %v656
    %v741 = vmul.f32 1.0, %v740
    %v742 = vrcp.pop %v657
    %v743 = vmul.f32 1.0, %v742
    %v744 = vrcp.pop %v658
    %v745 = vmul.f32 1.0, %v744
    %v746 = vrcp.pop %v659
    %v747 = vmul.f32 1.0, %v746
    %v748 = vrcp.pop %v660
    %v749 = vmul.f32 1.0, %v748
    %v750 = vrcp.pop %v661
    %v751 = vmul.f32 1.0, %v750
    %v752 = vrcp.pop %v662
    %v753 = vmul.f32 1.0, %v752
    %v754 = vrcp.pop %v663
    %v755 = vmul.f32 1.0, %v754
    %v756 = vrcp.pop %v664
    %v757 = vmul.f32 1.0, %v756
    %v758 = vrcp.pop %v665
    %v759 = vmul.f32 1.0, %v758
    %v760 = vrcp.pop %v666
    %v761 = vmul.f32 1.0, %v760
    %v762 = vrcp.pop %v667
    %v763 = vmul.f32 1.0, %v762
    %v764 = vmul.f32 %v669, 8.0
    %v765 = vmul.f32 %v671, 8.0
    %v766 = vmul.f32 %v673, 8.0
    %v767 = vmul.f32 %v675, 8.0
    %v768 = vmul.f32 %v677, 8.0
    %v769 = vmul.f32 %v679, 8.0
    %v770 = vmul.f32 %v681, 8.0
    %v771 = vmul.f32 %v683, 8.0
    %v772 = vmul.f32 %v685, 8.0
    %v773 = vmul.f32 %v687, 8.0
    %v774 = vmul.f32 %v689, 8.0
    %v775 = vmul.f32 %v691, 8.0
    %v776 = vmul.f32 %v693, 8.0
    %v777 = vmul.f32 %v695, 8.0
    %v778 = vmul.f32 %v697, 8.0
    %v779 = vmul.f32 %v699, 8.0
    %v780 = vmul.f32 %v701, 8.0
    %v781 = vmul.f32 %v703, 8.0
    %v782 = vmul.f32 %v705, 8.0
    %v783 = vmul.f32 %v707, 8.0
    %v784 = vmul.f32 %v709, 8.0
    %v785 = vmul.f32 %v711, 8.0
    %v786 = vmul.f32 %v713, 8.0
    %v787 = vmul.f32 %v715, 8.0
    %v788 = vmul.f32 %v717, 8.0
    %v789 = vmul.f32 %v719, 8.0
    %v790 = vmul.f32 %v721, 8.0
    %v791 = vmul.f32 %v723, 8.0
    %v792 = vmul.f32 %v725, 8.0
    %v793 = vmul.f32 %v727, 8.0
    %v794 = vmul.f32 %v729, 8.0
    %v795 = vmul.f32 %v731, 8.0
    %v796 = vmul.f32 %v733, 8.0
    %v797 = vmul.f32 %v735, 8.0
    %v798 = vmul.f32 %v737, 8.0
    %v799 = vmul.f32 %v739, 8.0
    %v800 = vmul.f32 %v741, 8.0
    %v801 = vmul.f32 %v743, 8.0
    %v802 = vmul.f32 %v745, 8.0
    %v803 = vmul.f32 %v747, 8.0
    %v804 = vmul.f32 %v749, 8.0
    %v805 = vmul.f32 %v751, 8.0
    %v806 = vmul.f32 %v753, 8.0
    %v807 = vmul.f32 %v755, 8.0
    %v808 = vmul.f32 %v757, 8.0
    %v809 = vmul.f32 %v759, 8.0
    %v810 = vmul.f32 %v761, 8.0
    %v811 = vmul.f32 %v763, 8.0
    %v812 = vmul.f32 %v132, 8.0
    %v813 = vmul.f32 %v133, 8.0
    %v814 = vmul.f32 %v134, 8.0
    %v815 = vmul.f32 %v135, 8.0
    %v816 = vmul.f32 %v136, 8.0
    %v817 = vmul.f32 %v137, 8.0
    %v818 = vmul.f32 %v138, 8.0
    %v819 = vmul.f32 %v139, 8.0
    %v820 = vmul.f32 %v140, 8.0
    %v821 = vmul.f32 %v141, 8.0
    %v822 = vmul.f32 %v142, 8.0
    %v823 = vmul.f32 %v143, 8.0
    %v824 = vmul.f32 %v144, 8.0
    %v825 = vmul.f32 %v145, 8.0
    %v826 = vmul.f32 %v146, 8.0
    %v827 = vmul.f32 %v147, 8.0
    %v828 = vmul.f32 %v148, 8.0
    %v829 = vmul.f32 %v149, 8.0
    %v830 = vmul.f32 %v150, 8.0
    %v831 = vmul.f32 %v151, 8.0
    %v832 = vmul.f32 %v152, 8.0
    %v833 = vmul.f32 %v153, 8.0
    %v834 = vmul.f32 %v154, 8.0
    %v835 = vmul.f32 %v155, 8.0
    %v836 = vmul.f32 %v156, 8.0
    %v837 = vmul.f32 %v157, 8.0
    %v838 = vmul.f32 %v158, 8.0
    %v839 = vmul.f32 %v159, 8.0
    %v840 = vmul.f32 %v160, 8.0
    %v841 = vmul.f32 %v161, 8.0
    %v842 = vmul.f32 %v162, 8.0
    %v843 = vmul.f32 %v163, 8.0
    %v844 = vmul.f32 %v164, 8.0
    %v845 = vmul.f32 %v165, 8.0
    %v846 = vmul.f32 %v166, 8.0
    %v847 = vmul.f32 %v167, 8.0
    %v848 = vmul.f32 %v168, 8.0
    %v849 = vmul.f32 %v169, 8.0
    %v850 = vmul.f32 %v170, 8.0
    %v851 = vmul.f32 %v171, 8.0
    %v852 = vmul.f32 %v172, 8.0
    %v853 = vmul.f32 %v173, 8.0
    %v854 = vmul.f32 %v174, 8.0
    %v855 = vmul.f32 %v175, 8.0
    %v856 = vmul.f32 %v176, 8.0
    %v857 = vmul.f32 %v177, 8.0
    %v858 = vmul.f32 %v178, 8.0
    %v859 = vmul.f32 %v179, 8.0
    %908 = vrot.lane.b32.xlu0 %v812, 123
    %v909 = vpop.permute.xlu0 %908
    %910 = vrot.lane.b32.xlu0 %v813, 123
    %v911 = vpop.permute.xlu0 %910
    %912 = vrot.lane.b32.xlu0 %v814, 123
    %v913 = vpop.permute.xlu0 %912
    %914 = vrot.lane.b32.xlu0 %v815, 123
    %v915 = vpop.permute.xlu0 %914
    %916 = vrot.lane.b32.xlu0 %v816, 123
    %v917 = vpop.permute.xlu0 %916
    %918 = vrot.lane.b32.xlu0 %v817, 123
    %v919 = vpop.permute.xlu0 %918
    %920 = vrot.lane.b32.xlu0 %v818, 123
    %v921 = vpop.permute.xlu0 %920
    %922 = vrot.lane.b32.xlu0 %v819, 123
    %v923 = vpop.permute.xlu0 %922
    %924 = vrot.lane.b32.xlu0 %v820, 123
    %v925 = vpop.permute.xlu0 %924
    %926 = vrot.lane.b32.xlu0 %v821, 123
    %v927 = vpop.permute.xlu0 %926
    %928 = vrot.lane.b32.xlu0 %v822, 123
    %v929 = vpop.permute.xlu0 %928
    %930 = vrot.lane.b32.xlu0 %v823, 123
    %v931 = vpop.permute.xlu0 %930
    %932 = vrot.lane.b32.xlu0 %v824, 123
    %v933 = vpop.permute.xlu0 %932
    %934 = vrot.lane.b32.xlu0 %v825, 123
    %v935 = vpop.permute.xlu0 %934
    %936 = vrot.lane.b32.xlu0 %v826, 123
    %v937 = vpop.permute.xlu0 %936
    %938 = vrot.lane.b32.xlu0 %v827, 123
    %v939 = vpop.permute.xlu0 %938
    %940 = vrot.lane.b32.xlu0 %v828, 123
    %v941 = vpop.permute.xlu0 %940
    %942 = vrot.lane.b32.xlu0 %v829, 123
    %v943 = vpop.permute.xlu0 %942
    %944 = vrot.lane.b32.xlu0 %v830, 123
    %v945 = vpop.permute.xlu0 %944
    %946 = vrot.lane.b32.xlu0 %v831, 123
    %v947 = vpop.permute.xlu0 %946
    %948 = vrot.lane.b32.xlu0 %v832, 123
    %v949 = vpop.permute.xlu0 %948
    %950 = vrot.lane.b32.xlu0 %v833, 123
    %v951 = vpop.permute.xlu0 %950
    %952 = vrot.lane.b32.xlu0 %v834, 123
    %v953 = vpop.permute.xlu0 %952
    %954 = vrot.lane.b32.xlu0 %v835, 123
    %v955 = vpop.permute.xlu0 %954
    %956 = vrot.lane.b32.xlu0 %v836, 123
    %v957 = vpop.permute.xlu0 %956
    %958 = vrot.lane.b32.xlu0 %v837, 123
    %v959 = vpop.permute.xlu0 %958
    %960 = vrot.lane.b32.xlu0 %v838, 123
    %v961 = vpop.permute.xlu0 %960
    %962 = vrot.lane.b32.xlu0 %v839, 123
    %v963 = vpop.permute.xlu0 %962
    %964 = vrot.lane.b32.xlu0 %v840, 123
    %v965 = vpop.permute.xlu0 %964
    %966 = vrot.lane.b32.xlu0 %v841, 123
    %v967 = vpop.permute.xlu0 %966
    %968 = vrot.lane.b32.xlu0 %v842, 123
    %v969 = vpop.permute.xlu0 %968
    %970 = vrot.lane.b32.xlu0 %v843, 123
    %v971 = vpop.permute.xlu0 %970
    %972 = vrot.lane.b32.xlu0 %v844, 123
    %v973 = vpop.permute.xlu0 %972
    %974 = vrot.lane.b32.xlu0 %v845, 123
    %v975 = vpop.permute.xlu0 %974
    %976 = vrot.lane.b32.xlu0 %v846, 123
    %v977 = vpop.permute.xlu0 %976
    %978 = vrot.lane.b32.xlu0 %v847, 123
    %v979 = vpop.permute.xlu0 %978
    %980 = vrot.lane.b32.xlu0 %v848, 123
    %v981 = vpop.permute.xlu0 %980
    %982 = vrot.lane.b32.xlu0 %v849, 123
    %v983 = vpop.permute.xlu0 %982
    %984 = vrot.lane.b32.xlu0 %v850, 123
    %v985 = vpop.permute.xlu0 %984
    %986 = vrot.lane.b32.xlu0 %v851, 123
    %v987 = vpop.permute.xlu0 %986
    %988 = vrot.lane.b32.xlu0 %v852, 123
    %v989 = vpop.permute.xlu0 %988
    %990 = vrot.lane.b32.xlu0 %v853, 123
    %v991 = vpop.permute.xlu0 %990
    %992 = vrot.lane.b32.xlu0 %v854, 123
    %v993 = vpop.permute.xlu0 %992
    %994 = vrot.lane.b32.xlu0 %v855, 123
    %v995 = vpop.permute.xlu0 %994
    %996 = vrot.lane.b32.xlu0 %v856, 123
    %v997 = vpop.permute.xlu0 %996
    %998 = vrot.lane.b32.xlu0 %v857, 123
    %v999 = vpop.permute.xlu0 %998
    %1000 = vrot.lane.b32.xlu0 %v858, 123
    %v1001 = vpop.permute.xlu0 %1000
    %1002 = vrot.lane.b32.xlu0 %v859, 123
    %v1003 = vpop.permute.xlu0 %1002
    %v1052 = vadd.f32 %v764, %v909
    %v1053 = vadd.f32 %v765, %v911
    %v1054 = vadd.f32 %v766, %v913
    %v1055 = vadd.f32 %v767, %v915
    %v1056 = vadd.f32 %v768, %v917
    %v1057 = vadd.f32 %v769, %v919
    %v1058 = vadd.f32 %v770, %v921
    %v1059 = vadd.f32 %v771, %v923
    %v1060 = vadd.f32 %v772, %v925
    %v1061 = vadd.f32 %v773, %v927
    %v1062 = vadd.f32 %v774, %v929
    %v1063 = vadd.f32 %v775, %v931
    %v1064 = vadd.f32 %v776, %v933
    %v1065 = vadd.f32 %v777, %v935
    %v1066 = vadd.f32 %v778, %v937
    %v1067 = vadd.f32 %v779, %v939
    %v1068 = vadd.f32 %v780, %v941
    %v1069 = vadd.f32 %v781, %v943
    %v1070 = vadd.f32 %v782, %v945
    %v1071 = vadd.f32 %v783, %v947
    %v1072 = vadd.f32 %v784, %v949
    %v1073 = vadd.f32 %v785, %v951
    %v1074 = vadd.f32 %v786, %v953
    %v1075 = vadd.f32 %v787, %v955
    %v1076 = vadd.f32 %v788, %v957
    %v1077 = vadd.f32 %v789, %v959
    %v1078 = vadd.f32 %v790, %v961
    %v1079 = vadd.f32 %v791, %v963
    %v1080 = vadd.f32 %v792, %v965
    %v1081 = vadd.f32 %v793, %v967
    %v1082 = vadd.f32 %v794, %v969
    %v1083 = vadd.f32 %v795, %v971
    %v1084 = vadd.f32 %v796, %v973
    %v1085 = vadd.f32 %v797, %v975
    %v1086 = vadd.f32 %v798, %v977
    %v1087 = vadd.f32 %v799, %v979
    %v1088 = vadd.f32 %v800, %v981
    %v1089 = vadd.f32 %v801, %v983
    %v1090 = vadd.f32 %v802, %v985
    %v1091 = vadd.f32 %v803, %v987
    %v1092 = vadd.f32 %v804, %v989
    %v1093 = vadd.f32 %v805, %v991
    %v1094 = vadd.f32 %v806, %v993
    %v1095 = vadd.f32 %v807, %v995
    %v1096 = vadd.f32 %v808, %v997
    %v1097 = vadd.f32 %v809, %v999
    %v1098 = vadd.f32 %v810, %v1001
    %v1099 = vadd.f32 %v811, %v1003
    %vm1100 = vcmp.eq.f32.partialorder %v132, 0.0
    %vm1101 = vcmp.eq.f32.partialorder %v133, 0.0
    %vm1102 = vcmp.eq.f32.partialorder %v134, 0.0
    %vm1103 = vcmp.eq.f32.partialorder %v135, 0.0
    %vm1104 = vcmp.eq.f32.partialorder %v136, 0.0
    %vm1105 = vcmp.eq.f32.partialorder %v137, 0.0
    %vm1106 = vcmp.eq.f32.partialorder %v138, 0.0
    %vm1107 = vcmp.eq.f32.partialorder %v139, 0.0
    %vm1108 = vcmp.eq.f32.partialorder %v140, 0.0
    %vm1109 = vcmp.eq.f32.partialorder %v141, 0.0
    %vm1110 = vcmp.eq.f32.partialorder %v142, 0.0
    %vm1111 = vcmp.eq.f32.partialorder %v143, 0.0
    %vm1112 = vcmp.eq.f32.partialorder %v144, 0.0
    %vm1113 = vcmp.eq.f32.partialorder %v145, 0.0
    %vm1114 = vcmp.eq.f32.partialorder %v146, 0.0
    %vm1115 = vcmp.eq.f32.partialorder %v147, 0.0
    %vm1116 = vcmp.eq.f32.partialorder %v148, 0.0
    %vm1117 = vcmp.eq.f32.partialorder %v149, 0.0
    %vm1118 = vcmp.eq.f32.partialorder %v150, 0.0
    %vm1119 = vcmp.eq.f32.partialorder %v151, 0.0
    %vm1120 = vcmp.eq.f32.partialorder %v152, 0.0
    %vm1121 = vcmp.eq.f32.partialorder %v153, 0.0
    %vm1122 = vcmp.eq.f32.partialorder %v154, 0.0
    %vm1123 = vcmp.eq.f32.partialorder %v155, 0.0
    %vm1124 = vcmp.eq.f32.partialorder %v156, 0.0
    %vm1125 = vcmp.eq.f32.partialorder %v157, 0.0
    %vm1126 = vcmp.eq.f32.partialorder %v158, 0.0
    %vm1127 = vcmp.eq.f32.partialorder %v159, 0.0
    %vm1128 = vcmp.eq.f32.partialorder %v160, 0.0
    %vm1129 = vcmp.eq.f32.partialorder %v161, 0.0
    %vm1130 = vcmp.eq.f32.partialorder %v162, 0.0
    %vm1131 = vcmp.eq.f32.partialorder %v163, 0.0
    %vm1132 = vcmp.eq.f32.partialorder %v164, 0.0
    %vm1133 = vcmp.eq.f32.partialorder %v165, 0.0
    %vm1134 = vcmp.eq.f32.partialorder %v166, 0.0
    %vm1135 = vcmp.eq.f32.partialorder %v167, 0.0
    %vm1136 = vcmp.eq.f32.partialorder %v168, 0.0
    %vm1137 = vcmp.eq.f32.partialorder %v169, 0.0
    %vm1138 = vcmp.eq.f32.partialorder %v170, 0.0
    %vm1139 = vcmp.eq.f32.partialorder %v171, 0.0
    %vm1140 = vcmp.eq.f32.partialorder %v172, 0.0
    %vm1141 = vcmp.eq.f32.partialorder %v173, 0.0
    %vm1142 = vcmp.eq.f32.partialorder %v174, 0.0
    %vm1143 = vcmp.eq.f32.partialorder %v175, 0.0
    %vm1144 = vcmp.eq.f32.partialorder %v176, 0.0
    %vm1145 = vcmp.eq.f32.partialorder %v177, 0.0
    %vm1146 = vcmp.eq.f32.partialorder %v178, 0.0
    %vm1147 = vcmp.eq.f32.partialorder %v179, 0.0
    %s1148 = sld [smem:[#allocation3]]
    %v1149 = vstv %s1148
    %v1150 = vsel %vm1100, %v1149, 0.0
    %v1151 = vsel %vm1101, %v1149, 0.0
    %v1152 = vsel %vm1102, %v1149, 0.0
    %v1153 = vsel %vm1103, %v1149, 0.0
    %v1154 = vsel %vm1104, %v1149, 0.0
    %v1155 = vsel %vm1105, %v1149, 0.0
    %v1156 = vsel %vm1106, %v1149, 0.0
    %v1157 = vsel %vm1107, %v1149, 0.0
    %v1158 = vsel %vm1108, %v1149, 0.0
    %v1159 = vsel %vm1109, %v1149, 0.0
    %v1160 = vsel %vm1110, %v1149, 0.0
    %v1161 = vsel %vm1111, %v1149, 0.0
    %v1162 = vsel %vm1112, %v1149, 0.0
    %v1163 = vsel %vm1113, %v1149, 0.0
    %v1164 = vsel %vm1114, %v1149, 0.0
    %v1165 = vsel %vm1115, %v1149, 0.0
    %v1166 = vsel %vm1116, %v1149, 0.0
    %v1167 = vsel %vm1117, %v1149, 0.0
    %v1168 = vsel %vm1118, %v1149, 0.0
    %v1169 = vsel %vm1119, %v1149, 0.0
    %v1170 = vsel %vm1120, %v1149, 0.0
    %v1171 = vsel %vm1121, %v1149, 0.0
    %v1172 = vsel %vm1122, %v1149, 0.0
    %v1173 = vsel %vm1123, %v1149, 0.0
    %v1174 = vsel %vm1124, %v1149, 0.0
    %v1175 = vsel %vm1125, %v1149, 0.0
    %v1176 = vsel %vm1126, %v1149, 0.0
    %v1177 = vsel %vm1127, %v1149, 0.0
    %v1178 = vsel %vm1128, %v1149, 0.0
    %v1179 = vsel %vm1129, %v1149, 0.0
    %v1180 = vsel %vm1130, %v1149, 0.0
    %v1181 = vsel %vm1131, %v1149, 0.0
    %v1182 = vsel %vm1132, %v1149, 0.0
    %v1183 = vsel %vm1133, %v1149, 0.0
    %v1184 = vsel %vm1134, %v1149, 0.0
    %v1185 = vsel %vm1135, %v1149, 0.0
    %v1186 = vsel %vm1136, %v1149, 0.0
    %v1187 = vsel %vm1137, %v1149, 0.0
    %v1188 = vsel %vm1138, %v1149, 0.0
    %v1189 = vsel %vm1139, %v1149, 0.0
    %v1190 = vsel %vm1140, %v1149, 0.0
    %v1191 = vsel %vm1141, %v1149, 0.0
    %v1192 = vsel %vm1142, %v1149, 0.0
    %v1193 = vsel %vm1143, %v1149, 0.0
    %v1194 = vsel %vm1144, %v1149, 0.0
    %v1195 = vsel %vm1145, %v1149, 0.0
    %v1196 = vsel %vm1146, %v1149, 0.0
    %v1197 = vsel %vm1147, %v1149, 0.0
    %s1198 = sld [smem:[#allocation3 + $0x1]]
    %v1199 = vstv %s1198
    %v1200 = vsel %vm1100, %v1199, 0.0
    %v1201 = vsel %vm1101, %v1199, 0.0
    %v1202 = vsel %vm1102, %v1199, 0.0
    %v1203 = vsel %vm1103, %v1199, 0.0
    %v1204 = vsel %vm1104, %v1199, 0.0
    %v1205 = vsel %vm1105, %v1199, 0.0
    %v1206 = vsel %vm1106, %v1199, 0.0
    %v1207 = vsel %vm1107, %v1199, 0.0
    %v1208 = vsel %vm1108, %v1199, 0.0
    %v1209 = vsel %vm1109, %v1199, 0.0
    %v1210 = vsel %vm1110, %v1199, 0.0
    %v1211 = vsel %vm1111, %v1199, 0.0
    %v1212 = vsel %vm1112, %v1199, 0.0
    %v1213 = vsel %vm1113, %v1199, 0.0
    %v1214 = vsel %vm1114, %v1199, 0.0
    %v1215 = vsel %vm1115, %v1199, 0.0
    %v1216 = vsel %vm1116, %v1199, 0.0
    %v1217 = vsel %vm1117, %v1199, 0.0
    %v1218 = vsel %vm1118, %v1199, 0.0
    %v1219 = vsel %vm1119, %v1199, 0.0
    %v1220 = vsel %vm1120, %v1199, 0.0
    %v1221 = vsel %vm1121, %v1199, 0.0
    %v1222 = vsel %vm1122, %v1199, 0.0
    %v1223 = vsel %vm1123, %v1199, 0.0
    %v1224 = vsel %vm1124, %v1199, 0.0
    %v1225 = vsel %vm1125, %v1199, 0.0
    %v1226 = vsel %vm1126, %v1199, 0.0
    %v1227 = vsel %vm1127, %v1199, 0.0
    %v1228 = vsel %vm1128, %v1199, 0.0
    %v1229 = vsel %vm1129, %v1199, 0.0
    %v1230 = vsel %vm1130, %v1199, 0.0
    %v1231 = vsel %vm1131, %v1199, 0.0
    %v1232 = vsel %vm1132, %v1199, 0.0
    %v1233 = vsel %vm1133, %v1199, 0.0
    %v1234 = vsel %vm1134, %v1199, 0.0
    %v1235 = vsel %vm1135, %v1199, 0.0
    %v1236 = vsel %vm1136, %v1199, 0.0
    %v1237 = vsel %vm1137, %v1199, 0.0
    %v1238 = vsel %vm1138, %v1199, 0.0
    %v1239 = vsel %vm1139, %v1199, 0.0
    %v1240 = vsel %vm1140, %v1199, 0.0
    %v1241 = vsel %vm1141, %v1199, 0.0
    %v1242 = vsel %vm1142, %v1199, 0.0
    %v1243 = vsel %vm1143, %v1199, 0.0
    %v1244 = vsel %vm1144, %v1199, 0.0
    %v1245 = vsel %vm1145, %v1199, 0.0
    %v1246 = vsel %vm1146, %v1199, 0.0
    %v1247 = vsel %vm1147, %v1199, 0.0
    %vm1248 = vcmp.eq.f32.partialorder %v132, 1.0
    %vm1249 = vcmp.eq.f32.partialorder %v133, 1.0
    %vm1250 = vcmp.eq.f32.partialorder %v134, 1.0
    %vm1251 = vcmp.eq.f32.partialorder %v135, 1.0
    %vm1252 = vcmp.eq.f32.partialorder %v136, 1.0
    %vm1253 = vcmp.eq.f32.partialorder %v137, 1.0
    %vm1254 = vcmp.eq.f32.partialorder %v138, 1.0
    %vm1255 = vcmp.eq.f32.partialorder %v139, 1.0
    %vm1256 = vcmp.eq.f32.partialorder %v140, 1.0
    %vm1257 = vcmp.eq.f32.partialorder %v141, 1.0
    %vm1258 = vcmp.eq.f32.partialorder %v142, 1.0
    %vm1259 = vcmp.eq.f32.partialorder %v143, 1.0
    %vm1260 = vcmp.eq.f32.partialorder %v144, 1.0
    %vm1261 = vcmp.eq.f32.partialorder %v145, 1.0
    %vm1262 = vcmp.eq.f32.partialorder %v146, 1.0
    %vm1263 = vcmp.eq.f32.partialorder %v147, 1.0
    %vm1264 = vcmp.eq.f32.partialorder %v148, 1.0
    %vm1265 = vcmp.eq.f32.partialorder %v149, 1.0
    %vm1266 = vcmp.eq.f32.partialorder %v150, 1.0
    %vm1267 = vcmp.eq.f32.partialorder %v151, 1.0
    %vm1268 = vcmp.eq.f32.partialorder %v152, 1.0
    %vm1269 = vcmp.eq.f32.partialorder %v153, 1.0
    %vm1270 = vcmp.eq.f32.partialorder %v154, 1.0
    %vm1271 = vcmp.eq.f32.partialorder %v155, 1.0
    %vm1272 = vcmp.eq.f32.partialorder %v156, 1.0
    %vm1273 = vcmp.eq.f32.partialorder %v157, 1.0
    %vm1274 = vcmp.eq.f32.partialorder %v158, 1.0
    %vm1275 = vcmp.eq.f32.partialorder %v159, 1.0
    %vm1276 = vcmp.eq.f32.partialorder %v160, 1.0
    %vm1277 = vcmp.eq.f32.partialorder %v161, 1.0
    %vm1278 = vcmp.eq.f32.partialorder %v162, 1.0
    %vm1279 = vcmp.eq.f32.partialorder %v163, 1.0
    %vm1280 = vcmp.eq.f32.partialorder %v164, 1.0
    %vm1281 = vcmp.eq.f32.partialorder %v165, 1.0
    %vm1282 = vcmp.eq.f32.partialorder %v166, 1.0
    %vm1283 = vcmp.eq.f32.partialorder %v167, 1.0
    %vm1284 = vcmp.eq.f32.partialorder %v168, 1.0
    %vm1285 = vcmp.eq.f32.partialorder %v169, 1.0
    %vm1286 = vcmp.eq.f32.partialorder %v170, 1.0
    %vm1287 = vcmp.eq.f32.partialorder %v171, 1.0
    %vm1288 = vcmp.eq.f32.partialorder %v172, 1.0
    %vm1289 = vcmp.eq.f32.partialorder %v173, 1.0
    %vm1290 = vcmp.eq.f32.partialorder %v174, 1.0
    %vm1291 = vcmp.eq.f32.partialorder %v175, 1.0
    %vm1292 = vcmp.eq.f32.partialorder %v176, 1.0
    %vm1293 = vcmp.eq.f32.partialorder %v177, 1.0
    %vm1294 = vcmp.eq.f32.partialorder %v178, 1.0
    %vm1295 = vcmp.eq.f32.partialorder %v179, 1.0
    %s1296 = sld [smem:[#allocation3 + $0x80]]
    %v1297 = vstv %s1296
    %v1298 = vsel %vm1248, %v1297, %v1150
    %v1299 = vsel %vm1249, %v1297, %v1151
    %v1300 = vsel %vm1250, %v1297, %v1152
    %v1301 = vsel %vm1251, %v1297, %v1153
    %v1302 = vsel %vm1252, %v1297, %v1154
    %v1303 = vsel %vm1253, %v1297, %v1155
    %v1304 = vsel %vm1254, %v1297, %v1156
    %v1305 = vsel %vm1255, %v1297, %v1157
    %v1306 = vsel %vm1256, %v1297, %v1158
    %v1307 = vsel %vm1257, %v1297, %v1159
    %v1308 = vsel %vm1258, %v1297, %v1160
    %v1309 = vsel %vm1259, %v1297, %v1161
    %v1310 = vsel %vm1260, %v1297, %v1162
    %v1311 = vsel %vm1261, %v1297, %v1163
    %v1312 = vsel %vm1262, %v1297, %v1164
    %v1313 = vsel %vm1263, %v1297, %v1165
    %v1314 = vsel %vm1264, %v1297, %v1166
    %v1315 = vsel %vm1265, %v1297, %v1167
    %v1316 = vsel %vm1266, %v1297, %v1168
    %v1317 = vsel %vm1267, %v1297, %v1169
    %v1318 = vsel %vm1268, %v1297, %v1170
    %v1319 = vsel %vm1269, %v1297, %v1171
    %v1320 = vsel %vm1270, %v1297, %v1172
    %v1321 = vsel %vm1271, %v1297, %v1173
    %v1322 = vsel %vm1272, %v1297, %v1174
    %v1323 = vsel %vm1273, %v1297, %v1175
    %v1324 = vsel %vm1274, %v1297, %v1176
    %v1325 = vsel %vm1275, %v1297, %v1177
    %v1326 = vsel %vm1276, %v1297, %v1178
    %v1327 = vsel %vm1277, %v1297, %v1179
    %v1328 = vsel %vm1278, %v1297, %v1180
    %v1329 = vsel %vm1279, %v1297, %v1181
    %v1330 = vsel %vm1280, %v1297, %v1182
    %v1331 = vsel %vm1281, %v1297, %v1183
    %v1332 = vsel %vm1282, %v1297, %v1184
    %v1333 = vsel %vm1283, %v1297, %v1185
    %v1334 = vsel %vm1284, %v1297, %v1186
    %v1335 = vsel %vm1285, %v1297, %v1187
    %v1336 = vsel %vm1286, %v1297, %v1188
    %v1337 = vsel %vm1287, %v1297, %v1189
    %v1338 = vsel %vm1288, %v1297, %v1190
    %v1339 = vsel %vm1289, %v1297, %v1191
    %v1340 = vsel %vm1290, %v1297, %v1192
    %v1341 = vsel %vm1291, %v1297, %v1193
    %v1342 = vsel %vm1292, %v1297, %v1194
    %v1343 = vsel %vm1293, %v1297, %v1195
    %v1344 = vsel %vm1294, %v1297, %v1196
    %v1345 = vsel %vm1295, %v1297, %v1197
    %s1346 = sld [smem:[#allocation3 + $0x81]]
    %v1347 = vstv %s1346
    %v1348 = vsel %vm1248, %v1347, %v1200
    %v1349 = vsel %vm1249, %v1347, %v1201
    %v1350 = vsel %vm1250, %v1347, %v1202
    %v1351 = vsel %vm1251, %v1347, %v1203
    %v1352 = vsel %vm1252, %v1347, %v1204
    %v1353 = vsel %vm1253, %v1347, %v1205
    %v1354 = vsel %vm1254, %v1347, %v1206
    %v1355 = vsel %vm1255, %v1347, %v1207
    %v1356 = vsel %vm1256, %v1347, %v1208
    %v1357 = vsel %vm1257, %v1347, %v1209
    %v1358 = vsel %vm1258, %v1347, %v1210
    %v1359 = vsel %vm1259, %v1347, %v1211
    %v1360 = vsel %vm1260, %v1347, %v1212
    %v1361 = vsel %vm1261, %v1347, %v1213
    %v1362 = vsel %vm1262, %v1347, %v1214
    %v1363 = vsel %vm1263, %v1347, %v1215
    %v1364 = vsel %vm1264, %v1347, %v1216
    %v1365 = vsel %vm1265, %v1347, %v1217
    %v1366 = vsel %vm1266, %v1347, %v1218
    %v1367 = vsel %vm1267, %v1347, %v1219
    %v1368 = vsel %vm1268, %v1347, %v1220
    %v1369 = vsel %vm1269, %v1347, %v1221
    %v1370 = vsel %vm1270, %v1347, %v1222
    %v1371 = vsel %vm1271, %v1347, %v1223
    %v1372 = vsel %vm1272, %v1347, %v1224
    %v1373 = vsel %vm1273, %v1347, %v1225
    %v1374 = vsel %vm1274, %v1347, %v1226
    %v1375 = vsel %vm1275, %v1347, %v1227
    %v1376 = vsel %vm1276, %v1347, %v1228
    %v1377 = vsel %vm1277, %v1347, %v1229
    %v1378 = vsel %vm1278, %v1347, %v1230
    %v1379 = vsel %vm1279, %v1347, %v1231
    %v1380 = vsel %vm1280, %v1347, %v1232
    %v1381 = vsel %vm1281, %v1347, %v1233
    %v1382 = vsel %vm1282, %v1347, %v1234
    %v1383 = vsel %vm1283, %v1347, %v1235
    %v1384 = vsel %vm1284, %v1347, %v1236
    %v1385 = vsel %vm1285, %v1347, %v1237
    %v1386 = vsel %vm1286, %v1347, %v1238
    %v1387 = vsel %vm1287, %v1347, %v1239
    %v1388 = vsel %vm1288, %v1347, %v1240
    %v1389 = vsel %vm1289, %v1347, %v1241
    %v1390 = vsel %vm1290, %v1347, %v1242
    %v1391 = vsel %vm1291, %v1347, %v1243
    %v1392 = vsel %vm1292, %v1347, %v1244
    %v1393 = vsel %vm1293, %v1347, %v1245
    %v1394 = vsel %vm1294, %v1347, %v1246
    %v1395 = vsel %vm1295, %v1347, %v1247
    %vm1396 = vcmp.eq.f32.partialorder %v132, 2.0
    %vm1397 = vcmp.eq.f32.partialorder %v133, 2.0
    %vm1398 = vcmp.eq.f32.partialorder %v134, 2.0
    %vm1399 = vcmp.eq.f32.partialorder %v135, 2.0
    %vm1400 = vcmp.eq.f32.partialorder %v136, 2.0
    %vm1401 = vcmp.eq.f32.partialorder %v137, 2.0
    %vm1402 = vcmp.eq.f32.partialorder %v138, 2.0
    %vm1403 = vcmp.eq.f32.partialorder %v139, 2.0
    %vm1404 = vcmp.eq.f32.partialorder %v140, 2.0
    %vm1405 = vcmp.eq.f32.partialorder %v141, 2.0
    %vm1406 = vcmp.eq.f32.partialorder %v142, 2.0
    %vm1407 = vcmp.eq.f32.partialorder %v143, 2.0
    %vm1408 = vcmp.eq.f32.partialorder %v144, 2.0
    %vm1409 = vcmp.eq.f32.partialorder %v145, 2.0
    %vm1410 = vcmp.eq.f32.partialorder %v146, 2.0
    %vm1411 = vcmp.eq.f32.partialorder %v147, 2.0
    %vm1412 = vcmp.eq.f32.partialorder %v148, 2.0
    %vm1413 = vcmp.eq.f32.partialorder %v149, 2.0
    %vm1414 = vcmp.eq.f32.partialorder %v150, 2.0
    %vm1415 = vcmp.eq.f32.partialorder %v151, 2.0
    %vm1416 = vcmp.eq.f32.partialorder %v152, 2.0
    %vm1417 = vcmp.eq.f32.partialorder %v153, 2.0
    %vm1418 = vcmp.eq.f32.partialorder %v154, 2.0
    %vm1419 = vcmp.eq.f32.partialorder %v155, 2.0
    %vm1420 = vcmp.eq.f32.partialorder %v156, 2.0
    %vm1421 = vcmp.eq.f32.partialorder %v157, 2.0
    %vm1422 = vcmp.eq.f32.partialorder %v158, 2.0
    %vm1423 = vcmp.eq.f32.partialorder %v159, 2.0
    %vm1424 = vcmp.eq.f32.partialorder %v160, 2.0
    %vm1425 = vcmp.eq.f32.partialorder %v161, 2.0
    %vm1426 = vcmp.eq.f32.partialorder %v162, 2.0
    %vm1427 = vcmp.eq.f32.partialorder %v163, 2.0
    %vm1428 = vcmp.eq.f32.partialorder %v164, 2.0
    %vm1429 = vcmp.eq.f32.partialorder %v165, 2.0
    %vm1430 = vcmp.eq.f32.partialorder %v166, 2.0
    %vm1431 = vcmp.eq.f32.partialorder %v167, 2.0
    %vm1432 = vcmp.eq.f32.partialorder %v168, 2.0
    %vm1433 = vcmp.eq.f32.partialorder %v169, 2.0
    %vm1434 = vcmp.eq.f32.partialorder %v170, 2.0
    %vm1435 = vcmp.eq.f32.partialorder %v171, 2.0
    %vm1436 = vcmp.eq.f32.partialorder %v172, 2.0
    %vm1437 = vcmp.eq.f32.partialorder %v173, 2.0
    %vm1438 = vcmp.eq.f32.partialorder %v174, 2.0
    %vm1439 = vcmp.eq.f32.partialorder %v175, 2.0
    %vm1440 = vcmp.eq.f32.partialorder %v176, 2.0
    %vm1441 = vcmp.eq.f32.partialorder %v177, 2.0
    %vm1442 = vcmp.eq.f32.partialorder %v178, 2.0
    %vm1443 = vcmp.eq.f32.partialorder %v179, 2.0
    %s1444 = sld [smem:[#allocation3 + $0x100]]
    %v1445 = vstv %s1444
    %v1446 = vsel %vm1396, %v1445, %v1298
    %v1447 = vsel %vm1397, %v1445, %v1299
    %v1448 = vsel %vm1398, %v1445, %v1300
    %v1449 = vsel %vm1399, %v1445, %v1301
    %v1450 = vsel %vm1400, %v1445, %v1302
    %v1451 = vsel %vm1401, %v1445, %v1303
    %v1452 = vsel %vm1402, %v1445, %v1304
    %v1453 = vsel %vm1403, %v1445, %v1305
    %v1454 = vsel %vm1404, %v1445, %v1306
    %v1455 = vsel %vm1405, %v1445, %v1307
    %v1456 = vsel %vm1406, %v1445, %v1308
    %v1457 = vsel %vm1407, %v1445, %v1309
    %v1458 = vsel %vm1408, %v1445, %v1310
    %v1459 = vsel %vm1409, %v1445, %v1311
    %v1460 = vsel %vm1410, %v1445, %v1312
    %v1461 = vsel %vm1411, %v1445, %v1313
    %v1462 = vsel %vm1412, %v1445, %v1314
    %v1463 = vsel %vm1413, %v1445, %v1315
    %v1464 = vsel %vm1414, %v1445, %v1316
    %v1465 = vsel %vm1415, %v1445, %v1317
    %v1466 = vsel %vm1416, %v1445, %v1318
    %v1467 = vsel %vm1417, %v1445, %v1319
    %v1468 = vsel %vm1418, %v1445, %v1320
    %v1469 = vsel %vm1419, %v1445, %v1321
    %v1470 = vsel %vm1420, %v1445, %v1322
    %v1471 = vsel %vm1421, %v1445, %v1323
    %v1472 = vsel %vm1422, %v1445, %v1324
    %v1473 = vsel %vm1423, %v1445, %v1325
    %v1474 = vsel %vm1424, %v1445, %v1326
    %v1475 = vsel %vm1425, %v1445, %v1327
    %v1476 = vsel %vm1426, %v1445, %v1328
    %v1477 = vsel %vm1427, %v1445, %v1329
    %v1478 = vsel %vm1428, %v1445, %v1330
    %v1479 = vsel %vm1429, %v1445, %v1331
    %v1480 = vsel %vm1430, %v1445, %v1332
    %v1481 = vsel %vm1431, %v1445, %v1333
    %v1482 = vsel %vm1432, %v1445, %v1334
    %v1483 = vsel %vm1433, %v1445, %v1335
    %v1484 = vsel %vm1434, %v1445, %v1336
    %v1485 = vsel %vm1435, %v1445, %v1337
    %v1486 = vsel %vm1436, %v1445, %v1338
    %v1487 = vsel %vm1437, %v1445, %v1339
    %v1488 = vsel %vm1438, %v1445, %v1340
    %v1489 = vsel %vm1439, %v1445, %v1341
    %v1490 = vsel %vm1440, %v1445, %v1342
    %v1491 = vsel %vm1441, %v1445, %v1343
    %v1492 = vsel %vm1442, %v1445, %v1344
    %v1493 = vsel %vm1443, %v1445, %v1345
    %s1494 = sld [smem:[#allocation3 + $0x101]]
    %v1495 = vstv %s1494
    %v1496 = vsel %vm1396, %v1495, %v1348
    %v1497 = vsel %vm1397, %v1495, %v1349
    %v1498 = vsel %vm1398, %v1495, %v1350
    %v1499 = vsel %vm1399, %v1495, %v1351
    %v1500 = vsel %vm1400, %v1495, %v1352
    %v1501 = vsel %vm1401, %v1495, %v1353
    %v1502 = vsel %vm1402, %v1495, %v1354
    %v1503 = vsel %vm1403, %v1495, %v1355
    %v1504 = vsel %vm1404, %v1495, %v1356
    %v1505 = vsel %vm1405, %v1495, %v1357
    %v1506 = vsel %vm1406, %v1495, %v1358
    %v1507 = vsel %vm1407, %v1495, %v1359
    %v1508 = vsel %vm1408, %v1495, %v1360
    %v1509 = vsel %vm1409, %v1495, %v1361
    %v1510 = vsel %vm1410, %v1495, %v1362
    %v1511 = vsel %vm1411, %v1495, %v1363
    %v1512 = vsel %vm1412, %v1495, %v1364
    %v1513 = vsel %vm1413, %v1495, %v1365
    %v1514 = vsel %vm1414, %v1495, %v1366
    %v1515 = vsel %vm1415, %v1495, %v1367
    %v1516 = vsel %vm1416, %v1495, %v1368
    %v1517 = vsel %vm1417, %v1495, %v1369
    %v1518 = vsel %vm1418, %v1495, %v1370
    %v1519 = vsel %vm1419, %v1495, %v1371
    %v1520 = vsel %vm1420, %v1495, %v1372
    %v1521 = vsel %vm1421, %v1495, %v1373
    %v1522 = vsel %vm1422, %v1495, %v1374
    %v1523 = vsel %vm1423, %v1495, %v1375
    %v1524 = vsel %vm1424, %v1495, %v1376
    %v1525 = vsel %vm1425, %v1495, %v1377
    %v1526 = vsel %vm1426, %v1495, %v1378
    %v1527 = vsel %vm1427, %v1495, %v1379
    %v1528 = vsel %vm1428, %v1495, %v1380
    %v1529 = vsel %vm1429, %v1495, %v1381
    %v1530 = vsel %vm1430, %v1495, %v1382
    %v1531 = vsel %vm1431, %v1495, %v1383
    %v1532 = vsel %vm1432, %v1495, %v1384
    %v1533 = vsel %vm1433, %v1495, %v1385
    %v1534 = vsel %vm1434, %v1495, %v1386
    %v1535 = vsel %vm1435, %v1495, %v1387
    %v1536 = vsel %vm1436, %v1495, %v1388
    %v1537 = vsel %vm1437, %v1495, %v1389
    %v1538 = vsel %vm1438, %v1495, %v1390
    %v1539 = vsel %vm1439, %v1495, %v1391
    %v1540 = vsel %vm1440, %v1495, %v1392
    %v1541 = vsel %vm1441, %v1495, %v1393
    %v1542 = vsel %vm1442, %v1495, %v1394
    %v1543 = vsel %vm1443, %v1495, %v1395
    %1592 = vrot.lane.b32.xlu0 %v1446, 123
    %v1593 = vpop.permute.xlu0 %1592
    %1594 = vrot.lane.b32.xlu0 %v1447, 123
    %v1595 = vpop.permute.xlu0 %1594
    %1596 = vrot.lane.b32.xlu0 %v1448, 123
    %v1597 = vpop.permute.xlu0 %1596
    %1598 = vrot.lane.b32.xlu0 %v1449, 123
    %v1599 = vpop.permute.xlu0 %1598
    %1600 = vrot.lane.b32.xlu0 %v1450, 123
    %v1601 = vpop.permute.xlu0 %1600
    %1602 = vrot.lane.b32.xlu0 %v1451, 123
    %v1603 = vpop.permute.xlu0 %1602
    %1604 = vrot.lane.b32.xlu0 %v1452, 123
    %v1605 = vpop.permute.xlu0 %1604
    %1606 = vrot.lane.b32.xlu0 %v1453, 123
    %v1607 = vpop.permute.xlu0 %1606
    %1608 = vrot.lane.b32.xlu0 %v1454, 123
    %v1609 = vpop.permute.xlu0 %1608
    %1610 = vrot.lane.b32.xlu0 %v1455, 123
    %v1611 = vpop.permute.xlu0 %1610
    %1612 = vrot.lane.b32.xlu0 %v1456, 123
    %v1613 = vpop.permute.xlu0 %1612
    %1614 = vrot.lane.b32.xlu0 %v1457, 123
    %v1615 = vpop.permute.xlu0 %1614
    %1616 = vrot.lane.b32.xlu0 %v1458, 123
    %v1617 = vpop.permute.xlu0 %1616
    %1618 = vrot.lane.b32.xlu0 %v1459, 123
    %v1619 = vpop.permute.xlu0 %1618
    %1620 = vrot.lane.b32.xlu0 %v1460, 123
    %v1621 = vpop.permute.xlu0 %1620
    %1622 = vrot.lane.b32.xlu0 %v1461, 123
    %v1623 = vpop.permute.xlu0 %1622
    %1624 = vrot.lane.b32.xlu0 %v1462, 123
    %v1625 = vpop.permute.xlu0 %1624
    %1626 = vrot.lane.b32.xlu0 %v1463, 123
    %v1627 = vpop.permute.xlu0 %1626
    %1628 = vrot.lane.b32.xlu0 %v1464, 123
    %v1629 = vpop.permute.xlu0 %1628
    %1630 = vrot.lane.b32.xlu0 %v1465, 123
    %v1631 = vpop.permute.xlu0 %1630
    %1632 = vrot.lane.b32.xlu0 %v1466, 123
    %v1633 = vpop.permute.xlu0 %1632
    %1634 = vrot.lane.b32.xlu0 %v1467, 123
    %v1635 = vpop.permute.xlu0 %1634
    %1636 = vrot.lane.b32.xlu0 %v1468, 123
    %v1637 = vpop.permute.xlu0 %1636
    %1638 = vrot.lane.b32.xlu0 %v1469, 123
    %v1639 = vpop.permute.xlu0 %1638
    %1640 = vrot.lane.b32.xlu0 %v1470, 123
    %v1641 = vpop.permute.xlu0 %1640
    %1642 = vrot.lane.b32.xlu0 %v1471, 123
    %v1643 = vpop.permute.xlu0 %1642
    %1644 = vrot.lane.b32.xlu0 %v1472, 123
    %v1645 = vpop.permute.xlu0 %1644
    %1646 = vrot.lane.b32.xlu0 %v1473, 123
    %v1647 = vpop.permute.xlu0 %1646
    %1648 = vrot.lane.b32.xlu0 %v1474, 123
    %v1649 = vpop.permute.xlu0 %1648
    %1650 = vrot.lane.b32.xlu0 %v1475, 123
    %v1651 = vpop.permute.xlu0 %1650
    %1652 = vrot.lane.b32.xlu0 %v1476, 123
    %v1653 = vpop.permute.xlu0 %1652
    %1654 = vrot.lane.b32.xlu0 %v1477, 123
    %v1655 = vpop.permute.xlu0 %1654
    %1656 = vrot.lane.b32.xlu0 %v1478, 123
    %v1657 = vpop.permute.xlu0 %1656
    %1658 = vrot.lane.b32.xlu0 %v1479, 123
    %v1659 = vpop.permute.xlu0 %1658
    %1660 = vrot.lane.b32.xlu0 %v1480, 123
    %v1661 = vpop.permute.xlu0 %1660
    %1662 = vrot.lane.b32.xlu0 %v1481, 123
    %v1663 = vpop.permute.xlu0 %1662
    %1664 = vrot.lane.b32.xlu0 %v1482, 123
    %v1665 = vpop.permute.xlu0 %1664
    %1666 = vrot.lane.b32.xlu0 %v1483, 123
    %v1667 = vpop.permute.xlu0 %1666
    %1668 = vrot.lane.b32.xlu0 %v1484, 123
    %v1669 = vpop.permute.xlu0 %1668
    %1670 = vrot.lane.b32.xlu0 %v1485, 123
    %v1671 = vpop.permute.xlu0 %1670
    %1672 = vrot.lane.b32.xlu0 %v1486, 123
    %v1673 = vpop.permute.xlu0 %1672
    %1674 = vrot.lane.b32.xlu0 %v1487, 123
    %v1675 = vpop.permute.xlu0 %1674
    %1676 = vrot.lane.b32.xlu0 %v1488, 123
    %v1677 = vpop.permute.xlu0 %1676
    %1678 = vrot.lane.b32.xlu0 %v1489, 123
    %v1679 = vpop.permute.xlu0 %1678
    %1680 = vrot.lane.b32.xlu0 %v1490, 123
    %v1681 = vpop.permute.xlu0 %1680
    %1682 = vrot.lane.b32.xlu0 %v1491, 123
    %v1683 = vpop.permute.xlu0 %1682
    %1684 = vrot.lane.b32.xlu0 %v1492, 123
    %v1685 = vpop.permute.xlu0 %1684
    %1686 = vrot.lane.b32.xlu0 %v1493, 123
    %v1687 = vpop.permute.xlu0 %1686
    %v1736 = vmul.f32 %v525, %v1593
    %v1737 = vmul.f32 %v527, %v1595
    %v1738 = vmul.f32 %v529, %v1597
    %v1739 = vmul.f32 %v531, %v1599
    %v1740 = vmul.f32 %v533, %v1601
    %v1741 = vmul.f32 %v535, %v1603
    %v1742 = vmul.f32 %v537, %v1605
    %v1743 = vmul.f32 %v539, %v1607
    %v1744 = vmul.f32 %v541, %v1609
    %v1745 = vmul.f32 %v543, %v1611
    %v1746 = vmul.f32 %v545, %v1613
    %v1747 = vmul.f32 %v547, %v1615
    %v1748 = vmul.f32 %v549, %v1617
    %v1749 = vmul.f32 %v551, %v1619
    %v1750 = vmul.f32 %v553, %v1621
    %v1751 = vmul.f32 %v555, %v1623
    %v1752 = vmul.f32 %v557, %v1625
    %v1753 = vmul.f32 %v559, %v1627
    %v1754 = vmul.f32 %v561, %v1629
    %v1755 = vmul.f32 %v563, %v1631
    %v1756 = vmul.f32 %v565, %v1633
    %v1757 = vmul.f32 %v567, %v1635
    %v1758 = vmul.f32 %v569, %v1637
    %v1759 = vmul.f32 %v571, %v1639
    %v1760 = vmul.f32 %v573, %v1641
    %v1761 = vmul.f32 %v575, %v1643
    %v1762 = vmul.f32 %v577, %v1645
    %v1763 = vmul.f32 %v579, %v1647
    %v1764 = vmul.f32 %v581, %v1649
    %v1765 = vmul.f32 %v583, %v1651
    %v1766 = vmul.f32 %v585, %v1653
    %v1767 = vmul.f32 %v587, %v1655
    %v1768 = vmul.f32 %v589, %v1657
    %v1769 = vmul.f32 %v591, %v1659
    %v1770 = vmul.f32 %v593, %v1661
    %v1771 = vmul.f32 %v595, %v1663
    %v1772 = vmul.f32 %v597, %v1665
    %v1773 = vmul.f32 %v599, %v1667
    %v1774 = vmul.f32 %v601, %v1669
    %v1775 = vmul.f32 %v603, %v1671
    %v1776 = vmul.f32 %v605, %v1673
    %v1777 = vmul.f32 %v607, %v1675
    %v1778 = vmul.f32 %v609, %v1677
    %v1779 = vmul.f32 %v611, %v1679
    %v1780 = vmul.f32 %v613, %v1681
    %v1781 = vmul.f32 %v615, %v1683
    %v1782 = vmul.f32 %v617, %v1685
    %v1783 = vmul.f32 %v619, %v1687
    %1832 = vrot.lane.b32.xlu0 %v1496, 124
    %v1833 = vpop.permute.xlu0 %1832
    %1834 = vrot.lane.b32.xlu0 %v1497, 124
    %v1835 = vpop.permute.xlu0 %1834
    %1836 = vrot.lane.b32.xlu0 %v1498, 124
    %v1837 = vpop.permute.xlu0 %1836
    %1838 = vrot.lane.b32.xlu0 %v1499, 124
    %v1839 = vpop.permute.xlu0 %1838
    %1840 = vrot.lane.b32.xlu0 %v1500, 124
    %v1841 = vpop.permute.xlu0 %1840
    %1842 = vrot.lane.b32.xlu0 %v1501, 124
    %v1843 = vpop.permute.xlu0 %1842
    %1844 = vrot.lane.b32.xlu0 %v1502, 124
    %v1845 = vpop.permute.xlu0 %1844
    %1846 = vrot.lane.b32.xlu0 %v1503, 124
    %v1847 = vpop.permute.xlu0 %1846
    %1848 = vrot.lane.b32.xlu0 %v1504, 124
    %v1849 = vpop.permute.xlu0 %1848
    %1850 = vrot.lane.b32.xlu0 %v1505, 124
    %v1851 = vpop.permute.xlu0 %1850
    %1852 = vrot.lane.b32.xlu0 %v1506, 124
    %v1853 = vpop.permute.xlu0 %1852
    %1854 = vrot.lane.b32.xlu0 %v1507, 124
    %v1855 = vpop.permute.xlu0 %1854
    %1856 = vrot.lane.b32.xlu0 %v1508, 124
    %v1857 = vpop.permute.xlu0 %1856
    %1858 = vrot.lane.b32.xlu0 %v1509, 124
    %v1859 = vpop.permute.xlu0 %1858
    %1860 = vrot.lane.b32.xlu0 %v1510, 124
    %v1861 = vpop.permute.xlu0 %1860
    %1862 = vrot.lane.b32.xlu0 %v1511, 124
    %v1863 = vpop.permute.xlu0 %1862
    %1864 = vrot.lane.b32.xlu0 %v1512, 124
    %v1865 = vpop.permute.xlu0 %1864
    %1866 = vrot.lane.b32.xlu0 %v1513, 124
    %v1867 = vpop.permute.xlu0 %1866
    %1868 = vrot.lane.b32.xlu0 %v1514, 124
    %v1869 = vpop.permute.xlu0 %1868
    %1870 = vrot.lane.b32.xlu0 %v1515, 124
    %v1871 = vpop.permute.xlu0 %1870
    %1872 = vrot.lane.b32.xlu0 %v1516, 124
    %v1873 = vpop.permute.xlu0 %1872
    %1874 = vrot.lane.b32.xlu0 %v1517, 124
    %v1875 = vpop.permute.xlu0 %1874
    %1876 = vrot.lane.b32.xlu0 %v1518, 124
    %v1877 = vpop.permute.xlu0 %1876
    %1878 = vrot.lane.b32.xlu0 %v1519, 124
    %v1879 = vpop.permute.xlu0 %1878
    %1880 = vrot.lane.b32.xlu0 %v1520, 124
    %v1881 = vpop.permute.xlu0 %1880
    %1882 = vrot.lane.b32.xlu0 %v1521, 124
    %v1883 = vpop.permute.xlu0 %1882
    %1884 = vrot.lane.b32.xlu0 %v1522, 124
    %v1885 = vpop.permute.xlu0 %1884
    %1886 = vrot.lane.b32.xlu0 %v1523, 124
    %v1887 = vpop.permute.xlu0 %1886
    %1888 = vrot.lane.b32.xlu0 %v1524, 124
    %v1889 = vpop.permute.xlu0 %1888
    %1890 = vrot.lane.b32.xlu0 %v1525, 124
    %v1891 = vpop.permute.xlu0 %1890
    %1892 = vrot.lane.b32.xlu0 %v1526, 124
    %v1893 = vpop.permute.xlu0 %1892
    %1894 = vrot.lane.b32.xlu0 %v1527, 124
    %v1895 = vpop.permute.xlu0 %1894
    %1896 = vrot.lane.b32.xlu0 %v1528, 124
    %v1897 = vpop.permute.xlu0 %1896
    %1898 = vrot.lane.b32.xlu0 %v1529, 124
    %v1899 = vpop.permute.xlu0 %1898
    %1900 = vrot.lane.b32.xlu0 %v1530, 124
    %v1901 = vpop.permute.xlu0 %1900
    %1902 = vrot.lane.b32.xlu0 %v1531, 124
    %v1903 = vpop.permute.xlu0 %1902
    %1904 = vrot.lane.b32.xlu0 %v1532, 124
    %v1905 = vpop.permute.xlu0 %1904
    %1906 = vrot.lane.b32.xlu0 %v1533, 124
    %v1907 = vpop.permute.xlu0 %1906
    %1908 = vrot.lane.b32.xlu0 %v1534, 124
    %v1909 = vpop.permute.xlu0 %1908
    %1910 = vrot.lane.b32.xlu0 %v1535, 124
    %v1911 = vpop.permute.xlu0 %1910
    %1912 = vrot.lane.b32.xlu0 %v1536, 124
    %v1913 = vpop.permute.xlu0 %1912
    %1914 = vrot.lane.b32.xlu0 %v1537, 124
    %v1915 = vpop.permute.xlu0 %1914
    %1916 = vrot.lane.b32.xlu0 %v1538, 124
    %v1917 = vpop.permute.xlu0 %1916
    %1918 = vrot.lane.b32.xlu0 %v1539, 124
    %v1919 = vpop.permute.xlu0 %1918
    %1920 = vrot.lane.b32.xlu0 %v1540, 124
    %v1921 = vpop.permute.xlu0 %1920
    %1922 = vrot.lane.b32.xlu0 %v1541, 124
    %v1923 = vpop.permute.xlu0 %1922
    %1924 = vrot.lane.b32.xlu0 %v1542, 124
    %v1925 = vpop.permute.xlu0 %1924
    %1926 = vrot.lane.b32.xlu0 %v1543, 124
    %v1927 = vpop.permute.xlu0 %1926
    %v1976 = vmul.f32 %v525, %v1833
    %v1977 = vmul.f32 %v527, %v1835
    %v1978 = vmul.f32 %v529, %v1837
    %v1979 = vmul.f32 %v531, %v1839
    %v1980 = vmul.f32 %v533, %v1841
    %v1981 = vmul.f32 %v535, %v1843
    %v1982 = vmul.f32 %v537, %v1845
    %v1983 = vmul.f32 %v539, %v1847
    %v1984 = vmul.f32 %v541, %v1849
    %v1985 = vmul.f32 %v543, %v1851
    %v1986 = vmul.f32 %v545, %v1853
    %v1987 = vmul.f32 %v547, %v1855
    %v1988 = vmul.f32 %v549, %v1857
    %v1989 = vmul.f32 %v551, %v1859
    %v1990 = vmul.f32 %v553, %v1861
    %v1991 = vmul.f32 %v555, %v1863
    %v1992 = vmul.f32 %v557, %v1865
    %v1993 = vmul.f32 %v559, %v1867
    %v1994 = vmul.f32 %v561, %v1869
    %v1995 = vmul.f32 %v563, %v1871
    %v1996 = vmul.f32 %v565, %v1873
    %v1997 = vmul.f32 %v567, %v1875
    %v1998 = vmul.f32 %v569, %v1877
    %v1999 = vmul.f32 %v571, %v1879
    %v2000 = vmul.f32 %v573, %v1881
    %v2001 = vmul.f32 %v575, %v1883
    %v2002 = vmul.f32 %v577, %v1885
    %v2003 = vmul.f32 %v579, %v1887
    %v2004 = vmul.f32 %v581, %v1889
    %v2005 = vmul.f32 %v583, %v1891
    %v2006 = vmul.f32 %v585, %v1893
    %v2007 = vmul.f32 %v587, %v1895
    %v2008 = vmul.f32 %v589, %v1897
    %v2009 = vmul.f32 %v591, %v1899
    %v2010 = vmul.f32 %v593, %v1901
    %v2011 = vmul.f32 %v595, %v1903
    %v2012 = vmul.f32 %v597, %v1905
    %v2013 = vmul.f32 %v599, %v1907
    %v2014 = vmul.f32 %v601, %v1909
    %v2015 = vmul.f32 %v603, %v1911
    %v2016 = vmul.f32 %v605, %v1913
    %v2017 = vmul.f32 %v607, %v1915
    %v2018 = vmul.f32 %v609, %v1917
    %v2019 = vmul.f32 %v611, %v1919
    %v2020 = vmul.f32 %v613, %v1921
    %v2021 = vmul.f32 %v615, %v1923
    %v2022 = vmul.f32 %v617, %v1925
    %v2023 = vmul.f32 %v619, %v1927
    %2025 = vset.pattern.permute.xlu0 0
    %2026 = vperm.xlu0 %2025, %v277
    %v2027 = vpop.permute.xlu0 %2026
    %2030 = vset.pattern.permute.xlu0 0
    %2031 = vperm.xlu0 %2030, %v278
    %v2032 = vpop.permute.xlu0 %2031
    %2035 = vset.pattern.permute.xlu0 0
    %2036 = vperm.xlu0 %2035, %v279
    %v2037 = vpop.permute.xlu0 %2036
    %2040 = vset.pattern.permute.xlu0 0
    %2041 = vperm.xlu0 %2040, %v280
    %v2042 = vpop.permute.xlu0 %2041
    %2045 = vset.pattern.permute.xlu0 0
    %2046 = vperm.xlu0 %2045, %v281
    %v2047 = vpop.permute.xlu0 %2046
    %2050 = vset.pattern.permute.xlu0 0
    %2051 = vperm.xlu0 %2050, %v282
    %v2052 = vpop.permute.xlu0 %2051
    %2055 = vset.pattern.permute.xlu0 0
    %2056 = vperm.xlu0 %2055, %v283
    %v2057 = vpop.permute.xlu0 %2056
    %2060 = vset.pattern.permute.xlu0 0
    %2061 = vperm.xlu0 %2060, %v284
    %v2062 = vpop.permute.xlu0 %2061
    %2065 = vset.pattern.permute.xlu0 0
    %2066 = vperm.xlu0 %2065, %v285
    %v2067 = vpop.permute.xlu0 %2066
    %2070 = vset.pattern.permute.xlu0 0
    %2071 = vperm.xlu0 %2070, %v286
    %v2072 = vpop.permute.xlu0 %2071
    %2075 = vset.pattern.permute.xlu0 0
    %2076 = vperm.xlu0 %2075, %v287
    %v2077 = vpop.permute.xlu0 %2076
    %2080 = vset.pattern.permute.xlu0 0
    %2081 = vperm.xlu0 %2080, %v288
    %v2082 = vpop.permute.xlu0 %2081
    %2085 = vset.pattern.permute.xlu0 0
    %2086 = vperm.xlu0 %2085, %v289
    %v2087 = vpop.permute.xlu0 %2086
    %2090 = vset.pattern.permute.xlu0 0
    %2091 = vperm.xlu0 %2090, %v290
    %v2092 = vpop.permute.xlu0 %2091
    %2095 = vset.pattern.permute.xlu0 0
    %2096 = vperm.xlu0 %2095, %v291
    %v2097 = vpop.permute.xlu0 %2096
    %2100 = vset.pattern.permute.xlu0 0
    %2101 = vperm.xlu0 %2100, %v292
    %v2102 = vpop.permute.xlu0 %2101
    %2105 = vset.pattern.permute.xlu0 0
    %2106 = vperm.xlu0 %2105, %v293
    %v2107 = vpop.permute.xlu0 %2106
    %2110 = vset.pattern.permute.xlu0 0
    %2111 = vperm.xlu0 %2110, %v294
    %v2112 = vpop.permute.xlu0 %2111
    %2115 = vset.pattern.permute.xlu0 0
    %2116 = vperm.xlu0 %2115, %v295
    %v2117 = vpop.permute.xlu0 %2116
    %2120 = vset.pattern.permute.xlu0 0
    %2121 = vperm.xlu0 %2120, %v296
    %v2122 = vpop.permute.xlu0 %2121
    %2125 = vset.pattern.permute.xlu0 0
    %2126 = vperm.xlu0 %2125, %v297
    %v2127 = vpop.permute.xlu0 %2126
    %2130 = vset.pattern.permute.xlu0 0
    %2131 = vperm.xlu0 %2130, %v298
    %v2132 = vpop.permute.xlu0 %2131
    %2135 = vset.pattern.permute.xlu0 0
    %2136 = vperm.xlu0 %2135, %v299
    %v2137 = vpop.permute.xlu0 %2136
    %2140 = vset.pattern.permute.xlu0 0
    %2141 = vperm.xlu0 %2140, %v300
    %v2142 = vpop.permute.xlu0 %2141
    %2145 = vset.pattern.permute.xlu0 0
    %2146 = vperm.xlu0 %2145, %v301
    %v2147 = vpop.permute.xlu0 %2146
    %2150 = vset.pattern.permute.xlu0 0
    %2151 = vperm.xlu0 %2150, %v302
    %v2152 = vpop.permute.xlu0 %2151
    %2155 = vset.pattern.permute.xlu0 0
    %2156 = vperm.xlu0 %2155, %v303
    %v2157 = vpop.permute.xlu0 %2156
    %2160 = vset.pattern.permute.xlu0 0
    %2161 = vperm.xlu0 %2160, %v304
    %v2162 = vpop.permute.xlu0 %2161
    %2165 = vset.pattern.permute.xlu0 0
    %2166 = vperm.xlu0 %2165, %v305
    %v2167 = vpop.permute.xlu0 %2166
    %2170 = vset.pattern.permute.xlu0 0
    %2171 = vperm.xlu0 %2170, %v306
    %v2172 = vpop.permute.xlu0 %2171
    %2175 = vset.pattern.permute.xlu0 0
    %2176 = vperm.xlu0 %2175, %v307
    %v2177 = vpop.permute.xlu0 %2176
    %2180 = vset.pattern.permute.xlu0 0
    %2181 = vperm.xlu0 %2180, %v308
    %v2182 = vpop.permute.xlu0 %2181
    %2185 = vset.pattern.permute.xlu0 0
    %2186 = vperm.xlu0 %2185, %v309
    %v2187 = vpop.permute.xlu0 %2186
    %2190 = vset.pattern.permute.xlu0 0
    %2191 = vperm.xlu0 %2190, %v310
    %v2192 = vpop.permute.xlu0 %2191
    %2195 = vset.pattern.permute.xlu0 0
    %2196 = vperm.xlu0 %2195, %v311
    %v2197 = vpop.permute.xlu0 %2196
    %2200 = vset.pattern.permute.xlu0 0
    %2201 = vperm.xlu0 %2200, %v312
    %v2202 = vpop.permute.xlu0 %2201
    %2205 = vset.pattern.permute.xlu0 0
    %2206 = vperm.xlu0 %2205, %v313
    %v2207 = vpop.permute.xlu0 %2206
    %2210 = vset.pattern.permute.xlu0 0
    %2211 = vperm.xlu0 %2210, %v314
    %v2212 = vpop.permute.xlu0 %2211
    %2215 = vset.pattern.permute.xlu0 0
    %2216 = vperm.xlu0 %2215, %v315
    %v2217 = vpop.permute.xlu0 %2216
    %2220 = vset.pattern.permute.xlu0 0
    %2221 = vperm.xlu0 %2220, %v316
    %v2222 = vpop.permute.xlu0 %2221
    %2225 = vset.pattern.permute.xlu0 0
    %2226 = vperm.xlu0 %2225, %v317
    %v2227 = vpop.permute.xlu0 %2226
    %2230 = vset.pattern.permute.xlu0 0
    %2231 = vperm.xlu0 %2230, %v318
    %v2232 = vpop.permute.xlu0 %2231
    %2235 = vset.pattern.permute.xlu0 0
    %2236 = vperm.xlu0 %2235, %v319
    %v2237 = vpop.permute.xlu0 %2236
    %2240 = vset.pattern.permute.xlu0 0
    %2241 = vperm.xlu0 %2240, %v320
    %v2242 = vpop.permute.xlu0 %2241
    %2245 = vset.pattern.permute.xlu0 0
    %2246 = vperm.xlu0 %2245, %v321
    %v2247 = vpop.permute.xlu0 %2246
    %2250 = vset.pattern.permute.xlu0 0
    %2251 = vperm.xlu0 %2250, %v322
    %v2252 = vpop.permute.xlu0 %2251
    %2255 = vset.pattern.permute.xlu0 0
    %2256 = vperm.xlu0 %2255, %v323
    %v2257 = vpop.permute.xlu0 %2256
    %2260 = vset.pattern.permute.xlu0 0
    %2261 = vperm.xlu0 %2260, %v324
    %v2262 = vpop.permute.xlu0 %2261
    %v2264 = vmul.f32 %v2027, %v1052
    %v2265 = vmul.f32 %v2032, %v1053
    %v2266 = vmul.f32 %v2037, %v1054
    %v2267 = vmul.f32 %v2042, %v1055
    %v2268 = vmul.f32 %v2047, %v1056
    %v2269 = vmul.f32 %v2052, %v1057
    %v2270 = vmul.f32 %v2057, %v1058
    %v2271 = vmul.f32 %v2062, %v1059
    %v2272 = vmul.f32 %v2067, %v1060
    %v2273 = vmul.f32 %v2072, %v1061
    %v2274 = vmul.f32 %v2077, %v1062
    %v2275 = vmul.f32 %v2082, %v1063
    %v2276 = vmul.f32 %v2087, %v1064
    %v2277 = vmul.f32 %v2092, %v1065
    %v2278 = vmul.f32 %v2097, %v1066
    %v2279 = vmul.f32 %v2102, %v1067
    %v2280 = vmul.f32 %v2107, %v1068
    %v2281 = vmul.f32 %v2112, %v1069
    %v2282 = vmul.f32 %v2117, %v1070
    %v2283 = vmul.f32 %v2122, %v1071
    %v2284 = vmul.f32 %v2127, %v1072
    %v2285 = vmul.f32 %v2132, %v1073
    %v2286 = vmul.f32 %v2137, %v1074
    %v2287 = vmul.f32 %v2142, %v1075
    %v2288 = vmul.f32 %v2147, %v1076
    %v2289 = vmul.f32 %v2152, %v1077
    %v2290 = vmul.f32 %v2157, %v1078
    %v2291 = vmul.f32 %v2162, %v1079
    %v2292 = vmul.f32 %v2167, %v1080
    %v2293 = vmul.f32 %v2172, %v1081
    %v2294 = vmul.f32 %v2177, %v1082
    %v2295 = vmul.f32 %v2182, %v1083
    %v2296 = vmul.f32 %v2187, %v1084
    %v2297 = vmul.f32 %v2192, %v1085
    %v2298 = vmul.f32 %v2197, %v1086
    %v2299 = vmul.f32 %v2202, %v1087
    %v2300 = vmul.f32 %v2207, %v1088
    %v2301 = vmul.f32 %v2212, %v1089
    %v2302 = vmul.f32 %v2217, %v1090
    %v2303 = vmul.f32 %v2222, %v1091
    %v2304 = vmul.f32 %v2227, %v1092
    %v2305 = vmul.f32 %v2232, %v1093
    %v2306 = vmul.f32 %v2237, %v1094
    %v2307 = vmul.f32 %v2242, %v1095
    %v2308 = vmul.f32 %v2247, %v1096
    %v2309 = vmul.f32 %v2252, %v1097
    %v2310 = vmul.f32 %v2257, %v1098
    %v2311 = vmul.f32 %v2262, %v1099
    %2360 = vrot.lane.b32.xlu0 %v132, 127
    %v2361 = vpop.permute.xlu0 %2360
    %2362 = vrot.lane.b32.xlu0 %v133, 127
    %v2363 = vpop.permute.xlu0 %2362
    %2364 = vrot.lane.b32.xlu0 %v134, 127
    %v2365 = vpop.permute.xlu0 %2364
    %2366 = vrot.lane.b32.xlu0 %v135, 127
    %v2367 = vpop.permute.xlu0 %2366
    %2368 = vrot.lane.b32.xlu0 %v136, 127
    %v2369 = vpop.permute.xlu0 %2368
    %2370 = vrot.lane.b32.xlu0 %v137, 127
    %v2371 = vpop.permute.xlu0 %2370
    %2372 = vrot.lane.b32.xlu0 %v138, 127
    %v2373 = vpop.permute.xlu0 %2372
    %2374 = vrot.lane.b32.xlu0 %v139, 127
    %v2375 = vpop.permute.xlu0 %2374
    %2376 = vrot.lane.b32.xlu0 %v140, 127
    %v2377 = vpop.permute.xlu0 %2376
    %2378 = vrot.lane.b32.xlu0 %v141, 127
    %v2379 = vpop.permute.xlu0 %2378
    %2380 = vrot.lane.b32.xlu0 %v142, 127
    %v2381 = vpop.permute.xlu0 %2380
    %2382 = vrot.lane.b32.xlu0 %v143, 127
    %v2383 = vpop.permute.xlu0 %2382
    %2384 = vrot.lane.b32.xlu0 %v144, 127
    %v2385 = vpop.permute.xlu0 %2384
    %2386 = vrot.lane.b32.xlu0 %v145, 127
    %v2387 = vpop.permute.xlu0 %2386
    %2388 = vrot.lane.b32.xlu0 %v146, 127
    %v2389 = vpop.permute.xlu0 %2388
    %2390 = vrot.lane.b32.xlu0 %v147, 127
    %v2391 = vpop.permute.xlu0 %2390
    %2392 = vrot.lane.b32.xlu0 %v148, 127
    %v2393 = vpop.permute.xlu0 %2392
    %2394 = vrot.lane.b32.xlu0 %v149, 127
    %v2395 = vpop.permute.xlu0 %2394
    %2396 = vrot.lane.b32.xlu0 %v150, 127
    %v2397 = vpop.permute.xlu0 %2396
    %2398 = vrot.lane.b32.xlu0 %v151, 127
    %v2399 = vpop.permute.xlu0 %2398
    %2400 = vrot.lane.b32.xlu0 %v152, 127
    %v2401 = vpop.permute.xlu0 %2400
    %2402 = vrot.lane.b32.xlu0 %v153, 127
    %v2403 = vpop.permute.xlu0 %2402
    %2404 = vrot.lane.b32.xlu0 %v154, 127
    %v2405 = vpop.permute.xlu0 %2404
    %2406 = vrot.lane.b32.xlu0 %v155, 127
    %v2407 = vpop.permute.xlu0 %2406
    %2408 = vrot.lane.b32.xlu0 %v156, 127
    %v2409 = vpop.permute.xlu0 %2408
    %2410 = vrot.lane.b32.xlu0 %v157, 127
    %v2411 = vpop.permute.xlu0 %2410
    %2412 = vrot.lane.b32.xlu0 %v158, 127
    %v2413 = vpop.permute.xlu0 %2412
    %2414 = vrot.lane.b32.xlu0 %v159, 127
    %v2415 = vpop.permute.xlu0 %2414
    %2416 = vrot.lane.b32.xlu0 %v160, 127
    %v2417 = vpop.permute.xlu0 %2416
    %2418 = vrot.lane.b32.xlu0 %v161, 127
    %v2419 = vpop.permute.xlu0 %2418
    %2420 = vrot.lane.b32.xlu0 %v162, 127
    %v2421 = vpop.permute.xlu0 %2420
    %2422 = vrot.lane.b32.xlu0 %v163, 127
    %v2423 = vpop.permute.xlu0 %2422
    %2424 = vrot.lane.b32.xlu0 %v164, 127
    %v2425 = vpop.permute.xlu0 %2424
    %2426 = vrot.lane.b32.xlu0 %v165, 127
    %v2427 = vpop.permute.xlu0 %2426
    %2428 = vrot.lane.b32.xlu0 %v166, 127
    %v2429 = vpop.permute.xlu0 %2428
    %2430 = vrot.lane.b32.xlu0 %v167, 127
    %v2431 = vpop.permute.xlu0 %2430
    %2432 = vrot.lane.b32.xlu0 %v168, 127
    %v2433 = vpop.permute.xlu0 %2432
    %2434 = vrot.lane.b32.xlu0 %v169, 127
    %v2435 = vpop.permute.xlu0 %2434
    %2436 = vrot.lane.b32.xlu0 %v170, 127
    %v2437 = vpop.permute.xlu0 %2436
    %2438 = vrot.lane.b32.xlu0 %v171, 127
    %v2439 = vpop.permute.xlu0 %2438
    %2440 = vrot.lane.b32.xlu0 %v172, 127
    %v2441 = vpop.permute.xlu0 %2440
    %2442 = vrot.lane.b32.xlu0 %v173, 127
    %v2443 = vpop.permute.xlu0 %2442
    %2444 = vrot.lane.b32.xlu0 %v174, 127
    %v2445 = vpop.permute.xlu0 %2444
    %2446 = vrot.lane.b32.xlu0 %v175, 127
    %v2447 = vpop.permute.xlu0 %2446
    %2448 = vrot.lane.b32.xlu0 %v176, 127
    %v2449 = vpop.permute.xlu0 %2448
    %2450 = vrot.lane.b32.xlu0 %v177, 127
    %v2451 = vpop.permute.xlu0 %2450
    %2452 = vrot.lane.b32.xlu0 %v178, 127
    %v2453 = vpop.permute.xlu0 %2452
    %2454 = vrot.lane.b32.xlu0 %v179, 127
    %v2455 = vpop.permute.xlu0 %2454
    %v2504 = vsub.f32 %v2264, %v2361
    %v2505 = vsub.f32 %v2265, %v2363
    %v2506 = vsub.f32 %v2266, %v2365
    %v2507 = vsub.f32 %v2267, %v2367
    %v2508 = vsub.f32 %v2268, %v2369
    %v2509 = vsub.f32 %v2269, %v2371
    %v2510 = vsub.f32 %v2270, %v2373
    %v2511 = vsub.f32 %v2271, %v2375
    %v2512 = vsub.f32 %v2272, %v2377
    %v2513 = vsub.f32 %v2273, %v2379
    %v2514 = vsub.f32 %v2274, %v2381
    %v2515 = vsub.f32 %v2275, %v2383
    %v2516 = vsub.f32 %v2276, %v2385
    %v2517 = vsub.f32 %v2277, %v2387
    %v2518 = vsub.f32 %v2278, %v2389
    %v2519 = vsub.f32 %v2279, %v2391
    %v2520 = vsub.f32 %v2280, %v2393
    %v2521 = vsub.f32 %v2281, %v2395
    %v2522 = vsub.f32 %v2282, %v2397
    %v2523 = vsub.f32 %v2283, %v2399
    %v2524 = vsub.f32 %v2284, %v2401
    %v2525 = vsub.f32 %v2285, %v2403
    %v2526 = vsub.f32 %v2286, %v2405
    %v2527 = vsub.f32 %v2287, %v2407
    %v2528 = vsub.f32 %v2288, %v2409
    %v2529 = vsub.f32 %v2289, %v2411
    %v2530 = vsub.f32 %v2290, %v2413
    %v2531 = vsub.f32 %v2291, %v2415
    %v2532 = vsub.f32 %v2292, %v2417
    %v2533 = vsub.f32 %v2293, %v2419
    %v2534 = vsub.f32 %v2294, %v2421
    %v2535 = vsub.f32 %v2295, %v2423
    %v2536 = vsub.f32 %v2296, %v2425
    %v2537 = vsub.f32 %v2297, %v2427
    %v2538 = vsub.f32 %v2298, %v2429
    %v2539 = vsub.f32 %v2299, %v2431
    %v2540 = vsub.f32 %v2300, %v2433
    %v2541 = vsub.f32 %v2301, %v2435
    %v2542 = vsub.f32 %v2302, %v2437
    %v2543 = vsub.f32 %v2303, %v2439
    %v2544 = vsub.f32 %v2304, %v2441
    %v2545 = vsub.f32 %v2305, %v2443
    %v2546 = vsub.f32 %v2306, %v2445
    %v2547 = vsub.f32 %v2307, %v2447
    %v2548 = vsub.f32 %v2308, %v2449
    %v2549 = vsub.f32 %v2309, %v2451
    %v2550 = vsub.f32 %v2310, %v2453
    %v2551 = vsub.f32 %v2311, %v2455
    %2600 = vrot.lane.b32.xlu0 %v1736, 126
    %v2601 = vpop.permute.xlu0 %2600
    %2602 = vrot.lane.b32.xlu0 %v1737, 126
    %v2603 = vpop.permute.xlu0 %2602
    %2604 = vrot.lane.b32.xlu0 %v1738, 126
    %v2605 = vpop.permute.xlu0 %2604
    %2606 = vrot.lane.b32.xlu0 %v1739, 126
    %v2607 = vpop.permute.xlu0 %2606
    %2608 = vrot.lane.b32.xlu0 %v1740, 126
    %v2609 = vpop.permute.xlu0 %2608
    %2610 = vrot.lane.b32.xlu0 %v1741, 126
    %v2611 = vpop.permute.xlu0 %2610
    %2612 = vrot.lane.b32.xlu0 %v1742, 126
    %v2613 = vpop.permute.xlu0 %2612
    %2614 = vrot.lane.b32.xlu0 %v1743, 126
    %v2615 = vpop.permute.xlu0 %2614
    %2616 = vrot.lane.b32.xlu0 %v1744, 126
    %v2617 = vpop.permute.xlu0 %2616
    %2618 = vrot.lane.b32.xlu0 %v1745, 126
    %v2619 = vpop.permute.xlu0 %2618
    %2620 = vrot.lane.b32.xlu0 %v1746, 126
    %v2621 = vpop.permute.xlu0 %2620
    %2622 = vrot.lane.b32.xlu0 %v1747, 126
    %v2623 = vpop.permute.xlu0 %2622
    %2624 = vrot.lane.b32.xlu0 %v1748, 126
    %v2625 = vpop.permute.xlu0 %2624
    %2626 = vrot.lane.b32.xlu0 %v1749, 126
    %v2627 = vpop.permute.xlu0 %2626
    %2628 = vrot.lane.b32.xlu0 %v1750, 126
    %v2629 = vpop.permute.xlu0 %2628
    %2630 = vrot.lane.b32.xlu0 %v1751, 126
    %v2631 = vpop.permute.xlu0 %2630
    %2632 = vrot.lane.b32.xlu0 %v1752, 126
    %v2633 = vpop.permute.xlu0 %2632
    %2634 = vrot.lane.b32.xlu0 %v1753, 126
    %v2635 = vpop.permute.xlu0 %2634
    %2636 = vrot.lane.b32.xlu0 %v1754, 126
    %v2637 = vpop.permute.xlu0 %2636
    %2638 = vrot.lane.b32.xlu0 %v1755, 126
    %v2639 = vpop.permute.xlu0 %2638
    %2640 = vrot.lane.b32.xlu0 %v1756, 126
    %v2641 = vpop.permute.xlu0 %2640
    %2642 = vrot.lane.b32.xlu0 %v1757, 126
    %v2643 = vpop.permute.xlu0 %2642
    %2644 = vrot.lane.b32.xlu0 %v1758, 126
    %v2645 = vpop.permute.xlu0 %2644
    %2646 = vrot.lane.b32.xlu0 %v1759, 126
    %v2647 = vpop.permute.xlu0 %2646
    %2648 = vrot.lane.b32.xlu0 %v1760, 126
    %v2649 = vpop.permute.xlu0 %2648
    %2650 = vrot.lane.b32.xlu0 %v1761, 126
    %v2651 = vpop.permute.xlu0 %2650
    %2652 = vrot.lane.b32.xlu0 %v1762, 126
    %v2653 = vpop.permute.xlu0 %2652
    %2654 = vrot.lane.b32.xlu0 %v1763, 126
    %v2655 = vpop.permute.xlu0 %2654
    %2656 = vrot.lane.b32.xlu0 %v1764, 126
    %v2657 = vpop.permute.xlu0 %2656
    %2658 = vrot.lane.b32.xlu0 %v1765, 126
    %v2659 = vpop.permute.xlu0 %2658
    %2660 = vrot.lane.b32.xlu0 %v1766, 126
    %v2661 = vpop.permute.xlu0 %2660
    %2662 = vrot.lane.b32.xlu0 %v1767, 126
    %v2663 = vpop.permute.xlu0 %2662
    %2664 = vrot.lane.b32.xlu0 %v1768, 126
    %v2665 = vpop.permute.xlu0 %2664
    %2666 = vrot.lane.b32.xlu0 %v1769, 126
    %v2667 = vpop.permute.xlu0 %2666
    %2668 = vrot.lane.b32.xlu0 %v1770, 126
    %v2669 = vpop.permute.xlu0 %2668
    %2670 = vrot.lane.b32.xlu0 %v1771, 126
    %v2671 = vpop.permute.xlu0 %2670
    %2672 = vrot.lane.b32.xlu0 %v1772, 126
    %v2673 = vpop.permute.xlu0 %2672
    %2674 = vrot.lane.b32.xlu0 %v1773, 126
    %v2675 = vpop.permute.xlu0 %2674
    %2676 = vrot.lane.b32.xlu0 %v1774, 126
    %v2677 = vpop.permute.xlu0 %2676
    %2678 = vrot.lane.b32.xlu0 %v1775, 126
    %v2679 = vpop.permute.xlu0 %2678
    %2680 = vrot.lane.b32.xlu0 %v1776, 126
    %v2681 = vpop.permute.xlu0 %2680
    %2682 = vrot.lane.b32.xlu0 %v1777, 126
    %v2683 = vpop.permute.xlu0 %2682
    %2684 = vrot.lane.b32.xlu0 %v1778, 126
    %v2685 = vpop.permute.xlu0 %2684
    %2686 = vrot.lane.b32.xlu0 %v1779, 126
    %v2687 = vpop.permute.xlu0 %2686
    %2688 = vrot.lane.b32.xlu0 %v1780, 126
    %v2689 = vpop.permute.xlu0 %2688
    %2690 = vrot.lane.b32.xlu0 %v1781, 126
    %v2691 = vpop.permute.xlu0 %2690
    %2692 = vrot.lane.b32.xlu0 %v1782, 126
    %v2693 = vpop.permute.xlu0 %2692
    %2694 = vrot.lane.b32.xlu0 %v1783, 126
    %v2695 = vpop.permute.xlu0 %2694
    %v2744 = vmul.f32 %v277, %v2601
    %v2745 = vmul.f32 %v278, %v2603
    %v2746 = vmul.f32 %v279, %v2605
    %v2747 = vmul.f32 %v280, %v2607
    %v2748 = vmul.f32 %v281, %v2609
    %v2749 = vmul.f32 %v282, %v2611
    %v2750 = vmul.f32 %v283, %v2613
    %v2751 = vmul.f32 %v284, %v2615
    %v2752 = vmul.f32 %v285, %v2617
    %v2753 = vmul.f32 %v286, %v2619
    %v2754 = vmul.f32 %v287, %v2621
    %v2755 = vmul.f32 %v288, %v2623
    %v2756 = vmul.f32 %v289, %v2625
    %v2757 = vmul.f32 %v290, %v2627
    %v2758 = vmul.f32 %v291, %v2629
    %v2759 = vmul.f32 %v292, %v2631
    %v2760 = vmul.f32 %v293, %v2633
    %v2761 = vmul.f32 %v294, %v2635
    %v2762 = vmul.f32 %v295, %v2637
    %v2763 = vmul.f32 %v296, %v2639
    %v2764 = vmul.f32 %v297, %v2641
    %v2765 = vmul.f32 %v298, %v2643
    %v2766 = vmul.f32 %v299, %v2645
    %v2767 = vmul.f32 %v300, %v2647
    %v2768 = vmul.f32 %v301, %v2649
    %v2769 = vmul.f32 %v302, %v2651
    %v2770 = vmul.f32 %v303, %v2653
    %v2771 = vmul.f32 %v304, %v2655
    %v2772 = vmul.f32 %v305, %v2657
    %v2773 = vmul.f32 %v306, %v2659
    %v2774 = vmul.f32 %v307, %v2661
    %v2775 = vmul.f32 %v308, %v2663
    %v2776 = vmul.f32 %v309, %v2665
    %v2777 = vmul.f32 %v310, %v2667
    %v2778 = vmul.f32 %v311, %v2669
    %v2779 = vmul.f32 %v312, %v2671
    %v2780 = vmul.f32 %v313, %v2673
    %v2781 = vmul.f32 %v314, %v2675
    %v2782 = vmul.f32 %v315, %v2677
    %v2783 = vmul.f32 %v316, %v2679
    %v2784 = vmul.f32 %v317, %v2681
    %v2785 = vmul.f32 %v318, %v2683
    %v2786 = vmul.f32 %v319, %v2685
    %v2787 = vmul.f32 %v320, %v2687
    %v2788 = vmul.f32 %v321, %v2689
    %v2789 = vmul.f32 %v322, %v2691
    %v2790 = vmul.f32 %v323, %v2693
    %v2791 = vmul.f32 %v324, %v2695
    %2792 = vrot.lane.b32.xlu0 %v132, 125
    %v2793 = vpop.permute.xlu0 %2792
    %2794 = vrot.lane.b32.xlu0 %v133, 125
    %v2795 = vpop.permute.xlu0 %2794
    %2796 = vrot.lane.b32.xlu0 %v134, 125
    %v2797 = vpop.permute.xlu0 %2796
    %2798 = vrot.lane.b32.xlu0 %v135, 125
    %v2799 = vpop.permute.xlu0 %2798
    %2800 = vrot.lane.b32.xlu0 %v136, 125
    %v2801 = vpop.permute.xlu0 %2800
    %2802 = vrot.lane.b32.xlu0 %v137, 125
    %v2803 = vpop.permute.xlu0 %2802
    %2804 = vrot.lane.b32.xlu0 %v138, 125
    %v2805 = vpop.permute.xlu0 %2804
    %2806 = vrot.lane.b32.xlu0 %v139, 125
    %v2807 = vpop.permute.xlu0 %2806
    %2808 = vrot.lane.b32.xlu0 %v140, 125
    %v2809 = vpop.permute.xlu0 %2808
    %2810 = vrot.lane.b32.xlu0 %v141, 125
    %v2811 = vpop.permute.xlu0 %2810
    %2812 = vrot.lane.b32.xlu0 %v142, 125
    %v2813 = vpop.permute.xlu0 %2812
    %2814 = vrot.lane.b32.xlu0 %v143, 125
    %v2815 = vpop.permute.xlu0 %2814
    %2816 = vrot.lane.b32.xlu0 %v144, 125
    %v2817 = vpop.permute.xlu0 %2816
    %2818 = vrot.lane.b32.xlu0 %v145, 125
    %v2819 = vpop.permute.xlu0 %2818
    %2820 = vrot.lane.b32.xlu0 %v146, 125
    %v2821 = vpop.permute.xlu0 %2820
    %2822 = vrot.lane.b32.xlu0 %v147, 125
    %v2823 = vpop.permute.xlu0 %2822
    %2824 = vrot.lane.b32.xlu0 %v148, 125
    %v2825 = vpop.permute.xlu0 %2824
    %2826 = vrot.lane.b32.xlu0 %v149, 125
    %v2827 = vpop.permute.xlu0 %2826
    %2828 = vrot.lane.b32.xlu0 %v150, 125
    %v2829 = vpop.permute.xlu0 %2828
    %2830 = vrot.lane.b32.xlu0 %v151, 125
    %v2831 = vpop.permute.xlu0 %2830
    %2832 = vrot.lane.b32.xlu0 %v152, 125
    %v2833 = vpop.permute.xlu0 %2832
    %2834 = vrot.lane.b32.xlu0 %v153, 125
    %v2835 = vpop.permute.xlu0 %2834
    %2836 = vrot.lane.b32.xlu0 %v154, 125
    %v2837 = vpop.permute.xlu0 %2836
    %2838 = vrot.lane.b32.xlu0 %v155, 125
    %v2839 = vpop.permute.xlu0 %2838
    %2840 = vrot.lane.b32.xlu0 %v156, 125
    %v2841 = vpop.permute.xlu0 %2840
    %2842 = vrot.lane.b32.xlu0 %v157, 125
    %v2843 = vpop.permute.xlu0 %2842
    %2844 = vrot.lane.b32.xlu0 %v158, 125
    %v2845 = vpop.permute.xlu0 %2844
    %2846 = vrot.lane.b32.xlu0 %v159, 125
    %v2847 = vpop.permute.xlu0 %2846
    %2848 = vrot.lane.b32.xlu0 %v160, 125
    %v2849 = vpop.permute.xlu0 %2848
    %2850 = vrot.lane.b32.xlu0 %v161, 125
    %v2851 = vpop.permute.xlu0 %2850
    %2852 = vrot.lane.b32.xlu0 %v162, 125
    %v2853 = vpop.permute.xlu0 %2852
    %2854 = vrot.lane.b32.xlu0 %v163, 125
    %v2855 = vpop.permute.xlu0 %2854
    %2856 = vrot.lane.b32.xlu0 %v164, 125
    %v2857 = vpop.permute.xlu0 %2856
    %2858 = vrot.lane.b32.xlu0 %v165, 125
    %v2859 = vpop.permute.xlu0 %2858
    %2860 = vrot.lane.b32.xlu0 %v166, 125
    %v2861 = vpop.permute.xlu0 %2860
    %2862 = vrot.lane.b32.xlu0 %v167, 125
    %v2863 = vpop.permute.xlu0 %2862
    %2864 = vrot.lane.b32.xlu0 %v168, 125
    %v2865 = vpop.permute.xlu0 %2864
    %2866 = vrot.lane.b32.xlu0 %v169, 125
    %v2867 = vpop.permute.xlu0 %2866
    %2868 = vrot.lane.b32.xlu0 %v170, 125
    %v2869 = vpop.permute.xlu0 %2868
    %2870 = vrot.lane.b32.xlu0 %v171, 125
    %v2871 = vpop.permute.xlu0 %2870
    %2872 = vrot.lane.b32.xlu0 %v172, 125
    %v2873 = vpop.permute.xlu0 %2872
    %2874 = vrot.lane.b32.xlu0 %v173, 125
    %v2875 = vpop.permute.xlu0 %2874
    %2876 = vrot.lane.b32.xlu0 %v174, 125
    %v2877 = vpop.permute.xlu0 %2876
    %2878 = vrot.lane.b32.xlu0 %v175, 125
    %v2879 = vpop.permute.xlu0 %2878
    %2880 = vrot.lane.b32.xlu0 %v176, 125
    %v2881 = vpop.permute.xlu0 %2880
    %2882 = vrot.lane.b32.xlu0 %v177, 125
    %v2883 = vpop.permute.xlu0 %2882
    %2884 = vrot.lane.b32.xlu0 %v178, 125
    %v2885 = vpop.permute.xlu0 %2884
    %2886 = vrot.lane.b32.xlu0 %v179, 125
    %v2887 = vpop.permute.xlu0 %2886
    %v2936 = vsub.f32 %v2744, %v2793
    %v2937 = vsub.f32 %v2745, %v2795
    %v2938 = vsub.f32 %v2746, %v2797
    %v2939 = vsub.f32 %v2747, %v2799
    %v2940 = vsub.f32 %v2748, %v2801
    %v2941 = vsub.f32 %v2749, %v2803
    %v2942 = vsub.f32 %v2750, %v2805
    %v2943 = vsub.f32 %v2751, %v2807
    %v2944 = vsub.f32 %v2752, %v2809
    %v2945 = vsub.f32 %v2753, %v2811
    %v2946 = vsub.f32 %v2754, %v2813
    %v2947 = vsub.f32 %v2755, %v2815
    %v2948 = vsub.f32 %v2756, %v2817
    %v2949 = vsub.f32 %v2757, %v2819
    %v2950 = vsub.f32 %v2758, %v2821
    %v2951 = vsub.f32 %v2759, %v2823
    %v2952 = vsub.f32 %v2760, %v2825
    %v2953 = vsub.f32 %v2761, %v2827
    %v2954 = vsub.f32 %v2762, %v2829
    %v2955 = vsub.f32 %v2763, %v2831
    %v2956 = vsub.f32 %v2764, %v2833
    %v2957 = vsub.f32 %v2765, %v2835
    %v2958 = vsub.f32 %v2766, %v2837
    %v2959 = vsub.f32 %v2767, %v2839
    %v2960 = vsub.f32 %v2768, %v2841
    %v2961 = vsub.f32 %v2769, %v2843
    %v2962 = vsub.f32 %v2770, %v2845
    %v2963 = vsub.f32 %v2771, %v2847
    %v2964 = vsub.f32 %v2772, %v2849
    %v2965 = vsub.f32 %v2773, %v2851
    %v2966 = vsub.f32 %v2774, %v2853
    %v2967 = vsub.f32 %v2775, %v2855
    %v2968 = vsub.f32 %v2776, %v2857
    %v2969 = vsub.f32 %v2777, %v2859
    %v2970 = vsub.f32 %v2778, %v2861
    %v2971 = vsub.f32 %v2779, %v2863
    %v2972 = vsub.f32 %v2780, %v2865
    %v2973 = vsub.f32 %v2781, %v2867
    %v2974 = vsub.f32 %v2782, %v2869
    %v2975 = vsub.f32 %v2783, %v2871
    %v2976 = vsub.f32 %v2784, %v2873
    %v2977 = vsub.f32 %v2785, %v2875
    %v2978 = vsub.f32 %v2786, %v2877
    %v2979 = vsub.f32 %v2787, %v2879
    %v2980 = vsub.f32 %v2788, %v2881
    %v2981 = vsub.f32 %v2789, %v2883
    %v2982 = vsub.f32 %v2790, %v2885
    %v2983 = vsub.f32 %v2791, %v2887
    %3032 = vrot.lane.b32.xlu0 %v1976, 125
    %v3033 = vpop.permute.xlu0 %3032
    %3034 = vrot.lane.b32.xlu0 %v1977, 125
    %v3035 = vpop.permute.xlu0 %3034
    %3036 = vrot.lane.b32.xlu0 %v1978, 125
    %v3037 = vpop.permute.xlu0 %3036
    %3038 = vrot.lane.b32.xlu0 %v1979, 125
    %v3039 = vpop.permute.xlu0 %3038
    %3040 = vrot.lane.b32.xlu0 %v1980, 125
    %v3041 = vpop.permute.xlu0 %3040
    %3042 = vrot.lane.b32.xlu0 %v1981, 125
    %v3043 = vpop.permute.xlu0 %3042
    %3044 = vrot.lane.b32.xlu0 %v1982, 125
    %v3045 = vpop.permute.xlu0 %3044
    %3046 = vrot.lane.b32.xlu0 %v1983, 125
    %v3047 = vpop.permute.xlu0 %3046
    %3048 = vrot.lane.b32.xlu0 %v1984, 125
    %v3049 = vpop.permute.xlu0 %3048
    %3050 = vrot.lane.b32.xlu0 %v1985, 125
    %v3051 = vpop.permute.xlu0 %3050
    %3052 = vrot.lane.b32.xlu0 %v1986, 125
    %v3053 = vpop.permute.xlu0 %3052
    %3054 = vrot.lane.b32.xlu0 %v1987, 125
    %v3055 = vpop.permute.xlu0 %3054
    %3056 = vrot.lane.b32.xlu0 %v1988, 125
    %v3057 = vpop.permute.xlu0 %3056
    %3058 = vrot.lane.b32.xlu0 %v1989, 125
    %v3059 = vpop.permute.xlu0 %3058
    %3060 = vrot.lane.b32.xlu0 %v1990, 125
    %v3061 = vpop.permute.xlu0 %3060
    %3062 = vrot.lane.b32.xlu0 %v1991, 125
    %v3063 = vpop.permute.xlu0 %3062
    %3064 = vrot.lane.b32.xlu0 %v1992, 125
    %v3065 = vpop.permute.xlu0 %3064
    %3066 = vrot.lane.b32.xlu0 %v1993, 125
    %v3067 = vpop.permute.xlu0 %3066
    %3068 = vrot.lane.b32.xlu0 %v1994, 125
    %v3069 = vpop.permute.xlu0 %3068
    %3070 = vrot.lane.b32.xlu0 %v1995, 125
    %v3071 = vpop.permute.xlu0 %3070
    %3072 = vrot.lane.b32.xlu0 %v1996, 125
    %v3073 = vpop.permute.xlu0 %3072
    %3074 = vrot.lane.b32.xlu0 %v1997, 125
    %v3075 = vpop.permute.xlu0 %3074
    %3076 = vrot.lane.b32.xlu0 %v1998, 125
    %v3077 = vpop.permute.xlu0 %3076
    %3078 = vrot.lane.b32.xlu0 %v1999, 125
    %v3079 = vpop.permute.xlu0 %3078
    %3080 = vrot.lane.b32.xlu0 %v2000, 125
    %v3081 = vpop.permute.xlu0 %3080
    %3082 = vrot.lane.b32.xlu0 %v2001, 125
    %v3083 = vpop.permute.xlu0 %3082
    %3084 = vrot.lane.b32.xlu0 %v2002, 125
    %v3085 = vpop.permute.xlu0 %3084
    %3086 = vrot.lane.b32.xlu0 %v2003, 125
    %v3087 = vpop.permute.xlu0 %3086
    %3088 = vrot.lane.b32.xlu0 %v2004, 125
    %v3089 = vpop.permute.xlu0 %3088
    %3090 = vrot.lane.b32.xlu0 %v2005, 125
    %v3091 = vpop.permute.xlu0 %3090
    %3092 = vrot.lane.b32.xlu0 %v2006, 125
    %v3093 = vpop.permute.xlu0 %3092
    %3094 = vrot.lane.b32.xlu0 %v2007, 125
    %v3095 = vpop.permute.xlu0 %3094
    %3096 = vrot.lane.b32.xlu0 %v2008, 125
    %v3097 = vpop.permute.xlu0 %3096
    %3098 = vrot.lane.b32.xlu0 %v2009, 125
    %v3099 = vpop.permute.xlu0 %3098
    %3100 = vrot.lane.b32.xlu0 %v2010, 125
    %v3101 = vpop.permute.xlu0 %3100
    %3102 = vrot.lane.b32.xlu0 %v2011, 125
    %v3103 = vpop.permute.xlu0 %3102
    %3104 = vrot.lane.b32.xlu0 %v2012, 125
    %v3105 = vpop.permute.xlu0 %3104
    %3106 = vrot.lane.b32.xlu0 %v2013, 125
    %v3107 = vpop.permute.xlu0 %3106
    %3108 = vrot.lane.b32.xlu0 %v2014, 125
    %v3109 = vpop.permute.xlu0 %3108
    %3110 = vrot.lane.b32.xlu0 %v2015, 125
    %v3111 = vpop.permute.xlu0 %3110
    %3112 = vrot.lane.b32.xlu0 %v2016, 125
    %v3113 = vpop.permute.xlu0 %3112
    %3114 = vrot.lane.b32.xlu0 %v2017, 125
    %v3115 = vpop.permute.xlu0 %3114
    %3116 = vrot.lane.b32.xlu0 %v2018, 125
    %v3117 = vpop.permute.xlu0 %3116
    %3118 = vrot.lane.b32.xlu0 %v2019, 125
    %v3119 = vpop.permute.xlu0 %3118
    %3120 = vrot.lane.b32.xlu0 %v2020, 125
    %v3121 = vpop.permute.xlu0 %3120
    %3122 = vrot.lane.b32.xlu0 %v2021, 125
    %v3123 = vpop.permute.xlu0 %3122
    %3124 = vrot.lane.b32.xlu0 %v2022, 125
    %v3125 = vpop.permute.xlu0 %3124
    %3126 = vrot.lane.b32.xlu0 %v2023, 125
    %v3127 = vpop.permute.xlu0 %3126
    %v3176 = vmul.f32 %v277, %v3033
    %v3177 = vmul.f32 %v278, %v3035
    %v3178 = vmul.f32 %v279, %v3037
    %v3179 = vmul.f32 %v280, %v3039
    %v3180 = vmul.f32 %v281, %v3041
    %v3181 = vmul.f32 %v282, %v3043
    %v3182 = vmul.f32 %v283, %v3045
    %v3183 = vmul.f32 %v284, %v3047
    %v3184 = vmul.f32 %v285, %v3049
    %v3185 = vmul.f32 %v286, %v3051
    %v3186 = vmul.f32 %v287, %v3053
    %v3187 = vmul.f32 %v288, %v3055
    %v3188 = vmul.f32 %v289, %v3057
    %v3189 = vmul.f32 %v290, %v3059
    %v3190 = vmul.f32 %v291, %v3061
    %v3191 = vmul.f32 %v292, %v3063
    %v3192 = vmul.f32 %v293, %v3065
    %v3193 = vmul.f32 %v294, %v3067
    %v3194 = vmul.f32 %v295, %v3069
    %v3195 = vmul.f32 %v296, %v3071
    %v3196 = vmul.f32 %v297, %v3073
    %v3197 = vmul.f32 %v298, %v3075
    %v3198 = vmul.f32 %v299, %v3077
    %v3199 = vmul.f32 %v300, %v3079
    %v3200 = vmul.f32 %v301, %v3081
    %v3201 = vmul.f32 %v302, %v3083
    %v3202 = vmul.f32 %v303, %v3085
    %v3203 = vmul.f32 %v304, %v3087
    %v3204 = vmul.f32 %v305, %v3089
    %v3205 = vmul.f32 %v306, %v3091
    %v3206 = vmul.f32 %v307, %v3093
    %v3207 = vmul.f32 %v308, %v3095
    %v3208 = vmul.f32 %v309, %v3097
    %v3209 = vmul.f32 %v310, %v3099
    %v3210 = vmul.f32 %v311, %v3101
    %v3211 = vmul.f32 %v312, %v3103
    %v3212 = vmul.f32 %v313, %v3105
    %v3213 = vmul.f32 %v314, %v3107
    %v3214 = vmul.f32 %v315, %v3109
    %v3215 = vmul.f32 %v316, %v3111
    %v3216 = vmul.f32 %v317, %v3113
    %v3217 = vmul.f32 %v318, %v3115
    %v3218 = vmul.f32 %v319, %v3117
    %v3219 = vmul.f32 %v320, %v3119
    %v3220 = vmul.f32 %v321, %v3121
    %v3221 = vmul.f32 %v322, %v3123
    %v3222 = vmul.f32 %v323, %v3125
    %v3223 = vmul.f32 %v324, %v3127
    %3224 = vrot.lane.b32.xlu0 %v132, 124
    %v3225 = vpop.permute.xlu0 %3224
    %3226 = vrot.lane.b32.xlu0 %v133, 124
    %v3227 = vpop.permute.xlu0 %3226
    %3228 = vrot.lane.b32.xlu0 %v134, 124
    %v3229 = vpop.permute.xlu0 %3228
    %3230 = vrot.lane.b32.xlu0 %v135, 124
    %v3231 = vpop.permute.xlu0 %3230
    %3232 = vrot.lane.b32.xlu0 %v136, 124
    %v3233 = vpop.permute.xlu0 %3232
    %3234 = vrot.lane.b32.xlu0 %v137, 124
    %v3235 = vpop.permute.xlu0 %3234
    %3236 = vrot.lane.b32.xlu0 %v138, 124
    %v3237 = vpop.permute.xlu0 %3236
    %3238 = vrot.lane.b32.xlu0 %v139, 124
    %v3239 = vpop.permute.xlu0 %3238
    %3240 = vrot.lane.b32.xlu0 %v140, 124
    %v3241 = vpop.permute.xlu0 %3240
    %3242 = vrot.lane.b32.xlu0 %v141, 124
    %v3243 = vpop.permute.xlu0 %3242
    %3244 = vrot.lane.b32.xlu0 %v142, 124
    %v3245 = vpop.permute.xlu0 %3244
    %3246 = vrot.lane.b32.xlu0 %v143, 124
    %v3247 = vpop.permute.xlu0 %3246
    %3248 = vrot.lane.b32.xlu0 %v144, 124
    %v3249 = vpop.permute.xlu0 %3248
    %3250 = vrot.lane.b32.xlu0 %v145, 124
    %v3251 = vpop.permute.xlu0 %3250
    %3252 = vrot.lane.b32.xlu0 %v146, 124
    %v3253 = vpop.permute.xlu0 %3252
    %3254 = vrot.lane.b32.xlu0 %v147, 124
    %v3255 = vpop.permute.xlu0 %3254
    %3256 = vrot.lane.b32.xlu0 %v148, 124
    %v3257 = vpop.permute.xlu0 %3256
    %3258 = vrot.lane.b32.xlu0 %v149, 124
    %v3259 = vpop.permute.xlu0 %3258
    %3260 = vrot.lane.b32.xlu0 %v150, 124
    %v3261 = vpop.permute.xlu0 %3260
    %3262 = vrot.lane.b32.xlu0 %v151, 124
    %v3263 = vpop.permute.xlu0 %3262
    %3264 = vrot.lane.b32.xlu0 %v152, 124
    %v3265 = vpop.permute.xlu0 %3264
    %3266 = vrot.lane.b32.xlu0 %v153, 124
    %v3267 = vpop.permute.xlu0 %3266
    %3268 = vrot.lane.b32.xlu0 %v154, 124
    %v3269 = vpop.permute.xlu0 %3268
    %3270 = vrot.lane.b32.xlu0 %v155, 124
    %v3271 = vpop.permute.xlu0 %3270
    %3272 = vrot.lane.b32.xlu0 %v156, 124
    %v3273 = vpop.permute.xlu0 %3272
    %3274 = vrot.lane.b32.xlu0 %v157, 124
    %v3275 = vpop.permute.xlu0 %3274
    %3276 = vrot.lane.b32.xlu0 %v158, 124
    %v3277 = vpop.permute.xlu0 %3276
    %3278 = vrot.lane.b32.xlu0 %v159, 124
    %v3279 = vpop.permute.xlu0 %3278
    %3280 = vrot.lane.b32.xlu0 %v160, 124
    %v3281 = vpop.permute.xlu0 %3280
    %3282 = vrot.lane.b32.xlu0 %v161, 124
    %v3283 = vpop.permute.xlu0 %3282
    %3284 = vrot.lane.b32.xlu0 %v162, 124
    %v3285 = vpop.permute.xlu0 %3284
    %3286 = vrot.lane.b32.xlu0 %v163, 124
    %v3287 = vpop.permute.xlu0 %3286
    %3288 = vrot.lane.b32.xlu0 %v164, 124
    %v3289 = vpop.permute.xlu0 %3288
    %3290 = vrot.lane.b32.xlu0 %v165, 124
    %v3291 = vpop.permute.xlu0 %3290
    %3292 = vrot.lane.b32.xlu0 %v166, 124
    %v3293 = vpop.permute.xlu0 %3292
    %3294 = vrot.lane.b32.xlu0 %v167, 124
    %v3295 = vpop.permute.xlu0 %3294
    %3296 = vrot.lane.b32.xlu0 %v168, 124
    %v3297 = vpop.permute.xlu0 %3296
    %3298 = vrot.lane.b32.xlu0 %v169, 124
    %v3299 = vpop.permute.xlu0 %3298
    %3300 = vrot.lane.b32.xlu0 %v170, 124
    %v3301 = vpop.permute.xlu0 %3300
    %3302 = vrot.lane.b32.xlu0 %v171, 124
    %v3303 = vpop.permute.xlu0 %3302
    %3304 = vrot.lane.b32.xlu0 %v172, 124
    %v3305 = vpop.permute.xlu0 %3304
    %3306 = vrot.lane.b32.xlu0 %v173, 124
    %v3307 = vpop.permute.xlu0 %3306
    %3308 = vrot.lane.b32.xlu0 %v174, 124
    %v3309 = vpop.permute.xlu0 %3308
    %3310 = vrot.lane.b32.xlu0 %v175, 124
    %v3311 = vpop.permute.xlu0 %3310
    %3312 = vrot.lane.b32.xlu0 %v176, 124
    %v3313 = vpop.permute.xlu0 %3312
    %3314 = vrot.lane.b32.xlu0 %v177, 124
    %v3315 = vpop.permute.xlu0 %3314
    %3316 = vrot.lane.b32.xlu0 %v178, 124
    %v3317 = vpop.permute.xlu0 %3316
    %3318 = vrot.lane.b32.xlu0 %v179, 124
    %v3319 = vpop.permute.xlu0 %3318
    %v3368 = vsub.f32 %v3176, %v3225
    %v3369 = vsub.f32 %v3177, %v3227
    %v3370 = vsub.f32 %v3178, %v3229
    %v3371 = vsub.f32 %v3179, %v3231
    %v3372 = vsub.f32 %v3180, %v3233
    %v3373 = vsub.f32 %v3181, %v3235
    %v3374 = vsub.f32 %v3182, %v3237
    %v3375 = vsub.f32 %v3183, %v3239
    %v3376 = vsub.f32 %v3184, %v3241
    %v3377 = vsub.f32 %v3185, %v3243
    %v3378 = vsub.f32 %v3186, %v3245
    %v3379 = vsub.f32 %v3187, %v3247
    %v3380 = vsub.f32 %v3188, %v3249
    %v3381 = vsub.f32 %v3189, %v3251
    %v3382 = vsub.f32 %v3190, %v3253
    %v3383 = vsub.f32 %v3191, %v3255
    %v3384 = vsub.f32 %v3192, %v3257
    %v3385 = vsub.f32 %v3193, %v3259
    %v3386 = vsub.f32 %v3194, %v3261
    %v3387 = vsub.f32 %v3195, %v3263
    %v3388 = vsub.f32 %v3196, %v3265
    %v3389 = vsub.f32 %v3197, %v3267
    %v3390 = vsub.f32 %v3198, %v3269
    %v3391 = vsub.f32 %v3199, %v3271
    %v3392 = vsub.f32 %v3200, %v3273
    %v3393 = vsub.f32 %v3201, %v3275
    %v3394 = vsub.f32 %v3202, %v3277
    %v3395 = vsub.f32 %v3203, %v3279
    %v3396 = vsub.f32 %v3204, %v3281
    %v3397 = vsub.f32 %v3205, %v3283
    %v3398 = vsub.f32 %v3206, %v3285
    %v3399 = vsub.f32 %v3207, %v3287
    %v3400 = vsub.f32 %v3208, %v3289
    %v3401 = vsub.f32 %v3209, %v3291
    %v3402 = vsub.f32 %v3210, %v3293
    %v3403 = vsub.f32 %v3211, %v3295
    %v3404 = vsub.f32 %v3212, %v3297
    %v3405 = vsub.f32 %v3213, %v3299
    %v3406 = vsub.f32 %v3214, %v3301
    %v3407 = vsub.f32 %v3215, %v3303
    %v3408 = vsub.f32 %v3216, %v3305
    %v3409 = vsub.f32 %v3217, %v3307
    %v3410 = vsub.f32 %v3218, %v3309
    %v3411 = vsub.f32 %v3219, %v3311
    %v3412 = vsub.f32 %v3220, %v3313
    %v3413 = vsub.f32 %v3221, %v3315
    %v3414 = vsub.f32 %v3222, %v3317
    %v3415 = vsub.f32 %v3223, %v3319
    %v3416 = vmul.f32 %v2504, %v2504
    %v3417 = vmul.f32 %v2505, %v2505
    %v3418 = vmul.f32 %v2506, %v2506
    %v3419 = vmul.f32 %v2507, %v2507
    %v3420 = vmul.f32 %v2508, %v2508
    %v3421 = vmul.f32 %v2509, %v2509
    %v3422 = vmul.f32 %v2510, %v2510
    %v3423 = vmul.f32 %v2511, %v2511
    %v3424 = vmul.f32 %v2512, %v2512
    %v3425 = vmul.f32 %v2513, %v2513
    %v3426 = vmul.f32 %v2514, %v2514
    %v3427 = vmul.f32 %v2515, %v2515
    %v3428 = vmul.f32 %v2516, %v2516
    %v3429 = vmul.f32 %v2517, %v2517
    %v3430 = vmul.f32 %v2518, %v2518
    %v3431 = vmul.f32 %v2519, %v2519
    %v3432 = vmul.f32 %v2520, %v2520
    %v3433 = vmul.f32 %v2521, %v2521
    %v3434 = vmul.f32 %v2522, %v2522
    %v3435 = vmul.f32 %v2523, %v2523
    %v3436 = vmul.f32 %v2524, %v2524
    %v3437 = vmul.f32 %v2525, %v2525
    %v3438 = vmul.f32 %v2526, %v2526
    %v3439 = vmul.f32 %v2527, %v2527
    %v3440 = vmul.f32 %v2528, %v2528
    %v3441 = vmul.f32 %v2529, %v2529
    %v3442 = vmul.f32 %v2530, %v2530
    %v3443 = vmul.f32 %v2531, %v2531
    %v3444 = vmul.f32 %v2532, %v2532
    %v3445 = vmul.f32 %v2533, %v2533
    %v3446 = vmul.f32 %v2534, %v2534
    %v3447 = vmul.f32 %v2535, %v2535
    %v3448 = vmul.f32 %v2536, %v2536
    %v3449 = vmul.f32 %v2537, %v2537
    %v3450 = vmul.f32 %v2538, %v2538
    %v3451 = vmul.f32 %v2539, %v2539
    %v3452 = vmul.f32 %v2540, %v2540
    %v3453 = vmul.f32 %v2541, %v2541
    %v3454 = vmul.f32 %v2542, %v2542
    %v3455 = vmul.f32 %v2543, %v2543
    %v3456 = vmul.f32 %v2544, %v2544
    %v3457 = vmul.f32 %v2545, %v2545
    %v3458 = vmul.f32 %v2546, %v2546
    %v3459 = vmul.f32 %v2547, %v2547
    %v3460 = vmul.f32 %v2548, %v2548
    %v3461 = vmul.f32 %v2549, %v2549
    %v3462 = vmul.f32 %v2550, %v2550
    %v3463 = vmul.f32 %v2551, %v2551
    %vm3464 = vcmask 15360
    %v3465 = vsel %vm3464, %v3416, 0.0
    %3466 = vadd.xlane.f32.xlu0 %v3465
    %v3467 = vpop.xlane.xlu0 %3466
    %v3468 = vsel %vm3464, %v3417, 0.0
    %3469 = vadd.xlane.f32.xlu0 %v3468
    %v3470 = vpop.xlane.xlu0 %3469
    %v3471 = vsel %vm3464, %v3418, 0.0
    %3472 = vadd.xlane.f32.xlu0 %v3471
    %v3473 = vpop.xlane.xlu0 %3472
    %v3474 = vsel %vm3464, %v3419, 0.0
    %3475 = vadd.xlane.f32.xlu0 %v3474
    %v3476 = vpop.xlane.xlu0 %3475
    %v3477 = vsel %vm3464, %v3420, 0.0
    %3478 = vadd.xlane.f32.xlu0 %v3477
    %v3479 = vpop.xlane.xlu0 %3478
    %v3480 = vsel %vm3464, %v3421, 0.0
    %3481 = vadd.xlane.f32.xlu0 %v3480
    %v3482 = vpop.xlane.xlu0 %3481
    %v3483 = vsel %vm3464, %v3422, 0.0
    %3484 = vadd.xlane.f32.xlu0 %v3483
    %v3485 = vpop.xlane.xlu0 %3484
    %v3486 = vsel %vm3464, %v3423, 0.0
    %3487 = vadd.xlane.f32.xlu0 %v3486
    %v3488 = vpop.xlane.xlu0 %3487
    %v3489 = vsel %vm3464, %v3424, 0.0
    %3490 = vadd.xlane.f32.xlu0 %v3489
    %v3491 = vpop.xlane.xlu0 %3490
    %v3492 = vsel %vm3464, %v3425, 0.0
    %3493 = vadd.xlane.f32.xlu0 %v3492
    %v3494 = vpop.xlane.xlu0 %3493
    %v3495 = vsel %vm3464, %v3426, 0.0
    %3496 = vadd.xlane.f32.xlu0 %v3495
    %v3497 = vpop.xlane.xlu0 %3496
    %v3498 = vsel %vm3464, %v3427, 0.0
    %3499 = vadd.xlane.f32.xlu0 %v3498
    %v3500 = vpop.xlane.xlu0 %3499
    %v3501 = vsel %vm3464, %v3428, 0.0
    %3502 = vadd.xlane.f32.xlu0 %v3501
    %v3503 = vpop.xlane.xlu0 %3502
    %v3504 = vsel %vm3464, %v3429, 0.0
    %3505 = vadd.xlane.f32.xlu0 %v3504
    %v3506 = vpop.xlane.xlu0 %3505
    %v3507 = vsel %vm3464, %v3430, 0.0
    %3508 = vadd.xlane.f32.xlu0 %v3507
    %v3509 = vpop.xlane.xlu0 %3508
    %v3510 = vsel %vm3464, %v3431, 0.0
    %3511 = vadd.xlane.f32.xlu0 %v3510
    %v3512 = vpop.xlane.xlu0 %3511
    %v3513 = vsel %vm3464, %v3432, 0.0
    %3514 = vadd.xlane.f32.xlu0 %v3513
    %v3515 = vpop.xlane.xlu0 %3514
    %v3516 = vsel %vm3464, %v3433, 0.0
    %3517 = vadd.xlane.f32.xlu0 %v3516
    %v3518 = vpop.xlane.xlu0 %3517
    %v3519 = vsel %vm3464, %v3434, 0.0
    %3520 = vadd.xlane.f32.xlu0 %v3519
    %v3521 = vpop.xlane.xlu0 %3520
    %v3522 = vsel %vm3464, %v3435, 0.0
    %3523 = vadd.xlane.f32.xlu0 %v3522
    %v3524 = vpop.xlane.xlu0 %3523
    %v3525 = vsel %vm3464, %v3436, 0.0
    %3526 = vadd.xlane.f32.xlu0 %v3525
    %v3527 = vpop.xlane.xlu0 %3526
    %v3528 = vsel %vm3464, %v3437, 0.0
    %3529 = vadd.xlane.f32.xlu0 %v3528
    %v3530 = vpop.xlane.xlu0 %3529
    %v3531 = vsel %vm3464, %v3438, 0.0
    %3532 = vadd.xlane.f32.xlu0 %v3531
    %v3533 = vpop.xlane.xlu0 %3532
    %v3534 = vsel %vm3464, %v3439, 0.0
    %3535 = vadd.xlane.f32.xlu0 %v3534
    %v3536 = vpop.xlane.xlu0 %3535
    %v3537 = vsel %vm3464, %v3440, 0.0
    %3538 = vadd.xlane.f32.xlu0 %v3537
    %v3539 = vpop.xlane.xlu0 %3538
    %v3540 = vsel %vm3464, %v3441, 0.0
    %3541 = vadd.xlane.f32.xlu0 %v3540
    %v3542 = vpop.xlane.xlu0 %3541
    %v3543 = vsel %vm3464, %v3442, 0.0
    %3544 = vadd.xlane.f32.xlu0 %v3543
    %v3545 = vpop.xlane.xlu0 %3544
    %v3546 = vsel %vm3464, %v3443, 0.0
    %3547 = vadd.xlane.f32.xlu0 %v3546
    %v3548 = vpop.xlane.xlu0 %3547
    %v3549 = vsel %vm3464, %v3444, 0.0
    %3550 = vadd.xlane.f32.xlu0 %v3549
    %v3551 = vpop.xlane.xlu0 %3550
    %v3552 = vsel %vm3464, %v3445, 0.0
    %3553 = vadd.xlane.f32.xlu0 %v3552
    %v3554 = vpop.xlane.xlu0 %3553
    %v3555 = vsel %vm3464, %v3446, 0.0
    %3556 = vadd.xlane.f32.xlu0 %v3555
    %v3557 = vpop.xlane.xlu0 %3556
    %v3558 = vsel %vm3464, %v3447, 0.0
    %3559 = vadd.xlane.f32.xlu0 %v3558
    %v3560 = vpop.xlane.xlu0 %3559
    %v3561 = vsel %vm3464, %v3448, 0.0
    %3562 = vadd.xlane.f32.xlu0 %v3561
    %v3563 = vpop.xlane.xlu0 %3562
    %v3564 = vsel %vm3464, %v3449, 0.0
    %3565 = vadd.xlane.f32.xlu0 %v3564
    %v3566 = vpop.xlane.xlu0 %3565
    %v3567 = vsel %vm3464, %v3450, 0.0
    %3568 = vadd.xlane.f32.xlu0 %v3567
    %v3569 = vpop.xlane.xlu0 %3568
    %v3570 = vsel %vm3464, %v3451, 0.0
    %3571 = vadd.xlane.f32.xlu0 %v3570
    %v3572 = vpop.xlane.xlu0 %3571
    %v3573 = vsel %vm3464, %v3452, 0.0
    %3574 = vadd.xlane.f32.xlu0 %v3573
    %v3575 = vpop.xlane.xlu0 %3574
    %v3576 = vsel %vm3464, %v3453, 0.0
    %3577 = vadd.xlane.f32.xlu0 %v3576
    %v3578 = vpop.xlane.xlu0 %3577
    %v3579 = vsel %vm3464, %v3454, 0.0
    %3580 = vadd.xlane.f32.xlu0 %v3579
    %v3581 = vpop.xlane.xlu0 %3580
    %v3582 = vsel %vm3464, %v3455, 0.0
    %3583 = vadd.xlane.f32.xlu0 %v3582
    %v3584 = vpop.xlane.xlu0 %3583
    %v3585 = vsel %vm3464, %v3456, 0.0
    %3586 = vadd.xlane.f32.xlu0 %v3585
    %v3587 = vpop.xlane.xlu0 %3586
    %v3588 = vsel %vm3464, %v3457, 0.0
    %3589 = vadd.xlane.f32.xlu0 %v3588
    %v3590 = vpop.xlane.xlu0 %3589
    %v3591 = vsel %vm3464, %v3458, 0.0
    %3592 = vadd.xlane.f32.xlu0 %v3591
    %v3593 = vpop.xlane.xlu0 %3592
    %v3594 = vsel %vm3464, %v3459, 0.0
    %3595 = vadd.xlane.f32.xlu0 %v3594
    %v3596 = vpop.xlane.xlu0 %3595
    %v3597 = vsel %vm3464, %v3460, 0.0
    %3598 = vadd.xlane.f32.xlu0 %v3597
    %v3599 = vpop.xlane.xlu0 %3598
    %v3600 = vsel %vm3464, %v3461, 0.0
    %3601 = vadd.xlane.f32.xlu0 %v3600
    %v3602 = vpop.xlane.xlu0 %3601
    %v3603 = vsel %vm3464, %v3462, 0.0
    %3604 = vadd.xlane.f32.xlu0 %v3603
    %v3605 = vpop.xlane.xlu0 %3604
    %v3606 = vsel %vm3464, %v3463, 0.0
    %3607 = vadd.xlane.f32.xlu0 %v3606
    %v3608 = vpop.xlane.xlu0 %3607
    %v3609 = vmul.f32 %v2936, %v2936
    %v3610 = vmul.f32 %v2937, %v2937
    %v3611 = vmul.f32 %v2938, %v2938
    %v3612 = vmul.f32 %v2939, %v2939
    %v3613 = vmul.f32 %v2940, %v2940
    %v3614 = vmul.f32 %v2941, %v2941
    %v3615 = vmul.f32 %v2942, %v2942
    %v3616 = vmul.f32 %v2943, %v2943
    %v3617 = vmul.f32 %v2944, %v2944
    %v3618 = vmul.f32 %v2945, %v2945
    %v3619 = vmul.f32 %v2946, %v2946
    %v3620 = vmul.f32 %v2947, %v2947
    %v3621 = vmul.f32 %v2948, %v2948
    %v3622 = vmul.f32 %v2949, %v2949
    %v3623 = vmul.f32 %v2950, %v2950
    %v3624 = vmul.f32 %v2951, %v2951
    %v3625 = vmul.f32 %v2952, %v2952
    %v3626 = vmul.f32 %v2953, %v2953
    %v3627 = vmul.f32 %v2954, %v2954
    %v3628 = vmul.f32 %v2955, %v2955
    %v3629 = vmul.f32 %v2956, %v2956
    %v3630 = vmul.f32 %v2957, %v2957
    %v3631 = vmul.f32 %v2958, %v2958
    %v3632 = vmul.f32 %v2959, %v2959
    %v3633 = vmul.f32 %v2960, %v2960
    %v3634 = vmul.f32 %v2961, %v2961
    %v3635 = vmul.f32 %v2962, %v2962
    %v3636 = vmul.f32 %v2963, %v2963
    %v3637 = vmul.f32 %v2964, %v2964
    %v3638 = vmul.f32 %v2965, %v2965
    %v3639 = vmul.f32 %v2966, %v2966
    %v3640 = vmul.f32 %v2967, %v2967
    %v3641 = vmul.f32 %v2968, %v2968
    %v3642 = vmul.f32 %v2969, %v2969
    %v3643 = vmul.f32 %v2970, %v2970
    %v3644 = vmul.f32 %v2971, %v2971
    %v3645 = vmul.f32 %v2972, %v2972
    %v3646 = vmul.f32 %v2973, %v2973
    %v3647 = vmul.f32 %v2974, %v2974
    %v3648 = vmul.f32 %v2975, %v2975
    %v3649 = vmul.f32 %v2976, %v2976
    %v3650 = vmul.f32 %v2977, %v2977
    %v3651 = vmul.f32 %v2978, %v2978
    %v3652 = vmul.f32 %v2979, %v2979
    %v3653 = vmul.f32 %v2980, %v2980
    %v3654 = vmul.f32 %v2981, %v2981
    %v3655 = vmul.f32 %v2982, %v2982
    %v3656 = vmul.f32 %v2983, %v2983
    %v3657 = vadd.f32 %v3467, %v3609
    %v3658 = vadd.f32 %v3470, %v3610
    %v3659 = vadd.f32 %v3473, %v3611
    %v3660 = vadd.f32 %v3476, %v3612
    %v3661 = vadd.f32 %v3479, %v3613
    %v3662 = vadd.f32 %v3482, %v3614
    %v3663 = vadd.f32 %v3485, %v3615
    %v3664 = vadd.f32 %v3488, %v3616
    %v3665 = vadd.f32 %v3491, %v3617
    %v3666 = vadd.f32 %v3494, %v3618
    %v3667 = vadd.f32 %v3497, %v3619
    %v3668 = vadd.f32 %v3500, %v3620
    %v3669 = vadd.f32 %v3503, %v3621
    %v3670 = vadd.f32 %v3506, %v3622
    %v3671 = vadd.f32 %v3509, %v3623
    %v3672 = vadd.f32 %v3512, %v3624
    %v3673 = vadd.f32 %v3515, %v3625
    %v3674 = vadd.f32 %v3518, %v3626
    %v3675 = vadd.f32 %v3521, %v3627
    %v3676 = vadd.f32 %v3524, %v3628
    %v3677 = vadd.f32 %v3527, %v3629
    %v3678 = vadd.f32 %v3530, %v3630
    %v3679 = vadd.f32 %v3533, %v3631
    %v3680 = vadd.f32 %v3536, %v3632
    %v3681 = vadd.f32 %v3539, %v3633
    %v3682 = vadd.f32 %v3542, %v3634
    %v3683 = vadd.f32 %v3545, %v3635
    %v3684 = vadd.f32 %v3548, %v3636
    %v3685 = vadd.f32 %v3551, %v3637
    %v3686 = vadd.f32 %v3554, %v3638
    %v3687 = vadd.f32 %v3557, %v3639
    %v3688 = vadd.f32 %v3560, %v3640
    %v3689 = vadd.f32 %v3563, %v3641
    %v3690 = vadd.f32 %v3566, %v3642
    %v3691 = vadd.f32 %v3569, %v3643
    %v3692 = vadd.f32 %v3572, %v3644
    %v3693 = vadd.f32 %v3575, %v3645
    %v3694 = vadd.f32 %v3578, %v3646
    %v3695 = vadd.f32 %v3581, %v3647
    %v3696 = vadd.f32 %v3584, %v3648
    %v3697 = vadd.f32 %v3587, %v3649
    %v3698 = vadd.f32 %v3590, %v3650
    %v3699 = vadd.f32 %v3593, %v3651
    %v3700 = vadd.f32 %v3596, %v3652
    %v3701 = vadd.f32 %v3599, %v3653
    %v3702 = vadd.f32 %v3602, %v3654
    %v3703 = vadd.f32 %v3605, %v3655
    %v3704 = vadd.f32 %v3608, %v3656
    %v3705 = vmul.f32 %v3368, %v3368
    %v3706 = vmul.f32 %v3369, %v3369
    %v3707 = vmul.f32 %v3370, %v3370
    %v3708 = vmul.f32 %v3371, %v3371
    %v3709 = vmul.f32 %v3372, %v3372
    %v3710 = vmul.f32 %v3373, %v3373
    %v3711 = vmul.f32 %v3374, %v3374
    %v3712 = vmul.f32 %v3375, %v3375
    %v3713 = vmul.f32 %v3376, %v3376
    %v3714 = vmul.f32 %v3377, %v3377
    %v3715 = vmul.f32 %v3378, %v3378
    %v3716 = vmul.f32 %v3379, %v3379
    %v3717 = vmul.f32 %v3380, %v3380
    %v3718 = vmul.f32 %v3381, %v3381
    %v3719 = vmul.f32 %v3382, %v3382
    %v3720 = vmul.f32 %v3383, %v3383
    %v3721 = vmul.f32 %v3384, %v3384
    %v3722 = vmul.f32 %v3385, %v3385
    %v3723 = vmul.f32 %v3386, %v3386
    %v3724 = vmul.f32 %v3387, %v3387
    %v3725 = vmul.f32 %v3388, %v3388
    %v3726 = vmul.f32 %v3389, %v3389
    %v3727 = vmul.f32 %v3390, %v3390
    %v3728 = vmul.f32 %v3391, %v3391
    %v3729 = vmul.f32 %v3392, %v3392
    %v3730 = vmul.f32 %v3393, %v3393
    %v3731 = vmul.f32 %v3394, %v3394
    %v3732 = vmul.f32 %v3395, %v3395
    %v3733 = vmul.f32 %v3396, %v3396
    %v3734 = vmul.f32 %v3397, %v3397
    %v3735 = vmul.f32 %v3398, %v3398
    %v3736 = vmul.f32 %v3399, %v3399
    %v3737 = vmul.f32 %v3400, %v3400
    %v3738 = vmul.f32 %v3401, %v3401
    %v3739 = vmul.f32 %v3402, %v3402
    %v3740 = vmul.f32 %v3403, %v3403
    %v3741 = vmul.f32 %v3404, %v3404
    %v3742 = vmul.f32 %v3405, %v3405
    %v3743 = vmul.f32 %v3406, %v3406
    %v3744 = vmul.f32 %v3407, %v3407
    %v3745 = vmul.f32 %v3408, %v3408
    %v3746 = vmul.f32 %v3409, %v3409
    %v3747 = vmul.f32 %v3410, %v3410
    %v3748 = vmul.f32 %v3411, %v3411
    %v3749 = vmul.f32 %v3412, %v3412
    %v3750 = vmul.f32 %v3413, %v3413
    %v3751 = vmul.f32 %v3414, %v3414
    %v3752 = vmul.f32 %v3415, %v3415
    %v3753 = vadd.f32 %v3657, %v3705
    %v3754 = vadd.f32 %v3658, %v3706
    %v3755 = vadd.f32 %v3659, %v3707
    %v3756 = vadd.f32 %v3660, %v3708
    %v3757 = vadd.f32 %v3661, %v3709
    %v3758 = vadd.f32 %v3662, %v3710
    %v3759 = vadd.f32 %v3663, %v3711
    %v3760 = vadd.f32 %v3664, %v3712
    %v3761 = vadd.f32 %v3665, %v3713
    %v3762 = vadd.f32 %v3666, %v3714
    %v3763 = vadd.f32 %v3667, %v3715
    %v3764 = vadd.f32 %v3668, %v3716
    %v3765 = vadd.f32 %v3669, %v3717
    %v3766 = vadd.f32 %v3670, %v3718
    %v3767 = vadd.f32 %v3671, %v3719
    %v3768 = vadd.f32 %v3672, %v3720
    %v3769 = vadd.f32 %v3673, %v3721
    %v3770 = vadd.f32 %v3674, %v3722
    %v3771 = vadd.f32 %v3675, %v3723
    %v3772 = vadd.f32 %v3676, %v3724
    %v3773 = vadd.f32 %v3677, %v3725
    %v3774 = vadd.f32 %v3678, %v3726
    %v3775 = vadd.f32 %v3679, %v3727
    %v3776 = vadd.f32 %v3680, %v3728
    %v3777 = vadd.f32 %v3681, %v3729
    %v3778 = vadd.f32 %v3682, %v3730
    %v3779 = vadd.f32 %v3683, %v3731
    %v3780 = vadd.f32 %v3684, %v3732
    %v3781 = vadd.f32 %v3685, %v3733
    %v3782 = vadd.f32 %v3686, %v3734
    %v3783 = vadd.f32 %v3687, %v3735
    %v3784 = vadd.f32 %v3688, %v3736
    %v3785 = vadd.f32 %v3689, %v3737
    %v3786 = vadd.f32 %v3690, %v3738
    %v3787 = vadd.f32 %v3691, %v3739
    %v3788 = vadd.f32 %v3692, %v3740
    %v3789 = vadd.f32 %v3693, %v3741
    %v3790 = vadd.f32 %v3694, %v3742
    %v3791 = vadd.f32 %v3695, %v3743
    %v3792 = vadd.f32 %v3696, %v3744
    %v3793 = vadd.f32 %v3697, %v3745
    %v3794 = vadd.f32 %v3698, %v3746
    %v3795 = vadd.f32 %v3699, %v3747
    %v3796 = vadd.f32 %v3700, %v3748
    %v3797 = vadd.f32 %v3701, %v3749
    %v3798 = vadd.f32 %v3702, %v3750
    %v3799 = vadd.f32 %v3703, %v3751
    %v3800 = vadd.f32 %v3704, %v3752
    %v3801 = vmul.f32 %v3753, 0.5
    %v3802 = vmul.f32 %v3754, 0.5
    %v3803 = vmul.f32 %v3755, 0.5
    %v3804 = vmul.f32 %v3756, 0.5
    %v3805 = vmul.f32 %v3757, 0.5
    %v3806 = vmul.f32 %v3758, 0.5
    %v3807 = vmul.f32 %v3759, 0.5
    %v3808 = vmul.f32 %v3760, 0.5
    %v3809 = vmul.f32 %v3761, 0.5
    %v3810 = vmul.f32 %v3762, 0.5
    %v3811 = vmul.f32 %v3763, 0.5
    %v3812 = vmul.f32 %v3764, 0.5
    %v3813 = vmul.f32 %v3765, 0.5
    %v3814 = vmul.f32 %v3766, 0.5
    %v3815 = vmul.f32 %v3767, 0.5
    %v3816 = vmul.f32 %v3768, 0.5
    %v3817 = vmul.f32 %v3769, 0.5
    %v3818 = vmul.f32 %v3770, 0.5
    %v3819 = vmul.f32 %v3771, 0.5
    %v3820 = vmul.f32 %v3772, 0.5
    %v3821 = vmul.f32 %v3773, 0.5
    %v3822 = vmul.f32 %v3774, 0.5
    %v3823 = vmul.f32 %v3775, 0.5
    %v3824 = vmul.f32 %v3776, 0.5
    %v3825 = vmul.f32 %v3777, 0.5
    %v3826 = vmul.f32 %v3778, 0.5
    %v3827 = vmul.f32 %v3779, 0.5
    %v3828 = vmul.f32 %v3780, 0.5
    %v3829 = vmul.f32 %v3781, 0.5
    %v3830 = vmul.f32 %v3782, 0.5
    %v3831 = vmul.f32 %v3783, 0.5
    %v3832 = vmul.f32 %v3784, 0.5
    %v3833 = vmul.f32 %v3785, 0.5
    %v3834 = vmul.f32 %v3786, 0.5
    %v3835 = vmul.f32 %v3787, 0.5
    %v3836 = vmul.f32 %v3788, 0.5
    %v3837 = vmul.f32 %v3789, 0.5
    %v3838 = vmul.f32 %v3790, 0.5
    %v3839 = vmul.f32 %v3791, 0.5
    %v3840 = vmul.f32 %v3792, 0.5
    %v3841 = vmul.f32 %v3793, 0.5
    %v3842 = vmul.f32 %v3794, 0.5
    %v3843 = vmul.f32 %v3795, 0.5
    %v3844 = vmul.f32 %v3796, 0.5
    %v3845 = vmul.f32 %v3797, 0.5
    %v3846 = vmul.f32 %v3798, 0.5
    %v3847 = vmul.f32 %v3799, 0.5
    %v3848 = vmul.f32 %v3800, 0.5
    %v3849 = vlog2.pop %v620
    %v3850 = vmul.f32 %v3849, 0.6931472
    %v3851 = vlog2.pop %v621
    %v3852 = vmul.f32 %v3851, 0.6931472
    %v3853 = vlog2.pop %v622
    %v3854 = vmul.f32 %v3853, 0.6931472
    %v3855 = vlog2.pop %v623
    %v3856 = vmul.f32 %v3855, 0.6931472
    %v3857 = vlog2.pop %v624
    %v3858 = vmul.f32 %v3857, 0.6931472
    %v3859 = vlog2.pop %v625
    %v3860 = vmul.f32 %v3859, 0.6931472
    %v3861 = vlog2.pop %v626
    %v3862 = vmul.f32 %v3861, 0.6931472
    %v3863 = vlog2.pop %v627
    %v3864 = vmul.f32 %v3863, 0.6931472
    %v3865 = vlog2.pop %v628
    %v3866 = vmul.f32 %v3865, 0.6931472
    %v3867 = vlog2.pop %v629
    %v3868 = vmul.f32 %v3867, 0.6931472
    %v3869 = vlog2.pop %v630
    %v3870 = vmul.f32 %v3869, 0.6931472
    %v3871 = vlog2.pop %v631
    %v3872 = vmul.f32 %v3871, 0.6931472
    %v3873 = vlog2.pop %v632
    %v3874 = vmul.f32 %v3873, 0.6931472
    %v3875 = vlog2.pop %v633
    %v3876 = vmul.f32 %v3875, 0.6931472
    %v3877 = vlog2.pop %v634
    %v3878 = vmul.f32 %v3877, 0.6931472
    %v3879 = vlog2.pop %v635
    %v3880 = vmul.f32 %v3879, 0.6931472
    %v3881 = vlog2.pop %v636
    %v3882 = vmul.f32 %v3881, 0.6931472
    %v3883 = vlog2.pop %v637
    %v3884 = vmul.f32 %v3883, 0.6931472
    %v3885 = vlog2.pop %v638
    %v3886 = vmul.f32 %v3885, 0.6931472
    %v3887 = vlog2.pop %v639
    %v3888 = vmul.f32 %v3887, 0.6931472
    %v3889 = vlog2.pop %v640
    %v3890 = vmul.f32 %v3889, 0.6931472
    %v3891 = vlog2.pop %v641
    %v3892 = vmul.f32 %v3891, 0.6931472
    %v3893 = vlog2.pop %v642
    %v3894 = vmul.f32 %v3893, 0.6931472
    %v3895 = vlog2.pop %v643
    %v3896 = vmul.f32 %v3895, 0.6931472
    %v3897 = vlog2.pop %v644
    %v3898 = vmul.f32 %v3897, 0.6931472
    %v3899 = vlog2.pop %v645
    %v3900 = vmul.f32 %v3899, 0.6931472
    %v3901 = vlog2.pop %v646
    %v3902 = vmul.f32 %v3901, 0.6931472
    %v3903 = vlog2.pop %v647
    %v3904 = vmul.f32 %v3903, 0.6931472
    %v3905 = vlog2.pop %v648
    %v3906 = vmul.f32 %v3905, 0.6931472
    %v3907 = vlog2.pop %v649
    %v3908 = vmul.f32 %v3907, 0.6931472
    %v3909 = vlog2.pop %v650
    %v3910 = vmul.f32 %v3909, 0.6931472
    %v3911 = vlog2.pop %v651
    %v3912 = vmul.f32 %v3911, 0.6931472
    %v3913 = vlog2.pop %v652
    %v3914 = vmul.f32 %v3913, 0.6931472
    %v3915 = vlog2.pop %v653
    %v3916 = vmul.f32 %v3915, 0.6931472
    %v3917 = vlog2.pop %v654
    %v3918 = vmul.f32 %v3917, 0.6931472
    %v3919 = vlog2.pop %v655
    %v3920 = vmul.f32 %v3919, 0.6931472
    %v3921 = vlog2.pop %v656
    %v3922 = vmul.f32 %v3921, 0.6931472
    %v3923 = vlog2.pop %v657
    %v3924 = vmul.f32 %v3923, 0.6931472
    %v3925 = vlog2.pop %v658
    %v3926 = vmul.f32 %v3925, 0.6931472
    %v3927 = vlog2.pop %v659
    %v3928 = vmul.f32 %v3927, 0.6931472
    %v3929 = vlog2.pop %v660
    %v3930 = vmul.f32 %v3929, 0.6931472
    %v3931 = vlog2.pop %v661
    %v3932 = vmul.f32 %v3931, 0.6931472
    %v3933 = vlog2.pop %v662
    %v3934 = vmul.f32 %v3933, 0.6931472
    %v3935 = vlog2.pop %v663
    %v3936 = vmul.f32 %v3935, 0.6931472
    %v3937 = vlog2.pop %v664
    %v3938 = vmul.f32 %v3937, 0.6931472
    %v3939 = vlog2.pop %v665
    %v3940 = vmul.f32 %v3939, 0.6931472
    %v3941 = vlog2.pop %v666
    %v3942 = vmul.f32 %v3941, 0.6931472
    %v3943 = vlog2.pop %v667
    %v3944 = vmul.f32 %v3943, 0.6931472
    %v3945 = vmax.f32 %v84, 0.0
    %v3946 = vmax.f32 %v85, 0.0
    %v3947 = vmax.f32 %v86, 0.0
    %v3948 = vmax.f32 %v87, 0.0
    %v3949 = vmax.f32 %v88, 0.0
    %v3950 = vmax.f32 %v89, 0.0
    %v3951 = vmax.f32 %v90, 0.0
    %v3952 = vmax.f32 %v91, 0.0
    %v3953 = vmax.f32 %v92, 0.0
    %v3954 = vmax.f32 %v93, 0.0
    %v3955 = vmax.f32 %v94, 0.0
    %v3956 = vmax.f32 %v95, 0.0
    %v3957 = vmax.f32 %v96, 0.0
    %v3958 = vmax.f32 %v97, 0.0
    %v3959 = vmax.f32 %v98, 0.0
    %v3960 = vmax.f32 %v99, 0.0
    %v3961 = vmax.f32 %v100, 0.0
    %v3962 = vmax.f32 %v101, 0.0
    %v3963 = vmax.f32 %v102, 0.0
    %v3964 = vmax.f32 %v103, 0.0
    %v3965 = vmax.f32 %v104, 0.0
    %v3966 = vmax.f32 %v105, 0.0
    %v3967 = vmax.f32 %v106, 0.0
    %v3968 = vmax.f32 %v107, 0.0
    %v3969 = vmax.f32 %v108, 0.0
    %v3970 = vmax.f32 %v109, 0.0
    %v3971 = vmax.f32 %v110, 0.0
    %v3972 = vmax.f32 %v111, 0.0
    %v3973 = vmax.f32 %v112, 0.0
    %v3974 = vmax.f32 %v113, 0.0
    %v3975 = vmax.f32 %v114, 0.0
    %v3976 = vmax.f32 %v115, 0.0
    %v3977 = vmax.f32 %v116, 0.0
    %v3978 = vmax.f32 %v117, 0.0
    %v3979 = vmax.f32 %v118, 0.0
    %v3980 = vmax.f32 %v119, 0.0
    %v3981 = vmax.f32 %v120, 0.0
    %v3982 = vmax.f32 %v121, 0.0
    %v3983 = vmax.f32 %v122, 0.0
    %v3984 = vmax.f32 %v123, 0.0
    %v3985 = vmax.f32 %v124, 0.0
    %v3986 = vmax.f32 %v125, 0.0
    %v3987 = vmax.f32 %v126, 0.0
    %v3988 = vmax.f32 %v127, 0.0
    %v3989 = vmax.f32 %v128, 0.0
    %v3990 = vmax.f32 %v129, 0.0
    %v3991 = vmax.f32 %v130, 0.0
    %v3992 = vmax.f32 %v131, 0.0
    %v3993 = vadd.f32 %v3945, %v3850
    %v3994 = vadd.f32 %v3946, %v3852
    %v3995 = vadd.f32 %v3947, %v3854
    %v3996 = vadd.f32 %v3948, %v3856
    %v3997 = vadd.f32 %v3949, %v3858
    %v3998 = vadd.f32 %v3950, %v3860
    %v3999 = vadd.f32 %v3951, %v3862
    %v4000 = vadd.f32 %v3952, %v3864
    %v4001 = vadd.f32 %v3953, %v3866
    %v4002 = vadd.f32 %v3954, %v3868
    %v4003 = vadd.f32 %v3955, %v3870
    %v4004 = vadd.f32 %v3956, %v3872
    %v4005 = vadd.f32 %v3957, %v3874
    %v4006 = vadd.f32 %v3958, %v3876
    %v4007 = vadd.f32 %v3959, %v3878
    %v4008 = vadd.f32 %v3960, %v3880
    %v4009 = vadd.f32 %v3961, %v3882
    %v4010 = vadd.f32 %v3962, %v3884
    %v4011 = vadd.f32 %v3963, %v3886
    %v4012 = vadd.f32 %v3964, %v3888
    %v4013 = vadd.f32 %v3965, %v3890
    %v4014 = vadd.f32 %v3966, %v3892
    %v4015 = vadd.f32 %v3967, %v3894
    %v4016 = vadd.f32 %v3968, %v3896
    %v4017 = vadd.f32 %v3969, %v3898
    %v4018 = vadd.f32 %v3970, %v3900
    %v4019 = vadd.f32 %v3971, %v3902
    %v4020 = vadd.f32 %v3972, %v3904
    %v4021 = vadd.f32 %v3973, %v3906
    %v4022 = vadd.f32 %v3974, %v3908
    %v4023 = vadd.f32 %v3975, %v3910
    %v4024 = vadd.f32 %v3976, %v3912
    %v4025 = vadd.f32 %v3977, %v3914
    %v4026 = vadd.f32 %v3978, %v3916
    %v4027 = vadd.f32 %v3979, %v3918
    %v4028 = vadd.f32 %v3980, %v3920
    %v4029 = vadd.f32 %v3981, %v3922
    %v4030 = vadd.f32 %v3982, %v3924
    %v4031 = vadd.f32 %v3983, %v3926
    %v4032 = vadd.f32 %v3984, %v3928
    %v4033 = vadd.f32 %v3985, %v3930
    %v4034 = vadd.f32 %v3986, %v3932
    %v4035 = vadd.f32 %v3987, %v3934
    %v4036 = vadd.f32 %v3988, %v3936
    %v4037 = vadd.f32 %v3989, %v3938
    %v4038 = vadd.f32 %v3990, %v3940
    %v4039 = vadd.f32 %v3991, %v3942
    %v4040 = vadd.f32 %v3992, %v3944
    %v4041 = vsub.f32 %v3993, %v84
    %v4042 = vsub.f32 %v3994, %v85
    %v4043 = vsub.f32 %v3995, %v86
    %v4044 = vsub.f32 %v3996, %v87
    %v4045 = vsub.f32 %v3997, %v88
    %v4046 = vsub.f32 %v3998, %v89
    %v4047 = vsub.f32 %v3999, %v90
    %v4048 = vsub.f32 %v4000, %v91
    %v4049 = vsub.f32 %v4001, %v92
    %v4050 = vsub.f32 %v4002, %v93
    %v4051 = vsub.f32 %v4003, %v94
    %v4052 = vsub.f32 %v4004, %v95
    %v4053 = vsub.f32 %v4005, %v96
    %v4054 = vsub.f32 %v4006, %v97
    %v4055 = vsub.f32 %v4007, %v98
    %v4056 = vsub.f32 %v4008, %v99
    %v4057 = vsub.f32 %v4009, %v100
    %v4058 = vsub.f32 %v4010, %v101
    %v4059 = vsub.f32 %v4011, %v102
    %v4060 = vsub.f32 %v4012, %v103
    %v4061 = vsub.f32 %v4013, %v104
    %v4062 = vsub.f32 %v4014, %v105
    %v4063 = vsub.f32 %v4015, %v106
    %v4064 = vsub.f32 %v4016, %v107
    %v4065 = vsub.f32 %v4017, %v108
    %v4066 = vsub.f32 %v4018, %v109
    %v4067 = vsub.f32 %v4019, %v110
    %v4068 = vsub.f32 %v4020, %v111
    %v4069 = vsub.f32 %v4021, %v112
    %v4070 = vsub.f32 %v4022, %v113
    %v4071 = vsub.f32 %v4023, %v114
    %v4072 = vsub.f32 %v4024, %v115
    %v4073 = vsub.f32 %v4025, %v116
    %v4074 = vsub.f32 %v4026, %v117
    %v4075 = vsub.f32 %v4027, %v118
    %v4076 = vsub.f32 %v4028, %v119
    %v4077 = vsub.f32 %v4029, %v120
    %v4078 = vsub.f32 %v4030, %v121
    %v4079 = vsub.f32 %v4031, %v122
    %v4080 = vsub.f32 %v4032, %v123
    %v4081 = vsub.f32 %v4033, %v124
    %v4082 = vsub.f32 %v4034, %v125
    %v4083 = vsub.f32 %v4035, %v126
    %v4084 = vsub.f32 %v4036, %v127
    %v4085 = vsub.f32 %v4037, %v128
    %v4086 = vsub.f32 %v4038, %v129
    %v4087 = vsub.f32 %v4039, %v130
    %v4088 = vsub.f32 %v4040, %v131
    %v4089 = vmul.f32 %v277, 2.0
    %v4090 = vmul.f32 %v278, 2.0
    %v4091 = vmul.f32 %v279, 2.0
    %v4092 = vmul.f32 %v280, 2.0
    %v4093 = vmul.f32 %v281, 2.0
    %v4094 = vmul.f32 %v282, 2.0
    %v4095 = vmul.f32 %v283, 2.0
    %v4096 = vmul.f32 %v284, 2.0
    %v4097 = vmul.f32 %v285, 2.0
    %v4098 = vmul.f32 %v286, 2.0
    %v4099 = vmul.f32 %v287, 2.0
    %v4100 = vmul.f32 %v288, 2.0
    %v4101 = vmul.f32 %v289, 2.0
    %v4102 = vmul.f32 %v290, 2.0
    %v4103 = vmul.f32 %v291, 2.0
    %v4104 = vmul.f32 %v292, 2.0
    %v4105 = vmul.f32 %v293, 2.0
    %v4106 = vmul.f32 %v294, 2.0
    %v4107 = vmul.f32 %v295, 2.0
    %v4108 = vmul.f32 %v296, 2.0
    %v4109 = vmul.f32 %v297, 2.0
    %v4110 = vmul.f32 %v298, 2.0
    %v4111 = vmul.f32 %v299, 2.0
    %v4112 = vmul.f32 %v300, 2.0
    %v4113 = vmul.f32 %v301, 2.0
    %v4114 = vmul.f32 %v302, 2.0
    %v4115 = vmul.f32 %v303, 2.0
    %v4116 = vmul.f32 %v304, 2.0
    %v4117 = vmul.f32 %v305, 2.0
    %v4118 = vmul.f32 %v306, 2.0
    %v4119 = vmul.f32 %v307, 2.0
    %v4120 = vmul.f32 %v308, 2.0
    %v4121 = vmul.f32 %v309, 2.0
    %v4122 = vmul.f32 %v310, 2.0
    %v4123 = vmul.f32 %v311, 2.0
    %v4124 = vmul.f32 %v312, 2.0
    %v4125 = vmul.f32 %v313, 2.0
    %v4126 = vmul.f32 %v314, 2.0
    %v4127 = vmul.f32 %v315, 2.0
    %v4128 = vmul.f32 %v316, 2.0
    %v4129 = vmul.f32 %v317, 2.0
    %v4130 = vmul.f32 %v318, 2.0
    %v4131 = vmul.f32 %v319, 2.0
    %v4132 = vmul.f32 %v320, 2.0
    %v4133 = vmul.f32 %v321, 2.0
    %v4134 = vmul.f32 %v322, 2.0
    %v4135 = vmul.f32 %v323, 2.0
    %v4136 = vmul.f32 %v324, 2.0
    %v4137 = vmin.f32 %v4041, 100.0
    %v4138 = vmin.f32 %v4042, 100.0
    %v4139 = vmin.f32 %v4043, 100.0
    %v4140 = vmin.f32 %v4044, 100.0
    %v4141 = vmin.f32 %v4045, 100.0
    %v4142 = vmin.f32 %v4046, 100.0
    %v4143 = vmin.f32 %v4047, 100.0
    %v4144 = vmin.f32 %v4048, 100.0
    %v4145 = vmin.f32 %v4049, 100.0
    %v4146 = vmin.f32 %v4050, 100.0
    %v4147 = vmin.f32 %v4051, 100.0
    %v4148 = vmin.f32 %v4052, 100.0
    %v4149 = vmin.f32 %v4053, 100.0
    %v4150 = vmin.f32 %v4054, 100.0
    %v4151 = vmin.f32 %v4055, 100.0
    %v4152 = vmin.f32 %v4056, 100.0
    %v4153 = vmin.f32 %v4057, 100.0
    %v4154 = vmin.f32 %v4058, 100.0
    %v4155 = vmin.f32 %v4059, 100.0
    %v4156 = vmin.f32 %v4060, 100.0
    %v4157 = vmin.f32 %v4061, 100.0
    %v4158 = vmin.f32 %v4062, 100.0
    %v4159 = vmin.f32 %v4063, 100.0
    %v4160 = vmin.f32 %v4064, 100.0
    %v4161 = vmin.f32 %v4065, 100.0
    %v4162 = vmin.f32 %v4066, 100.0
    %v4163 = vmin.f32 %v4067, 100.0
    %v4164 = vmin.f32 %v4068, 100.0
    %v4165 = vmin.f32 %v4069, 100.0
    %v4166 = vmin.f32 %v4070, 100.0
    %v4167 = vmin.f32 %v4071, 100.0
    %v4168 = vmin.f32 %v4072, 100.0
    %v4169 = vmin.f32 %v4073, 100.0
    %v4170 = vmin.f32 %v4074, 100.0
    %v4171 = vmin.f32 %v4075, 100.0
    %v4172 = vmin.f32 %v4076, 100.0
    %v4173 = vmin.f32 %v4077, 100.0
    %v4174 = vmin.f32 %v4078, 100.0
    %v4175 = vmin.f32 %v4079, 100.0
    %v4176 = vmin.f32 %v4080, 100.0
    %v4177 = vmin.f32 %v4081, 100.0
    %v4178 = vmin.f32 %v4082, 100.0
    %v4179 = vmin.f32 %v4083, 100.0
    %v4180 = vmin.f32 %v4084, 100.0
    %v4181 = vmin.f32 %v4085, 100.0
    %v4182 = vmin.f32 %v4086, 100.0
    %v4183 = vmin.f32 %v4087, 100.0
    %v4184 = vmin.f32 %v4088, 100.0
    %4233 = vrot.lane.b32.xlu0 %v4137, 124
    %v4234 = vpop.permute.xlu0 %4233
    %4235 = vrot.lane.b32.xlu0 %v4138, 124
    %v4236 = vpop.permute.xlu0 %4235
    %4237 = vrot.lane.b32.xlu0 %v4139, 124
    %v4238 = vpop.permute.xlu0 %4237
    %4239 = vrot.lane.b32.xlu0 %v4140, 124
    %v4240 = vpop.permute.xlu0 %4239
    %4241 = vrot.lane.b32.xlu0 %v4141, 124
    %v4242 = vpop.permute.xlu0 %4241
    %4243 = vrot.lane.b32.xlu0 %v4142, 124
    %v4244 = vpop.permute.xlu0 %4243
    %4245 = vrot.lane.b32.xlu0 %v4143, 124
    %v4246 = vpop.permute.xlu0 %4245
    %4247 = vrot.lane.b32.xlu0 %v4144, 124
    %v4248 = vpop.permute.xlu0 %4247
    %4249 = vrot.lane.b32.xlu0 %v4145, 124
    %v4250 = vpop.permute.xlu0 %4249
    %4251 = vrot.lane.b32.xlu0 %v4146, 124
    %v4252 = vpop.permute.xlu0 %4251
    %4253 = vrot.lane.b32.xlu0 %v4147, 124
    %v4254 = vpop.permute.xlu0 %4253
    %4255 = vrot.lane.b32.xlu0 %v4148, 124
    %v4256 = vpop.permute.xlu0 %4255
    %4257 = vrot.lane.b32.xlu0 %v4149, 124
    %v4258 = vpop.permute.xlu0 %4257
    %4259 = vrot.lane.b32.xlu0 %v4150, 124
    %v4260 = vpop.permute.xlu0 %4259
    %4261 = vrot.lane.b32.xlu0 %v4151, 124
    %v4262 = vpop.permute.xlu0 %4261
    %4263 = vrot.lane.b32.xlu0 %v4152, 124
    %v4264 = vpop.permute.xlu0 %4263
    %4265 = vrot.lane.b32.xlu0 %v4153, 124
    %v4266 = vpop.permute.xlu0 %4265
    %4267 = vrot.lane.b32.xlu0 %v4154, 124
    %v4268 = vpop.permute.xlu0 %4267
    %4269 = vrot.lane.b32.xlu0 %v4155, 124
    %v4270 = vpop.permute.xlu0 %4269
    %4271 = vrot.lane.b32.xlu0 %v4156, 124
    %v4272 = vpop.permute.xlu0 %4271
    %4273 = vrot.lane.b32.xlu0 %v4157, 124
    %v4274 = vpop.permute.xlu0 %4273
    %4275 = vrot.lane.b32.xlu0 %v4158, 124
    %v4276 = vpop.permute.xlu0 %4275
    %4277 = vrot.lane.b32.xlu0 %v4159, 124
    %v4278 = vpop.permute.xlu0 %4277
    %4279 = vrot.lane.b32.xlu0 %v4160, 124
    %v4280 = vpop.permute.xlu0 %4279
    %4281 = vrot.lane.b32.xlu0 %v4161, 124
    %v4282 = vpop.permute.xlu0 %4281
    %4283 = vrot.lane.b32.xlu0 %v4162, 124
    %v4284 = vpop.permute.xlu0 %4283
    %4285 = vrot.lane.b32.xlu0 %v4163, 124
    %v4286 = vpop.permute.xlu0 %4285
    %4287 = vrot.lane.b32.xlu0 %v4164, 124
    %v4288 = vpop.permute.xlu0 %4287
    %4289 = vrot.lane.b32.xlu0 %v4165, 124
    %v4290 = vpop.permute.xlu0 %4289
    %4291 = vrot.lane.b32.xlu0 %v4166, 124
    %v4292 = vpop.permute.xlu0 %4291
    %4293 = vrot.lane.b32.xlu0 %v4167, 124
    %v4294 = vpop.permute.xlu0 %4293
    %4295 = vrot.lane.b32.xlu0 %v4168, 124
    %v4296 = vpop.permute.xlu0 %4295
    %4297 = vrot.lane.b32.xlu0 %v4169, 124
    %v4298 = vpop.permute.xlu0 %4297
    %4299 = vrot.lane.b32.xlu0 %v4170, 124
    %v4300 = vpop.permute.xlu0 %4299
    %4301 = vrot.lane.b32.xlu0 %v4171, 124
    %v4302 = vpop.permute.xlu0 %4301
    %4303 = vrot.lane.b32.xlu0 %v4172, 124
    %v4304 = vpop.permute.xlu0 %4303
    %4305 = vrot.lane.b32.xlu0 %v4173, 124
    %v4306 = vpop.permute.xlu0 %4305
    %4307 = vrot.lane.b32.xlu0 %v4174, 124
    %v4308 = vpop.permute.xlu0 %4307
    %4309 = vrot.lane.b32.xlu0 %v4175, 124
    %v4310 = vpop.permute.xlu0 %4309
    %4311 = vrot.lane.b32.xlu0 %v4176, 124
    %v4312 = vpop.permute.xlu0 %4311
    %4313 = vrot.lane.b32.xlu0 %v4177, 124
    %v4314 = vpop.permute.xlu0 %4313
    %4315 = vrot.lane.b32.xlu0 %v4178, 124
    %v4316 = vpop.permute.xlu0 %4315
    %4317 = vrot.lane.b32.xlu0 %v4179, 124
    %v4318 = vpop.permute.xlu0 %4317
    %4319 = vrot.lane.b32.xlu0 %v4180, 124
    %v4320 = vpop.permute.xlu0 %4319
    %4321 = vrot.lane.b32.xlu0 %v4181, 124
    %v4322 = vpop.permute.xlu0 %4321
    %4323 = vrot.lane.b32.xlu0 %v4182, 124
    %v4324 = vpop.permute.xlu0 %4323
    %4325 = vrot.lane.b32.xlu0 %v4183, 124
    %v4326 = vpop.permute.xlu0 %4325
    %4327 = vrot.lane.b32.xlu0 %v4184, 124
    %v4328 = vpop.permute.xlu0 %4327
    %v4377 = vmul.f32 %v4089, %v4234
    %v4378 = vmul.f32 %v4090, %v4236
    %v4379 = vmul.f32 %v4091, %v4238
    %v4380 = vmul.f32 %v4092, %v4240
    %v4381 = vmul.f32 %v4093, %v4242
    %v4382 = vmul.f32 %v4094, %v4244
    %v4383 = vmul.f32 %v4095, %v4246
    %v4384 = vmul.f32 %v4096, %v4248
    %v4385 = vmul.f32 %v4097, %v4250
    %v4386 = vmul.f32 %v4098, %v4252
    %v4387 = vmul.f32 %v4099, %v4254
    %v4388 = vmul.f32 %v4100, %v4256
    %v4389 = vmul.f32 %v4101, %v4258
    %v4390 = vmul.f32 %v4102, %v4260
    %v4391 = vmul.f32 %v4103, %v4262
    %v4392 = vmul.f32 %v4104, %v4264
    %v4393 = vmul.f32 %v4105, %v4266
    %v4394 = vmul.f32 %v4106, %v4268
    %v4395 = vmul.f32 %v4107, %v4270
    %v4396 = vmul.f32 %v4108, %v4272
    %v4397 = vmul.f32 %v4109, %v4274
    %v4398 = vmul.f32 %v4110, %v4276
    %v4399 = vmul.f32 %v4111, %v4278
    %v4400 = vmul.f32 %v4112, %v4280
    %v4401 = vmul.f32 %v4113, %v4282
    %v4402 = vmul.f32 %v4114, %v4284
    %v4403 = vmul.f32 %v4115, %v4286
    %v4404 = vmul.f32 %v4116, %v4288
    %v4405 = vmul.f32 %v4117, %v4290
    %v4406 = vmul.f32 %v4118, %v4292
    %v4407 = vmul.f32 %v4119, %v4294
    %v4408 = vmul.f32 %v4120, %v4296
    %v4409 = vmul.f32 %v4121, %v4298
    %v4410 = vmul.f32 %v4122, %v4300
    %v4411 = vmul.f32 %v4123, %v4302
    %v4412 = vmul.f32 %v4124, %v4304
    %v4413 = vmul.f32 %v4125, %v4306
    %v4414 = vmul.f32 %v4126, %v4308
    %v4415 = vmul.f32 %v4127, %v4310
    %v4416 = vmul.f32 %v4128, %v4312
    %v4417 = vmul.f32 %v4129, %v4314
    %v4418 = vmul.f32 %v4130, %v4316
    %v4419 = vmul.f32 %v4131, %v4318
    %v4420 = vmul.f32 %v4132, %v4320
    %v4421 = vmul.f32 %v4133, %v4322
    %v4422 = vmul.f32 %v4134, %v4324
    %v4423 = vmul.f32 %v4135, %v4326
    %v4424 = vmul.f32 %v4136, %v4328
    %v4425 = vmin.f32 %v3993, 100.0
    %v4426 = vmin.f32 %v3994, 100.0
    %v4427 = vmin.f32 %v3995, 100.0
    %v4428 = vmin.f32 %v3996, 100.0
    %v4429 = vmin.f32 %v3997, 100.0
    %v4430 = vmin.f32 %v3998, 100.0
    %v4431 = vmin.f32 %v3999, 100.0
    %v4432 = vmin.f32 %v4000, 100.0
    %v4433 = vmin.f32 %v4001, 100.0
    %v4434 = vmin.f32 %v4002, 100.0
    %v4435 = vmin.f32 %v4003, 100.0
    %v4436 = vmin.f32 %v4004, 100.0
    %v4437 = vmin.f32 %v4005, 100.0
    %v4438 = vmin.f32 %v4006, 100.0
    %v4439 = vmin.f32 %v4007, 100.0
    %v4440 = vmin.f32 %v4008, 100.0
    %v4441 = vmin.f32 %v4009, 100.0
    %v4442 = vmin.f32 %v4010, 100.0
    %v4443 = vmin.f32 %v4011, 100.0
    %v4444 = vmin.f32 %v4012, 100.0
    %v4445 = vmin.f32 %v4013, 100.0
    %v4446 = vmin.f32 %v4014, 100.0
    %v4447 = vmin.f32 %v4015, 100.0
    %v4448 = vmin.f32 %v4016, 100.0
    %v4449 = vmin.f32 %v4017, 100.0
    %v4450 = vmin.f32 %v4018, 100.0
    %v4451 = vmin.f32 %v4019, 100.0
    %v4452 = vmin.f32 %v4020, 100.0
    %v4453 = vmin.f32 %v4021, 100.0
    %v4454 = vmin.f32 %v4022, 100.0
    %v4455 = vmin.f32 %v4023, 100.0
    %v4456 = vmin.f32 %v4024, 100.0
    %v4457 = vmin.f32 %v4025, 100.0
    %v4458 = vmin.f32 %v4026, 100.0
    %v4459 = vmin.f32 %v4027, 100.0
    %v4460 = vmin.f32 %v4028, 100.0
    %v4461 = vmin.f32 %v4029, 100.0
    %v4462 = vmin.f32 %v4030, 100.0
    %v4463 = vmin.f32 %v4031, 100.0
    %v4464 = vmin.f32 %v4032, 100.0
    %v4465 = vmin.f32 %v4033, 100.0
    %v4466 = vmin.f32 %v4034, 100.0
    %v4467 = vmin.f32 %v4035, 100.0
    %v4468 = vmin.f32 %v4036, 100.0
    %v4469 = vmin.f32 %v4037, 100.0
    %v4470 = vmin.f32 %v4038, 100.0
    %v4471 = vmin.f32 %v4039, 100.0
    %v4472 = vmin.f32 %v4040, 100.0
    %4521 = vrot.lane.b32.xlu0 %v4425, 124
    %v4522 = vpop.permute.xlu0 %4521
    %4523 = vrot.lane.b32.xlu0 %v4426, 124
    %v4524 = vpop.permute.xlu0 %4523
    %4525 = vrot.lane.b32.xlu0 %v4427, 124
    %v4526 = vpop.permute.xlu0 %4525
    %4527 = vrot.lane.b32.xlu0 %v4428, 124
    %v4528 = vpop.permute.xlu0 %4527
    %4529 = vrot.lane.b32.xlu0 %v4429, 124
    %v4530 = vpop.permute.xlu0 %4529
    %4531 = vrot.lane.b32.xlu0 %v4430, 124
    %v4532 = vpop.permute.xlu0 %4531
    %4533 = vrot.lane.b32.xlu0 %v4431, 124
    %v4534 = vpop.permute.xlu0 %4533
    %4535 = vrot.lane.b32.xlu0 %v4432, 124
    %v4536 = vpop.permute.xlu0 %4535
    %4537 = vrot.lane.b32.xlu0 %v4433, 124
    %v4538 = vpop.permute.xlu0 %4537
    %4539 = vrot.lane.b32.xlu0 %v4434, 124
    %v4540 = vpop.permute.xlu0 %4539
    %4541 = vrot.lane.b32.xlu0 %v4435, 124
    %v4542 = vpop.permute.xlu0 %4541
    %4543 = vrot.lane.b32.xlu0 %v4436, 124
    %v4544 = vpop.permute.xlu0 %4543
    %4545 = vrot.lane.b32.xlu0 %v4437, 124
    %v4546 = vpop.permute.xlu0 %4545
    %4547 = vrot.lane.b32.xlu0 %v4438, 124
    %v4548 = vpop.permute.xlu0 %4547
    %4549 = vrot.lane.b32.xlu0 %v4439, 124
    %v4550 = vpop.permute.xlu0 %4549
    %4551 = vrot.lane.b32.xlu0 %v4440, 124
    %v4552 = vpop.permute.xlu0 %4551
    %4553 = vrot.lane.b32.xlu0 %v4441, 124
    %v4554 = vpop.permute.xlu0 %4553
    %4555 = vrot.lane.b32.xlu0 %v4442, 124
    %v4556 = vpop.permute.xlu0 %4555
    %4557 = vrot.lane.b32.xlu0 %v4443, 124
    %v4558 = vpop.permute.xlu0 %4557
    %4559 = vrot.lane.b32.xlu0 %v4444, 124
    %v4560 = vpop.permute.xlu0 %4559
    %4561 = vrot.lane.b32.xlu0 %v4445, 124
    %v4562 = vpop.permute.xlu0 %4561
    %4563 = vrot.lane.b32.xlu0 %v4446, 124
    %v4564 = vpop.permute.xlu0 %4563
    %4565 = vrot.lane.b32.xlu0 %v4447, 124
    %v4566 = vpop.permute.xlu0 %4565
    %4567 = vrot.lane.b32.xlu0 %v4448, 124
    %v4568 = vpop.permute.xlu0 %4567
    %4569 = vrot.lane.b32.xlu0 %v4449, 124
    %v4570 = vpop.permute.xlu0 %4569
    %4571 = vrot.lane.b32.xlu0 %v4450, 124
    %v4572 = vpop.permute.xlu0 %4571
    %4573 = vrot.lane.b32.xlu0 %v4451, 124
    %v4574 = vpop.permute.xlu0 %4573
    %4575 = vrot.lane.b32.xlu0 %v4452, 124
    %v4576 = vpop.permute.xlu0 %4575
    %4577 = vrot.lane.b32.xlu0 %v4453, 124
    %v4578 = vpop.permute.xlu0 %4577
    %4579 = vrot.lane.b32.xlu0 %v4454, 124
    %v4580 = vpop.permute.xlu0 %4579
    %4581 = vrot.lane.b32.xlu0 %v4455, 124
    %v4582 = vpop.permute.xlu0 %4581
    %4583 = vrot.lane.b32.xlu0 %v4456, 124
    %v4584 = vpop.permute.xlu0 %4583
    %4585 = vrot.lane.b32.xlu0 %v4457, 124
    %v4586 = vpop.permute.xlu0 %4585
    %4587 = vrot.lane.b32.xlu0 %v4458, 124
    %v4588 = vpop.permute.xlu0 %4587
    %4589 = vrot.lane.b32.xlu0 %v4459, 124
    %v4590 = vpop.permute.xlu0 %4589
    %4591 = vrot.lane.b32.xlu0 %v4460, 124
    %v4592 = vpop.permute.xlu0 %4591
    %4593 = vrot.lane.b32.xlu0 %v4461, 124
    %v4594 = vpop.permute.xlu0 %4593
    %4595 = vrot.lane.b32.xlu0 %v4462, 124
    %v4596 = vpop.permute.xlu0 %4595
    %4597 = vrot.lane.b32.xlu0 %v4463, 124
    %v4598 = vpop.permute.xlu0 %4597
    %4599 = vrot.lane.b32.xlu0 %v4464, 124
    %v4600 = vpop.permute.xlu0 %4599
    %4601 = vrot.lane.b32.xlu0 %v4465, 124
    %v4602 = vpop.permute.xlu0 %4601
    %4603 = vrot.lane.b32.xlu0 %v4466, 124
    %v4604 = vpop.permute.xlu0 %4603
    %4605 = vrot.lane.b32.xlu0 %v4467, 124
    %v4606 = vpop.permute.xlu0 %4605
    %4607 = vrot.lane.b32.xlu0 %v4468, 124
    %v4608 = vpop.permute.xlu0 %4607
    %4609 = vrot.lane.b32.xlu0 %v4469, 124
    %v4610 = vpop.permute.xlu0 %4609
    %4611 = vrot.lane.b32.xlu0 %v4470, 124
    %v4612 = vpop.permute.xlu0 %4611
    %4613 = vrot.lane.b32.xlu0 %v4471, 124
    %v4614 = vpop.permute.xlu0 %4613
    %4615 = vrot.lane.b32.xlu0 %v4472, 124
    %v4616 = vpop.permute.xlu0 %4615
    %v4665 = vmul.f32 %v325, %v4522
    %v4666 = vmul.f32 %v326, %v4524
    %v4667 = vmul.f32 %v327, %v4526
    %v4668 = vmul.f32 %v328, %v4528
    %v4669 = vmul.f32 %v329, %v4530
    %v4670 = vmul.f32 %v330, %v4532
    %v4671 = vmul.f32 %v331, %v4534
    %v4672 = vmul.f32 %v332, %v4536
    %v4673 = vmul.f32 %v333, %v4538
    %v4674 = vmul.f32 %v334, %v4540
    %v4675 = vmul.f32 %v335, %v4542
    %v4676 = vmul.f32 %v336, %v4544
    %v4677 = vmul.f32 %v337, %v4546
    %v4678 = vmul.f32 %v338, %v4548
    %v4679 = vmul.f32 %v339, %v4550
    %v4680 = vmul.f32 %v340, %v4552
    %v4681 = vmul.f32 %v341, %v4554
    %v4682 = vmul.f32 %v342, %v4556
    %v4683 = vmul.f32 %v343, %v4558
    %v4684 = vmul.f32 %v344, %v4560
    %v4685 = vmul.f32 %v345, %v4562
    %v4686 = vmul.f32 %v346, %v4564
    %v4687 = vmul.f32 %v347, %v4566
    %v4688 = vmul.f32 %v348, %v4568
    %v4689 = vmul.f32 %v349, %v4570
    %v4690 = vmul.f32 %v350, %v4572
    %v4691 = vmul.f32 %v351, %v4574
    %v4692 = vmul.f32 %v352, %v4576
    %v4693 = vmul.f32 %v353, %v4578
    %v4694 = vmul.f32 %v354, %v4580
    %v4695 = vmul.f32 %v355, %v4582
    %v4696 = vmul.f32 %v356, %v4584
    %v4697 = vmul.f32 %v357, %v4586
    %v4698 = vmul.f32 %v358, %v4588
    %v4699 = vmul.f32 %v359, %v4590
    %v4700 = vmul.f32 %v360, %v4592
    %v4701 = vmul.f32 %v361, %v4594
    %v4702 = vmul.f32 %v362, %v4596
    %v4703 = vmul.f32 %v363, %v4598
    %v4704 = vmul.f32 %v364, %v4600
    %v4705 = vmul.f32 %v365, %v4602
    %v4706 = vmul.f32 %v366, %v4604
    %v4707 = vmul.f32 %v367, %v4606
    %v4708 = vmul.f32 %v368, %v4608
    %v4709 = vmul.f32 %v369, %v4610
    %v4710 = vmul.f32 %v370, %v4612
    %v4711 = vmul.f32 %v371, %v4614
    %v4712 = vmul.f32 %v372, %v4616
    %v4713 = vmul.f32 %v277, 100.0
    %v4714 = vmul.f32 %v278, 100.0
    %v4715 = vmul.f32 %v279, 100.0
    %v4716 = vmul.f32 %v280, 100.0
    %v4717 = vmul.f32 %v281, 100.0
    %v4718 = vmul.f32 %v282, 100.0
    %v4719 = vmul.f32 %v283, 100.0
    %v4720 = vmul.f32 %v284, 100.0
    %v4721 = vmul.f32 %v285, 100.0
    %v4722 = vmul.f32 %v286, 100.0
    %v4723 = vmul.f32 %v287, 100.0
    %v4724 = vmul.f32 %v288, 100.0
    %v4725 = vmul.f32 %v289, 100.0
    %v4726 = vmul.f32 %v290, 100.0
    %v4727 = vmul.f32 %v291, 100.0
    %v4728 = vmul.f32 %v292, 100.0
    %v4729 = vmul.f32 %v293, 100.0
    %v4730 = vmul.f32 %v294, 100.0
    %v4731 = vmul.f32 %v295, 100.0
    %v4732 = vmul.f32 %v296, 100.0
    %v4733 = vmul.f32 %v297, 100.0
    %v4734 = vmul.f32 %v298, 100.0
    %v4735 = vmul.f32 %v299, 100.0
    %v4736 = vmul.f32 %v300, 100.0
    %v4737 = vmul.f32 %v301, 100.0
    %v4738 = vmul.f32 %v302, 100.0
    %v4739 = vmul.f32 %v303, 100.0
    %v4740 = vmul.f32 %v304, 100.0
    %v4741 = vmul.f32 %v305, 100.0
    %v4742 = vmul.f32 %v306, 100.0
    %v4743 = vmul.f32 %v307, 100.0
    %v4744 = vmul.f32 %v308, 100.0
    %v4745 = vmul.f32 %v309, 100.0
    %v4746 = vmul.f32 %v310, 100.0
    %v4747 = vmul.f32 %v311, 100.0
    %v4748 = vmul.f32 %v312, 100.0
    %v4749 = vmul.f32 %v313, 100.0
    %v4750 = vmul.f32 %v314, 100.0
    %v4751 = vmul.f32 %v315, 100.0
    %v4752 = vmul.f32 %v316, 100.0
    %v4753 = vmul.f32 %v317, 100.0
    %v4754 = vmul.f32 %v318, 100.0
    %v4755 = vmul.f32 %v319, 100.0
    %v4756 = vmul.f32 %v320, 100.0
    %v4757 = vmul.f32 %v321, 100.0
    %v4758 = vmul.f32 %v322, 100.0
    %v4759 = vmul.f32 %v323, 100.0
    %v4760 = vmul.f32 %v324, 100.0
    %v4761 = vadd.f32 %v4665, %v4713
    %v4762 = vadd.f32 %v4666, %v4714
    %v4763 = vadd.f32 %v4667, %v4715
    %v4764 = vadd.f32 %v4668, %v4716
    %v4765 = vadd.f32 %v4669, %v4717
    %v4766 = vadd.f32 %v4670, %v4718
    %v4767 = vadd.f32 %v4671, %v4719
    %v4768 = vadd.f32 %v4672, %v4720
    %v4769 = vadd.f32 %v4673, %v4721
    %v4770 = vadd.f32 %v4674, %v4722
    %v4771 = vadd.f32 %v4675, %v4723
    %v4772 = vadd.f32 %v4676, %v4724
    %v4773 = vadd.f32 %v4677, %v4725
    %v4774 = vadd.f32 %v4678, %v4726
    %v4775 = vadd.f32 %v4679, %v4727
    %v4776 = vadd.f32 %v4680, %v4728
    %v4777 = vadd.f32 %v4681, %v4729
    %v4778 = vadd.f32 %v4682, %v4730
    %v4779 = vadd.f32 %v4683, %v4731
    %v4780 = vadd.f32 %v4684, %v4732
    %v4781 = vadd.f32 %v4685, %v4733
    %v4782 = vadd.f32 %v4686, %v4734
    %v4783 = vadd.f32 %v4687, %v4735
    %v4784 = vadd.f32 %v4688, %v4736
    %v4785 = vadd.f32 %v4689, %v4737
    %v4786 = vadd.f32 %v4690, %v4738
    %v4787 = vadd.f32 %v4691, %v4739
    %v4788 = vadd.f32 %v4692, %v4740
    %v4789 = vadd.f32 %v4693, %v4741
    %v4790 = vadd.f32 %v4694, %v4742
    %v4791 = vadd.f32 %v4695, %v4743
    %v4792 = vadd.f32 %v4696, %v4744
    %v4793 = vadd.f32 %v4697, %v4745
    %v4794 = vadd.f32 %v4698, %v4746
    %v4795 = vadd.f32 %v4699, %v4747
    %v4796 = vadd.f32 %v4700, %v4748
    %v4797 = vadd.f32 %v4701, %v4749
    %v4798 = vadd.f32 %v4702, %v4750
    %v4799 = vadd.f32 %v4703, %v4751
    %v4800 = vadd.f32 %v4704, %v4752
    %v4801 = vadd.f32 %v4705, %v4753
    %v4802 = vadd.f32 %v4706, %v4754
    %v4803 = vadd.f32 %v4707, %v4755
    %v4804 = vadd.f32 %v4708, %v4756
    %v4805 = vadd.f32 %v4709, %v4757
    %v4806 = vadd.f32 %v4710, %v4758
    %v4807 = vadd.f32 %v4711, %v4759
    %v4808 = vadd.f32 %v4712, %v4760
    %v4809 = vmul.f32 %v4761, 0.25
    %v4810 = vmul.f32 %v4762, 0.25
    %v4811 = vmul.f32 %v4763, 0.25
    %v4812 = vmul.f32 %v4764, 0.25
    %v4813 = vmul.f32 %v4765, 0.25
    %v4814 = vmul.f32 %v4766, 0.25
    %v4815 = vmul.f32 %v4767, 0.25
    %v4816 = vmul.f32 %v4768, 0.25
    %v4817 = vmul.f32 %v4769, 0.25
    %v4818 = vmul.f32 %v4770, 0.25
    %v4819 = vmul.f32 %v4771, 0.25
    %v4820 = vmul.f32 %v4772, 0.25
    %v4821 = vmul.f32 %v4773, 0.25
    %v4822 = vmul.f32 %v4774, 0.25
    %v4823 = vmul.f32 %v4775, 0.25
    %v4824 = vmul.f32 %v4776, 0.25
    %v4825 = vmul.f32 %v4777, 0.25
    %v4826 = vmul.f32 %v4778, 0.25
    %v4827 = vmul.f32 %v4779, 0.25
    %v4828 = vmul.f32 %v4780, 0.25
    %v4829 = vmul.f32 %v4781, 0.25
    %v4830 = vmul.f32 %v4782, 0.25
    %v4831 = vmul.f32 %v4783, 0.25
    %v4832 = vmul.f32 %v4784, 0.25
    %v4833 = vmul.f32 %v4785, 0.25
    %v4834 = vmul.f32 %v4786, 0.25
    %v4835 = vmul.f32 %v4787, 0.25
    %v4836 = vmul.f32 %v4788, 0.25
    %v4837 = vmul.f32 %v4789, 0.25
    %v4838 = vmul.f32 %v4790, 0.25
    %v4839 = vmul.f32 %v4791, 0.25
    %v4840 = vmul.f32 %v4792, 0.25
    %v4841 = vmul.f32 %v4793, 0.25
    %v4842 = vmul.f32 %v4794, 0.25
    %v4843 = vmul.f32 %v4795, 0.25
    %v4844 = vmul.f32 %v4796, 0.25
    %v4845 = vmul.f32 %v4797, 0.25
    %v4846 = vmul.f32 %v4798, 0.25
    %v4847 = vmul.f32 %v4799, 0.25
    %v4848 = vmul.f32 %v4800, 0.25
    %v4849 = vmul.f32 %v4801, 0.25
    %v4850 = vmul.f32 %v4802, 0.25
    %v4851 = vmul.f32 %v4803, 0.25
    %v4852 = vmul.f32 %v4804, 0.25
    %v4853 = vmul.f32 %v4805, 0.25
    %v4854 = vmul.f32 %v4806, 0.25
    %v4855 = vmul.f32 %v4807, 0.25
    %v4856 = vmul.f32 %v4808, 0.25
    %v4857 = vcvt.s32.f32 %v374
    %v4858 = vsub.f32 %v132, 1.0
    %v4859 = vsub.f32 %v133, 1.0
    %v4860 = vsub.f32 %v134, 1.0
    %v4861 = vsub.f32 %v135, 1.0
    %v4862 = vsub.f32 %v136, 1.0
    %v4863 = vsub.f32 %v137, 1.0
    %v4864 = vsub.f32 %v138, 1.0
    %v4865 = vsub.f32 %v139, 1.0
    %v4866 = vsub.f32 %v140, 1.0
    %v4867 = vsub.f32 %v141, 1.0
    %v4868 = vsub.f32 %v142, 1.0
    %v4869 = vsub.f32 %v143, 1.0
    %v4870 = vsub.f32 %v144, 1.0
    %v4871 = vsub.f32 %v145, 1.0
    %v4872 = vsub.f32 %v146, 1.0
    %v4873 = vsub.f32 %v147, 1.0
    %v4874 = vsub.f32 %v148, 1.0
    %v4875 = vsub.f32 %v149, 1.0
    %v4876 = vsub.f32 %v150, 1.0
    %v4877 = vsub.f32 %v151, 1.0
    %v4878 = vsub.f32 %v152, 1.0
    %v4879 = vsub.f32 %v153, 1.0
    %v4880 = vsub.f32 %v154, 1.0
    %v4881 = vsub.f32 %v155, 1.0
    %v4882 = vsub.f32 %v156, 1.0
    %v4883 = vsub.f32 %v157, 1.0
    %v4884 = vsub.f32 %v158, 1.0
    %v4885 = vsub.f32 %v159, 1.0
    %v4886 = vsub.f32 %v160, 1.0
    %v4887 = vsub.f32 %v161, 1.0
    %v4888 = vsub.f32 %v162, 1.0
    %v4889 = vsub.f32 %v163, 1.0
    %v4890 = vsub.f32 %v164, 1.0
    %v4891 = vsub.f32 %v165, 1.0
    %v4892 = vsub.f32 %v166, 1.0
    %v4893 = vsub.f32 %v167, 1.0
    %v4894 = vsub.f32 %v168, 1.0
    %v4895 = vsub.f32 %v169, 1.0
    %v4896 = vsub.f32 %v170, 1.0
    %v4897 = vsub.f32 %v171, 1.0
    %v4898 = vsub.f32 %v172, 1.0
    %v4899 = vsub.f32 %v173, 1.0
    %v4900 = vsub.f32 %v174, 1.0
    %v4901 = vsub.f32 %v175, 1.0
    %v4902 = vsub.f32 %v176, 1.0
    %v4903 = vsub.f32 %v177, 1.0
    %v4904 = vsub.f32 %v178, 1.0
    %v4905 = vsub.f32 %v179, 1.0
    %4907 = vset.pattern.permute.xlu0 0
    %4908 = vperm.xlu0 %4907, %v4858
    %v4909 = vpop.permute.xlu0 %4908
    %4912 = vset.pattern.permute.xlu0 0
    %4913 = vperm.xlu0 %4912, %v4859
    %v4914 = vpop.permute.xlu0 %4913
    %4917 = vset.pattern.permute.xlu0 0
    %4918 = vperm.xlu0 %4917, %v4860
    %v4919 = vpop.permute.xlu0 %4918
    %4922 = vset.pattern.permute.xlu0 0
    %4923 = vperm.xlu0 %4922, %v4861
    %v4924 = vpop.permute.xlu0 %4923
    %4927 = vset.pattern.permute.xlu0 0
    %4928 = vperm.xlu0 %4927, %v4862
    %v4929 = vpop.permute.xlu0 %4928
    %4932 = vset.pattern.permute.xlu0 0
    %4933 = vperm.xlu0 %4932, %v4863
    %v4934 = vpop.permute.xlu0 %4933
    %4937 = vset.pattern.permute.xlu0 0
    %4938 = vperm.xlu0 %4937, %v4864
    %v4939 = vpop.permute.xlu0 %4938
    %4942 = vset.pattern.permute.xlu0 0
    %4943 = vperm.xlu0 %4942, %v4865
    %v4944 = vpop.permute.xlu0 %4943
    %4947 = vset.pattern.permute.xlu0 0
    %4948 = vperm.xlu0 %4947, %v4866
    %v4949 = vpop.permute.xlu0 %4948
    %4952 = vset.pattern.permute.xlu0 0
    %4953 = vperm.xlu0 %4952, %v4867
    %v4954 = vpop.permute.xlu0 %4953
    %4957 = vset.pattern.permute.xlu0 0
    %4958 = vperm.xlu0 %4957, %v4868
    %v4959 = vpop.permute.xlu0 %4958
    %4962 = vset.pattern.permute.xlu0 0
    %4963 = vperm.xlu0 %4962, %v4869
    %v4964 = vpop.permute.xlu0 %4963
    %4967 = vset.pattern.permute.xlu0 0
    %4968 = vperm.xlu0 %4967, %v4870
    %v4969 = vpop.permute.xlu0 %4968
    %4972 = vset.pattern.permute.xlu0 0
    %4973 = vperm.xlu0 %4972, %v4871
    %v4974 = vpop.permute.xlu0 %4973
    %4977 = vset.pattern.permute.xlu0 0
    %4978 = vperm.xlu0 %4977, %v4872
    %v4979 = vpop.permute.xlu0 %4978
    %4982 = vset.pattern.permute.xlu0 0
    %4983 = vperm.xlu0 %4982, %v4873
    %v4984 = vpop.permute.xlu0 %4983
    %4987 = vset.pattern.permute.xlu0 0
    %4988 = vperm.xlu0 %4987, %v4874
    %v4989 = vpop.permute.xlu0 %4988
    %4992 = vset.pattern.permute.xlu0 0
    %4993 = vperm.xlu0 %4992, %v4875
    %v4994 = vpop.permute.xlu0 %4993
    %4997 = vset.pattern.permute.xlu0 0
    %4998 = vperm.xlu0 %4997, %v4876
    %v4999 = vpop.permute.xlu0 %4998
    %5002 = vset.pattern.permute.xlu0 0
    %5003 = vperm.xlu0 %5002, %v4877
    %v5004 = vpop.permute.xlu0 %5003
    %5007 = vset.pattern.permute.xlu0 0
    %5008 = vperm.xlu0 %5007, %v4878
    %v5009 = vpop.permute.xlu0 %5008
    %5012 = vset.pattern.permute.xlu0 0
    %5013 = vperm.xlu0 %5012, %v4879
    %v5014 = vpop.permute.xlu0 %5013
    %5017 = vset.pattern.permute.xlu0 0
    %5018 = vperm.xlu0 %5017, %v4880
    %v5019 = vpop.permute.xlu0 %5018
    %5022 = vset.pattern.permute.xlu0 0
    %5023 = vperm.xlu0 %5022, %v4881
    %v5024 = vpop.permute.xlu0 %5023
    %5027 = vset.pattern.permute.xlu0 0
    %5028 = vperm.xlu0 %5027, %v4882
    %v5029 = vpop.permute.xlu0 %5028
    %5032 = vset.pattern.permute.xlu0 0
    %5033 = vperm.xlu0 %5032, %v4883
    %v5034 = vpop.permute.xlu0 %5033
    %5037 = vset.pattern.permute.xlu0 0
    %5038 = vperm.xlu0 %5037, %v4884
    %v5039 = vpop.permute.xlu0 %5038
    %5042 = vset.pattern.permute.xlu0 0
    %5043 = vperm.xlu0 %5042, %v4885
    %v5044 = vpop.permute.xlu0 %5043
    %5047 = vset.pattern.permute.xlu0 0
    %5048 = vperm.xlu0 %5047, %v4886
    %v5049 = vpop.permute.xlu0 %5048
    %5052 = vset.pattern.permute.xlu0 0
    %5053 = vperm.xlu0 %5052, %v4887
    %v5054 = vpop.permute.xlu0 %5053
    %5057 = vset.pattern.permute.xlu0 0
    %5058 = vperm.xlu0 %5057, %v4888
    %v5059 = vpop.permute.xlu0 %5058
    %5062 = vset.pattern.permute.xlu0 0
    %5063 = vperm.xlu0 %5062, %v4889
    %v5064 = vpop.permute.xlu0 %5063
    %5067 = vset.pattern.permute.xlu0 0
    %5068 = vperm.xlu0 %5067, %v4890
    %v5069 = vpop.permute.xlu0 %5068
    %5072 = vset.pattern.permute.xlu0 0
    %5073 = vperm.xlu0 %5072, %v4891
    %v5074 = vpop.permute.xlu0 %5073
    %5077 = vset.pattern.permute.xlu0 0
    %5078 = vperm.xlu0 %5077, %v4892
    %v5079 = vpop.permute.xlu0 %5078
    %5082 = vset.pattern.permute.xlu0 0
    %5083 = vperm.xlu0 %5082, %v4893
    %v5084 = vpop.permute.xlu0 %5083
    %5087 = vset.pattern.permute.xlu0 0
    %5088 = vperm.xlu0 %5087, %v4894
    %v5089 = vpop.permute.xlu0 %5088
    %5092 = vset.pattern.permute.xlu0 0
    %5093 = vperm.xlu0 %5092, %v4895
    %v5094 = vpop.permute.xlu0 %5093
    %5097 = vset.pattern.permute.xlu0 0
    %5098 = vperm.xlu0 %5097, %v4896
    %v5099 = vpop.permute.xlu0 %5098
    %5102 = vset.pattern.permute.xlu0 0
    %5103 = vperm.xlu0 %5102, %v4897
    %v5104 = vpop.permute.xlu0 %5103
    %5107 = vset.pattern.permute.xlu0 0
    %5108 = vperm.xlu0 %5107, %v4898
    %v5109 = vpop.permute.xlu0 %5108
    %5112 = vset.pattern.permute.xlu0 0
    %5113 = vperm.xlu0 %5112, %v4899
    %v5114 = vpop.permute.xlu0 %5113
    %5117 = vset.pattern.permute.xlu0 0
    %5118 = vperm.xlu0 %5117, %v4900
    %v5119 = vpop.permute.xlu0 %5118
    %5122 = vset.pattern.permute.xlu0 0
    %5123 = vperm.xlu0 %5122, %v4901
    %v5124 = vpop.permute.xlu0 %5123
    %5127 = vset.pattern.permute.xlu0 0
    %5128 = vperm.xlu0 %5127, %v4902
    %v5129 = vpop.permute.xlu0 %5128
    %5132 = vset.pattern.permute.xlu0 0
    %5133 = vperm.xlu0 %5132, %v4903
    %v5134 = vpop.permute.xlu0 %5133
    %5137 = vset.pattern.permute.xlu0 0
    %5138 = vperm.xlu0 %5137, %v4904
    %v5139 = vpop.permute.xlu0 %5138
    %5142 = vset.pattern.permute.xlu0 0
    %5143 = vperm.xlu0 %5142, %v4905
    %v5144 = vpop.permute.xlu0 %5143
    %vm5146 = vcmp.eq.f32.partialorder %v4857, %v4909
    %vm5147 = vcmp.eq.f32.partialorder %v4857, %v4914
    %vm5148 = vcmp.eq.f32.partialorder %v4857, %v4919
    %vm5149 = vcmp.eq.f32.partialorder %v4857, %v4924
    %vm5150 = vcmp.eq.f32.partialorder %v4857, %v4929
    %vm5151 = vcmp.eq.f32.partialorder %v4857, %v4934
    %vm5152 = vcmp.eq.f32.partialorder %v4857, %v4939
    %vm5153 = vcmp.eq.f32.partialorder %v4857, %v4944
    %vm5154 = vcmp.eq.f32.partialorder %v4857, %v4949
    %vm5155 = vcmp.eq.f32.partialorder %v4857, %v4954
    %vm5156 = vcmp.eq.f32.partialorder %v4857, %v4959
    %vm5157 = vcmp.eq.f32.partialorder %v4857, %v4964
    %vm5158 = vcmp.eq.f32.partialorder %v4857, %v4969
    %vm5159 = vcmp.eq.f32.partialorder %v4857, %v4974
    %vm5160 = vcmp.eq.f32.partialorder %v4857, %v4979
    %vm5161 = vcmp.eq.f32.partialorder %v4857, %v4984
    %vm5162 = vcmp.eq.f32.partialorder %v4857, %v4989
    %vm5163 = vcmp.eq.f32.partialorder %v4857, %v4994
    %vm5164 = vcmp.eq.f32.partialorder %v4857, %v4999
    %vm5165 = vcmp.eq.f32.partialorder %v4857, %v5004
    %vm5166 = vcmp.eq.f32.partialorder %v4857, %v5009
    %vm5167 = vcmp.eq.f32.partialorder %v4857, %v5014
    %vm5168 = vcmp.eq.f32.partialorder %v4857, %v5019
    %vm5169 = vcmp.eq.f32.partialorder %v4857, %v5024
    %vm5170 = vcmp.eq.f32.partialorder %v4857, %v5029
    %vm5171 = vcmp.eq.f32.partialorder %v4857, %v5034
    %vm5172 = vcmp.eq.f32.partialorder %v4857, %v5039
    %vm5173 = vcmp.eq.f32.partialorder %v4857, %v5044
    %vm5174 = vcmp.eq.f32.partialorder %v4857, %v5049
    %vm5175 = vcmp.eq.f32.partialorder %v4857, %v5054
    %vm5176 = vcmp.eq.f32.partialorder %v4857, %v5059
    %vm5177 = vcmp.eq.f32.partialorder %v4857, %v5064
    %vm5178 = vcmp.eq.f32.partialorder %v4857, %v5069
    %vm5179 = vcmp.eq.f32.partialorder %v4857, %v5074
    %vm5180 = vcmp.eq.f32.partialorder %v4857, %v5079
    %vm5181 = vcmp.eq.f32.partialorder %v4857, %v5084
    %vm5182 = vcmp.eq.f32.partialorder %v4857, %v5089
    %vm5183 = vcmp.eq.f32.partialorder %v4857, %v5094
    %vm5184 = vcmp.eq.f32.partialorder %v4857, %v5099
    %vm5185 = vcmp.eq.f32.partialorder %v4857, %v5104
    %vm5186 = vcmp.eq.f32.partialorder %v4857, %v5109
    %vm5187 = vcmp.eq.f32.partialorder %v4857, %v5114
    %vm5188 = vcmp.eq.f32.partialorder %v4857, %v5119
    %vm5189 = vcmp.eq.f32.partialorder %v4857, %v5124
    %vm5190 = vcmp.eq.f32.partialorder %v4857, %v5129
    %vm5191 = vcmp.eq.f32.partialorder %v4857, %v5134
    %vm5192 = vcmp.eq.f32.partialorder %v4857, %v5139
    %vm5193 = vcmp.eq.f32.partialorder %v4857, %v5144
    %v5194 = vsel %vm5146, 1, 0
    %v5195 = vsel %vm5147, 1, 0
    %v5196 = vsel %vm5148, 1, 0
    %v5197 = vsel %vm5149, 1, 0
    %v5198 = vsel %vm5150, 1, 0
    %v5199 = vsel %vm5151, 1, 0
    %v5200 = vsel %vm5152, 1, 0
    %v5201 = vsel %vm5153, 1, 0
    %v5202 = vsel %vm5154, 1, 0
    %v5203 = vsel %vm5155, 1, 0
    %v5204 = vsel %vm5156, 1, 0
    %v5205 = vsel %vm5157, 1, 0
    %v5206 = vsel %vm5158, 1, 0
    %v5207 = vsel %vm5159, 1, 0
    %v5208 = vsel %vm5160, 1, 0
    %v5209 = vsel %vm5161, 1, 0
    %v5210 = vsel %vm5162, 1, 0
    %v5211 = vsel %vm5163, 1, 0
    %v5212 = vsel %vm5164, 1, 0
    %v5213 = vsel %vm5165, 1, 0
    %v5214 = vsel %vm5166, 1, 0
    %v5215 = vsel %vm5167, 1, 0
    %v5216 = vsel %vm5168, 1, 0
    %v5217 = vsel %vm5169, 1, 0
    %v5218 = vsel %vm5170, 1, 0
    %v5219 = vsel %vm5171, 1, 0
    %v5220 = vsel %vm5172, 1, 0
    %v5221 = vsel %vm5173, 1, 0
    %v5222 = vsel %vm5174, 1, 0
    %v5223 = vsel %vm5175, 1, 0
    %v5224 = vsel %vm5176, 1, 0
    %v5225 = vsel %vm5177, 1, 0
    %v5226 = vsel %vm5178, 1, 0
    %v5227 = vsel %vm5179, 1, 0
    %v5228 = vsel %vm5180, 1, 0
    %v5229 = vsel %vm5181, 1, 0
    %v5230 = vsel %vm5182, 1, 0
    %v5231 = vsel %vm5183, 1, 0
    %v5232 = vsel %vm5184, 1, 0
    %v5233 = vsel %vm5185, 1, 0
    %v5234 = vsel %vm5186, 1, 0
    %v5235 = vsel %vm5187, 1, 0
    %v5236 = vsel %vm5188, 1, 0
    %v5237 = vsel %vm5189, 1, 0
    %v5238 = vsel %vm5190, 1, 0
    %v5239 = vsel %vm5191, 1, 0
    %v5240 = vsel %vm5192, 1, 0
    %v5241 = vsel %vm5193, 1, 0
    %v5242 = vcvt.s32.f32 %v5194
    %v5243 = vcvt.s32.f32 %v5195
    %v5244 = vcvt.s32.f32 %v5196
    %v5245 = vcvt.s32.f32 %v5197
    %v5246 = vcvt.s32.f32 %v5198
    %v5247 = vcvt.s32.f32 %v5199
    %v5248 = vcvt.s32.f32 %v5200
    %v5249 = vcvt.s32.f32 %v5201
    %v5250 = vcvt.s32.f32 %v5202
    %v5251 = vcvt.s32.f32 %v5203
    %v5252 = vcvt.s32.f32 %v5204
    %v5253 = vcvt.s32.f32 %v5205
    %v5254 = vcvt.s32.f32 %v5206
    %v5255 = vcvt.s32.f32 %v5207
    %v5256 = vcvt.s32.f32 %v5208
    %v5257 = vcvt.s32.f32 %v5209
    %v5258 = vcvt.s32.f32 %v5210
    %v5259 = vcvt.s32.f32 %v5211
    %v5260 = vcvt.s32.f32 %v5212
    %v5261 = vcvt.s32.f32 %v5213
    %v5262 = vcvt.s32.f32 %v5214
    %v5263 = vcvt.s32.f32 %v5215
    %v5264 = vcvt.s32.f32 %v5216
    %v5265 = vcvt.s32.f32 %v5217
    %v5266 = vcvt.s32.f32 %v5218
    %v5267 = vcvt.s32.f32 %v5219
    %v5268 = vcvt.s32.f32 %v5220
    %v5269 = vcvt.s32.f32 %v5221
    %v5270 = vcvt.s32.f32 %v5222
    %v5271 = vcvt.s32.f32 %v5223
    %v5272 = vcvt.s32.f32 %v5224
    %v5273 = vcvt.s32.f32 %v5225
    %v5274 = vcvt.s32.f32 %v5226
    %v5275 = vcvt.s32.f32 %v5227
    %v5276 = vcvt.s32.f32 %v5228
    %v5277 = vcvt.s32.f32 %v5229
    %v5278 = vcvt.s32.f32 %v5230
    %v5279 = vcvt.s32.f32 %v5231
    %v5280 = vcvt.s32.f32 %v5232
    %v5281 = vcvt.s32.f32 %v5233
    %v5282 = vcvt.s32.f32 %v5234
    %v5283 = vcvt.s32.f32 %v5235
    %v5284 = vcvt.s32.f32 %v5236
    %v5285 = vcvt.s32.f32 %v5237
    %v5286 = vcvt.s32.f32 %v5238
    %v5287 = vcvt.s32.f32 %v5239
    %v5288 = vcvt.s32.f32 %v5240
    %v5289 = vcvt.s32.f32 %v5241
    %5338 = vrot.lane.b32.xlu0 %v5242, 5
    %v5339 = vpop.permute.xlu0 %5338
    %5340 = vrot.lane.b32.xlu0 %v5243, 5
    %v5341 = vpop.permute.xlu0 %5340
    %5342 = vrot.lane.b32.xlu0 %v5244, 5
    %v5343 = vpop.permute.xlu0 %5342
    %5344 = vrot.lane.b32.xlu0 %v5245, 5
    %v5345 = vpop.permute.xlu0 %5344
    %5346 = vrot.lane.b32.xlu0 %v5246, 5
    %v5347 = vpop.permute.xlu0 %5346
    %5348 = vrot.lane.b32.xlu0 %v5247, 5
    %v5349 = vpop.permute.xlu0 %5348
    %5350 = vrot.lane.b32.xlu0 %v5248, 5
    %v5351 = vpop.permute.xlu0 %5350
    %5352 = vrot.lane.b32.xlu0 %v5249, 5
    %v5353 = vpop.permute.xlu0 %5352
    %5354 = vrot.lane.b32.xlu0 %v5250, 5
    %v5355 = vpop.permute.xlu0 %5354
    %5356 = vrot.lane.b32.xlu0 %v5251, 5
    %v5357 = vpop.permute.xlu0 %5356
    %5358 = vrot.lane.b32.xlu0 %v5252, 5
    %v5359 = vpop.permute.xlu0 %5358
    %5360 = vrot.lane.b32.xlu0 %v5253, 5
    %v5361 = vpop.permute.xlu0 %5360
    %5362 = vrot.lane.b32.xlu0 %v5254, 5
    %v5363 = vpop.permute.xlu0 %5362
    %5364 = vrot.lane.b32.xlu0 %v5255, 5
    %v5365 = vpop.permute.xlu0 %5364
    %5366 = vrot.lane.b32.xlu0 %v5256, 5
    %v5367 = vpop.permute.xlu0 %5366
    %5368 = vrot.lane.b32.xlu0 %v5257, 5
    %v5369 = vpop.permute.xlu0 %5368
    %5370 = vrot.lane.b32.xlu0 %v5258, 5
    %v5371 = vpop.permute.xlu0 %5370
    %5372 = vrot.lane.b32.xlu0 %v5259, 5
    %v5373 = vpop.permute.xlu0 %5372
    %5374 = vrot.lane.b32.xlu0 %v5260, 5
    %v5375 = vpop.permute.xlu0 %5374
    %5376 = vrot.lane.b32.xlu0 %v5261, 5
    %v5377 = vpop.permute.xlu0 %5376
    %5378 = vrot.lane.b32.xlu0 %v5262, 5
    %v5379 = vpop.permute.xlu0 %5378
    %5380 = vrot.lane.b32.xlu0 %v5263, 5
    %v5381 = vpop.permute.xlu0 %5380
    %5382 = vrot.lane.b32.xlu0 %v5264, 5
    %v5383 = vpop.permute.xlu0 %5382
    %5384 = vrot.lane.b32.xlu0 %v5265, 5
    %v5385 = vpop.permute.xlu0 %5384
    %5386 = vrot.lane.b32.xlu0 %v5266, 5
    %v5387 = vpop.permute.xlu0 %5386
    %5388 = vrot.lane.b32.xlu0 %v5267, 5
    %v5389 = vpop.permute.xlu0 %5388
    %5390 = vrot.lane.b32.xlu0 %v5268, 5
    %v5391 = vpop.permute.xlu0 %5390
    %5392 = vrot.lane.b32.xlu0 %v5269, 5
    %v5393 = vpop.permute.xlu0 %5392
    %5394 = vrot.lane.b32.xlu0 %v5270, 5
    %v5395 = vpop.permute.xlu0 %5394
    %5396 = vrot.lane.b32.xlu0 %v5271, 5
    %v5397 = vpop.permute.xlu0 %5396
    %5398 = vrot.lane.b32.xlu0 %v5272, 5
    %v5399 = vpop.permute.xlu0 %5398
    %5400 = vrot.lane.b32.xlu0 %v5273, 5
    %v5401 = vpop.permute.xlu0 %5400
    %5402 = vrot.lane.b32.xlu0 %v5274, 5
    %v5403 = vpop.permute.xlu0 %5402
    %5404 = vrot.lane.b32.xlu0 %v5275, 5
    %v5405 = vpop.permute.xlu0 %5404
    %5406 = vrot.lane.b32.xlu0 %v5276, 5
    %v5407 = vpop.permute.xlu0 %5406
    %5408 = vrot.lane.b32.xlu0 %v5277, 5
    %v5409 = vpop.permute.xlu0 %5408
    %5410 = vrot.lane.b32.xlu0 %v5278, 5
    %v5411 = vpop.permute.xlu0 %5410
    %5412 = vrot.lane.b32.xlu0 %v5279, 5
    %v5413 = vpop.permute.xlu0 %5412
    %5414 = vrot.lane.b32.xlu0 %v5280, 5
    %v5415 = vpop.permute.xlu0 %5414
    %5416 = vrot.lane.b32.xlu0 %v5281, 5
    %v5417 = vpop.permute.xlu0 %5416
    %5418 = vrot.lane.b32.xlu0 %v5282, 5
    %v5419 = vpop.permute.xlu0 %5418
    %5420 = vrot.lane.b32.xlu0 %v5283, 5
    %v5421 = vpop.permute.xlu0 %5420
    %5422 = vrot.lane.b32.xlu0 %v5284, 5
    %v5423 = vpop.permute.xlu0 %5422
    %5424 = vrot.lane.b32.xlu0 %v5285, 5
    %v5425 = vpop.permute.xlu0 %5424
    %5426 = vrot.lane.b32.xlu0 %v5286, 5
    %v5427 = vpop.permute.xlu0 %5426
    %5428 = vrot.lane.b32.xlu0 %v5287, 5
    %v5429 = vpop.permute.xlu0 %5428
    %5430 = vrot.lane.b32.xlu0 %v5288, 5
    %v5431 = vpop.permute.xlu0 %5430
    %5432 = vrot.lane.b32.xlu0 %v5289, 5
    %v5433 = vpop.permute.xlu0 %5432
    %v5482 = vmul.f32 %v84, %v5339
    %v5483 = vmul.f32 %v85, %v5341
    %v5484 = vmul.f32 %v86, %v5343
    %v5485 = vmul.f32 %v87, %v5345
    %v5486 = vmul.f32 %v88, %v5347
    %v5487 = vmul.f32 %v89, %v5349
    %v5488 = vmul.f32 %v90, %v5351
    %v5489 = vmul.f32 %v91, %v5353
    %v5490 = vmul.f32 %v92, %v5355
    %v5491 = vmul.f32 %v93, %v5357
    %v5492 = vmul.f32 %v94, %v5359
    %v5493 = vmul.f32 %v95, %v5361
    %v5494 = vmul.f32 %v96, %v5363
    %v5495 = vmul.f32 %v97, %v5365
    %v5496 = vmul.f32 %v98, %v5367
    %v5497 = vmul.f32 %v99, %v5369
    %v5498 = vmul.f32 %v100, %v5371
    %v5499 = vmul.f32 %v101, %v5373
    %v5500 = vmul.f32 %v102, %v5375
    %v5501 = vmul.f32 %v103, %v5377
    %v5502 = vmul.f32 %v104, %v5379
    %v5503 = vmul.f32 %v105, %v5381
    %v5504 = vmul.f32 %v106, %v5383
    %v5505 = vmul.f32 %v107, %v5385
    %v5506 = vmul.f32 %v108, %v5387
    %v5507 = vmul.f32 %v109, %v5389
    %v5508 = vmul.f32 %v110, %v5391
    %v5509 = vmul.f32 %v111, %v5393
    %v5510 = vmul.f32 %v112, %v5395
    %v5511 = vmul.f32 %v113, %v5397
    %v5512 = vmul.f32 %v114, %v5399
    %v5513 = vmul.f32 %v115, %v5401
    %v5514 = vmul.f32 %v116, %v5403
    %v5515 = vmul.f32 %v117, %v5405
    %v5516 = vmul.f32 %v118, %v5407
    %v5517 = vmul.f32 %v119, %v5409
    %v5518 = vmul.f32 %v120, %v5411
    %v5519 = vmul.f32 %v121, %v5413
    %v5520 = vmul.f32 %v122, %v5415
    %v5521 = vmul.f32 %v123, %v5417
    %v5522 = vmul.f32 %v124, %v5419
    %v5523 = vmul.f32 %v125, %v5421
    %v5524 = vmul.f32 %v126, %v5423
    %v5525 = vmul.f32 %v127, %v5425
    %v5526 = vmul.f32 %v128, %v5427
    %v5527 = vmul.f32 %v129, %v5429
    %v5528 = vmul.f32 %v130, %v5431
    %v5529 = vmul.f32 %v131, %v5433
    %v5530 = vsub.f32 %v3945, %v5482
    %v5531 = vsub.f32 %v3946, %v5483
    %v5532 = vsub.f32 %v3947, %v5484
    %v5533 = vsub.f32 %v3948, %v5485
    %v5534 = vsub.f32 %v3949, %v5486
    %v5535 = vsub.f32 %v3950, %v5487
    %v5536 = vsub.f32 %v3951, %v5488
    %v5537 = vsub.f32 %v3952, %v5489
    %v5538 = vsub.f32 %v3953, %v5490
    %v5539 = vsub.f32 %v3954, %v5491
    %v5540 = vsub.f32 %v3955, %v5492
    %v5541 = vsub.f32 %v3956, %v5493
    %v5542 = vsub.f32 %v3957, %v5494
    %v5543 = vsub.f32 %v3958, %v5495
    %v5544 = vsub.f32 %v3959, %v5496
    %v5545 = vsub.f32 %v3960, %v5497
    %v5546 = vsub.f32 %v3961, %v5498
    %v5547 = vsub.f32 %v3962, %v5499
    %v5548 = vsub.f32 %v3963, %v5500
    %v5549 = vsub.f32 %v3964, %v5501
    %v5550 = vsub.f32 %v3965, %v5502
    %v5551 = vsub.f32 %v3966, %v5503
    %v5552 = vsub.f32 %v3967, %v5504
    %v5553 = vsub.f32 %v3968, %v5505
    %v5554 = vsub.f32 %v3969, %v5506
    %v5555 = vsub.f32 %v3970, %v5507
    %v5556 = vsub.f32 %v3971, %v5508
    %v5557 = vsub.f32 %v3972, %v5509
    %v5558 = vsub.f32 %v3973, %v5510
    %v5559 = vsub.f32 %v3974, %v5511
    %v5560 = vsub.f32 %v3975, %v5512
    %v5561 = vsub.f32 %v3976, %v5513
    %v5562 = vsub.f32 %v3977, %v5514
    %v5563 = vsub.f32 %v3978, %v5515
    %v5564 = vsub.f32 %v3979, %v5516
    %v5565 = vsub.f32 %v3980, %v5517
    %v5566 = vsub.f32 %v3981, %v5518
    %v5567 = vsub.f32 %v3982, %v5519
    %v5568 = vsub.f32 %v3983, %v5520
    %v5569 = vsub.f32 %v3984, %v5521
    %v5570 = vsub.f32 %v3985, %v5522
    %v5571 = vsub.f32 %v3986, %v5523
    %v5572 = vsub.f32 %v3987, %v5524
    %v5573 = vsub.f32 %v3988, %v5525
    %v5574 = vsub.f32 %v3989, %v5526
    %v5575 = vsub.f32 %v3990, %v5527
    %v5576 = vsub.f32 %v3991, %v5528
    %v5577 = vsub.f32 %v3992, %v5529
    %v5578 = vadd.f32 %v5530, %v3850
    %v5579 = vadd.f32 %v5531, %v3852
    %v5580 = vadd.f32 %v5532, %v3854
    %v5581 = vadd.f32 %v5533, %v3856
    %v5582 = vadd.f32 %v5534, %v3858
    %v5583 = vadd.f32 %v5535, %v3860
    %v5584 = vadd.f32 %v5536, %v3862
    %v5585 = vadd.f32 %v5537, %v3864
    %v5586 = vadd.f32 %v5538, %v3866
    %v5587 = vadd.f32 %v5539, %v3868
    %v5588 = vadd.f32 %v5540, %v3870
    %v5589 = vadd.f32 %v5541, %v3872
    %v5590 = vadd.f32 %v5542, %v3874
    %v5591 = vadd.f32 %v5543, %v3876
    %v5592 = vadd.f32 %v5544, %v3878
    %v5593 = vadd.f32 %v5545, %v3880
    %v5594 = vadd.f32 %v5546, %v3882
    %v5595 = vadd.f32 %v5547, %v3884
    %v5596 = vadd.f32 %v5548, %v3886
    %v5597 = vadd.f32 %v5549, %v3888
    %v5598 = vadd.f32 %v5550, %v3890
    %v5599 = vadd.f32 %v5551, %v3892
    %v5600 = vadd.f32 %v5552, %v3894
    %v5601 = vadd.f32 %v5553, %v3896
    %v5602 = vadd.f32 %v5554, %v3898
    %v5603 = vadd.f32 %v5555, %v3900
    %v5604 = vadd.f32 %v5556, %v3902
    %v5605 = vadd.f32 %v5557, %v3904
    %v5606 = vadd.f32 %v5558, %v3906
    %v5607 = vadd.f32 %v5559, %v3908
    %v5608 = vadd.f32 %v5560, %v3910
    %v5609 = vadd.f32 %v5561, %v3912
    %v5610 = vadd.f32 %v5562, %v3914
    %v5611 = vadd.f32 %v5563, %v3916
    %v5612 = vadd.f32 %v5564, %v3918
    %v5613 = vadd.f32 %v5565, %v3920
    %v5614 = vadd.f32 %v5566, %v3922
    %v5615 = vadd.f32 %v5567, %v3924
    %v5616 = vadd.f32 %v5568, %v3926
    %v5617 = vadd.f32 %v5569, %v3928
    %v5618 = vadd.f32 %v5570, %v3930
    %v5619 = vadd.f32 %v5571, %v3932
    %v5620 = vadd.f32 %v5572, %v3934
    %v5621 = vadd.f32 %v5573, %v3936
    %v5622 = vadd.f32 %v5574, %v3938
    %v5623 = vadd.f32 %v5575, %v3940
    %v5624 = vadd.f32 %v5576, %v3942
    %v5625 = vadd.f32 %v5577, %v3944
    %v5626 = vmin.f32 %v5578, 100.0
    %v5627 = vmin.f32 %v5579, 100.0
    %v5628 = vmin.f32 %v5580, 100.0
    %v5629 = vmin.f32 %v5581, 100.0
    %v5630 = vmin.f32 %v5582, 100.0
    %v5631 = vmin.f32 %v5583, 100.0
    %v5632 = vmin.f32 %v5584, 100.0
    %v5633 = vmin.f32 %v5585, 100.0
    %v5634 = vmin.f32 %v5586, 100.0
    %v5635 = vmin.f32 %v5587, 100.0
    %v5636 = vmin.f32 %v5588, 100.0
    %v5637 = vmin.f32 %v5589, 100.0
    %v5638 = vmin.f32 %v5590, 100.0
    %v5639 = vmin.f32 %v5591, 100.0
    %v5640 = vmin.f32 %v5592, 100.0
    %v5641 = vmin.f32 %v5593, 100.0
    %v5642 = vmin.f32 %v5594, 100.0
    %v5643 = vmin.f32 %v5595, 100.0
    %v5644 = vmin.f32 %v5596, 100.0
    %v5645 = vmin.f32 %v5597, 100.0
    %v5646 = vmin.f32 %v5598, 100.0
    %v5647 = vmin.f32 %v5599, 100.0
    %v5648 = vmin.f32 %v5600, 100.0
    %v5649 = vmin.f32 %v5601, 100.0
    %v5650 = vmin.f32 %v5602, 100.0
    %v5651 = vmin.f32 %v5603, 100.0
    %v5652 = vmin.f32 %v5604, 100.0
    %v5653 = vmin.f32 %v5605, 100.0
    %v5654 = vmin.f32 %v5606, 100.0
    %v5655 = vmin.f32 %v5607, 100.0
    %v5656 = vmin.f32 %v5608, 100.0
    %v5657 = vmin.f32 %v5609, 100.0
    %v5658 = vmin.f32 %v5610, 100.0
    %v5659 = vmin.f32 %v5611, 100.0
    %v5660 = vmin.f32 %v5612, 100.0
    %v5661 = vmin.f32 %v5613, 100.0
    %v5662 = vmin.f32 %v5614, 100.0
    %v5663 = vmin.f32 %v5615, 100.0
    %v5664 = vmin.f32 %v5616, 100.0
    %v5665 = vmin.f32 %v5617, 100.0
    %v5666 = vmin.f32 %v5618, 100.0
    %v5667 = vmin.f32 %v5619, 100.0
    %v5668 = vmin.f32 %v5620, 100.0
    %v5669 = vmin.f32 %v5621, 100.0
    %v5670 = vmin.f32 %v5622, 100.0
    %v5671 = vmin.f32 %v5623, 100.0
    %v5672 = vmin.f32 %v5624, 100.0
    %v5673 = vmin.f32 %v5625, 100.0
    %v5675 = vlaneseq
    %v5676 = vshrl.u32 %v5675, 7
    %v5677 = vsub.s32 0, %v5676
    %v5678 = vrot.slane %v180, %v5677
    %5728 = vrot.lane.b32.xlu0 %v5626, 123
    %v5729 = vpop.permute.xlu0 %5728
    %5730 = vrot.lane.b32.xlu0 %v5627, 123
    %v5731 = vpop.permute.xlu0 %5730
    %5732 = vrot.lane.b32.xlu0 %v5628, 123
    %v5733 = vpop.permute.xlu0 %5732
    %5734 = vrot.lane.b32.xlu0 %v5629, 123
    %v5735 = vpop.permute.xlu0 %5734
    %5736 = vrot.lane.b32.xlu0 %v5630, 123
    %v5737 = vpop.permute.xlu0 %5736
    %5738 = vrot.lane.b32.xlu0 %v5631, 123
    %v5739 = vpop.permute.xlu0 %5738
    %5740 = vrot.lane.b32.xlu0 %v5632, 123
    %v5741 = vpop.permute.xlu0 %5740
    %5742 = vrot.lane.b32.xlu0 %v5633, 123
    %v5743 = vpop.permute.xlu0 %5742
    %5744 = vrot.lane.b32.xlu0 %v5634, 123
    %v5745 = vpop.permute.xlu0 %5744
    %5746 = vrot.lane.b32.xlu0 %v5635, 123
    %v5747 = vpop.permute.xlu0 %5746
    %5748 = vrot.lane.b32.xlu0 %v5636, 123
    %v5749 = vpop.permute.xlu0 %5748
    %5750 = vrot.lane.b32.xlu0 %v5637, 123
    %v5751 = vpop.permute.xlu0 %5750
    %5752 = vrot.lane.b32.xlu0 %v5638, 123
    %v5753 = vpop.permute.xlu0 %5752
    %5754 = vrot.lane.b32.xlu0 %v5639, 123
    %v5755 = vpop.permute.xlu0 %5754
    %5756 = vrot.lane.b32.xlu0 %v5640, 123
    %v5757 = vpop.permute.xlu0 %5756
    %5758 = vrot.lane.b32.xlu0 %v5641, 123
    %v5759 = vpop.permute.xlu0 %5758
    %5760 = vrot.lane.b32.xlu0 %v5642, 123
    %v5761 = vpop.permute.xlu0 %5760
    %5762 = vrot.lane.b32.xlu0 %v5643, 123
    %v5763 = vpop.permute.xlu0 %5762
    %5764 = vrot.lane.b32.xlu0 %v5644, 123
    %v5765 = vpop.permute.xlu0 %5764
    %5766 = vrot.lane.b32.xlu0 %v5645, 123
    %v5767 = vpop.permute.xlu0 %5766
    %5768 = vrot.lane.b32.xlu0 %v5646, 123
    %v5769 = vpop.permute.xlu0 %5768
    %5770 = vrot.lane.b32.xlu0 %v5647, 123
    %v5771 = vpop.permute.xlu0 %5770
    %5772 = vrot.lane.b32.xlu0 %v5648, 123
    %v5773 = vpop.permute.xlu0 %5772
    %5774 = vrot.lane.b32.xlu0 %v5649, 123
    %v5775 = vpop.permute.xlu0 %5774
    %5776 = vrot.lane.b32.xlu0 %v5650, 123
    %v5777 = vpop.permute.xlu0 %5776
    %5778 = vrot.lane.b32.xlu0 %v5651, 123
    %v5779 = vpop.permute.xlu0 %5778
    %5780 = vrot.lane.b32.xlu0 %v5652, 123
    %v5781 = vpop.permute.xlu0 %5780
    %5782 = vrot.lane.b32.xlu0 %v5653, 123
    %v5783 = vpop.permute.xlu0 %5782
    %5784 = vrot.lane.b32.xlu0 %v5654, 123
    %v5785 = vpop.permute.xlu0 %5784
    %5786 = vrot.lane.b32.xlu0 %v5655, 123
    %v5787 = vpop.permute.xlu0 %5786
    %5788 = vrot.lane.b32.xlu0 %v5656, 123
    %v5789 = vpop.permute.xlu0 %5788
    %5790 = vrot.lane.b32.xlu0 %v5657, 123
    %v5791 = vpop.permute.xlu0 %5790
    %5792 = vrot.lane.b32.xlu0 %v5658, 123
    %v5793 = vpop.permute.xlu0 %5792
    %5794 = vrot.lane.b32.xlu0 %v5659, 123
    %v5795 = vpop.permute.xlu0 %5794
    %5796 = vrot.lane.b32.xlu0 %v5660, 123
    %v5797 = vpop.permute.xlu0 %5796
    %5798 = vrot.lane.b32.xlu0 %v5661, 123
    %v5799 = vpop.permute.xlu0 %5798
    %5800 = vrot.lane.b32.xlu0 %v5662, 123
    %v5801 = vpop.permute.xlu0 %5800
    %5802 = vrot.lane.b32.xlu0 %v5663, 123
    %v5803 = vpop.permute.xlu0 %5802
    %5804 = vrot.lane.b32.xlu0 %v5664, 123
    %v5805 = vpop.permute.xlu0 %5804
    %5806 = vrot.lane.b32.xlu0 %v5665, 123
    %v5807 = vpop.permute.xlu0 %5806
    %5808 = vrot.lane.b32.xlu0 %v5666, 123
    %v5809 = vpop.permute.xlu0 %5808
    %5810 = vrot.lane.b32.xlu0 %v5667, 123
    %v5811 = vpop.permute.xlu0 %5810
    %5812 = vrot.lane.b32.xlu0 %v5668, 123
    %v5813 = vpop.permute.xlu0 %5812
    %5814 = vrot.lane.b32.xlu0 %v5669, 123
    %v5815 = vpop.permute.xlu0 %5814
    %5816 = vrot.lane.b32.xlu0 %v5670, 123
    %v5817 = vpop.permute.xlu0 %5816
    %5818 = vrot.lane.b32.xlu0 %v5671, 123
    %v5819 = vpop.permute.xlu0 %5818
    %5820 = vrot.lane.b32.xlu0 %v5672, 123
    %v5821 = vpop.permute.xlu0 %5820
    %5822 = vrot.lane.b32.xlu0 %v5673, 123
    %v5823 = vpop.permute.xlu0 %5822
    %v5872 = vmul.f32 %v5678, %v5729
    %v5873 = vmul.f32 %v5678, %v5731
    %v5874 = vmul.f32 %v5678, %v5733
    %v5875 = vmul.f32 %v5678, %v5735
    %v5876 = vmul.f32 %v5678, %v5737
    %v5877 = vmul.f32 %v5678, %v5739
    %v5878 = vmul.f32 %v5678, %v5741
    %v5879 = vmul.f32 %v5678, %v5743
    %v5880 = vmul.f32 %v5678, %v5745
    %v5881 = vmul.f32 %v5678, %v5747
    %v5882 = vmul.f32 %v5678, %v5749
    %v5883 = vmul.f32 %v5678, %v5751
    %v5884 = vmul.f32 %v5678, %v5753
    %v5885 = vmul.f32 %v5678, %v5755
    %v5886 = vmul.f32 %v5678, %v5757
    %v5887 = vmul.f32 %v5678, %v5759
    %v5888 = vmul.f32 %v5678, %v5761
    %v5889 = vmul.f32 %v5678, %v5763
    %v5890 = vmul.f32 %v5678, %v5765
    %v5891 = vmul.f32 %v5678, %v5767
    %v5892 = vmul.f32 %v5678, %v5769
    %v5893 = vmul.f32 %v5678, %v5771
    %v5894 = vmul.f32 %v5678, %v5773
    %v5895 = vmul.f32 %v5678, %v5775
    %v5896 = vmul.f32 %v5678, %v5777
    %v5897 = vmul.f32 %v5678, %v5779
    %v5898 = vmul.f32 %v5678, %v5781
    %v5899 = vmul.f32 %v5678, %v5783
    %v5900 = vmul.f32 %v5678, %v5785
    %v5901 = vmul.f32 %v5678, %v5787
    %v5902 = vmul.f32 %v5678, %v5789
    %v5903 = vmul.f32 %v5678, %v5791
    %v5904 = vmul.f32 %v5678, %v5793
    %v5905 = vmul.f32 %v5678, %v5795
    %v5906 = vmul.f32 %v5678, %v5797
    %v5907 = vmul.f32 %v5678, %v5799
    %v5908 = vmul.f32 %v5678, %v5801
    %v5909 = vmul.f32 %v5678, %v5803
    %v5910 = vmul.f32 %v5678, %v5805
    %v5911 = vmul.f32 %v5678, %v5807
    %v5912 = vmul.f32 %v5678, %v5809
    %v5913 = vmul.f32 %v5678, %v5811
    %v5914 = vmul.f32 %v5678, %v5813
    %v5915 = vmul.f32 %v5678, %v5815
    %v5916 = vmul.f32 %v5678, %v5817
    %v5917 = vmul.f32 %v5678, %v5819
    %v5918 = vmul.f32 %v5678, %v5821
    %v5919 = vmul.f32 %v5678, %v5823
    %vm5920 = vcmask 130048
    %v5921 = vsel %vm5920, %v5872, 0.0
    %5922 = vadd.xlane.f32.xlu0 %v5921
    %v5923 = vpop.xlane.xlu0 %5922
    %v5924 = vsel %vm5920, %v5873, 0.0
    %5925 = vadd.xlane.f32.xlu0 %v5924
    %v5926 = vpop.xlane.xlu0 %5925
    %v5927 = vsel %vm5920, %v5874, 0.0
    %5928 = vadd.xlane.f32.xlu0 %v5927
    %v5929 = vpop.xlane.xlu0 %5928
    %v5930 = vsel %vm5920, %v5875, 0.0
    %5931 = vadd.xlane.f32.xlu0 %v5930
    %v5932 = vpop.xlane.xlu0 %5931
    %v5933 = vsel %vm5920, %v5876, 0.0
    %5934 = vadd.xlane.f32.xlu0 %v5933
    %v5935 = vpop.xlane.xlu0 %5934
    %v5936 = vsel %vm5920, %v5877, 0.0
    %5937 = vadd.xlane.f32.xlu0 %v5936
    %v5938 = vpop.xlane.xlu0 %5937
    %v5939 = vsel %vm5920, %v5878, 0.0
    %5940 = vadd.xlane.f32.xlu0 %v5939
    %v5941 = vpop.xlane.xlu0 %5940
    %v5942 = vsel %vm5920, %v5879, 0.0
    %5943 = vadd.xlane.f32.xlu0 %v5942
    %v5944 = vpop.xlane.xlu0 %5943
    %v5945 = vsel %vm5920, %v5880, 0.0
    %5946 = vadd.xlane.f32.xlu0 %v5945
    %v5947 = vpop.xlane.xlu0 %5946
    %v5948 = vsel %vm5920, %v5881, 0.0
    %5949 = vadd.xlane.f32.xlu0 %v5948
    %v5950 = vpop.xlane.xlu0 %5949
    %v5951 = vsel %vm5920, %v5882, 0.0
    %5952 = vadd.xlane.f32.xlu0 %v5951
    %v5953 = vpop.xlane.xlu0 %5952
    %v5954 = vsel %vm5920, %v5883, 0.0
    %5955 = vadd.xlane.f32.xlu0 %v5954
    %v5956 = vpop.xlane.xlu0 %5955
    %v5957 = vsel %vm5920, %v5884, 0.0
    %5958 = vadd.xlane.f32.xlu0 %v5957
    %v5959 = vpop.xlane.xlu0 %5958
    %v5960 = vsel %vm5920, %v5885, 0.0
    %5961 = vadd.xlane.f32.xlu0 %v5960
    %v5962 = vpop.xlane.xlu0 %5961
    %v5963 = vsel %vm5920, %v5886, 0.0
    %5964 = vadd.xlane.f32.xlu0 %v5963
    %v5965 = vpop.xlane.xlu0 %5964
    %v5966 = vsel %vm5920, %v5887, 0.0
    %5967 = vadd.xlane.f32.xlu0 %v5966
    %v5968 = vpop.xlane.xlu0 %5967
    %v5969 = vsel %vm5920, %v5888, 0.0
    %5970 = vadd.xlane.f32.xlu0 %v5969
    %v5971 = vpop.xlane.xlu0 %5970
    %v5972 = vsel %vm5920, %v5889, 0.0
    %5973 = vadd.xlane.f32.xlu0 %v5972
    %v5974 = vpop.xlane.xlu0 %5973
    %v5975 = vsel %vm5920, %v5890, 0.0
    %5976 = vadd.xlane.f32.xlu0 %v5975
    %v5977 = vpop.xlane.xlu0 %5976
    %v5978 = vsel %vm5920, %v5891, 0.0
    %5979 = vadd.xlane.f32.xlu0 %v5978
    %v5980 = vpop.xlane.xlu0 %5979
    %v5981 = vsel %vm5920, %v5892, 0.0
    %5982 = vadd.xlane.f32.xlu0 %v5981
    %v5983 = vpop.xlane.xlu0 %5982
    %v5984 = vsel %vm5920, %v5893, 0.0
    %5985 = vadd.xlane.f32.xlu0 %v5984
    %v5986 = vpop.xlane.xlu0 %5985
    %v5987 = vsel %vm5920, %v5894, 0.0
    %5988 = vadd.xlane.f32.xlu0 %v5987
    %v5989 = vpop.xlane.xlu0 %5988
    %v5990 = vsel %vm5920, %v5895, 0.0
    %5991 = vadd.xlane.f32.xlu0 %v5990
    %v5992 = vpop.xlane.xlu0 %5991
    %v5993 = vsel %vm5920, %v5896, 0.0
    %5994 = vadd.xlane.f32.xlu0 %v5993
    %v5995 = vpop.xlane.xlu0 %5994
    %v5996 = vsel %vm5920, %v5897, 0.0
    %5997 = vadd.xlane.f32.xlu0 %v5996
    %v5998 = vpop.xlane.xlu0 %5997
    %v5999 = vsel %vm5920, %v5898, 0.0
    %6000 = vadd.xlane.f32.xlu0 %v5999
    %v6001 = vpop.xlane.xlu0 %6000
    %v6002 = vsel %vm5920, %v5899, 0.0
    %6003 = vadd.xlane.f32.xlu0 %v6002
    %v6004 = vpop.xlane.xlu0 %6003
    %v6005 = vsel %vm5920, %v5900, 0.0
    %6006 = vadd.xlane.f32.xlu0 %v6005
    %v6007 = vpop.xlane.xlu0 %6006
    %v6008 = vsel %vm5920, %v5901, 0.0
    %6009 = vadd.xlane.f32.xlu0 %v6008
    %v6010 = vpop.xlane.xlu0 %6009
    %v6011 = vsel %vm5920, %v5902, 0.0
    %6012 = vadd.xlane.f32.xlu0 %v6011
    %v6013 = vpop.xlane.xlu0 %6012
    %v6014 = vsel %vm5920, %v5903, 0.0
    %6015 = vadd.xlane.f32.xlu0 %v6014
    %v6016 = vpop.xlane.xlu0 %6015
    %v6017 = vsel %vm5920, %v5904, 0.0
    %6018 = vadd.xlane.f32.xlu0 %v6017
    %v6019 = vpop.xlane.xlu0 %6018
    %v6020 = vsel %vm5920, %v5905, 0.0
    %6021 = vadd.xlane.f32.xlu0 %v6020
    %v6022 = vpop.xlane.xlu0 %6021
    %v6023 = vsel %vm5920, %v5906, 0.0
    %6024 = vadd.xlane.f32.xlu0 %v6023
    %v6025 = vpop.xlane.xlu0 %6024
    %v6026 = vsel %vm5920, %v5907, 0.0
    %6027 = vadd.xlane.f32.xlu0 %v6026
    %v6028 = vpop.xlane.xlu0 %6027
    %v6029 = vsel %vm5920, %v5908, 0.0
    %6030 = vadd.xlane.f32.xlu0 %v6029
    %v6031 = vpop.xlane.xlu0 %6030
    %v6032 = vsel %vm5920, %v5909, 0.0
    %6033 = vadd.xlane.f32.xlu0 %v6032
    %v6034 = vpop.xlane.xlu0 %6033
    %v6035 = vsel %vm5920, %v5910, 0.0
    %6036 = vadd.xlane.f32.xlu0 %v6035
    %v6037 = vpop.xlane.xlu0 %6036
    %v6038 = vsel %vm5920, %v5911, 0.0
    %6039 = vadd.xlane.f32.xlu0 %v6038
    %v6040 = vpop.xlane.xlu0 %6039
    %v6041 = vsel %vm5920, %v5912, 0.0
    %6042 = vadd.xlane.f32.xlu0 %v6041
    %v6043 = vpop.xlane.xlu0 %6042
    %v6044 = vsel %vm5920, %v5913, 0.0
    %6045 = vadd.xlane.f32.xlu0 %v6044
    %v6046 = vpop.xlane.xlu0 %6045
    %v6047 = vsel %vm5920, %v5914, 0.0
    %6048 = vadd.xlane.f32.xlu0 %v6047
    %v6049 = vpop.xlane.xlu0 %6048
    %v6050 = vsel %vm5920, %v5915, 0.0
    %6051 = vadd.xlane.f32.xlu0 %v6050
    %v6052 = vpop.xlane.xlu0 %6051
    %v6053 = vsel %vm5920, %v5916, 0.0
    %6054 = vadd.xlane.f32.xlu0 %v6053
    %v6055 = vpop.xlane.xlu0 %6054
    %v6056 = vsel %vm5920, %v5917, 0.0
    %6057 = vadd.xlane.f32.xlu0 %v6056
    %v6058 = vpop.xlane.xlu0 %6057
    %v6059 = vsel %vm5920, %v5918, 0.0
    %6060 = vadd.xlane.f32.xlu0 %v6059
    %v6061 = vpop.xlane.xlu0 %6060
    %v6062 = vsel %vm5920, %v5919, 0.0
    %6063 = vadd.xlane.f32.xlu0 %v6062
    %v6064 = vpop.xlane.xlu0 %6063
    %v6065 = vmul.f32 %v4089, %v5923
    %v6066 = vmul.f32 %v4090, %v5926
    %v6067 = vmul.f32 %v4091, %v5929
    %v6068 = vmul.f32 %v4092, %v5932
    %v6069 = vmul.f32 %v4093, %v5935
    %v6070 = vmul.f32 %v4094, %v5938
    %v6071 = vmul.f32 %v4095, %v5941
    %v6072 = vmul.f32 %v4096, %v5944
    %v6073 = vmul.f32 %v4097, %v5947
    %v6074 = vmul.f32 %v4098, %v5950
    %v6075 = vmul.f32 %v4099, %v5953
    %v6076 = vmul.f32 %v4100, %v5956
    %v6077 = vmul.f32 %v4101, %v5959
    %v6078 = vmul.f32 %v4102, %v5962
    %v6079 = vmul.f32 %v4103, %v5965
    %v6080 = vmul.f32 %v4104, %v5968
    %v6081 = vmul.f32 %v4105, %v5971
    %v6082 = vmul.f32 %v4106, %v5974
    %v6083 = vmul.f32 %v4107, %v5977
    %v6084 = vmul.f32 %v4108, %v5980
    %v6085 = vmul.f32 %v4109, %v5983
    %v6086 = vmul.f32 %v4110, %v5986
    %v6087 = vmul.f32 %v4111, %v5989
    %v6088 = vmul.f32 %v4112, %v5992
    %v6089 = vmul.f32 %v4113, %v5995
    %v6090 = vmul.f32 %v4114, %v5998
    %v6091 = vmul.f32 %v4115, %v6001
    %v6092 = vmul.f32 %v4116, %v6004
    %v6093 = vmul.f32 %v4117, %v6007
    %v6094 = vmul.f32 %v4118, %v6010
    %v6095 = vmul.f32 %v4119, %v6013
    %v6096 = vmul.f32 %v4120, %v6016
    %v6097 = vmul.f32 %v4121, %v6019
    %v6098 = vmul.f32 %v4122, %v6022
    %v6099 = vmul.f32 %v4123, %v6025
    %v6100 = vmul.f32 %v4124, %v6028
    %v6101 = vmul.f32 %v4125, %v6031
    %v6102 = vmul.f32 %v4126, %v6034
    %v6103 = vmul.f32 %v4127, %v6037
    %v6104 = vmul.f32 %v4128, %v6040
    %v6105 = vmul.f32 %v4129, %v6043
    %v6106 = vmul.f32 %v4130, %v6046
    %v6107 = vmul.f32 %v4131, %v6049
    %v6108 = vmul.f32 %v4132, %v6052
    %v6109 = vmul.f32 %v4133, %v6055
    %v6110 = vmul.f32 %v4134, %v6058
    %v6111 = vmul.f32 %v4135, %v6061
    %v6112 = vmul.f32 %v4136, %v6064
    %v6113 = vld [vmem:[#allocation2] sm:$0xff]
    %v6114 = vld [vmem:[#allocation2 + $0x8] sm:$0xff]
    %v6115 = vld [vmem:[#allocation2 + $0x10] sm:$0xff]
    %v6116 = vld [vmem:[#allocation2 + $0x18] sm:$0xff]
    %v6117 = vld [vmem:[#allocation2 + $0x20] sm:$0xff]
    %v6118 = vld [vmem:[#allocation2 + $0x28] sm:$0xff]
    %v6119 = vld [vmem:[#allocation2 + $0x30] sm:$0xff]
    %v6120 = vld [vmem:[#allocation2 + $0x38] sm:$0xff]
    %v6121 = vld [vmem:[#allocation2 + $0x40] sm:$0xff]
    %v6122 = vld [vmem:[#allocation2 + $0x48] sm:$0xff]
    %v6123 = vld [vmem:[#allocation2 + $0x50] sm:$0xff]
    %v6124 = vld [vmem:[#allocation2 + $0x58] sm:$0xff]
    %v6125 = vld [vmem:[#allocation2 + $0x60] sm:$0xff]
    %v6126 = vld [vmem:[#allocation2 + $0x68] sm:$0xff]
    %v6127 = vld [vmem:[#allocation2 + $0x70] sm:$0xff]
    %v6128 = vld [vmem:[#allocation2 + $0x78] sm:$0xff]
    %v6129 = vld [vmem:[#allocation2 + $0x80] sm:$0xff]
    %v6130 = vld [vmem:[#allocation2 + $0x88] sm:$0xff]
    %v6131 = vld [vmem:[#allocation2 + $0x90] sm:$0xff]
    %v6132 = vld [vmem:[#allocation2 + $0x98] sm:$0xff]
    %v6133 = vld [vmem:[#allocation2 + $0xa0] sm:$0xff]
    %v6134 = vld [vmem:[#allocation2 + $0xa8] sm:$0xff]
    %v6135 = vld [vmem:[#allocation2 + $0xb0] sm:$0xff]
    %v6136 = vld [vmem:[#allocation2 + $0xb8] sm:$0xff]
    %v6137 = vld [vmem:[#allocation2 + $0xc0] sm:$0xff]
    %v6138 = vld [vmem:[#allocation2 + $0xc8] sm:$0xff]
    %v6139 = vld [vmem:[#allocation2 + $0xd0] sm:$0xff]
    %v6140 = vld [vmem:[#allocation2 + $0xd8] sm:$0xff]
    %v6141 = vld [vmem:[#allocation2 + $0xe0] sm:$0xff]
    %v6142 = vld [vmem:[#allocation2 + $0xe8] sm:$0xff]
    %v6143 = vld [vmem:[#allocation2 + $0xf0] sm:$0xff]
    %v6144 = vld [vmem:[#allocation2 + $0xf8] sm:$0xff]
    %v6145 = vld [vmem:[#allocation2 + $0x100] sm:$0xff]
    %v6146 = vld [vmem:[#allocation2 + $0x108] sm:$0xff]
    %v6147 = vld [vmem:[#allocation2 + $0x110] sm:$0xff]
    %v6148 = vld [vmem:[#allocation2 + $0x118] sm:$0xff]
    %v6149 = vld [vmem:[#allocation2 + $0x120] sm:$0xff]
    %v6150 = vld [vmem:[#allocation2 + $0x128] sm:$0xff]
    %v6151 = vld [vmem:[#allocation2 + $0x130] sm:$0xff]
    %v6152 = vld [vmem:[#allocation2 + $0x138] sm:$0xff]
    %v6153 = vld [vmem:[#allocation2 + $0x140] sm:$0xff]
    %v6154 = vld [vmem:[#allocation2 + $0x148] sm:$0xff]
    %v6155 = vld [vmem:[#allocation2 + $0x150] sm:$0xff]
    %v6156 = vld [vmem:[#allocation2 + $0x158] sm:$0xff]
    %v6157 = vld [vmem:[#allocation2 + $0x160] sm:$0xff]
    %v6158 = vld [vmem:[#allocation2 + $0x168] sm:$0xff]
    %v6159 = vld [vmem:[#allocation2 + $0x170] sm:$0xff]
    %v6160 = vld [vmem:[#allocation2 + $0x178] sm:$0xff]
    %v6161 = vadd.f32 %v6113, %v3801
    %v6162 = vadd.f32 %v6114, %v3802
    %v6163 = vadd.f32 %v6115, %v3803
    %v6164 = vadd.f32 %v6116, %v3804
    %v6165 = vadd.f32 %v6117, %v3805
    %v6166 = vadd.f32 %v6118, %v3806
    %v6167 = vadd.f32 %v6119, %v3807
    %v6168 = vadd.f32 %v6120, %v3808
    %v6169 = vadd.f32 %v6121, %v3809
    %v6170 = vadd.f32 %v6122, %v3810
    %v6171 = vadd.f32 %v6123, %v3811
    %v6172 = vadd.f32 %v6124, %v3812
    %v6173 = vadd.f32 %v6125, %v3813
    %v6174 = vadd.f32 %v6126, %v3814
    %v6175 = vadd.f32 %v6127, %v3815
    %v6176 = vadd.f32 %v6128, %v3816
    %v6177 = vadd.f32 %v6129, %v3817
    %v6178 = vadd.f32 %v6130, %v3818
    %v6179 = vadd.f32 %v6131, %v3819
    %v6180 = vadd.f32 %v6132, %v3820
    %v6181 = vadd.f32 %v6133, %v3821
    %v6182 = vadd.f32 %v6134, %v3822
    %v6183 = vadd.f32 %v6135, %v3823
    %v6184 = vadd.f32 %v6136, %v3824
    %v6185 = vadd.f32 %v6137, %v3825
    %v6186 = vadd.f32 %v6138, %v3826
    %v6187 = vadd.f32 %v6139, %v3827
    %v6188 = vadd.f32 %v6140, %v3828
    %v6189 = vadd.f32 %v6141, %v3829
    %v6190 = vadd.f32 %v6142, %v3830
    %v6191 = vadd.f32 %v6143, %v3831
    %v6192 = vadd.f32 %v6144, %v3832
    %v6193 = vadd.f32 %v6145, %v3833
    %v6194 = vadd.f32 %v6146, %v3834
    %v6195 = vadd.f32 %v6147, %v3835
    %v6196 = vadd.f32 %v6148, %v3836
    %v6197 = vadd.f32 %v6149, %v3837
    %v6198 = vadd.f32 %v6150, %v3838
    %v6199 = vadd.f32 %v6151, %v3839
    %v6200 = vadd.f32 %v6152, %v3840
    %v6201 = vadd.f32 %v6153, %v3841
    %v6202 = vadd.f32 %v6154, %v3842
    %v6203 = vadd.f32 %v6155, %v3843
    %v6204 = vadd.f32 %v6156, %v3844
    %v6205 = vadd.f32 %v6157, %v3845
    %v6206 = vadd.f32 %v6158, %v3846
    %v6207 = vadd.f32 %v6159, %v3847
    %v6208 = vadd.f32 %v6160, %v3848
    %vm6209 = vcmask 7168
    %6210 = vst.msk [vmem:[#allocation2] sm:$0xff] %vm6209, %v6161
    %6211 = vst.msk [vmem:[#allocation2 + $0x8] sm:$0xff] %vm6209, %v6162
    %6212 = vst.msk [vmem:[#allocation2 + $0x10] sm:$0xff] %vm6209, %v6163
    %6213 = vst.msk [vmem:[#allocation2 + $0x18] sm:$0xff] %vm6209, %v6164
    %6214 = vst.msk [vmem:[#allocation2 + $0x20] sm:$0xff] %vm6209, %v6165
    %6215 = vst.msk [vmem:[#allocation2 + $0x28] sm:$0xff] %vm6209, %v6166
    %6216 = vst.msk [vmem:[#allocation2 + $0x30] sm:$0xff] %vm6209, %v6167
    %6217 = vst.msk [vmem:[#allocation2 + $0x38] sm:$0xff] %vm6209, %v6168
    %6218 = vst.msk [vmem:[#allocation2 + $0x40] sm:$0xff] %vm6209, %v6169
    %6219 = vst.msk [vmem:[#allocation2 + $0x48] sm:$0xff] %vm6209, %v6170
    %6220 = vst.msk [vmem:[#allocation2 + $0x50] sm:$0xff] %vm6209, %v6171
    %6221 = vst.msk [vmem:[#allocation2 + $0x58] sm:$0xff] %vm6209, %v6172
    %6222 = vst.msk [vmem:[#allocation2 + $0x60] sm:$0xff] %vm6209, %v6173
    %6223 = vst.msk [vmem:[#allocation2 + $0x68] sm:$0xff] %vm6209, %v6174
    %6224 = vst.msk [vmem:[#allocation2 + $0x70] sm:$0xff] %vm6209, %v6175
    %6225 = vst.msk [vmem:[#allocation2 + $0x78] sm:$0xff] %vm6209, %v6176
    %6226 = vst.msk [vmem:[#allocation2 + $0x80] sm:$0xff] %vm6209, %v6177
    %6227 = vst.msk [vmem:[#allocation2 + $0x88] sm:$0xff] %vm6209, %v6178
    %6228 = vst.msk [vmem:[#allocation2 + $0x90] sm:$0xff] %vm6209, %v6179
    %6229 = vst.msk [vmem:[#allocation2 + $0x98] sm:$0xff] %vm6209, %v6180
    %6230 = vst.msk [vmem:[#allocation2 + $0xa0] sm:$0xff] %vm6209, %v6181
    %6231 = vst.msk [vmem:[#allocation2 + $0xa8] sm:$0xff] %vm6209, %v6182
    %6232 = vst.msk [vmem:[#allocation2 + $0xb0] sm:$0xff] %vm6209, %v6183
    %6233 = vst.msk [vmem:[#allocation2 + $0xb8] sm:$0xff] %vm6209, %v6184
    %6234 = vst.msk [vmem:[#allocation2 + $0xc0] sm:$0xff] %vm6209, %v6185
    %6235 = vst.msk [vmem:[#allocation2 + $0xc8] sm:$0xff] %vm6209, %v6186
    %6236 = vst.msk [vmem:[#allocation2 + $0xd0] sm:$0xff] %vm6209, %v6187
    %6237 = vst.msk [vmem:[#allocation2 + $0xd8] sm:$0xff] %vm6209, %v6188
    %6238 = vst.msk [vmem:[#allocation2 + $0xe0] sm:$0xff] %vm6209, %v6189
    %6239 = vst.msk [vmem:[#allocation2 + $0xe8] sm:$0xff] %vm6209, %v6190
    %6240 = vst.msk [vmem:[#allocation2 + $0xf0] sm:$0xff] %vm6209, %v6191
    %6241 = vst.msk [vmem:[#allocation2 + $0xf8] sm:$0xff] %vm6209, %v6192
    %6242 = vst.msk [vmem:[#allocation2 + $0x100] sm:$0xff] %vm6209, %v6193
    %6243 = vst.msk [vmem:[#allocation2 + $0x108] sm:$0xff] %vm6209, %v6194
    %6244 = vst.msk [vmem:[#allocation2 + $0x110] sm:$0xff] %vm6209, %v6195
    %6245 = vst.msk [vmem:[#allocation2 + $0x118] sm:$0xff] %vm6209, %v6196
    %6246 = vst.msk [vmem:[#allocation2 + $0x120] sm:$0xff] %vm6209, %v6197
    %6247 = vst.msk [vmem:[#allocation2 + $0x128] sm:$0xff] %vm6209, %v6198
    %6248 = vst.msk [vmem:[#allocation2 + $0x130] sm:$0xff] %vm6209, %v6199
    %6249 = vst.msk [vmem:[#allocation2 + $0x138] sm:$0xff] %vm6209, %v6200
    %6250 = vst.msk [vmem:[#allocation2 + $0x140] sm:$0xff] %vm6209, %v6201
    %6251 = vst.msk [vmem:[#allocation2 + $0x148] sm:$0xff] %vm6209, %v6202
    %6252 = vst.msk [vmem:[#allocation2 + $0x150] sm:$0xff] %vm6209, %v6203
    %6253 = vst.msk [vmem:[#allocation2 + $0x158] sm:$0xff] %vm6209, %v6204
    %6254 = vst.msk [vmem:[#allocation2 + $0x160] sm:$0xff] %vm6209, %v6205
    %6255 = vst.msk [vmem:[#allocation2 + $0x168] sm:$0xff] %vm6209, %v6206
    %6256 = vst.msk [vmem:[#allocation2 + $0x170] sm:$0xff] %vm6209, %v6207
    %6257 = vst.msk [vmem:[#allocation2 + $0x178] sm:$0xff] %vm6209, %v6208
    %v6258 = vld [vmem:[#allocation2] sm:$0xff]
    %v6259 = vld [vmem:[#allocation2 + $0x8] sm:$0xff]
    %v6260 = vld [vmem:[#allocation2 + $0x10] sm:$0xff]
    %v6261 = vld [vmem:[#allocation2 + $0x18] sm:$0xff]
    %v6262 = vld [vmem:[#allocation2 + $0x20] sm:$0xff]
    %v6263 = vld [vmem:[#allocation2 + $0x28] sm:$0xff]
    %v6264 = vld [vmem:[#allocation2 + $0x30] sm:$0xff]
    %v6265 = vld [vmem:[#allocation2 + $0x38] sm:$0xff]
    %v6266 = vld [vmem:[#allocation2 + $0x40] sm:$0xff]
    %v6267 = vld [vmem:[#allocation2 + $0x48] sm:$0xff]
    %v6268 = vld [vmem:[#allocation2 + $0x50] sm:$0xff]
    %v6269 = vld [vmem:[#allocation2 + $0x58] sm:$0xff]
    %v6270 = vld [vmem:[#allocation2 + $0x60] sm:$0xff]
    %v6271 = vld [vmem:[#allocation2 + $0x68] sm:$0xff]
    %v6272 = vld [vmem:[#allocation2 + $0x70] sm:$0xff]
    %v6273 = vld [vmem:[#allocation2 + $0x78] sm:$0xff]
    %v6274 = vld [vmem:[#allocation2 + $0x80] sm:$0xff]
    %v6275 = vld [vmem:[#allocation2 + $0x88] sm:$0xff]
    %v6276 = vld [vmem:[#allocation2 + $0x90] sm:$0xff]
    %v6277 = vld [vmem:[#allocation2 + $0x98] sm:$0xff]
    %v6278 = vld [vmem:[#allocation2 + $0xa0] sm:$0xff]
    %v6279 = vld [vmem:[#allocation2 + $0xa8] sm:$0xff]
    %v6280 = vld [vmem:[#allocation2 + $0xb0] sm:$0xff]
    %v6281 = vld [vmem:[#allocation2 + $0xb8] sm:$0xff]
    %v6282 = vld [vmem:[#allocation2 + $0xc0] sm:$0xff]
    %v6283 = vld [vmem:[#allocation2 + $0xc8] sm:$0xff]
    %v6284 = vld [vmem:[#allocation2 + $0xd0] sm:$0xff]
    %v6285 = vld [vmem:[#allocation2 + $0xd8] sm:$0xff]
    %v6286 = vld [vmem:[#allocation2 + $0xe0] sm:$0xff]
    %v6287 = vld [vmem:[#allocation2 + $0xe8] sm:$0xff]
    %v6288 = vld [vmem:[#allocation2 + $0xf0] sm:$0xff]
    %v6289 = vld [vmem:[#allocation2 + $0xf8] sm:$0xff]
    %v6290 = vld [vmem:[#allocation2 + $0x100] sm:$0xff]
    %v6291 = vld [vmem:[#allocation2 + $0x108] sm:$0xff]
    %v6292 = vld [vmem:[#allocation2 + $0x110] sm:$0xff]
    %v6293 = vld [vmem:[#allocation2 + $0x118] sm:$0xff]
    %v6294 = vld [vmem:[#allocation2 + $0x120] sm:$0xff]
    %v6295 = vld [vmem:[#allocation2 + $0x128] sm:$0xff]
    %v6296 = vld [vmem:[#allocation2 + $0x130] sm:$0xff]
    %v6297 = vld [vmem:[#allocation2 + $0x138] sm:$0xff]
    %v6298 = vld [vmem:[#allocation2 + $0x140] sm:$0xff]
    %v6299 = vld [vmem:[#allocation2 + $0x148] sm:$0xff]
    %v6300 = vld [vmem:[#allocation2 + $0x150] sm:$0xff]
    %v6301 = vld [vmem:[#allocation2 + $0x158] sm:$0xff]
    %v6302 = vld [vmem:[#allocation2 + $0x160] sm:$0xff]
    %v6303 = vld [vmem:[#allocation2 + $0x168] sm:$0xff]
    %v6304 = vld [vmem:[#allocation2 + $0x170] sm:$0xff]
    %v6305 = vld [vmem:[#allocation2 + $0x178] sm:$0xff]
    %6354 = vrot.lane.b32.xlu0 %v4377, 1
    %v6355 = vpop.permute.xlu0 %6354
    %6356 = vrot.lane.b32.xlu0 %v4378, 1
    %v6357 = vpop.permute.xlu0 %6356
    %6358 = vrot.lane.b32.xlu0 %v4379, 1
    %v6359 = vpop.permute.xlu0 %6358
    %6360 = vrot.lane.b32.xlu0 %v4380, 1
    %v6361 = vpop.permute.xlu0 %6360
    %6362 = vrot.lane.b32.xlu0 %v4381, 1
    %v6363 = vpop.permute.xlu0 %6362
    %6364 = vrot.lane.b32.xlu0 %v4382, 1
    %v6365 = vpop.permute.xlu0 %6364
    %6366 = vrot.lane.b32.xlu0 %v4383, 1
    %v6367 = vpop.permute.xlu0 %6366
    %6368 = vrot.lane.b32.xlu0 %v4384, 1
    %v6369 = vpop.permute.xlu0 %6368
    %6370 = vrot.lane.b32.xlu0 %v4385, 1
    %v6371 = vpop.permute.xlu0 %6370
    %6372 = vrot.lane.b32.xlu0 %v4386, 1
    %v6373 = vpop.permute.xlu0 %6372
    %6374 = vrot.lane.b32.xlu0 %v4387, 1
    %v6375 = vpop.permute.xlu0 %6374
    %6376 = vrot.lane.b32.xlu0 %v4388, 1
    %v6377 = vpop.permute.xlu0 %6376
    %6378 = vrot.lane.b32.xlu0 %v4389, 1
    %v6379 = vpop.permute.xlu0 %6378
    %6380 = vrot.lane.b32.xlu0 %v4390, 1
    %v6381 = vpop.permute.xlu0 %6380
    %6382 = vrot.lane.b32.xlu0 %v4391, 1
    %v6383 = vpop.permute.xlu0 %6382
    %6384 = vrot.lane.b32.xlu0 %v4392, 1
    %v6385 = vpop.permute.xlu0 %6384
    %6386 = vrot.lane.b32.xlu0 %v4393, 1
    %v6387 = vpop.permute.xlu0 %6386
    %6388 = vrot.lane.b32.xlu0 %v4394, 1
    %v6389 = vpop.permute.xlu0 %6388
    %6390 = vrot.lane.b32.xlu0 %v4395, 1
    %v6391 = vpop.permute.xlu0 %6390
    %6392 = vrot.lane.b32.xlu0 %v4396, 1
    %v6393 = vpop.permute.xlu0 %6392
    %6394 = vrot.lane.b32.xlu0 %v4397, 1
    %v6395 = vpop.permute.xlu0 %6394
    %6396 = vrot.lane.b32.xlu0 %v4398, 1
    %v6397 = vpop.permute.xlu0 %6396
    %6398 = vrot.lane.b32.xlu0 %v4399, 1
    %v6399 = vpop.permute.xlu0 %6398
    %6400 = vrot.lane.b32.xlu0 %v4400, 1
    %v6401 = vpop.permute.xlu0 %6400
    %6402 = vrot.lane.b32.xlu0 %v4401, 1
    %v6403 = vpop.permute.xlu0 %6402
    %6404 = vrot.lane.b32.xlu0 %v4402, 1
    %v6405 = vpop.permute.xlu0 %6404
    %6406 = vrot.lane.b32.xlu0 %v4403, 1
    %v6407 = vpop.permute.xlu0 %6406
    %6408 = vrot.lane.b32.xlu0 %v4404, 1
    %v6409 = vpop.permute.xlu0 %6408
    %6410 = vrot.lane.b32.xlu0 %v4405, 1
    %v6411 = vpop.permute.xlu0 %6410
    %6412 = vrot.lane.b32.xlu0 %v4406, 1
    %v6413 = vpop.permute.xlu0 %6412
    %6414 = vrot.lane.b32.xlu0 %v4407, 1
    %v6415 = vpop.permute.xlu0 %6414
    %6416 = vrot.lane.b32.xlu0 %v4408, 1
    %v6417 = vpop.permute.xlu0 %6416
    %6418 = vrot.lane.b32.xlu0 %v4409, 1
    %v6419 = vpop.permute.xlu0 %6418
    %6420 = vrot.lane.b32.xlu0 %v4410, 1
    %v6421 = vpop.permute.xlu0 %6420
    %6422 = vrot.lane.b32.xlu0 %v4411, 1
    %v6423 = vpop.permute.xlu0 %6422
    %6424 = vrot.lane.b32.xlu0 %v4412, 1
    %v6425 = vpop.permute.xlu0 %6424
    %6426 = vrot.lane.b32.xlu0 %v4413, 1
    %v6427 = vpop.permute.xlu0 %6426
    %6428 = vrot.lane.b32.xlu0 %v4414, 1
    %v6429 = vpop.permute.xlu0 %6428
    %6430 = vrot.lane.b32.xlu0 %v4415, 1
    %v6431 = vpop.permute.xlu0 %6430
    %6432 = vrot.lane.b32.xlu0 %v4416, 1
    %v6433 = vpop.permute.xlu0 %6432
    %6434 = vrot.lane.b32.xlu0 %v4417, 1
    %v6435 = vpop.permute.xlu0 %6434
    %6436 = vrot.lane.b32.xlu0 %v4418, 1
    %v6437 = vpop.permute.xlu0 %6436
    %6438 = vrot.lane.b32.xlu0 %v4419, 1
    %v6439 = vpop.permute.xlu0 %6438
    %6440 = vrot.lane.b32.xlu0 %v4420, 1
    %v6441 = vpop.permute.xlu0 %6440
    %6442 = vrot.lane.b32.xlu0 %v4421, 1
    %v6443 = vpop.permute.xlu0 %6442
    %6444 = vrot.lane.b32.xlu0 %v4422, 1
    %v6445 = vpop.permute.xlu0 %6444
    %6446 = vrot.lane.b32.xlu0 %v4423, 1
    %v6447 = vpop.permute.xlu0 %6446
    %6448 = vrot.lane.b32.xlu0 %v4424, 1
    %v6449 = vpop.permute.xlu0 %6448
    %v6498 = vadd.f32 %v6258, %v6355
    %v6499 = vadd.f32 %v6259, %v6357
    %v6500 = vadd.f32 %v6260, %v6359
    %v6501 = vadd.f32 %v6261, %v6361
    %v6502 = vadd.f32 %v6262, %v6363
    %v6503 = vadd.f32 %v6263, %v6365
    %v6504 = vadd.f32 %v6264, %v6367
    %v6505 = vadd.f32 %v6265, %v6369
    %v6506 = vadd.f32 %v6266, %v6371
    %v6507 = vadd.f32 %v6267, %v6373
    %v6508 = vadd.f32 %v6268, %v6375
    %v6509 = vadd.f32 %v6269, %v6377
    %v6510 = vadd.f32 %v6270, %v6379
    %v6511 = vadd.f32 %v6271, %v6381
    %v6512 = vadd.f32 %v6272, %v6383
    %v6513 = vadd.f32 %v6273, %v6385
    %v6514 = vadd.f32 %v6274, %v6387
    %v6515 = vadd.f32 %v6275, %v6389
    %v6516 = vadd.f32 %v6276, %v6391
    %v6517 = vadd.f32 %v6277, %v6393
    %v6518 = vadd.f32 %v6278, %v6395
    %v6519 = vadd.f32 %v6279, %v6397
    %v6520 = vadd.f32 %v6280, %v6399
    %v6521 = vadd.f32 %v6281, %v6401
    %v6522 = vadd.f32 %v6282, %v6403
    %v6523 = vadd.f32 %v6283, %v6405
    %v6524 = vadd.f32 %v6284, %v6407
    %v6525 = vadd.f32 %v6285, %v6409
    %v6526 = vadd.f32 %v6286, %v6411
    %v6527 = vadd.f32 %v6287, %v6413
    %v6528 = vadd.f32 %v6288, %v6415
    %v6529 = vadd.f32 %v6289, %v6417
    %v6530 = vadd.f32 %v6290, %v6419
    %v6531 = vadd.f32 %v6291, %v6421
    %v6532 = vadd.f32 %v6292, %v6423
    %v6533 = vadd.f32 %v6293, %v6425
    %v6534 = vadd.f32 %v6294, %v6427
    %v6535 = vadd.f32 %v6295, %v6429
    %v6536 = vadd.f32 %v6296, %v6431
    %v6537 = vadd.f32 %v6297, %v6433
    %v6538 = vadd.f32 %v6298, %v6435
    %v6539 = vadd.f32 %v6299, %v6437
    %v6540 = vadd.f32 %v6300, %v6439
    %v6541 = vadd.f32 %v6301, %v6441
    %v6542 = vadd.f32 %v6302, %v6443
    %v6543 = vadd.f32 %v6303, %v6445
    %v6544 = vadd.f32 %v6304, %v6447
    %v6545 = vadd.f32 %v6305, %v6449
    %vm6546 = vcmask 15368
    %6547 = vst.msk [vmem:[#allocation2] sm:$0xff] %vm6546, %v6498
    %6548 = vst.msk [vmem:[#allocation2 + $0x8] sm:$0xff] %vm6546, %v6499
    %6549 = vst.msk [vmem:[#allocation2 + $0x10] sm:$0xff] %vm6546, %v6500
    %6550 = vst.msk [vmem:[#allocation2 + $0x18] sm:$0xff] %vm6546, %v6501
    %6551 = vst.msk [vmem:[#allocation2 + $0x20] sm:$0xff] %vm6546, %v6502
    %6552 = vst.msk [vmem:[#allocation2 + $0x28] sm:$0xff] %vm6546, %v6503
    %6553 = vst.msk [vmem:[#allocation2 + $0x30] sm:$0xff] %vm6546, %v6504
    %6554 = vst.msk [vmem:[#allocation2 + $0x38] sm:$0xff] %vm6546, %v6505
    %6555 = vst.msk [vmem:[#allocation2 + $0x40] sm:$0xff] %vm6546, %v6506
    %6556 = vst.msk [vmem:[#allocation2 + $0x48] sm:$0xff] %vm6546, %v6507
    %6557 = vst.msk [vmem:[#allocation2 + $0x50] sm:$0xff] %vm6546, %v6508
    %6558 = vst.msk [vmem:[#allocation2 + $0x58] sm:$0xff] %vm6546, %v6509
    %6559 = vst.msk [vmem:[#allocation2 + $0x60] sm:$0xff] %vm6546, %v6510
    %6560 = vst.msk [vmem:[#allocation2 + $0x68] sm:$0xff] %vm6546, %v6511
    %6561 = vst.msk [vmem:[#allocation2 + $0x70] sm:$0xff] %vm6546, %v6512
    %6562 = vst.msk [vmem:[#allocation2 + $0x78] sm:$0xff] %vm6546, %v6513
    %6563 = vst.msk [vmem:[#allocation2 + $0x80] sm:$0xff] %vm6546, %v6514
    %6564 = vst.msk [vmem:[#allocation2 + $0x88] sm:$0xff] %vm6546, %v6515
    %6565 = vst.msk [vmem:[#allocation2 + $0x90] sm:$0xff] %vm6546, %v6516
    %6566 = vst.msk [vmem:[#allocation2 + $0x98] sm:$0xff] %vm6546, %v6517
    %6567 = vst.msk [vmem:[#allocation2 + $0xa0] sm:$0xff] %vm6546, %v6518
    %6568 = vst.msk [vmem:[#allocation2 + $0xa8] sm:$0xff] %vm6546, %v6519
    %6569 = vst.msk [vmem:[#allocation2 + $0xb0] sm:$0xff] %vm6546, %v6520
    %6570 = vst.msk [vmem:[#allocation2 + $0xb8] sm:$0xff] %vm6546, %v6521
    %6571 = vst.msk [vmem:[#allocation2 + $0xc0] sm:$0xff] %vm6546, %v6522
    %6572 = vst.msk [vmem:[#allocation2 + $0xc8] sm:$0xff] %vm6546, %v6523
    %6573 = vst.msk [vmem:[#allocation2 + $0xd0] sm:$0xff] %vm6546, %v6524
    %6574 = vst.msk [vmem:[#allocation2 + $0xd8] sm:$0xff] %vm6546, %v6525
    %6575 = vst.msk [vmem:[#allocation2 + $0xe0] sm:$0xff] %vm6546, %v6526
    %6576 = vst.msk [vmem:[#allocation2 + $0xe8] sm:$0xff] %vm6546, %v6527
    %6577 = vst.msk [vmem:[#allocation2 + $0xf0] sm:$0xff] %vm6546, %v6528
    %6578 = vst.msk [vmem:[#allocation2 + $0xf8] sm:$0xff] %vm6546, %v6529
    %6579 = vst.msk [vmem:[#allocation2 + $0x100] sm:$0xff] %vm6546, %v6530
    %6580 = vst.msk [vmem:[#allocation2 + $0x108] sm:$0xff] %vm6546, %v6531
    %6581 = vst.msk [vmem:[#allocation2 + $0x110] sm:$0xff] %vm6546, %v6532
    %6582 = vst.msk [vmem:[#allocation2 + $0x118] sm:$0xff] %vm6546, %v6533
    %6583 = vst.msk [vmem:[#allocation2 + $0x120] sm:$0xff] %vm6546, %v6534
    %6584 = vst.msk [vmem:[#allocation2 + $0x128] sm:$0xff] %vm6546, %v6535
    %6585 = vst.msk [vmem:[#allocation2 + $0x130] sm:$0xff] %vm6546, %v6536
    %6586 = vst.msk [vmem:[#allocation2 + $0x138] sm:$0xff] %vm6546, %v6537
    %6587 = vst.msk [vmem:[#allocation2 + $0x140] sm:$0xff] %vm6546, %v6538
    %6588 = vst.msk [vmem:[#allocation2 + $0x148] sm:$0xff] %vm6546, %v6539
    %6589 = vst.msk [vmem:[#allocation2 + $0x150] sm:$0xff] %vm6546, %v6540
    %6590 = vst.msk [vmem:[#allocation2 + $0x158] sm:$0xff] %vm6546, %v6541
    %6591 = vst.msk [vmem:[#allocation2 + $0x160] sm:$0xff] %vm6546, %v6542
    %6592 = vst.msk [vmem:[#allocation2 + $0x168] sm:$0xff] %vm6546, %v6543
    %6593 = vst.msk [vmem:[#allocation2 + $0x170] sm:$0xff] %vm6546, %v6544
    %6594 = vst.msk [vmem:[#allocation2 + $0x178] sm:$0xff] %vm6546, %v6545
    %v6595 = vld [vmem:[#allocation2] sm:$0xff]
    %v6596 = vld [vmem:[#allocation2 + $0x8] sm:$0xff]
    %v6597 = vld [vmem:[#allocation2 + $0x10] sm:$0xff]
    %v6598 = vld [vmem:[#allocation2 + $0x18] sm:$0xff]
    %v6599 = vld [vmem:[#allocation2 + $0x20] sm:$0xff]
    %v6600 = vld [vmem:[#allocation2 + $0x28] sm:$0xff]
    %v6601 = vld [vmem:[#allocation2 + $0x30] sm:$0xff]
    %v6602 = vld [vmem:[#allocation2 + $0x38] sm:$0xff]
    %v6603 = vld [vmem:[#allocation2 + $0x40] sm:$0xff]
    %v6604 = vld [vmem:[#allocation2 + $0x48] sm:$0xff]
    %v6605 = vld [vmem:[#allocation2 + $0x50] sm:$0xff]
    %v6606 = vld [vmem:[#allocation2 + $0x58] sm:$0xff]
    %v6607 = vld [vmem:[#allocation2 + $0x60] sm:$0xff]
    %v6608 = vld [vmem:[#allocation2 + $0x68] sm:$0xff]
    %v6609 = vld [vmem:[#allocation2 + $0x70] sm:$0xff]
    %v6610 = vld [vmem:[#allocation2 + $0x78] sm:$0xff]
    %v6611 = vld [vmem:[#allocation2 + $0x80] sm:$0xff]
    %v6612 = vld [vmem:[#allocation2 + $0x88] sm:$0xff]
    %v6613 = vld [vmem:[#allocation2 + $0x90] sm:$0xff]
    %v6614 = vld [vmem:[#allocation2 + $0x98] sm:$0xff]
    %v6615 = vld [vmem:[#allocation2 + $0xa0] sm:$0xff]
    %v6616 = vld [vmem:[#allocation2 + $0xa8] sm:$0xff]
    %v6617 = vld [vmem:[#allocation2 + $0xb0] sm:$0xff]
    %v6618 = vld [vmem:[#allocation2 + $0xb8] sm:$0xff]
    %v6619 = vld [vmem:[#allocation2 + $0xc0] sm:$0xff]
    %v6620 = vld [vmem:[#allocation2 + $0xc8] sm:$0xff]
    %v6621 = vld [vmem:[#allocation2 + $0xd0] sm:$0xff]
    %v6622 = vld [vmem:[#allocation2 + $0xd8] sm:$0xff]
    %v6623 = vld [vmem:[#allocation2 + $0xe0] sm:$0xff]
    %v6624 = vld [vmem:[#allocation2 + $0xe8] sm:$0xff]
    %v6625 = vld [vmem:[#allocation2 + $0xf0] sm:$0xff]
    %v6626 = vld [vmem:[#allocation2 + $0xf8] sm:$0xff]
    %v6627 = vld [vmem:[#allocation2 + $0x100] sm:$0xff]
    %v6628 = vld [vmem:[#allocation2 + $0x108] sm:$0xff]
    %v6629 = vld [vmem:[#allocation2 + $0x110] sm:$0xff]
    %v6630 = vld [vmem:[#allocation2 + $0x118] sm:$0xff]
    %v6631 = vld [vmem:[#allocation2 + $0x120] sm:$0xff]
    %v6632 = vld [vmem:[#allocation2 + $0x128] sm:$0xff]
    %v6633 = vld [vmem:[#allocation2 + $0x130] sm:$0xff]
    %v6634 = vld [vmem:[#allocation2 + $0x138] sm:$0xff]
    %v6635 = vld [vmem:[#allocation2 + $0x140] sm:$0xff]
    %v6636 = vld [vmem:[#allocation2 + $0x148] sm:$0xff]
    %v6637 = vld [vmem:[#allocation2 + $0x150] sm:$0xff]
    %v6638 = vld [vmem:[#allocation2 + $0x158] sm:$0xff]
    %v6639 = vld [vmem:[#allocation2 + $0x160] sm:$0xff]
    %v6640 = vld [vmem:[#allocation2 + $0x168] sm:$0xff]
    %v6641 = vld [vmem:[#allocation2 + $0x170] sm:$0xff]
    %v6642 = vld [vmem:[#allocation2 + $0x178] sm:$0xff]
    %6691 = vrot.lane.b32.xlu0 %v4809, 2
    %v6692 = vpop.permute.xlu0 %6691
    %6693 = vrot.lane.b32.xlu0 %v4810, 2
    %v6694 = vpop.permute.xlu0 %6693
    %6695 = vrot.lane.b32.xlu0 %v4811, 2
    %v6696 = vpop.permute.xlu0 %6695
    %6697 = vrot.lane.b32.xlu0 %v4812, 2
    %v6698 = vpop.permute.xlu0 %6697
    %6699 = vrot.lane.b32.xlu0 %v4813, 2
    %v6700 = vpop.permute.xlu0 %6699
    %6701 = vrot.lane.b32.xlu0 %v4814, 2
    %v6702 = vpop.permute.xlu0 %6701
    %6703 = vrot.lane.b32.xlu0 %v4815, 2
    %v6704 = vpop.permute.xlu0 %6703
    %6705 = vrot.lane.b32.xlu0 %v4816, 2
    %v6706 = vpop.permute.xlu0 %6705
    %6707 = vrot.lane.b32.xlu0 %v4817, 2
    %v6708 = vpop.permute.xlu0 %6707
    %6709 = vrot.lane.b32.xlu0 %v4818, 2
    %v6710 = vpop.permute.xlu0 %6709
    %6711 = vrot.lane.b32.xlu0 %v4819, 2
    %v6712 = vpop.permute.xlu0 %6711
    %6713 = vrot.lane.b32.xlu0 %v4820, 2
    %v6714 = vpop.permute.xlu0 %6713
    %6715 = vrot.lane.b32.xlu0 %v4821, 2
    %v6716 = vpop.permute.xlu0 %6715
    %6717 = vrot.lane.b32.xlu0 %v4822, 2
    %v6718 = vpop.permute.xlu0 %6717
    %6719 = vrot.lane.b32.xlu0 %v4823, 2
    %v6720 = vpop.permute.xlu0 %6719
    %6721 = vrot.lane.b32.xlu0 %v4824, 2
    %v6722 = vpop.permute.xlu0 %6721
    %6723 = vrot.lane.b32.xlu0 %v4825, 2
    %v6724 = vpop.permute.xlu0 %6723
    %6725 = vrot.lane.b32.xlu0 %v4826, 2
    %v6726 = vpop.permute.xlu0 %6725
    %6727 = vrot.lane.b32.xlu0 %v4827, 2
    %v6728 = vpop.permute.xlu0 %6727
    %6729 = vrot.lane.b32.xlu0 %v4828, 2
    %v6730 = vpop.permute.xlu0 %6729
    %6731 = vrot.lane.b32.xlu0 %v4829, 2
    %v6732 = vpop.permute.xlu0 %6731
    %6733 = vrot.lane.b32.xlu0 %v4830, 2
    %v6734 = vpop.permute.xlu0 %6733
    %6735 = vrot.lane.b32.xlu0 %v4831, 2
    %v6736 = vpop.permute.xlu0 %6735
    %6737 = vrot.lane.b32.xlu0 %v4832, 2
    %v6738 = vpop.permute.xlu0 %6737
    %6739 = vrot.lane.b32.xlu0 %v4833, 2
    %v6740 = vpop.permute.xlu0 %6739
    %6741 = vrot.lane.b32.xlu0 %v4834, 2
    %v6742 = vpop.permute.xlu0 %6741
    %6743 = vrot.lane.b32.xlu0 %v4835, 2
    %v6744 = vpop.permute.xlu0 %6743
    %6745 = vrot.lane.b32.xlu0 %v4836, 2
    %v6746 = vpop.permute.xlu0 %6745
    %6747 = vrot.lane.b32.xlu0 %v4837, 2
    %v6748 = vpop.permute.xlu0 %6747
    %6749 = vrot.lane.b32.xlu0 %v4838, 2
    %v6750 = vpop.permute.xlu0 %6749
    %6751 = vrot.lane.b32.xlu0 %v4839, 2
    %v6752 = vpop.permute.xlu0 %6751
    %6753 = vrot.lane.b32.xlu0 %v4840, 2
    %v6754 = vpop.permute.xlu0 %6753
    %6755 = vrot.lane.b32.xlu0 %v4841, 2
    %v6756 = vpop.permute.xlu0 %6755
    %6757 = vrot.lane.b32.xlu0 %v4842, 2
    %v6758 = vpop.permute.xlu0 %6757
    %6759 = vrot.lane.b32.xlu0 %v4843, 2
    %v6760 = vpop.permute.xlu0 %6759
    %6761 = vrot.lane.b32.xlu0 %v4844, 2
    %v6762 = vpop.permute.xlu0 %6761
    %6763 = vrot.lane.b32.xlu0 %v4845, 2
    %v6764 = vpop.permute.xlu0 %6763
    %6765 = vrot.lane.b32.xlu0 %v4846, 2
    %v6766 = vpop.permute.xlu0 %6765
    %6767 = vrot.lane.b32.xlu0 %v4847, 2
    %v6768 = vpop.permute.xlu0 %6767
    %6769 = vrot.lane.b32.xlu0 %v4848, 2
    %v6770 = vpop.permute.xlu0 %6769
    %6771 = vrot.lane.b32.xlu0 %v4849, 2
    %v6772 = vpop.permute.xlu0 %6771
    %6773 = vrot.lane.b32.xlu0 %v4850, 2
    %v6774 = vpop.permute.xlu0 %6773
    %6775 = vrot.lane.b32.xlu0 %v4851, 2
    %v6776 = vpop.permute.xlu0 %6775
    %6777 = vrot.lane.b32.xlu0 %v4852, 2
    %v6778 = vpop.permute.xlu0 %6777
    %6779 = vrot.lane.b32.xlu0 %v4853, 2
    %v6780 = vpop.permute.xlu0 %6779
    %6781 = vrot.lane.b32.xlu0 %v4854, 2
    %v6782 = vpop.permute.xlu0 %6781
    %6783 = vrot.lane.b32.xlu0 %v4855, 2
    %v6784 = vpop.permute.xlu0 %6783
    %6785 = vrot.lane.b32.xlu0 %v4856, 2
    %v6786 = vpop.permute.xlu0 %6785
    %v6835 = vadd.f32 %v6595, %v6692
    %v6836 = vadd.f32 %v6596, %v6694
    %v6837 = vadd.f32 %v6597, %v6696
    %v6838 = vadd.f32 %v6598, %v6698
    %v6839 = vadd.f32 %v6599, %v6700
    %v6840 = vadd.f32 %v6600, %v6702
    %v6841 = vadd.f32 %v6601, %v6704
    %v6842 = vadd.f32 %v6602, %v6706
    %v6843 = vadd.f32 %v6603, %v6708
    %v6844 = vadd.f32 %v6604, %v6710
    %v6845 = vadd.f32 %v6605, %v6712
    %v6846 = vadd.f32 %v6606, %v6714
    %v6847 = vadd.f32 %v6607, %v6716
    %v6848 = vadd.f32 %v6608, %v6718
    %v6849 = vadd.f32 %v6609, %v6720
    %v6850 = vadd.f32 %v6610, %v6722
    %v6851 = vadd.f32 %v6611, %v6724
    %v6852 = vadd.f32 %v6612, %v6726
    %v6853 = vadd.f32 %v6613, %v6728
    %v6854 = vadd.f32 %v6614, %v6730
    %v6855 = vadd.f32 %v6615, %v6732
    %v6856 = vadd.f32 %v6616, %v6734
    %v6857 = vadd.f32 %v6617, %v6736
    %v6858 = vadd.f32 %v6618, %v6738
    %v6859 = vadd.f32 %v6619, %v6740
    %v6860 = vadd.f32 %v6620, %v6742
    %v6861 = vadd.f32 %v6621, %v6744
    %v6862 = vadd.f32 %v6622, %v6746
    %v6863 = vadd.f32 %v6623, %v6748
    %v6864 = vadd.f32 %v6624, %v6750
    %v6865 = vadd.f32 %v6625, %v6752
    %v6866 = vadd.f32 %v6626, %v6754
    %v6867 = vadd.f32 %v6627, %v6756
    %v6868 = vadd.f32 %v6628, %v6758
    %v6869 = vadd.f32 %v6629, %v6760
    %v6870 = vadd.f32 %v6630, %v6762
    %v6871 = vadd.f32 %v6631, %v6764
    %v6872 = vadd.f32 %v6632, %v6766
    %v6873 = vadd.f32 %v6633, %v6768
    %v6874 = vadd.f32 %v6634, %v6770
    %v6875 = vadd.f32 %v6635, %v6772
    %v6876 = vadd.f32 %v6636, %v6774
    %v6877 = vadd.f32 %v6637, %v6776
    %v6878 = vadd.f32 %v6638, %v6778
    %v6879 = vadd.f32 %v6639, %v6780
    %v6880 = vadd.f32 %v6640, %v6782
    %v6881 = vadd.f32 %v6641, %v6784
    %v6882 = vadd.f32 %v6642, %v6786
    %vm6883 = vcmask 23568
    %6884 = vst.msk [vmem:[#allocation2] sm:$0xff] %vm6883, %v6835
    %6885 = vst.msk [vmem:[#allocation2 + $0x8] sm:$0xff] %vm6883, %v6836
    %6886 = vst.msk [vmem:[#allocation2 + $0x10] sm:$0xff] %vm6883, %v6837
    %6887 = vst.msk [vmem:[#allocation2 + $0x18] sm:$0xff] %vm6883, %v6838
    %6888 = vst.msk [vmem:[#allocation2 + $0x20] sm:$0xff] %vm6883, %v6839
    %6889 = vst.msk [vmem:[#allocation2 + $0x28] sm:$0xff] %vm6883, %v6840
    %6890 = vst.msk [vmem:[#allocation2 + $0x30] sm:$0xff] %vm6883, %v6841
    %6891 = vst.msk [vmem:[#allocation2 + $0x38] sm:$0xff] %vm6883, %v6842
    %6892 = vst.msk [vmem:[#allocation2 + $0x40] sm:$0xff] %vm6883, %v6843
    %6893 = vst.msk [vmem:[#allocation2 + $0x48] sm:$0xff] %vm6883, %v6844
    %6894 = vst.msk [vmem:[#allocation2 + $0x50] sm:$0xff] %vm6883, %v6845
    %6895 = vst.msk [vmem:[#allocation2 + $0x58] sm:$0xff] %vm6883, %v6846
    %6896 = vst.msk [vmem:[#allocation2 + $0x60] sm:$0xff] %vm6883, %v6847
    %6897 = vst.msk [vmem:[#allocation2 + $0x68] sm:$0xff] %vm6883, %v6848
    %6898 = vst.msk [vmem:[#allocation2 + $0x70] sm:$0xff] %vm6883, %v6849
    %6899 = vst.msk [vmem:[#allocation2 + $0x78] sm:$0xff] %vm6883, %v6850
    %6900 = vst.msk [vmem:[#allocation2 + $0x80] sm:$0xff] %vm6883, %v6851
    %6901 = vst.msk [vmem:[#allocation2 + $0x88] sm:$0xff] %vm6883, %v6852
    %6902 = vst.msk [vmem:[#allocation2 + $0x90] sm:$0xff] %vm6883, %v6853
    %6903 = vst.msk [vmem:[#allocation2 + $0x98] sm:$0xff] %vm6883, %v6854
    %6904 = vst.msk [vmem:[#allocation2 + $0xa0] sm:$0xff] %vm6883, %v6855
    %6905 = vst.msk [vmem:[#allocation2 + $0xa8] sm:$0xff] %vm6883, %v6856
    %6906 = vst.msk [vmem:[#allocation2 + $0xb0] sm:$0xff] %vm6883, %v6857
    %6907 = vst.msk [vmem:[#allocation2 + $0xb8] sm:$0xff] %vm6883, %v6858
    %6908 = vst.msk [vmem:[#allocation2 + $0xc0] sm:$0xff] %vm6883, %v6859
    %6909 = vst.msk [vmem:[#allocation2 + $0xc8] sm:$0xff] %vm6883, %v6860
    %6910 = vst.msk [vmem:[#allocation2 + $0xd0] sm:$0xff] %vm6883, %v6861
    %6911 = vst.msk [vmem:[#allocation2 + $0xd8] sm:$0xff] %vm6883, %v6862
    %6912 = vst.msk [vmem:[#allocation2 + $0xe0] sm:$0xff] %vm6883, %v6863
    %6913 = vst.msk [vmem:[#allocation2 + $0xe8] sm:$0xff] %vm6883, %v6864
    %6914 = vst.msk [vmem:[#allocation2 + $0xf0] sm:$0xff] %vm6883, %v6865
    %6915 = vst.msk [vmem:[#allocation2 + $0xf8] sm:$0xff] %vm6883, %v6866
    %6916 = vst.msk [vmem:[#allocation2 + $0x100] sm:$0xff] %vm6883, %v6867
    %6917 = vst.msk [vmem:[#allocation2 + $0x108] sm:$0xff] %vm6883, %v6868
    %6918 = vst.msk [vmem:[#allocation2 + $0x110] sm:$0xff] %vm6883, %v6869
    %6919 = vst.msk [vmem:[#allocation2 + $0x118] sm:$0xff] %vm6883, %v6870
    %6920 = vst.msk [vmem:[#allocation2 + $0x120] sm:$0xff] %vm6883, %v6871
    %6921 = vst.msk [vmem:[#allocation2 + $0x128] sm:$0xff] %vm6883, %v6872
    %6922 = vst.msk [vmem:[#allocation2 + $0x130] sm:$0xff] %vm6883, %v6873
    %6923 = vst.msk [vmem:[#allocation2 + $0x138] sm:$0xff] %vm6883, %v6874
    %6924 = vst.msk [vmem:[#allocation2 + $0x140] sm:$0xff] %vm6883, %v6875
    %6925 = vst.msk [vmem:[#allocation2 + $0x148] sm:$0xff] %vm6883, %v6876
    %6926 = vst.msk [vmem:[#allocation2 + $0x150] sm:$0xff] %vm6883, %v6877
    %6927 = vst.msk [vmem:[#allocation2 + $0x158] sm:$0xff] %vm6883, %v6878
    %6928 = vst.msk [vmem:[#allocation2 + $0x160] sm:$0xff] %vm6883, %v6879
    %6929 = vst.msk [vmem:[#allocation2 + $0x168] sm:$0xff] %vm6883, %v6880
    %6930 = vst.msk [vmem:[#allocation2 + $0x170] sm:$0xff] %vm6883, %v6881
    %6931 = vst.msk [vmem:[#allocation2 + $0x178] sm:$0xff] %vm6883, %v6882
    %v6932 = vld [vmem:[#allocation2] sm:$0xff]
    %v6933 = vld [vmem:[#allocation2 + $0x8] sm:$0xff]
    %v6934 = vld [vmem:[#allocation2 + $0x10] sm:$0xff]
    %v6935 = vld [vmem:[#allocation2 + $0x18] sm:$0xff]
    %v6936 = vld [vmem:[#allocation2 + $0x20] sm:$0xff]
    %v6937 = vld [vmem:[#allocation2 + $0x28] sm:$0xff]
    %v6938 = vld [vmem:[#allocation2 + $0x30] sm:$0xff]
    %v6939 = vld [vmem:[#allocation2 + $0x38] sm:$0xff]
    %v6940 = vld [vmem:[#allocation2 + $0x40] sm:$0xff]
    %v6941 = vld [vmem:[#allocation2 + $0x48] sm:$0xff]
    %v6942 = vld [vmem:[#allocation2 + $0x50] sm:$0xff]
    %v6943 = vld [vmem:[#allocation2 + $0x58] sm:$0xff]
    %v6944 = vld [vmem:[#allocation2 + $0x60] sm:$0xff]
    %v6945 = vld [vmem:[#allocation2 + $0x68] sm:$0xff]
    %v6946 = vld [vmem:[#allocation2 + $0x70] sm:$0xff]
    %v6947 = vld [vmem:[#allocation2 + $0x78] sm:$0xff]
    %v6948 = vld [vmem:[#allocation2 + $0x80] sm:$0xff]
    %v6949 = vld [vmem:[#allocation2 + $0x88] sm:$0xff]
    %v6950 = vld [vmem:[#allocation2 + $0x90] sm:$0xff]
    %v6951 = vld [vmem:[#allocation2 + $0x98] sm:$0xff]
    %v6952 = vld [vmem:[#allocation2 + $0xa0] sm:$0xff]
    %v6953 = vld [vmem:[#allocation2 + $0xa8] sm:$0xff]
    %v6954 = vld [vmem:[#allocation2 + $0xb0] sm:$0xff]
    %v6955 = vld [vmem:[#allocation2 + $0xb8] sm:$0xff]
    %v6956 = vld [vmem:[#allocation2 + $0xc0] sm:$0xff]
    %v6957 = vld [vmem:[#allocation2 + $0xc8] sm:$0xff]
    %v6958 = vld [vmem:[#allocation2 + $0xd0] sm:$0xff]
    %v6959 = vld [vmem:[#allocation2 + $0xd8] sm:$0xff]
    %v6960 = vld [vmem:[#allocation2 + $0xe0] sm:$0xff]
    %v6961 = vld [vmem:[#allocation2 + $0xe8] sm:$0xff]
    %v6962 = vld [vmem:[#allocation2 + $0xf0] sm:$0xff]
    %v6963 = vld [vmem:[#allocation2 + $0xf8] sm:$0xff]
    %v6964 = vld [vmem:[#allocation2 + $0x100] sm:$0xff]
    %v6965 = vld [vmem:[#allocation2 + $0x108] sm:$0xff]
    %v6966 = vld [vmem:[#allocation2 + $0x110] sm:$0xff]
    %v6967 = vld [vmem:[#allocation2 + $0x118] sm:$0xff]
    %v6968 = vld [vmem:[#allocation2 + $0x120] sm:$0xff]
    %v6969 = vld [vmem:[#allocation2 + $0x128] sm:$0xff]
    %v6970 = vld [vmem:[#allocation2 + $0x130] sm:$0xff]
    %v6971 = vld [vmem:[#allocation2 + $0x138] sm:$0xff]
    %v6972 = vld [vmem:[#allocation2 + $0x140] sm:$0xff]
    %v6973 = vld [vmem:[#allocation2 + $0x148] sm:$0xff]
    %v6974 = vld [vmem:[#allocation2 + $0x150] sm:$0xff]
    %v6975 = vld [vmem:[#allocation2 + $0x158] sm:$0xff]
    %v6976 = vld [vmem:[#allocation2 + $0x160] sm:$0xff]
    %v6977 = vld [vmem:[#allocation2 + $0x168] sm:$0xff]
    %v6978 = vld [vmem:[#allocation2 + $0x170] sm:$0xff]
    %v6979 = vld [vmem:[#allocation2 + $0x178] sm:$0xff]
    %7028 = vrot.lane.b32.xlu0 %v6065, 3
    %v7029 = vpop.permute.xlu0 %7028
    %7030 = vrot.lane.b32.xlu0 %v6066, 3
    %v7031 = vpop.permute.xlu0 %7030
    %7032 = vrot.lane.b32.xlu0 %v6067, 3
    %v7033 = vpop.permute.xlu0 %7032
    %7034 = vrot.lane.b32.xlu0 %v6068, 3
    %v7035 = vpop.permute.xlu0 %7034
    %7036 = vrot.lane.b32.xlu0 %v6069, 3
    %v7037 = vpop.permute.xlu0 %7036
    %7038 = vrot.lane.b32.xlu0 %v6070, 3
    %v7039 = vpop.permute.xlu0 %7038
    %7040 = vrot.lane.b32.xlu0 %v6071, 3
    %v7041 = vpop.permute.xlu0 %7040
    %7042 = vrot.lane.b32.xlu0 %v6072, 3
    %v7043 = vpop.permute.xlu0 %7042
    %7044 = vrot.lane.b32.xlu0 %v6073, 3
    %v7045 = vpop.permute.xlu0 %7044
    %7046 = vrot.lane.b32.xlu0 %v6074, 3
    %v7047 = vpop.permute.xlu0 %7046
    %7048 = vrot.lane.b32.xlu0 %v6075, 3
    %v7049 = vpop.permute.xlu0 %7048
    %7050 = vrot.lane.b32.xlu0 %v6076, 3
    %v7051 = vpop.permute.xlu0 %7050
    %7052 = vrot.lane.b32.xlu0 %v6077, 3
    %v7053 = vpop.permute.xlu0 %7052
    %7054 = vrot.lane.b32.xlu0 %v6078, 3
    %v7055 = vpop.permute.xlu0 %7054
    %7056 = vrot.lane.b32.xlu0 %v6079, 3
    %v7057 = vpop.permute.xlu0 %7056
    %7058 = vrot.lane.b32.xlu0 %v6080, 3
    %v7059 = vpop.permute.xlu0 %7058
    %7060 = vrot.lane.b32.xlu0 %v6081, 3
    %v7061 = vpop.permute.xlu0 %7060
    %7062 = vrot.lane.b32.xlu0 %v6082, 3
    %v7063 = vpop.permute.xlu0 %7062
    %7064 = vrot.lane.b32.xlu0 %v6083, 3
    %v7065 = vpop.permute.xlu0 %7064
    %7066 = vrot.lane.b32.xlu0 %v6084, 3
    %v7067 = vpop.permute.xlu0 %7066
    %7068 = vrot.lane.b32.xlu0 %v6085, 3
    %v7069 = vpop.permute.xlu0 %7068
    %7070 = vrot.lane.b32.xlu0 %v6086, 3
    %v7071 = vpop.permute.xlu0 %7070
    %7072 = vrot.lane.b32.xlu0 %v6087, 3
    %v7073 = vpop.permute.xlu0 %7072
    %7074 = vrot.lane.b32.xlu0 %v6088, 3
    %v7075 = vpop.permute.xlu0 %7074
    %7076 = vrot.lane.b32.xlu0 %v6089, 3
    %v7077 = vpop.permute.xlu0 %7076
    %7078 = vrot.lane.b32.xlu0 %v6090, 3
    %v7079 = vpop.permute.xlu0 %7078
    %7080 = vrot.lane.b32.xlu0 %v6091, 3
    %v7081 = vpop.permute.xlu0 %7080
    %7082 = vrot.lane.b32.xlu0 %v6092, 3
    %v7083 = vpop.permute.xlu0 %7082
    %7084 = vrot.lane.b32.xlu0 %v6093, 3
    %v7085 = vpop.permute.xlu0 %7084
    %7086 = vrot.lane.b32.xlu0 %v6094, 3
    %v7087 = vpop.permute.xlu0 %7086
    %7088 = vrot.lane.b32.xlu0 %v6095, 3
    %v7089 = vpop.permute.xlu0 %7088
    %7090 = vrot.lane.b32.xlu0 %v6096, 3
    %v7091 = vpop.permute.xlu0 %7090
    %7092 = vrot.lane.b32.xlu0 %v6097, 3
    %v7093 = vpop.permute.xlu0 %7092
    %7094 = vrot.lane.b32.xlu0 %v6098, 3
    %v7095 = vpop.permute.xlu0 %7094
    %7096 = vrot.lane.b32.xlu0 %v6099, 3
    %v7097 = vpop.permute.xlu0 %7096
    %7098 = vrot.lane.b32.xlu0 %v6100, 3
    %v7099 = vpop.permute.xlu0 %7098
    %7100 = vrot.lane.b32.xlu0 %v6101, 3
    %v7101 = vpop.permute.xlu0 %7100
    %7102 = vrot.lane.b32.xlu0 %v6102, 3
    %v7103 = vpop.permute.xlu0 %7102
    %7104 = vrot.lane.b32.xlu0 %v6103, 3
    %v7105 = vpop.permute.xlu0 %7104
    %7106 = vrot.lane.b32.xlu0 %v6104, 3
    %v7107 = vpop.permute.xlu0 %7106
    %7108 = vrot.lane.b32.xlu0 %v6105, 3
    %v7109 = vpop.permute.xlu0 %7108
    %7110 = vrot.lane.b32.xlu0 %v6106, 3
    %v7111 = vpop.permute.xlu0 %7110
    %7112 = vrot.lane.b32.xlu0 %v6107, 3
    %v7113 = vpop.permute.xlu0 %7112
    %7114 = vrot.lane.b32.xlu0 %v6108, 3
    %v7115 = vpop.permute.xlu0 %7114
    %7116 = vrot.lane.b32.xlu0 %v6109, 3
    %v7117 = vpop.permute.xlu0 %7116
    %7118 = vrot.lane.b32.xlu0 %v6110, 3
    %v7119 = vpop.permute.xlu0 %7118
    %7120 = vrot.lane.b32.xlu0 %v6111, 3
    %v7121 = vpop.permute.xlu0 %7120
    %7122 = vrot.lane.b32.xlu0 %v6112, 3
    %v7123 = vpop.permute.xlu0 %7122
    %v7172 = vadd.f32 %v6932, %v7029
    %v7173 = vadd.f32 %v6933, %v7031
    %v7174 = vadd.f32 %v6934, %v7033
    %v7175 = vadd.f32 %v6935, %v7035
    %v7176 = vadd.f32 %v6936, %v7037
    %v7177 = vadd.f32 %v6937, %v7039
    %v7178 = vadd.f32 %v6938, %v7041
    %v7179 = vadd.f32 %v6939, %v7043
    %v7180 = vadd.f32 %v6940, %v7045
    %v7181 = vadd.f32 %v6941, %v7047
    %v7182 = vadd.f32 %v6942, %v7049
    %v7183 = vadd.f32 %v6943, %v7051
    %v7184 = vadd.f32 %v6944, %v7053
    %v7185 = vadd.f32 %v6945, %v7055
    %v7186 = vadd.f32 %v6946, %v7057
    %v7187 = vadd.f32 %v6947, %v7059
    %v7188 = vadd.f32 %v6948, %v7061
    %v7189 = vadd.f32 %v6949, %v7063
    %v7190 = vadd.f32 %v6950, %v7065
    %v7191 = vadd.f32 %v6951, %v7067
    %v7192 = vadd.f32 %v6952, %v7069
    %v7193 = vadd.f32 %v6953, %v7071
    %v7194 = vadd.f32 %v6954, %v7073
    %v7195 = vadd.f32 %v6955, %v7075
    %v7196 = vadd.f32 %v6956, %v7077
    %v7197 = vadd.f32 %v6957, %v7079
    %v7198 = vadd.f32 %v6958, %v7081
    %v7199 = vadd.f32 %v6959, %v7083
    %v7200 = vadd.f32 %v6960, %v7085
    %v7201 = vadd.f32 %v6961, %v7087
    %v7202 = vadd.f32 %v6962, %v7089
    %v7203 = vadd.f32 %v6963, %v7091
    %v7204 = vadd.f32 %v6964, %v7093
    %v7205 = vadd.f32 %v6965, %v7095
    %v7206 = vadd.f32 %v6966, %v7097
    %v7207 = vadd.f32 %v6967, %v7099
    %v7208 = vadd.f32 %v6968, %v7101
    %v7209 = vadd.f32 %v6969, %v7103
    %v7210 = vadd.f32 %v6970, %v7105
    %v7211 = vadd.f32 %v6971, %v7107
    %v7212 = vadd.f32 %v6972, %v7109
    %v7213 = vadd.f32 %v6973, %v7111
    %v7214 = vadd.f32 %v6974, %v7113
    %v7215 = vadd.f32 %v6975, %v7115
    %v7216 = vadd.f32 %v6976, %v7117
    %v7217 = vadd.f32 %v6977, %v7119
    %v7218 = vadd.f32 %v6978, %v7121
    %v7219 = vadd.f32 %v6979, %v7123
    %vm7220 = vcmask 31768
    %7221 = vst.msk [vmem:[#allocation2] sm:$0xff] %vm7220, %v7172
    %7222 = vst.msk [vmem:[#allocation2 + $0x8] sm:$0xff] %vm7220, %v7173
    %7223 = vst.msk [vmem:[#allocation2 + $0x10] sm:$0xff] %vm7220, %v7174
    %7224 = vst.msk [vmem:[#allocation2 + $0x18] sm:$0xff] %vm7220, %v7175
    %7225 = vst.msk [vmem:[#allocation2 + $0x20] sm:$0xff] %vm7220, %v7176
    %7226 = vst.msk [vmem:[#allocation2 + $0x28] sm:$0xff] %vm7220, %v7177
    %7227 = vst.msk [vmem:[#allocation2 + $0x30] sm:$0xff] %vm7220, %v7178
    %7228 = vst.msk [vmem:[#allocation2 + $0x38] sm:$0xff] %vm7220, %v7179
    %7229 = vst.msk [vmem:[#allocation2 + $0x40] sm:$0xff] %vm7220, %v7180
    %7230 = vst.msk [vmem:[#allocation2 + $0x48] sm:$0xff] %vm7220, %v7181
    %7231 = vst.msk [vmem:[#allocation2 + $0x50] sm:$0xff] %vm7220, %v7182
    %7232 = vst.msk [vmem:[#allocation2 + $0x58] sm:$0xff] %vm7220, %v7183
    %7233 = vst.msk [vmem:[#allocation2 + $0x60] sm:$0xff] %vm7220, %v7184
    %7234 = vst.msk [vmem:[#allocation2 + $0x68] sm:$0xff] %vm7220, %v7185
    %7235 = vst.msk [vmem:[#allocation2 + $0x70] sm:$0xff] %vm7220, %v7186
    %7236 = vst.msk [vmem:[#allocation2 + $0x78] sm:$0xff] %vm7220, %v7187
    %7237 = vst.msk [vmem:[#allocation2 + $0x80] sm:$0xff] %vm7220, %v7188
    %7238 = vst.msk [vmem:[#allocation2 + $0x88] sm:$0xff] %vm7220, %v7189
    %7239 = vst.msk [vmem:[#allocation2 + $0x90] sm:$0xff] %vm7220, %v7190
    %7240 = vst.msk [vmem:[#allocation2 + $0x98] sm:$0xff] %vm7220, %v7191
    %7241 = vst.msk [vmem:[#allocation2 + $0xa0] sm:$0xff] %vm7220, %v7192
    %7242 = vst.msk [vmem:[#allocation2 + $0xa8] sm:$0xff] %vm7220, %v7193
    %7243 = vst.msk [vmem:[#allocation2 + $0xb0] sm:$0xff] %vm7220, %v7194
    %7244 = vst.msk [vmem:[#allocation2 + $0xb8] sm:$0xff] %vm7220, %v7195
    %7245 = vst.msk [vmem:[#allocation2 + $0xc0] sm:$0xff] %vm7220, %v7196
    %7246 = vst.msk [vmem:[#allocation2 + $0xc8] sm:$0xff] %vm7220, %v7197
    %7247 = vst.msk [vmem:[#allocation2 + $0xd0] sm:$0xff] %vm7220, %v7198
    %7248 = vst.msk [vmem:[#allocation2 + $0xd8] sm:$0xff] %vm7220, %v7199
    %7249 = vst.msk [vmem:[#allocation2 + $0xe0] sm:$0xff] %vm7220, %v7200
    %7250 = vst.msk [vmem:[#allocation2 + $0xe8] sm:$0xff] %vm7220, %v7201
    %7251 = vst.msk [vmem:[#allocation2 + $0xf0] sm:$0xff] %vm7220, %v7202
    %7252 = vst.msk [vmem:[#allocation2 + $0xf8] sm:$0xff] %vm7220, %v7203
    %7253 = vst.msk [vmem:[#allocation2 + $0x100] sm:$0xff] %vm7220, %v7204
    %7254 = vst.msk [vmem:[#allocation2 + $0x108] sm:$0xff] %vm7220, %v7205
    %7255 = vst.msk [vmem:[#allocation2 + $0x110] sm:$0xff] %vm7220, %v7206
    %7256 = vst.msk [vmem:[#allocation2 + $0x118] sm:$0xff] %vm7220, %v7207
    %7257 = vst.msk [vmem:[#allocation2 + $0x120] sm:$0xff] %vm7220, %v7208
    %7258 = vst.msk [vmem:[#allocation2 + $0x128] sm:$0xff] %vm7220, %v7209
    %7259 = vst.msk [vmem:[#allocation2 + $0x130] sm:$0xff] %vm7220, %v7210
    %7260 = vst.msk [vmem:[#allocation2 + $0x138] sm:$0xff] %vm7220, %v7211
    %7261 = vst.msk [vmem:[#allocation2 + $0x140] sm:$0xff] %vm7220, %v7212
    %7262 = vst.msk [vmem:[#allocation2 + $0x148] sm:$0xff] %vm7220, %v7213
    %7263 = vst.msk [vmem:[#allocation2 + $0x150] sm:$0xff] %vm7220, %v7214
    %7264 = vst.msk [vmem:[#allocation2 + $0x158] sm:$0xff] %vm7220, %v7215
    %7265 = vst.msk [vmem:[#allocation2 + $0x160] sm:$0xff] %vm7220, %v7216
    %7266 = vst.msk [vmem:[#allocation2 + $0x168] sm:$0xff] %vm7220, %v7217
    %7267 = vst.msk [vmem:[#allocation2 + $0x170] sm:$0xff] %vm7220, %v7218
    %7268 = vst.msk [vmem:[#allocation2 + $0x178] sm:$0xff] %vm7220, %v7219
    %v7269 = vld [vmem:[#allocation2] sm:$0xff]
    %v7270 = vld [vmem:[#allocation2 + $0x8] sm:$0xff]
    %v7271 = vld [vmem:[#allocation2 + $0x10] sm:$0xff]
    %v7272 = vld [vmem:[#allocation2 + $0x18] sm:$0xff]
    %v7273 = vld [vmem:[#allocation2 + $0x20] sm:$0xff]
    %v7274 = vld [vmem:[#allocation2 + $0x28] sm:$0xff]
    %v7275 = vld [vmem:[#allocation2 + $0x30] sm:$0xff]
    %v7276 = vld [vmem:[#allocation2 + $0x38] sm:$0xff]
    %v7277 = vld [vmem:[#allocation2 + $0x40] sm:$0xff]
    %v7278 = vld [vmem:[#allocation2 + $0x48] sm:$0xff]
    %v7279 = vld [vmem:[#allocation2 + $0x50] sm:$0xff]
    %v7280 = vld [vmem:[#allocation2 + $0x58] sm:$0xff]
    %v7281 = vld [vmem:[#allocation2 + $0x60] sm:$0xff]
    %v7282 = vld [vmem:[#allocation2 + $0x68] sm:$0xff]
    %v7283 = vld [vmem:[#allocation2 + $0x70] sm:$0xff]
    %v7284 = vld [vmem:[#allocation2 + $0x78] sm:$0xff]
    %v7285 = vld [vmem:[#allocation2 + $0x80] sm:$0xff]
    %v7286 = vld [vmem:[#allocation2 + $0x88] sm:$0xff]
    %v7287 = vld [vmem:[#allocation2 + $0x90] sm:$0xff]
    %v7288 = vld [vmem:[#allocation2 + $0x98] sm:$0xff]
    %v7289 = vld [vmem:[#allocation2 + $0xa0] sm:$0xff]
    %v7290 = vld [vmem:[#allocation2 + $0xa8] sm:$0xff]
    %v7291 = vld [vmem:[#allocation2 + $0xb0] sm:$0xff]
    %v7292 = vld [vmem:[#allocation2 + $0xb8] sm:$0xff]
    %v7293 = vld [vmem:[#allocation2 + $0xc0] sm:$0xff]
    %v7294 = vld [vmem:[#allocation2 + $0xc8] sm:$0xff]
    %v7295 = vld [vmem:[#allocation2 + $0xd0] sm:$0xff]
    %v7296 = vld [vmem:[#allocation2 + $0xd8] sm:$0xff]
    %v7297 = vld [vmem:[#allocation2 + $0xe0] sm:$0xff]
    %v7298 = vld [vmem:[#allocation2 + $0xe8] sm:$0xff]
    %v7299 = vld [vmem:[#allocation2 + $0xf0] sm:$0xff]
    %v7300 = vld [vmem:[#allocation2 + $0xf8] sm:$0xff]
    %v7301 = vld [vmem:[#allocation2 + $0x100] sm:$0xff]
    %v7302 = vld [vmem:[#allocation2 + $0x108] sm:$0xff]
    %v7303 = vld [vmem:[#allocation2 + $0x110] sm:$0xff]
    %v7304 = vld [vmem:[#allocation2 + $0x118] sm:$0xff]
    %v7305 = vld [vmem:[#allocation2 + $0x120] sm:$0xff]
    %v7306 = vld [vmem:[#allocation2 + $0x128] sm:$0xff]
    %v7307 = vld [vmem:[#allocation2 + $0x130] sm:$0xff]
    %v7308 = vld [vmem:[#allocation2 + $0x138] sm:$0xff]
    %v7309 = vld [vmem:[#allocation2 + $0x140] sm:$0xff]
    %v7310 = vld [vmem:[#allocation2 + $0x148] sm:$0xff]
    %v7311 = vld [vmem:[#allocation2 + $0x150] sm:$0xff]
    %v7312 = vld [vmem:[#allocation2 + $0x158] sm:$0xff]
    %v7313 = vld [vmem:[#allocation2 + $0x160] sm:$0xff]
    %v7314 = vld [vmem:[#allocation2 + $0x168] sm:$0xff]
    %v7315 = vld [vmem:[#allocation2 + $0x170] sm:$0xff]
    %v7316 = vld [vmem:[#allocation2 + $0x178] sm:$0xff]
    %7317 = vrot.lane.b32.xlu0 %v277, 4
    %v7318 = vpop.permute.xlu0 %7317
    %7319 = vrot.lane.b32.xlu0 %v278, 4
    %v7320 = vpop.permute.xlu0 %7319
    %7321 = vrot.lane.b32.xlu0 %v279, 4
    %v7322 = vpop.permute.xlu0 %7321
    %7323 = vrot.lane.b32.xlu0 %v280, 4
    %v7324 = vpop.permute.xlu0 %7323
    %7325 = vrot.lane.b32.xlu0 %v281, 4
    %v7326 = vpop.permute.xlu0 %7325
    %7327 = vrot.lane.b32.xlu0 %v282, 4
    %v7328 = vpop.permute.xlu0 %7327
    %7329 = vrot.lane.b32.xlu0 %v283, 4
    %v7330 = vpop.permute.xlu0 %7329
    %7331 = vrot.lane.b32.xlu0 %v284, 4
    %v7332 = vpop.permute.xlu0 %7331
    %7333 = vrot.lane.b32.xlu0 %v285, 4
    %v7334 = vpop.permute.xlu0 %7333
    %7335 = vrot.lane.b32.xlu0 %v286, 4
    %v7336 = vpop.permute.xlu0 %7335
    %7337 = vrot.lane.b32.xlu0 %v287, 4
    %v7338 = vpop.permute.xlu0 %7337
    %7339 = vrot.lane.b32.xlu0 %v288, 4
    %v7340 = vpop.permute.xlu0 %7339
    %7341 = vrot.lane.b32.xlu0 %v289, 4
    %v7342 = vpop.permute.xlu0 %7341
    %7343 = vrot.lane.b32.xlu0 %v290, 4
    %v7344 = vpop.permute.xlu0 %7343
    %7345 = vrot.lane.b32.xlu0 %v291, 4
    %v7346 = vpop.permute.xlu0 %7345
    %7347 = vrot.lane.b32.xlu0 %v292, 4
    %v7348 = vpop.permute.xlu0 %7347
    %7349 = vrot.lane.b32.xlu0 %v293, 4
    %v7350 = vpop.permute.xlu0 %7349
    %7351 = vrot.lane.b32.xlu0 %v294, 4
    %v7352 = vpop.permute.xlu0 %7351
    %7353 = vrot.lane.b32.xlu0 %v295, 4
    %v7354 = vpop.permute.xlu0 %7353
    %7355 = vrot.lane.b32.xlu0 %v296, 4
    %v7356 = vpop.permute.xlu0 %7355
    %7357 = vrot.lane.b32.xlu0 %v297, 4
    %v7358 = vpop.permute.xlu0 %7357
    %7359 = vrot.lane.b32.xlu0 %v298, 4
    %v7360 = vpop.permute.xlu0 %7359
    %7361 = vrot.lane.b32.xlu0 %v299, 4
    %v7362 = vpop.permute.xlu0 %7361
    %7363 = vrot.lane.b32.xlu0 %v300, 4
    %v7364 = vpop.permute.xlu0 %7363
    %7365 = vrot.lane.b32.xlu0 %v301, 4
    %v7366 = vpop.permute.xlu0 %7365
    %7367 = vrot.lane.b32.xlu0 %v302, 4
    %v7368 = vpop.permute.xlu0 %7367
    %7369 = vrot.lane.b32.xlu0 %v303, 4
    %v7370 = vpop.permute.xlu0 %7369
    %7371 = vrot.lane.b32.xlu0 %v304, 4
    %v7372 = vpop.permute.xlu0 %7371
    %7373 = vrot.lane.b32.xlu0 %v305, 4
    %v7374 = vpop.permute.xlu0 %7373
    %7375 = vrot.lane.b32.xlu0 %v306, 4
    %v7376 = vpop.permute.xlu0 %7375
    %7377 = vrot.lane.b32.xlu0 %v307, 4
    %v7378 = vpop.permute.xlu0 %7377
    %7379 = vrot.lane.b32.xlu0 %v308, 4
    %v7380 = vpop.permute.xlu0 %7379
    %7381 = vrot.lane.b32.xlu0 %v309, 4
    %v7382 = vpop.permute.xlu0 %7381
    %7383 = vrot.lane.b32.xlu0 %v310, 4
    %v7384 = vpop.permute.xlu0 %7383
    %7385 = vrot.lane.b32.xlu0 %v311, 4
    %v7386 = vpop.permute.xlu0 %7385
    %7387 = vrot.lane.b32.xlu0 %v312, 4
    %v7388 = vpop.permute.xlu0 %7387
    %7389 = vrot.lane.b32.xlu0 %v313, 4
    %v7390 = vpop.permute.xlu0 %7389
    %7391 = vrot.lane.b32.xlu0 %v314, 4
    %v7392 = vpop.permute.xlu0 %7391
    %7393 = vrot.lane.b32.xlu0 %v315, 4
    %v7394 = vpop.permute.xlu0 %7393
    %7395 = vrot.lane.b32.xlu0 %v316, 4
    %v7396 = vpop.permute.xlu0 %7395
    %7397 = vrot.lane.b32.xlu0 %v317, 4
    %v7398 = vpop.permute.xlu0 %7397
    %7399 = vrot.lane.b32.xlu0 %v318, 4
    %v7400 = vpop.permute.xlu0 %7399
    %7401 = vrot.lane.b32.xlu0 %v319, 4
    %v7402 = vpop.permute.xlu0 %7401
    %7403 = vrot.lane.b32.xlu0 %v320, 4
    %v7404 = vpop.permute.xlu0 %7403
    %7405 = vrot.lane.b32.xlu0 %v321, 4
    %v7406 = vpop.permute.xlu0 %7405
    %7407 = vrot.lane.b32.xlu0 %v322, 4
    %v7408 = vpop.permute.xlu0 %7407
    %7409 = vrot.lane.b32.xlu0 %v323, 4
    %v7410 = vpop.permute.xlu0 %7409
    %7411 = vrot.lane.b32.xlu0 %v324, 4
    %v7412 = vpop.permute.xlu0 %7411
    %v7461 = vadd.f32 %v7269, %v7318
    %v7462 = vadd.f32 %v7270, %v7320
    %v7463 = vadd.f32 %v7271, %v7322
    %v7464 = vadd.f32 %v7272, %v7324
    %v7465 = vadd.f32 %v7273, %v7326
    %v7466 = vadd.f32 %v7274, %v7328
    %v7467 = vadd.f32 %v7275, %v7330
    %v7468 = vadd.f32 %v7276, %v7332
    %v7469 = vadd.f32 %v7277, %v7334
    %v7470 = vadd.f32 %v7278, %v7336
    %v7471 = vadd.f32 %v7279, %v7338
    %v7472 = vadd.f32 %v7280, %v7340
    %v7473 = vadd.f32 %v7281, %v7342
    %v7474 = vadd.f32 %v7282, %v7344
    %v7475 = vadd.f32 %v7283, %v7346
    %v7476 = vadd.f32 %v7284, %v7348
    %v7477 = vadd.f32 %v7285, %v7350
    %v7478 = vadd.f32 %v7286, %v7352
    %v7479 = vadd.f32 %v7287, %v7354
    %v7480 = vadd.f32 %v7288, %v7356
    %v7481 = vadd.f32 %v7289, %v7358
    %v7482 = vadd.f32 %v7290, %v7360
    %v7483 = vadd.f32 %v7291, %v7362
    %v7484 = vadd.f32 %v7292, %v7364
    %v7485 = vadd.f32 %v7293, %v7366
    %v7486 = vadd.f32 %v7294, %v7368
    %v7487 = vadd.f32 %v7295, %v7370
    %v7488 = vadd.f32 %v7296, %v7372
    %v7489 = vadd.f32 %v7297, %v7374
    %v7490 = vadd.f32 %v7298, %v7376
    %v7491 = vadd.f32 %v7299, %v7378
    %v7492 = vadd.f32 %v7300, %v7380
    %v7493 = vadd.f32 %v7301, %v7382
    %v7494 = vadd.f32 %v7302, %v7384
    %v7495 = vadd.f32 %v7303, %v7386
    %v7496 = vadd.f32 %v7304, %v7388
    %v7497 = vadd.f32 %v7305, %v7390
    %v7498 = vadd.f32 %v7306, %v7392
    %v7499 = vadd.f32 %v7307, %v7394
    %v7500 = vadd.f32 %v7308, %v7396
    %v7501 = vadd.f32 %v7309, %v7398
    %v7502 = vadd.f32 %v7310, %v7400
    %v7503 = vadd.f32 %v7311, %v7402
    %v7504 = vadd.f32 %v7312, %v7404
    %v7505 = vadd.f32 %v7313, %v7406
    %v7506 = vadd.f32 %v7314, %v7408
    %v7507 = vadd.f32 %v7315, %v7410
    %v7508 = vadd.f32 %v7316, %v7412
    %vm7509 = vcmask 39968
    %7510 = vst.msk [vmem:[#allocation2] sm:$0xff] %vm7509, %v7461
    %7511 = vst.msk [vmem:[#allocation2 + $0x8] sm:$0xff] %vm7509, %v7462
    %7512 = vst.msk [vmem:[#allocation2 + $0x10] sm:$0xff] %vm7509, %v7463
    %7513 = vst.msk [vmem:[#allocation2 + $0x18] sm:$0xff] %vm7509, %v7464
    %7514 = vst.msk [vmem:[#allocation2 + $0x20] sm:$0xff] %vm7509, %v7465
    %7515 = vst.msk [vmem:[#allocation2 + $0x28] sm:$0xff] %vm7509, %v7466
    %7516 = vst.msk [vmem:[#allocation2 + $0x30] sm:$0xff] %vm7509, %v7467
    %7517 = vst.msk [vmem:[#allocation2 + $0x38] sm:$0xff] %vm7509, %v7468
    %7518 = vst.msk [vmem:[#allocation2 + $0x40] sm:$0xff] %vm7509, %v7469
    %7519 = vst.msk [vmem:[#allocation2 + $0x48] sm:$0xff] %vm7509, %v7470
    %7520 = vst.msk [vmem:[#allocation2 + $0x50] sm:$0xff] %vm7509, %v7471
    %7521 = vst.msk [vmem:[#allocation2 + $0x58] sm:$0xff] %vm7509, %v7472
    %7522 = vst.msk [vmem:[#allocation2 + $0x60] sm:$0xff] %vm7509, %v7473
    %7523 = vst.msk [vmem:[#allocation2 + $0x68] sm:$0xff] %vm7509, %v7474
    %7524 = vst.msk [vmem:[#allocation2 + $0x70] sm:$0xff] %vm7509, %v7475
    %7525 = vst.msk [vmem:[#allocation2 + $0x78] sm:$0xff] %vm7509, %v7476
    %7526 = vst.msk [vmem:[#allocation2 + $0x80] sm:$0xff] %vm7509, %v7477
    %7527 = vst.msk [vmem:[#allocation2 + $0x88] sm:$0xff] %vm7509, %v7478
    %7528 = vst.msk [vmem:[#allocation2 + $0x90] sm:$0xff] %vm7509, %v7479
    %7529 = vst.msk [vmem:[#allocation2 + $0x98] sm:$0xff] %vm7509, %v7480
    %7530 = vst.msk [vmem:[#allocation2 + $0xa0] sm:$0xff] %vm7509, %v7481
    %7531 = vst.msk [vmem:[#allocation2 + $0xa8] sm:$0xff] %vm7509, %v7482
    %7532 = vst.msk [vmem:[#allocation2 + $0xb0] sm:$0xff] %vm7509, %v7483
    %7533 = vst.msk [vmem:[#allocation2 + $0xb8] sm:$0xff] %vm7509, %v7484
    %7534 = vst.msk [vmem:[#allocation2 + $0xc0] sm:$0xff] %vm7509, %v7485
    %7535 = vst.msk [vmem:[#allocation2 + $0xc8] sm:$0xff] %vm7509, %v7486
    %7536 = vst.msk [vmem:[#allocation2 + $0xd0] sm:$0xff] %vm7509, %v7487
    %7537 = vst.msk [vmem:[#allocation2 + $0xd8] sm:$0xff] %vm7509, %v7488
    %7538 = vst.msk [vmem:[#allocation2 + $0xe0] sm:$0xff] %vm7509, %v7489
    %7539 = vst.msk [vmem:[#allocation2 + $0xe8] sm:$0xff] %vm7509, %v7490
    %7540 = vst.msk [vmem:[#allocation2 + $0xf0] sm:$0xff] %vm7509, %v7491
    %7541 = vst.msk [vmem:[#allocation2 + $0xf8] sm:$0xff] %vm7509, %v7492
    %7542 = vst.msk [vmem:[#allocation2 + $0x100] sm:$0xff] %vm7509, %v7493
    %7543 = vst.msk [vmem:[#allocation2 + $0x108] sm:$0xff] %vm7509, %v7494
    %7544 = vst.msk [vmem:[#allocation2 + $0x110] sm:$0xff] %vm7509, %v7495
    %7545 = vst.msk [vmem:[#allocation2 + $0x118] sm:$0xff] %vm7509, %v7496
    %7546 = vst.msk [vmem:[#allocation2 + $0x120] sm:$0xff] %vm7509, %v7497
    %7547 = vst.msk [vmem:[#allocation2 + $0x128] sm:$0xff] %vm7509, %v7498
    %7548 = vst.msk [vmem:[#allocation2 + $0x130] sm:$0xff] %vm7509, %v7499
    %7549 = vst.msk [vmem:[#allocation2 + $0x138] sm:$0xff] %vm7509, %v7500
    %7550 = vst.msk [vmem:[#allocation2 + $0x140] sm:$0xff] %vm7509, %v7501
    %7551 = vst.msk [vmem:[#allocation2 + $0x148] sm:$0xff] %vm7509, %v7502
    %7552 = vst.msk [vmem:[#allocation2 + $0x150] sm:$0xff] %vm7509, %v7503
    %7553 = vst.msk [vmem:[#allocation2 + $0x158] sm:$0xff] %vm7509, %v7504
    %7554 = vst.msk [vmem:[#allocation2 + $0x160] sm:$0xff] %vm7509, %v7505
    %7555 = vst.msk [vmem:[#allocation2 + $0x168] sm:$0xff] %vm7509, %v7506
    %7556 = vst.msk [vmem:[#allocation2 + $0x170] sm:$0xff] %vm7509, %v7507
    %7557 = vst.msk [vmem:[#allocation2 + $0x178] sm:$0xff] %vm7509, %v7508
    // Predicated region
    $region26: #{tpu_custom_call.1} parent=1 // pred_check
      %p7558 = pneg %p31
    $region27: #{tpu_custom_call.1} parent=1 // pred_check_branch
      %7560 = sbr.rel (%p7558) target = $region29
    $region28: #{tpu_custom_call.1} parent=1 // pred_region
      %v7561 = vld [vmem:[#allocation2] sm:$0xff]
      %v7562 = vld [vmem:[#allocation2 + $0x8] sm:$0xff]
      %v7563 = vld [vmem:[#allocation2 + $0x10] sm:$0xff]
      %v7564 = vld [vmem:[#allocation2 + $0x18] sm:$0xff]
      %v7565 = vld [vmem:[#allocation2 + $0x20] sm:$0xff]
      %v7566 = vld [vmem:[#allocation2 + $0x28] sm:$0xff]
      %v7567 = vld [vmem:[#allocation2 + $0x30] sm:$0xff]
      %v7568 = vld [vmem:[#allocation2 + $0x38] sm:$0xff]
      %v7569 = vld [vmem:[#allocation2 + $0x40] sm:$0xff]
      %v7570 = vld [vmem:[#allocation2 + $0x48] sm:$0xff]
      %v7571 = vld [vmem:[#allocation2 + $0x50] sm:$0xff]
      %v7572 = vld [vmem:[#allocation2 + $0x58] sm:$0xff]
      %v7573 = vld [vmem:[#allocation2 + $0x60] sm:$0xff]
      %v7574 = vld [vmem:[#allocation2 + $0x68] sm:$0xff]
      %v7575 = vld [vmem:[#allocation2 + $0x70] sm:$0xff]
      %v7576 = vld [vmem:[#allocation2 + $0x78] sm:$0xff]
      %v7577 = vld [vmem:[#allocation2 + $0x80] sm:$0xff]
      %v7578 = vld [vmem:[#allocation2 + $0x88] sm:$0xff]
      %v7579 = vld [vmem:[#allocation2 + $0x90] sm:$0xff]
      %v7580 = vld [vmem:[#allocation2 + $0x98] sm:$0xff]
      %v7581 = vld [vmem:[#allocation2 + $0xa0] sm:$0xff]
      %v7582 = vld [vmem:[#allocation2 + $0xa8] sm:$0xff]
      %v7583 = vld [vmem:[#allocation2 + $0xb0] sm:$0xff]
      %v7584 = vld [vmem:[#allocation2 + $0xb8] sm:$0xff]
      %v7585 = vld [vmem:[#allocation2 + $0xc0] sm:$0xff]
      %v7586 = vld [vmem:[#allocation2 + $0xc8] sm:$0xff]
      %v7587 = vld [vmem:[#allocation2 + $0xd0] sm:$0xff]
      %v7588 = vld [vmem:[#allocation2 + $0xd8] sm:$0xff]
      %v7589 = vld [vmem:[#allocation2 + $0xe0] sm:$0xff]
      %v7590 = vld [vmem:[#allocation2 + $0xe8] sm:$0xff]
      %v7591 = vld [vmem:[#allocation2 + $0xf0] sm:$0xff]
      %v7592 = vld [vmem:[#allocation2 + $0xf8] sm:$0xff]
      %v7593 = vld [vmem:[#allocation2 + $0x100] sm:$0xff]
      %v7594 = vld [vmem:[#allocation2 + $0x108] sm:$0xff]
      %v7595 = vld [vmem:[#allocation2 + $0x110] sm:$0xff]
      %v7596 = vld [vmem:[#allocation2 + $0x118] sm:$0xff]
      %v7597 = vld [vmem:[#allocation2 + $0x120] sm:$0xff]
      %v7598 = vld [vmem:[#allocation2 + $0x128] sm:$0xff]
      %v7599 = vld [vmem:[#allocation2 + $0x130] sm:$0xff]
      %v7600 = vld [vmem:[#allocation2 + $0x138] sm:$0xff]
      %v7601 = vld [vmem:[#allocation2 + $0x140] sm:$0xff]
      %v7602 = vld [vmem:[#allocation2 + $0x148] sm:$0xff]
      %v7603 = vld [vmem:[#allocation2 + $0x150] sm:$0xff]
      %v7604 = vld [vmem:[#allocation2 + $0x158] sm:$0xff]
      %v7605 = vld [vmem:[#allocation2 + $0x160] sm:$0xff]
      %v7606 = vld [vmem:[#allocation2 + $0x168] sm:$0xff]
      %v7607 = vld [vmem:[#allocation2 + $0x170] sm:$0xff]
      %v7608 = vld [vmem:[#allocation2 + $0x178] sm:$0xff]
      %v7609 = vsel %vm6209, %v7561, 0.0
      %v7610 = vsel %vm6209, %v7562, 0.0
      %v7611 = vadd.f32 %v7609, %v7610
      %v7612 = vsel %vm6209, %v7563, 0.0
      %v7613 = vadd.f32 %v7611, %v7612
      %v7614 = vsel %vm6209, %v7564, 0.0
      %v7615 = vadd.f32 %v7613, %v7614
      %v7616 = vsel %vm6209, %v7565, 0.0
      %v7617 = vadd.f32 %v7615, %v7616
      %v7618 = vsel %vm6209, %v7566, 0.0
      %v7619 = vadd.f32 %v7617, %v7618
      %v7620 = vsel %vm6209, %v7567, 0.0
      %v7621 = vadd.f32 %v7619, %v7620
      %v7622 = vsel %vm6209, %v7568, 0.0
      %v7623 = vadd.f32 %v7621, %v7622
      %v7624 = vsel %vm6209, %v7569, 0.0
      %v7625 = vadd.f32 %v7623, %v7624
      %v7626 = vsel %vm6209, %v7570, 0.0
      %v7627 = vadd.f32 %v7625, %v7626
      %v7628 = vsel %vm6209, %v7571, 0.0
      %v7629 = vadd.f32 %v7627, %v7628
      %v7630 = vsel %vm6209, %v7572, 0.0
      %v7631 = vadd.f32 %v7629, %v7630
      %v7632 = vsel %vm6209, %v7573, 0.0
      %v7633 = vadd.f32 %v7631, %v7632
      %v7634 = vsel %vm6209, %v7574, 0.0
      %v7635 = vadd.f32 %v7633, %v7634
      %v7636 = vsel %vm6209, %v7575, 0.0
      %v7637 = vadd.f32 %v7635, %v7636
      %v7638 = vsel %vm6209, %v7576, 0.0
      %v7639 = vadd.f32 %v7637, %v7638
      %v7640 = vsel %vm6209, %v7577, 0.0
      %v7641 = vadd.f32 %v7639, %v7640
      %v7642 = vsel %vm6209, %v7578, 0.0
      %v7643 = vadd.f32 %v7641, %v7642
      %v7644 = vsel %vm6209, %v7579, 0.0
      %v7645 = vadd.f32 %v7643, %v7644
      %v7646 = vsel %vm6209, %v7580, 0.0
      %v7647 = vadd.f32 %v7645, %v7646
      %v7648 = vsel %vm6209, %v7581, 0.0
      %v7649 = vadd.f32 %v7647, %v7648
      %v7650 = vsel %vm6209, %v7582, 0.0
      %v7651 = vadd.f32 %v7649, %v7650
      %v7652 = vsel %vm6209, %v7583, 0.0
      %v7653 = vadd.f32 %v7651, %v7652
      %v7654 = vsel %vm6209, %v7584, 0.0
      %v7655 = vadd.f32 %v7653, %v7654
      %v7656 = vsel %vm6209, %v7585, 0.0
      %v7657 = vadd.f32 %v7655, %v7656
      %v7658 = vsel %vm6209, %v7586, 0.0
      %v7659 = vadd.f32 %v7657, %v7658
      %v7660 = vsel %vm6209, %v7587, 0.0
      %v7661 = vadd.f32 %v7659, %v7660
      %v7662 = vsel %vm6209, %v7588, 0.0
      %v7663 = vadd.f32 %v7661, %v7662
      %v7664 = vsel %vm6209, %v7589, 0.0
      %v7665 = vadd.f32 %v7663, %v7664
      %v7666 = vsel %vm6209, %v7590, 0.0
      %v7667 = vadd.f32 %v7665, %v7666
      %v7668 = vsel %vm6209, %v7591, 0.0
      %v7669 = vadd.f32 %v7667, %v7668
      %v7670 = vsel %vm6209, %v7592, 0.0
      %v7671 = vadd.f32 %v7669, %v7670
      %v7672 = vsel %vm6209, %v7593, 0.0
      %v7673 = vadd.f32 %v7671, %v7672
      %v7674 = vsel %vm6209, %v7594, 0.0
      %v7675 = vadd.f32 %v7673, %v7674
      %v7676 = vsel %vm6209, %v7595, 0.0
      %v7677 = vadd.f32 %v7675, %v7676
      %v7678 = vsel %vm6209, %v7596, 0.0
      %v7679 = vadd.f32 %v7677, %v7678
      %v7680 = vsel %vm6209, %v7597, 0.0
      %v7681 = vadd.f32 %v7679, %v7680
      %v7682 = vsel %vm6209, %v7598, 0.0
      %v7683 = vadd.f32 %v7681, %v7682
      %v7684 = vsel %vm6209, %v7599, 0.0
      %v7685 = vadd.f32 %v7683, %v7684
      %v7686 = vsel %vm6209, %v7600, 0.0
      %v7687 = vadd.f32 %v7685, %v7686
      %v7688 = vsel %vm6209, %v7601, 0.0
      %v7689 = vadd.f32 %v7687, %v7688
      %v7690 = vsel %vm6209, %v7602, 0.0
      %v7691 = vadd.f32 %v7689, %v7690
      %v7692 = vsel %vm6209, %v7603, 0.0
      %v7693 = vadd.f32 %v7691, %v7692
      %v7694 = vsel %vm6209, %v7604, 0.0
      %v7695 = vadd.f32 %v7693, %v7694
      %v7696 = vsel %vm6209, %v7605, 0.0
      %v7697 = vadd.f32 %v7695, %v7696
      %v7698 = vsel %vm6209, %v7606, 0.0
      %v7699 = vadd.f32 %v7697, %v7698
      %v7700 = vsel %vm6209, %v7607, 0.0
      %v7701 = vadd.f32 %v7699, %v7700
      %v7702 = vsel %vm6209, %v7608, 0.0
      %v7703 = vadd.f32 %v7701, %v7702
      %7704 = vadd.xlane.f32.xlu0 %v7703
      %v7705 = vpop.xlane.xlu0 %7704
      %v7706 = vrot.slane %v7705, 4
      %v7707 = vadd.f32 %v7705, %v7706
      %v7708 = vrot.slane %v7707, 2
      %v7709 = vadd.f32 %v7707, %v7708
      %v7710 = vrot.slane %v7709, 1
      %v7711 = vadd.f32 %v7709, %v7710
      %s7712 = vtos %v7711
      %s7713 = scalar_lea.smem [#allocation6], 0
      %7714 = sst [smem:[%s7713]] %s7712
      %v7715 = vld [vmem:[#allocation2] sm:$0xff]
      %v7716 = vld [vmem:[#allocation2 + $0x8] sm:$0xff]
      %v7717 = vld [vmem:[#allocation2 + $0x10] sm:$0xff]
      %v7718 = vld [vmem:[#allocation2 + $0x18] sm:$0xff]
      %v7719 = vld [vmem:[#allocation2 + $0x20] sm:$0xff]
      %v7720 = vld [vmem:[#allocation2 + $0x28] sm:$0xff]
      %v7721 = vld [vmem:[#allocation2 + $0x30] sm:$0xff]
      %v7722 = vld [vmem:[#allocation2 + $0x38] sm:$0xff]
      %v7723 = vld [vmem:[#allocation2 + $0x40] sm:$0xff]
      %v7724 = vld [vmem:[#allocation2 + $0x48] sm:$0xff]
      %v7725 = vld [vmem:[#allocation2 + $0x50] sm:$0xff]
      %v7726 = vld [vmem:[#allocation2 + $0x58] sm:$0xff]
      %v7727 = vld [vmem:[#allocation2 + $0x60] sm:$0xff]
      %v7728 = vld [vmem:[#allocation2 + $0x68] sm:$0xff]
      %v7729 = vld [vmem:[#allocation2 + $0x70] sm:$0xff]
      %v7730 = vld [vmem:[#allocation2 + $0x78] sm:$0xff]
      %v7731 = vld [vmem:[#allocation2 + $0x80] sm:$0xff]
      %v7732 = vld [vmem:[#allocation2 + $0x88] sm:$0xff]
      %v7733 = vld [vmem:[#allocation2 + $0x90] sm:$0xff]
      %v7734 = vld [vmem:[#allocation2 + $0x98] sm:$0xff]
      %v7735 = vld [vmem:[#allocation2 + $0xa0] sm:$0xff]
      %v7736 = vld [vmem:[#allocation2 + $0xa8] sm:$0xff]
      %v7737 = vld [vmem:[#allocation2 + $0xb0] sm:$0xff]
      %v7738 = vld [vmem:[#allocation2 + $0xb8] sm:$0xff]
      %v7739 = vld [vmem:[#allocation2 + $0xc0] sm:$0xff]
      %v7740 = vld [vmem:[#allocation2 + $0xc8] sm:$0xff]
      %v7741 = vld [vmem:[#allocation2 + $0xd0] sm:$0xff]
      %v7742 = vld [vmem:[#allocation2 + $0xd8] sm:$0xff]
      %v7743 = vld [vmem:[#allocation2 + $0xe0] sm:$0xff]
      %v7744 = vld [vmem:[#allocation2 + $0xe8] sm:$0xff]
      %v7745 = vld [vmem:[#allocation2 + $0xf0] sm:$0xff]
      %v7746 = vld [vmem:[#allocation2 + $0xf8] sm:$0xff]
      %v7747 = vld [vmem:[#allocation2 + $0x100] sm:$0xff]
      %v7748 = vld [vmem:[#allocation2 + $0x108] sm:$0xff]
      %v7749 = vld [vmem:[#allocation2 + $0x110] sm:$0xff]
      %v7750 = vld [vmem:[#allocation2 + $0x118] sm:$0xff]
      %v7751 = vld [vmem:[#allocation2 + $0x120] sm:$0xff]
      %v7752 = vld [vmem:[#allocation2 + $0x128] sm:$0xff]
      %v7753 = vld [vmem:[#allocation2 + $0x130] sm:$0xff]
      %v7754 = vld [vmem:[#allocation2 + $0x138] sm:$0xff]
      %v7755 = vld [vmem:[#allocation2 + $0x140] sm:$0xff]
      %v7756 = vld [vmem:[#allocation2 + $0x148] sm:$0xff]
      %v7757 = vld [vmem:[#allocation2 + $0x150] sm:$0xff]
      %v7758 = vld [vmem:[#allocation2 + $0x158] sm:$0xff]
      %v7759 = vld [vmem:[#allocation2 + $0x160] sm:$0xff]
      %v7760 = vld [vmem:[#allocation2 + $0x168] sm:$0xff]
      %v7761 = vld [vmem:[#allocation2 + $0x170] sm:$0xff]
      %v7762 = vld [vmem:[#allocation2 + $0x178] sm:$0xff]
      %7811 = vrot.lane.b32.xlu0 %v7715, 127
      %v7812 = vpop.permute.xlu0 %7811
      %7813 = vrot.lane.b32.xlu0 %v7716, 127
      %v7814 = vpop.permute.xlu0 %7813
      %7815 = vrot.lane.b32.xlu0 %v7717, 127
      %v7816 = vpop.permute.xlu0 %7815
      %7817 = vrot.lane.b32.xlu0 %v7718, 127
      %v7818 = vpop.permute.xlu0 %7817
      %7819 = vrot.lane.b32.xlu0 %v7719, 127
      %v7820 = vpop.permute.xlu0 %7819
      %7821 = vrot.lane.b32.xlu0 %v7720, 127
      %v7822 = vpop.permute.xlu0 %7821
      %7823 = vrot.lane.b32.xlu0 %v7721, 127
      %v7824 = vpop.permute.xlu0 %7823
      %7825 = vrot.lane.b32.xlu0 %v7722, 127
      %v7826 = vpop.permute.xlu0 %7825
      %7827 = vrot.lane.b32.xlu0 %v7723, 127
      %v7828 = vpop.permute.xlu0 %7827
      %7829 = vrot.lane.b32.xlu0 %v7724, 127
      %v7830 = vpop.permute.xlu0 %7829
      %7831 = vrot.lane.b32.xlu0 %v7725, 127
      %v7832 = vpop.permute.xlu0 %7831
      %7833 = vrot.lane.b32.xlu0 %v7726, 127
      %v7834 = vpop.permute.xlu0 %7833
      %7835 = vrot.lane.b32.xlu0 %v7727, 127
      %v7836 = vpop.permute.xlu0 %7835
      %7837 = vrot.lane.b32.xlu0 %v7728, 127
      %v7838 = vpop.permute.xlu0 %7837
      %7839 = vrot.lane.b32.xlu0 %v7729, 127
      %v7840 = vpop.permute.xlu0 %7839
      %7841 = vrot.lane.b32.xlu0 %v7730, 127
      %v7842 = vpop.permute.xlu0 %7841
      %7843 = vrot.lane.b32.xlu0 %v7731, 127
      %v7844 = vpop.permute.xlu0 %7843
      %7845 = vrot.lane.b32.xlu0 %v7732, 127
      %v7846 = vpop.permute.xlu0 %7845
      %7847 = vrot.lane.b32.xlu0 %v7733, 127
      %v7848 = vpop.permute.xlu0 %7847
      %7849 = vrot.lane.b32.xlu0 %v7734, 127
      %v7850 = vpop.permute.xlu0 %7849
      %7851 = vrot.lane.b32.xlu0 %v7735, 127
      %v7852 = vpop.permute.xlu0 %7851
      %7853 = vrot.lane.b32.xlu0 %v7736, 127
      %v7854 = vpop.permute.xlu0 %7853
      %7855 = vrot.lane.b32.xlu0 %v7737, 127
      %v7856 = vpop.permute.xlu0 %7855
      %7857 = vrot.lane.b32.xlu0 %v7738, 127
      %v7858 = vpop.permute.xlu0 %7857
      %7859 = vrot.lane.b32.xlu0 %v7739, 127
      %v7860 = vpop.permute.xlu0 %7859
      %7861 = vrot.lane.b32.xlu0 %v7740, 127
      %v7862 = vpop.permute.xlu0 %7861
      %7863 = vrot.lane.b32.xlu0 %v7741, 127
      %v7864 = vpop.permute.xlu0 %7863
      %7865 = vrot.lane.b32.xlu0 %v7742, 127
      %v7866 = vpop.permute.xlu0 %7865
      %7867 = vrot.lane.b32.xlu0 %v7743, 127
      %v7868 = vpop.permute.xlu0 %7867
      %7869 = vrot.lane.b32.xlu0 %v7744, 127
      %v7870 = vpop.permute.xlu0 %7869
      %7871 = vrot.lane.b32.xlu0 %v7745, 127
      %v7872 = vpop.permute.xlu0 %7871
      %7873 = vrot.lane.b32.xlu0 %v7746, 127
      %v7874 = vpop.permute.xlu0 %7873
      %7875 = vrot.lane.b32.xlu0 %v7747, 127
      %v7876 = vpop.permute.xlu0 %7875
      %7877 = vrot.lane.b32.xlu0 %v7748, 127
      %v7878 = vpop.permute.xlu0 %7877
      %7879 = vrot.lane.b32.xlu0 %v7749, 127
      %v7880 = vpop.permute.xlu0 %7879
      %7881 = vrot.lane.b32.xlu0 %v7750, 127
      %v7882 = vpop.permute.xlu0 %7881
      %7883 = vrot.lane.b32.xlu0 %v7751, 127
      %v7884 = vpop.permute.xlu0 %7883
      %7885 = vrot.lane.b32.xlu0 %v7752, 127
      %v7886 = vpop.permute.xlu0 %7885
      %7887 = vrot.lane.b32.xlu0 %v7753, 127
      %v7888 = vpop.permute.xlu0 %7887
      %7889 = vrot.lane.b32.xlu0 %v7754, 127
      %v7890 = vpop.permute.xlu0 %7889
      %7891 = vrot.lane.b32.xlu0 %v7755, 127
      %v7892 = vpop.permute.xlu0 %7891
      %7893 = vrot.lane.b32.xlu0 %v7756, 127
      %v7894 = vpop.permute.xlu0 %7893
      %7895 = vrot.lane.b32.xlu0 %v7757, 127
      %v7896 = vpop.permute.xlu0 %7895
      %7897 = vrot.lane.b32.xlu0 %v7758, 127
      %v7898 = vpop.permute.xlu0 %7897
      %7899 = vrot.lane.b32.xlu0 %v7759, 127
      %v7900 = vpop.permute.xlu0 %7899
      %7901 = vrot.lane.b32.xlu0 %v7760, 127
      %v7902 = vpop.permute.xlu0 %7901
      %7903 = vrot.lane.b32.xlu0 %v7761, 127
      %v7904 = vpop.permute.xlu0 %7903
      %7905 = vrot.lane.b32.xlu0 %v7762, 127
      %v7906 = vpop.permute.xlu0 %7905
      %v7955 = vsel %vm6209, %v7812, 0.0
      %v7956 = vsel %vm6209, %v7814, 0.0
      %v7957 = vadd.f32 %v7955, %v7956
      %v7958 = vsel %vm6209, %v7816, 0.0
      %v7959 = vadd.f32 %v7957, %v7958
      %v7960 = vsel %vm6209, %v7818, 0.0
      %v7961 = vadd.f32 %v7959, %v7960
      %v7962 = vsel %vm6209, %v7820, 0.0
      %v7963 = vadd.f32 %v7961, %v7962
      %v7964 = vsel %vm6209, %v7822, 0.0
      %v7965 = vadd.f32 %v7963, %v7964
      %v7966 = vsel %vm6209, %v7824, 0.0
      %v7967 = vadd.f32 %v7965, %v7966
      %v7968 = vsel %vm6209, %v7826, 0.0
      %v7969 = vadd.f32 %v7967, %v7968
      %v7970 = vsel %vm6209, %v7828, 0.0
      %v7971 = vadd.f32 %v7969, %v7970
      %v7972 = vsel %vm6209, %v7830, 0.0
      %v7973 = vadd.f32 %v7971, %v7972
      %v7974 = vsel %vm6209, %v7832, 0.0
      %v7975 = vadd.f32 %v7973, %v7974
      %v7976 = vsel %vm6209, %v7834, 0.0
      %v7977 = vadd.f32 %v7975, %v7976
      %v7978 = vsel %vm6209, %v7836, 0.0
      %v7979 = vadd.f32 %v7977, %v7978
      %v7980 = vsel %vm6209, %v7838, 0.0
      %v7981 = vadd.f32 %v7979, %v7980
      %v7982 = vsel %vm6209, %v7840, 0.0
      %v7983 = vadd.f32 %v7981, %v7982
      %v7984 = vsel %vm6209, %v7842, 0.0
      %v7985 = vadd.f32 %v7983, %v7984
      %v7986 = vsel %vm6209, %v7844, 0.0
      %v7987 = vadd.f32 %v7985, %v7986
      %v7988 = vsel %vm6209, %v7846, 0.0
      %v7989 = vadd.f32 %v7987, %v7988
      %v7990 = vsel %vm6209, %v7848, 0.0
      %v7991 = vadd.f32 %v7989, %v7990
      %v7992 = vsel %vm6209, %v7850, 0.0
      %v7993 = vadd.f32 %v7991, %v7992
      %v7994 = vsel %vm6209, %v7852, 0.0
      %v7995 = vadd.f32 %v7993, %v7994
      %v7996 = vsel %vm6209, %v7854, 0.0
      %v7997 = vadd.f32 %v7995, %v7996
      %v7998 = vsel %vm6209, %v7856, 0.0
      %v7999 = vadd.f32 %v7997, %v7998
      %v8000 = vsel %vm6209, %v7858, 0.0
      %v8001 = vadd.f32 %v7999, %v8000
      %v8002 = vsel %vm6209, %v7860, 0.0
      %v8003 = vadd.f32 %v8001, %v8002
      %v8004 = vsel %vm6209, %v7862, 0.0
      %v8005 = vadd.f32 %v8003, %v8004
      %v8006 = vsel %vm6209, %v7864, 0.0
      %v8007 = vadd.f32 %v8005, %v8006
      %v8008 = vsel %vm6209, %v7866, 0.0
      %v8009 = vadd.f32 %v8007, %v8008
      %v8010 = vsel %vm6209, %v7868, 0.0
      %v8011 = vadd.f32 %v8009, %v8010
      %v8012 = vsel %vm6209, %v7870, 0.0
      %v8013 = vadd.f32 %v8011, %v8012
      %v8014 = vsel %vm6209, %v7872, 0.0
      %v8015 = vadd.f32 %v8013, %v8014
      %v8016 = vsel %vm6209, %v7874, 0.0
      %v8017 = vadd.f32 %v8015, %v8016
      %v8018 = vsel %vm6209, %v7876, 0.0
      %v8019 = vadd.f32 %v8017, %v8018
      %v8020 = vsel %vm6209, %v7878, 0.0
      %v8021 = vadd.f32 %v8019, %v8020
      %v8022 = vsel %vm6209, %v7880, 0.0
      %v8023 = vadd.f32 %v8021, %v8022
      %v8024 = vsel %vm6209, %v7882, 0.0
      %v8025 = vadd.f32 %v8023, %v8024
      %v8026 = vsel %vm6209, %v7884, 0.0
      %v8027 = vadd.f32 %v8025, %v8026
      %v8028 = vsel %vm6209, %v7886, 0.0
      %v8029 = vadd.f32 %v8027, %v8028
      %v8030 = vsel %vm6209, %v7888, 0.0
      %v8031 = vadd.f32 %v8029, %v8030
      %v8032 = vsel %vm6209, %v7890, 0.0
      %v8033 = vadd.f32 %v8031, %v8032
      %v8034 = vsel %vm6209, %v7892, 0.0
      %v8035 = vadd.f32 %v8033, %v8034
      %v8036 = vsel %vm6209, %v7894, 0.0
      %v8037 = vadd.f32 %v8035, %v8036
      %v8038 = vsel %vm6209, %v7896, 0.0
      %v8039 = vadd.f32 %v8037, %v8038
      %v8040 = vsel %vm6209, %v7898, 0.0
      %v8041 = vadd.f32 %v8039, %v8040
      %v8042 = vsel %vm6209, %v7900, 0.0
      %v8043 = vadd.f32 %v8041, %v8042
      %v8044 = vsel %vm6209, %v7902, 0.0
      %v8045 = vadd.f32 %v8043, %v8044
      %v8046 = vsel %vm6209, %v7904, 0.0
      %v8047 = vadd.f32 %v8045, %v8046
      %v8048 = vsel %vm6209, %v7906, 0.0
      %v8049 = vadd.f32 %v8047, %v8048
      %8050 = vadd.xlane.f32.xlu0 %v8049
      %v8051 = vpop.xlane.xlu0 %8050
      %v8052 = vrot.slane %v8051, 4
      %v8053 = vadd.f32 %v8051, %v8052
      %v8054 = vrot.slane %v8053, 2
      %v8055 = vadd.f32 %v8053, %v8054
      %v8056 = vrot.slane %v8055, 1
      %v8057 = vadd.f32 %v8055, %v8056
      %s8058 = vtos %v8057
      %s8059 = scalar_lea.smem [#allocation6], 1
      %8060 = sst [smem:[%s8059]] %s8058
      %v8061 = vld [vmem:[#allocation2] sm:$0xff]
      %v8062 = vld [vmem:[#allocation2 + $0x8] sm:$0xff]
      %v8063 = vld [vmem:[#allocation2 + $0x10] sm:$0xff]
      %v8064 = vld [vmem:[#allocation2 + $0x18] sm:$0xff]
      %v8065 = vld [vmem:[#allocation2 + $0x20] sm:$0xff]
      %v8066 = vld [vmem:[#allocation2 + $0x28] sm:$0xff]
      %v8067 = vld [vmem:[#allocation2 + $0x30] sm:$0xff]
      %v8068 = vld [vmem:[#allocation2 + $0x38] sm:$0xff]
      %v8069 = vld [vmem:[#allocation2 + $0x40] sm:$0xff]
      %v8070 = vld [vmem:[#allocation2 + $0x48] sm:$0xff]
      %v8071 = vld [vmem:[#allocation2 + $0x50] sm:$0xff]
      %v8072 = vld [vmem:[#allocation2 + $0x58] sm:$0xff]
      %v8073 = vld [vmem:[#allocation2 + $0x60] sm:$0xff]
      %v8074 = vld [vmem:[#allocation2 + $0x68] sm:$0xff]
      %v8075 = vld [vmem:[#allocation2 + $0x70] sm:$0xff]
      %v8076 = vld [vmem:[#allocation2 + $0x78] sm:$0xff]
      %v8077 = vld [vmem:[#allocation2 + $0x80] sm:$0xff]
      %v8078 = vld [vmem:[#allocation2 + $0x88] sm:$0xff]
      %v8079 = vld [vmem:[#allocation2 + $0x90] sm:$0xff]
      %v8080 = vld [vmem:[#allocation2 + $0x98] sm:$0xff]
      %v8081 = vld [vmem:[#allocation2 + $0xa0] sm:$0xff]
      %v8082 = vld [vmem:[#allocation2 + $0xa8] sm:$0xff]
      %v8083 = vld [vmem:[#allocation2 + $0xb0] sm:$0xff]
      %v8084 = vld [vmem:[#allocation2 + $0xb8] sm:$0xff]
      %v8085 = vld [vmem:[#allocation2 + $0xc0] sm:$0xff]
      %v8086 = vld [vmem:[#allocation2 + $0xc8] sm:$0xff]
      %v8087 = vld [vmem:[#allocation2 + $0xd0] sm:$0xff]
      %v8088 = vld [vmem:[#allocation2 + $0xd8] sm:$0xff]
      %v8089 = vld [vmem:[#allocation2 + $0xe0] sm:$0xff]
      %v8090 = vld [vmem:[#allocation2 + $0xe8] sm:$0xff]
      %v8091 = vld [vmem:[#allocation2 + $0xf0] sm:$0xff]
      %v8092 = vld [vmem:[#allocation2 + $0xf8] sm:$0xff]
      %v8093 = vld [vmem:[#allocation2 + $0x100] sm:$0xff]
      %v8094 = vld [vmem:[#allocation2 + $0x108] sm:$0xff]
      %v8095 = vld [vmem:[#allocation2 + $0x110] sm:$0xff]
      %v8096 = vld [vmem:[#allocation2 + $0x118] sm:$0xff]
      %v8097 = vld [vmem:[#allocation2 + $0x120] sm:$0xff]
      %v8098 = vld [vmem:[#allocation2 + $0x128] sm:$0xff]
      %v8099 = vld [vmem:[#allocation2 + $0x130] sm:$0xff]
      %v8100 = vld [vmem:[#allocation2 + $0x138] sm:$0xff]
      %v8101 = vld [vmem:[#allocation2 + $0x140] sm:$0xff]
      %v8102 = vld [vmem:[#allocation2 + $0x148] sm:$0xff]
      %v8103 = vld [vmem:[#allocation2 + $0x150] sm:$0xff]
      %v8104 = vld [vmem:[#allocation2 + $0x158] sm:$0xff]
      %v8105 = vld [vmem:[#allocation2 + $0x160] sm:$0xff]
      %v8106 = vld [vmem:[#allocation2 + $0x168] sm:$0xff]
      %v8107 = vld [vmem:[#allocation2 + $0x170] sm:$0xff]
      %v8108 = vld [vmem:[#allocation2 + $0x178] sm:$0xff]
      %8157 = vrot.lane.b32.xlu0 %v8061, 126
      %v8158 = vpop.permute.xlu0 %8157
      %8159 = vrot.lane.b32.xlu0 %v8062, 126
      %v8160 = vpop.permute.xlu0 %8159
      %8161 = vrot.lane.b32.xlu0 %v8063, 126
      %v8162 = vpop.permute.xlu0 %8161
      %8163 = vrot.lane.b32.xlu0 %v8064, 126
      %v8164 = vpop.permute.xlu0 %8163
      %8165 = vrot.lane.b32.xlu0 %v8065, 126
      %v8166 = vpop.permute.xlu0 %8165
      %8167 = vrot.lane.b32.xlu0 %v8066, 126
      %v8168 = vpop.permute.xlu0 %8167
      %8169 = vrot.lane.b32.xlu0 %v8067, 126
      %v8170 = vpop.permute.xlu0 %8169
      %8171 = vrot.lane.b32.xlu0 %v8068, 126
      %v8172 = vpop.permute.xlu0 %8171
      %8173 = vrot.lane.b32.xlu0 %v8069, 126
      %v8174 = vpop.permute.xlu0 %8173
      %8175 = vrot.lane.b32.xlu0 %v8070, 126
      %v8176 = vpop.permute.xlu0 %8175
      %8177 = vrot.lane.b32.xlu0 %v8071, 126
      %v8178 = vpop.permute.xlu0 %8177
      %8179 = vrot.lane.b32.xlu0 %v8072, 126
      %v8180 = vpop.permute.xlu0 %8179
      %8181 = vrot.lane.b32.xlu0 %v8073, 126
      %v8182 = vpop.permute.xlu0 %8181
      %8183 = vrot.lane.b32.xlu0 %v8074, 126
      %v8184 = vpop.permute.xlu0 %8183
      %8185 = vrot.lane.b32.xlu0 %v8075, 126
      %v8186 = vpop.permute.xlu0 %8185
      %8187 = vrot.lane.b32.xlu0 %v8076, 126
      %v8188 = vpop.permute.xlu0 %8187
      %8189 = vrot.lane.b32.xlu0 %v8077, 126
      %v8190 = vpop.permute.xlu0 %8189
      %8191 = vrot.lane.b32.xlu0 %v8078, 126
      %v8192 = vpop.permute.xlu0 %8191
      %8193 = vrot.lane.b32.xlu0 %v8079, 126
      %v8194 = vpop.permute.xlu0 %8193
      %8195 = vrot.lane.b32.xlu0 %v8080, 126
      %v8196 = vpop.permute.xlu0 %8195
      %8197 = vrot.lane.b32.xlu0 %v8081, 126
      %v8198 = vpop.permute.xlu0 %8197
      %8199 = vrot.lane.b32.xlu0 %v8082, 126
      %v8200 = vpop.permute.xlu0 %8199
      %8201 = vrot.lane.b32.xlu0 %v8083, 126
      %v8202 = vpop.permute.xlu0 %8201
      %8203 = vrot.lane.b32.xlu0 %v8084, 126
      %v8204 = vpop.permute.xlu0 %8203
      %8205 = vrot.lane.b32.xlu0 %v8085, 126
      %v8206 = vpop.permute.xlu0 %8205
      %8207 = vrot.lane.b32.xlu0 %v8086, 126
      %v8208 = vpop.permute.xlu0 %8207
      %8209 = vrot.lane.b32.xlu0 %v8087, 126
      %v8210 = vpop.permute.xlu0 %8209
      %8211 = vrot.lane.b32.xlu0 %v8088, 126
      %v8212 = vpop.permute.xlu0 %8211
      %8213 = vrot.lane.b32.xlu0 %v8089, 126
      %v8214 = vpop.permute.xlu0 %8213
      %8215 = vrot.lane.b32.xlu0 %v8090, 126
      %v8216 = vpop.permute.xlu0 %8215
      %8217 = vrot.lane.b32.xlu0 %v8091, 126
      %v8218 = vpop.permute.xlu0 %8217
      %8219 = vrot.lane.b32.xlu0 %v8092, 126
      %v8220 = vpop.permute.xlu0 %8219
      %8221 = vrot.lane.b32.xlu0 %v8093, 126
      %v8222 = vpop.permute.xlu0 %8221
      %8223 = vrot.lane.b32.xlu0 %v8094, 126
      %v8224 = vpop.permute.xlu0 %8223
      %8225 = vrot.lane.b32.xlu0 %v8095, 126
      %v8226 = vpop.permute.xlu0 %8225
      %8227 = vrot.lane.b32.xlu0 %v8096, 126
      %v8228 = vpop.permute.xlu0 %8227
      %8229 = vrot.lane.b32.xlu0 %v8097, 126
      %v8230 = vpop.permute.xlu0 %8229
      %8231 = vrot.lane.b32.xlu0 %v8098, 126
      %v8232 = vpop.permute.xlu0 %8231
      %8233 = vrot.lane.b32.xlu0 %v8099, 126
      %v8234 = vpop.permute.xlu0 %8233
      %8235 = vrot.lane.b32.xlu0 %v8100, 126
      %v8236 = vpop.permute.xlu0 %8235
      %8237 = vrot.lane.b32.xlu0 %v8101, 126
      %v8238 = vpop.permute.xlu0 %8237
      %8239 = vrot.lane.b32.xlu0 %v8102, 126
      %v8240 = vpop.permute.xlu0 %8239
      %8241 = vrot.lane.b32.xlu0 %v8103, 126
      %v8242 = vpop.permute.xlu0 %8241
      %8243 = vrot.lane.b32.xlu0 %v8104, 126
      %v8244 = vpop.permute.xlu0 %8243
      %8245 = vrot.lane.b32.xlu0 %v8105, 126
      %v8246 = vpop.permute.xlu0 %8245
      %8247 = vrot.lane.b32.xlu0 %v8106, 126
      %v8248 = vpop.permute.xlu0 %8247
      %8249 = vrot.lane.b32.xlu0 %v8107, 126
      %v8250 = vpop.permute.xlu0 %8249
      %8251 = vrot.lane.b32.xlu0 %v8108, 126
      %v8252 = vpop.permute.xlu0 %8251
      %v8301 = vsel %vm6209, %v8158, 0.0
      %v8302 = vsel %vm6209, %v8160, 0.0
      %v8303 = vadd.f32 %v8301, %v8302
      %v8304 = vsel %vm6209, %v8162, 0.0
      %v8305 = vadd.f32 %v8303, %v8304
      %v8306 = vsel %vm6209, %v8164, 0.0
      %v8307 = vadd.f32 %v8305, %v8306
      %v8308 = vsel %vm6209, %v8166, 0.0
      %v8309 = vadd.f32 %v8307, %v8308
      %v8310 = vsel %vm6209, %v8168, 0.0
      %v8311 = vadd.f32 %v8309, %v8310
      %v8312 = vsel %vm6209, %v8170, 0.0
      %v8313 = vadd.f32 %v8311, %v8312
      %v8314 = vsel %vm6209, %v8172, 0.0
      %v8315 = vadd.f32 %v8313, %v8314
      %v8316 = vsel %vm6209, %v8174, 0.0
      %v8317 = vadd.f32 %v8315, %v8316
      %v8318 = vsel %vm6209, %v8176, 0.0
      %v8319 = vadd.f32 %v8317, %v8318
      %v8320 = vsel %vm6209, %v8178, 0.0
      %v8321 = vadd.f32 %v8319, %v8320
      %v8322 = vsel %vm6209, %v8180, 0.0
      %v8323 = vadd.f32 %v8321, %v8322
      %v8324 = vsel %vm6209, %v8182, 0.0
      %v8325 = vadd.f32 %v8323, %v8324
      %v8326 = vsel %vm6209, %v8184, 0.0
      %v8327 = vadd.f32 %v8325, %v8326
      %v8328 = vsel %vm6209, %v8186, 0.0
      %v8329 = vadd.f32 %v8327, %v8328
      %v8330 = vsel %vm6209, %v8188, 0.0
      %v8331 = vadd.f32 %v8329, %v8330
      %v8332 = vsel %vm6209, %v8190, 0.0
      %v8333 = vadd.f32 %v8331, %v8332
      %v8334 = vsel %vm6209, %v8192, 0.0
      %v8335 = vadd.f32 %v8333, %v8334
      %v8336 = vsel %vm6209, %v8194, 0.0
      %v8337 = vadd.f32 %v8335, %v8336
      %v8338 = vsel %vm6209, %v8196, 0.0
      %v8339 = vadd.f32 %v8337, %v8338
      %v8340 = vsel %vm6209, %v8198, 0.0
      %v8341 = vadd.f32 %v8339, %v8340
      %v8342 = vsel %vm6209, %v8200, 0.0
      %v8343 = vadd.f32 %v8341, %v8342
      %v8344 = vsel %vm6209, %v8202, 0.0
      %v8345 = vadd.f32 %v8343, %v8344
      %v8346 = vsel %vm6209, %v8204, 0.0
      %v8347 = vadd.f32 %v8345, %v8346
      %v8348 = vsel %vm6209, %v8206, 0.0
      %v8349 = vadd.f32 %v8347, %v8348
      %v8350 = vsel %vm6209, %v8208, 0.0
      %v8351 = vadd.f32 %v8349, %v8350
      %v8352 = vsel %vm6209, %v8210, 0.0
      %v8353 = vadd.f32 %v8351, %v8352
      %v8354 = vsel %vm6209, %v8212, 0.0
      %v8355 = vadd.f32 %v8353, %v8354
      %v8356 = vsel %vm6209, %v8214, 0.0
      %v8357 = vadd.f32 %v8355, %v8356
      %v8358 = vsel %vm6209, %v8216, 0.0
      %v8359 = vadd.f32 %v8357, %v8358
      %v8360 = vsel %vm6209, %v8218, 0.0
      %v8361 = vadd.f32 %v8359, %v8360
      %v8362 = vsel %vm6209, %v8220, 0.0
      %v8363 = vadd.f32 %v8361, %v8362
      %v8364 = vsel %vm6209, %v8222, 0.0
      %v8365 = vadd.f32 %v8363, %v8364
      %v8366 = vsel %vm6209, %v8224, 0.0
      %v8367 = vadd.f32 %v8365, %v8366
      %v8368 = vsel %vm6209, %v8226, 0.0
      %v8369 = vadd.f32 %v8367, %v8368
      %v8370 = vsel %vm6209, %v8228, 0.0
      %v8371 = vadd.f32 %v8369, %v8370
      %v8372 = vsel %vm6209, %v8230, 0.0
      %v8373 = vadd.f32 %v8371, %v8372
      %v8374 = vsel %vm6209, %v8232, 0.0
      %v8375 = vadd.f32 %v8373, %v8374
      %v8376 = vsel %vm6209, %v8234, 0.0
      %v8377 = vadd.f32 %v8375, %v8376
      %v8378 = vsel %vm6209, %v8236, 0.0
      %v8379 = vadd.f32 %v8377, %v8378
      %v8380 = vsel %vm6209, %v8238, 0.0
      %v8381 = vadd.f32 %v8379, %v8380
      %v8382 = vsel %vm6209, %v8240, 0.0
      %v8383 = vadd.f32 %v8381, %v8382
      %v8384 = vsel %vm6209, %v8242, 0.0
      %v8385 = vadd.f32 %v8383, %v8384
      %v8386 = vsel %vm6209, %v8244, 0.0
      %v8387 = vadd.f32 %v8385, %v8386
      %v8388 = vsel %vm6209, %v8246, 0.0
      %v8389 = vadd.f32 %v8387, %v8388
      %v8390 = vsel %vm6209, %v8248, 0.0
      %v8391 = vadd.f32 %v8389, %v8390
      %v8392 = vsel %vm6209, %v8250, 0.0
      %v8393 = vadd.f32 %v8391, %v8392
      %v8394 = vsel %vm6209, %v8252, 0.0
      %v8395 = vadd.f32 %v8393, %v8394
      %8396 = vadd.xlane.f32.xlu0 %v8395
      %v8397 = vpop.xlane.xlu0 %8396
      %v8398 = vrot.slane %v8397, 4
      %v8399 = vadd.f32 %v8397, %v8398
      %v8400 = vrot.slane %v8399, 2
      %v8401 = vadd.f32 %v8399, %v8400
      %v8402 = vrot.slane %v8401, 1
      %v8403 = vadd.f32 %v8401, %v8402
      %s8404 = vtos %v8403
      %s8405 = scalar_lea.smem [#allocation6], 2
      %8406 = sst [smem:[%s8405]] %s8404
      %v8407 = vld [vmem:[#allocation2] sm:$0xff]
      %v8408 = vld [vmem:[#allocation2 + $0x8] sm:$0xff]
      %v8409 = vld [vmem:[#allocation2 + $0x10] sm:$0xff]
      %v8410 = vld [vmem:[#allocation2 + $0x18] sm:$0xff]
      %v8411 = vld [vmem:[#allocation2 + $0x20] sm:$0xff]
      %v8412 = vld [vmem:[#allocation2 + $0x28] sm:$0xff]
      %v8413 = vld [vmem:[#allocation2 + $0x30] sm:$0xff]
      %v8414 = vld [vmem:[#allocation2 + $0x38] sm:$0xff]
      %v8415 = vld [vmem:[#allocation2 + $0x40] sm:$0xff]
      %v8416 = vld [vmem:[#allocation2 + $0x48] sm:$0xff]
      %v8417 = vld [vmem:[#allocation2 + $0x50] sm:$0xff]
      %v8418 = vld [vmem:[#allocation2 + $0x58] sm:$0xff]
      %v8419 = vld [vmem:[#allocation2 + $0x60] sm:$0xff]
      %v8420 = vld [vmem:[#allocation2 + $0x68] sm:$0xff]
      %v8421 = vld [vmem:[#allocation2 + $0x70] sm:$0xff]
      %v8422 = vld [vmem:[#allocation2 + $0x78] sm:$0xff]
      %v8423 = vld [vmem:[#allocation2 + $0x80] sm:$0xff]
      %v8424 = vld [vmem:[#allocation2 + $0x88] sm:$0xff]
      %v8425 = vld [vmem:[#allocation2 + $0x90] sm:$0xff]
      %v8426 = vld [vmem:[#allocation2 + $0x98] sm:$0xff]
      %v8427 = vld [vmem:[#allocation2 + $0xa0] sm:$0xff]
      %v8428 = vld [vmem:[#allocation2 + $0xa8] sm:$0xff]
      %v8429 = vld [vmem:[#allocation2 + $0xb0] sm:$0xff]
      %v8430 = vld [vmem:[#allocation2 + $0xb8] sm:$0xff]
      %v8431 = vld [vmem:[#allocation2 + $0xc0] sm:$0xff]
      %v8432 = vld [vmem:[#allocation2 + $0xc8] sm:$0xff]
      %v8433 = vld [vmem:[#allocation2 + $0xd0] sm:$0xff]
      %v8434 = vld [vmem:[#allocation2 + $0xd8] sm:$0xff]
      %v8435 = vld [vmem:[#allocation2 + $0xe0] sm:$0xff]
      %v8436 = vld [vmem:[#allocation2 + $0xe8] sm:$0xff]
      %v8437 = vld [vmem:[#allocation2 + $0xf0] sm:$0xff]
      %v8438 = vld [vmem:[#allocation2 + $0xf8] sm:$0xff]
      %v8439 = vld [vmem:[#allocation2 + $0x100] sm:$0xff]
      %v8440 = vld [vmem:[#allocation2 + $0x108] sm:$0xff]
      %v8441 = vld [vmem:[#allocation2 + $0x110] sm:$0xff]
      %v8442 = vld [vmem:[#allocation2 + $0x118] sm:$0xff]
      %v8443 = vld [vmem:[#allocation2 + $0x120] sm:$0xff]
      %v8444 = vld [vmem:[#allocation2 + $0x128] sm:$0xff]
      %v8445 = vld [vmem:[#allocation2 + $0x130] sm:$0xff]
      %v8446 = vld [vmem:[#allocation2 + $0x138] sm:$0xff]
      %v8447 = vld [vmem:[#allocation2 + $0x140] sm:$0xff]
      %v8448 = vld [vmem:[#allocation2 + $0x148] sm:$0xff]
      %v8449 = vld [vmem:[#allocation2 + $0x150] sm:$0xff]
      %v8450 = vld [vmem:[#allocation2 + $0x158] sm:$0xff]
      %v8451 = vld [vmem:[#allocation2 + $0x160] sm:$0xff]
      %v8452 = vld [vmem:[#allocation2 + $0x168] sm:$0xff]
      %v8453 = vld [vmem:[#allocation2 + $0x170] sm:$0xff]
      %v8454 = vld [vmem:[#allocation2 + $0x178] sm:$0xff]
      %8503 = vrot.lane.b32.xlu0 %v8407, 125
      %v8504 = vpop.permute.xlu0 %8503
      %8505 = vrot.lane.b32.xlu0 %v8408, 125
      %v8506 = vpop.permute.xlu0 %8505
      %8507 = vrot.lane.b32.xlu0 %v8409, 125
      %v8508 = vpop.permute.xlu0 %8507
      %8509 = vrot.lane.b32.xlu0 %v8410, 125
      %v8510 = vpop.permute.xlu0 %8509
      %8511 = vrot.lane.b32.xlu0 %v8411, 125
      %v8512 = vpop.permute.xlu0 %8511
      %8513 = vrot.lane.b32.xlu0 %v8412, 125
      %v8514 = vpop.permute.xlu0 %8513
      %8515 = vrot.lane.b32.xlu0 %v8413, 125
      %v8516 = vpop.permute.xlu0 %8515
      %8517 = vrot.lane.b32.xlu0 %v8414, 125
      %v8518 = vpop.permute.xlu0 %8517
      %8519 = vrot.lane.b32.xlu0 %v8415, 125
      %v8520 = vpop.permute.xlu0 %8519
      %8521 = vrot.lane.b32.xlu0 %v8416, 125
      %v8522 = vpop.permute.xlu0 %8521
      %8523 = vrot.lane.b32.xlu0 %v8417, 125
      %v8524 = vpop.permute.xlu0 %8523
      %8525 = vrot.lane.b32.xlu0 %v8418, 125
      %v8526 = vpop.permute.xlu0 %8525
      %8527 = vrot.lane.b32.xlu0 %v8419, 125
      %v8528 = vpop.permute.xlu0 %8527
      %8529 = vrot.lane.b32.xlu0 %v8420, 125
      %v8530 = vpop.permute.xlu0 %8529
      %8531 = vrot.lane.b32.xlu0 %v8421, 125
      %v8532 = vpop.permute.xlu0 %8531
      %8533 = vrot.lane.b32.xlu0 %v8422, 125
      %v8534 = vpop.permute.xlu0 %8533
      %8535 = vrot.lane.b32.xlu0 %v8423, 125
      %v8536 = vpop.permute.xlu0 %8535
      %8537 = vrot.lane.b32.xlu0 %v8424, 125
      %v8538 = vpop.permute.xlu0 %8537
      %8539 = vrot.lane.b32.xlu0 %v8425, 125
      %v8540 = vpop.permute.xlu0 %8539
      %8541 = vrot.lane.b32.xlu0 %v8426, 125
      %v8542 = vpop.permute.xlu0 %8541
      %8543 = vrot.lane.b32.xlu0 %v8427, 125
      %v8544 = vpop.permute.xlu0 %8543
      %8545 = vrot.lane.b32.xlu0 %v8428, 125
      %v8546 = vpop.permute.xlu0 %8545
      %8547 = vrot.lane.b32.xlu0 %v8429, 125
      %v8548 = vpop.permute.xlu0 %8547
      %8549 = vrot.lane.b32.xlu0 %v8430, 125
      %v8550 = vpop.permute.xlu0 %8549
      %8551 = vrot.lane.b32.xlu0 %v8431, 125
      %v8552 = vpop.permute.xlu0 %8551
      %8553 = vrot.lane.b32.xlu0 %v8432, 125
      %v8554 = vpop.permute.xlu0 %8553
      %8555 = vrot.lane.b32.xlu0 %v8433, 125
      %v8556 = vpop.permute.xlu0 %8555
      %8557 = vrot.lane.b32.xlu0 %v8434, 125
      %v8558 = vpop.permute.xlu0 %8557
      %8559 = vrot.lane.b32.xlu0 %v8435, 125
      %v8560 = vpop.permute.xlu0 %8559
      %8561 = vrot.lane.b32.xlu0 %v8436, 125
      %v8562 = vpop.permute.xlu0 %8561
      %8563 = vrot.lane.b32.xlu0 %v8437, 125
      %v8564 = vpop.permute.xlu0 %8563
      %8565 = vrot.lane.b32.xlu0 %v8438, 125
      %v8566 = vpop.permute.xlu0 %8565
      %8567 = vrot.lane.b32.xlu0 %v8439, 125
      %v8568 = vpop.permute.xlu0 %8567
      %8569 = vrot.lane.b32.xlu0 %v8440, 125
      %v8570 = vpop.permute.xlu0 %8569
      %8571 = vrot.lane.b32.xlu0 %v8441, 125
      %v8572 = vpop.permute.xlu0 %8571
      %8573 = vrot.lane.b32.xlu0 %v8442, 125
      %v8574 = vpop.permute.xlu0 %8573
      %8575 = vrot.lane.b32.xlu0 %v8443, 125
      %v8576 = vpop.permute.xlu0 %8575
      %8577 = vrot.lane.b32.xlu0 %v8444, 125
      %v8578 = vpop.permute.xlu0 %8577
      %8579 = vrot.lane.b32.xlu0 %v8445, 125
      %v8580 = vpop.permute.xlu0 %8579
      %8581 = vrot.lane.b32.xlu0 %v8446, 125
      %v8582 = vpop.permute.xlu0 %8581
      %8583 = vrot.lane.b32.xlu0 %v8447, 125
      %v8584 = vpop.permute.xlu0 %8583
      %8585 = vrot.lane.b32.xlu0 %v8448, 125
      %v8586 = vpop.permute.xlu0 %8585
      %8587 = vrot.lane.b32.xlu0 %v8449, 125
      %v8588 = vpop.permute.xlu0 %8587
      %8589 = vrot.lane.b32.xlu0 %v8450, 125
      %v8590 = vpop.permute.xlu0 %8589
      %8591 = vrot.lane.b32.xlu0 %v8451, 125
      %v8592 = vpop.permute.xlu0 %8591
      %8593 = vrot.lane.b32.xlu0 %v8452, 125
      %v8594 = vpop.permute.xlu0 %8593
      %8595 = vrot.lane.b32.xlu0 %v8453, 125
      %v8596 = vpop.permute.xlu0 %8595
      %8597 = vrot.lane.b32.xlu0 %v8454, 125
      %v8598 = vpop.permute.xlu0 %8597
      %v8647 = vsel %vm6209, %v8504, 0.0
      %v8648 = vsel %vm6209, %v8506, 0.0
      %v8649 = vadd.f32 %v8647, %v8648
      %v8650 = vsel %vm6209, %v8508, 0.0
      %v8651 = vadd.f32 %v8649, %v8650
      %v8652 = vsel %vm6209, %v8510, 0.0
      %v8653 = vadd.f32 %v8651, %v8652
      %v8654 = vsel %vm6209, %v8512, 0.0
      %v8655 = vadd.f32 %v8653, %v8654
      %v8656 = vsel %vm6209, %v8514, 0.0
      %v8657 = vadd.f32 %v8655, %v8656
      %v8658 = vsel %vm6209, %v8516, 0.0
      %v8659 = vadd.f32 %v8657, %v8658
      %v8660 = vsel %vm6209, %v8518, 0.0
      %v8661 = vadd.f32 %v8659, %v8660
      %v8662 = vsel %vm6209, %v8520, 0.0
      %v8663 = vadd.f32 %v8661, %v8662
      %v8664 = vsel %vm6209, %v8522, 0.0
      %v8665 = vadd.f32 %v8663, %v8664
      %v8666 = vsel %vm6209, %v8524, 0.0
      %v8667 = vadd.f32 %v8665, %v8666
      %v8668 = vsel %vm6209, %v8526, 0.0
      %v8669 = vadd.f32 %v8667, %v8668
      %v8670 = vsel %vm6209, %v8528, 0.0
      %v8671 = vadd.f32 %v8669, %v8670
      %v8672 = vsel %vm6209, %v8530, 0.0
      %v8673 = vadd.f32 %v8671, %v8672
      %v8674 = vsel %vm6209, %v8532, 0.0
      %v8675 = vadd.f32 %v8673, %v8674
      %v8676 = vsel %vm6209, %v8534, 0.0
      %v8677 = vadd.f32 %v8675, %v8676
      %v8678 = vsel %vm6209, %v8536, 0.0
      %v8679 = vadd.f32 %v8677, %v8678
      %v8680 = vsel %vm6209, %v8538, 0.0
      %v8681 = vadd.f32 %v8679, %v8680
      %v8682 = vsel %vm6209, %v8540, 0.0
      %v8683 = vadd.f32 %v8681, %v8682
      %v8684 = vsel %vm6209, %v8542, 0.0
      %v8685 = vadd.f32 %v8683, %v8684
      %v8686 = vsel %vm6209, %v8544, 0.0
      %v8687 = vadd.f32 %v8685, %v8686
      %v8688 = vsel %vm6209, %v8546, 0.0
      %v8689 = vadd.f32 %v8687, %v8688
      %v8690 = vsel %vm6209, %v8548, 0.0
      %v8691 = vadd.f32 %v8689, %v8690
      %v8692 = vsel %vm6209, %v8550, 0.0
      %v8693 = vadd.f32 %v8691, %v8692
      %v8694 = vsel %vm6209, %v8552, 0.0
      %v8695 = vadd.f32 %v8693, %v8694
      %v8696 = vsel %vm6209, %v8554, 0.0
      %v8697 = vadd.f32 %v8695, %v8696
      %v8698 = vsel %vm6209, %v8556, 0.0
      %v8699 = vadd.f32 %v8697, %v8698
      %v8700 = vsel %vm6209, %v8558, 0.0
      %v8701 = vadd.f32 %v8699, %v8700
      %v8702 = vsel %vm6209, %v8560, 0.0
      %v8703 = vadd.f32 %v8701, %v8702
      %v8704 = vsel %vm6209, %v8562, 0.0
      %v8705 = vadd.f32 %v8703, %v8704
      %v8706 = vsel %vm6209, %v8564, 0.0
      %v8707 = vadd.f32 %v8705, %v8706
      %v8708 = vsel %vm6209, %v8566, 0.0
      %v8709 = vadd.f32 %v8707, %v8708
      %v8710 = vsel %vm6209, %v8568, 0.0
      %v8711 = vadd.f32 %v8709, %v8710
      %v8712 = vsel %vm6209, %v8570, 0.0
      %v8713 = vadd.f32 %v8711, %v8712
      %v8714 = vsel %vm6209, %v8572, 0.0
      %v8715 = vadd.f32 %v8713, %v8714
      %v8716 = vsel %vm6209, %v8574, 0.0
      %v8717 = vadd.f32 %v8715, %v8716
      %v8718 = vsel %vm6209, %v8576, 0.0
      %v8719 = vadd.f32 %v8717, %v8718
      %v8720 = vsel %vm6209, %v8578, 0.0
      %v8721 = vadd.f32 %v8719, %v8720
      %v8722 = vsel %vm6209, %v8580, 0.0
      %v8723 = vadd.f32 %v8721, %v8722
      %v8724 = vsel %vm6209, %v8582, 0.0
      %v8725 = vadd.f32 %v8723, %v8724
      %v8726 = vsel %vm6209, %v8584, 0.0
      %v8727 = vadd.f32 %v8725, %v8726
      %v8728 = vsel %vm6209, %v8586, 0.0
      %v8729 = vadd.f32 %v8727, %v8728
      %v8730 = vsel %vm6209, %v8588, 0.0
      %v8731 = vadd.f32 %v8729, %v8730
      %v8732 = vsel %vm6209, %v8590, 0.0
      %v8733 = vadd.f32 %v8731, %v8732
      %v8734 = vsel %vm6209, %v8592, 0.0
      %v8735 = vadd.f32 %v8733, %v8734
      %v8736 = vsel %vm6209, %v8594, 0.0
      %v8737 = vadd.f32 %v8735, %v8736
      %v8738 = vsel %vm6209, %v8596, 0.0
      %v8739 = vadd.f32 %v8737, %v8738
      %v8740 = vsel %vm6209, %v8598, 0.0
      %v8741 = vadd.f32 %v8739, %v8740
      %8742 = vadd.xlane.f32.xlu0 %v8741
      %v8743 = vpop.xlane.xlu0 %8742
      %v8744 = vrot.slane %v8743, 4
      %v8745 = vadd.f32 %v8743, %v8744
      %v8746 = vrot.slane %v8745, 2
      %v8747 = vadd.f32 %v8745, %v8746
      %v8748 = vrot.slane %v8747, 1
      %v8749 = vadd.f32 %v8747, %v8748
      %s8750 = vtos %v8749
      %s8751 = scalar_lea.smem [#allocation6], 3
      %8752 = sst [smem:[%s8751]] %s8750
      %v8753 = vld [vmem:[#allocation2] sm:$0xff]
      %v8754 = vld [vmem:[#allocation2 + $0x8] sm:$0xff]
      %v8755 = vld [vmem:[#allocation2 + $0x10] sm:$0xff]
      %v8756 = vld [vmem:[#allocation2 + $0x18] sm:$0xff]
      %v8757 = vld [vmem:[#allocation2 + $0x20] sm:$0xff]
      %v8758 = vld [vmem:[#allocation2 + $0x28] sm:$0xff]
      %v8759 = vld [vmem:[#allocation2 + $0x30] sm:$0xff]
      %v8760 = vld [vmem:[#allocation2 + $0x38] sm:$0xff]
      %v8761 = vld [vmem:[#allocation2 + $0x40] sm:$0xff]
      %v8762 = vld [vmem:[#allocation2 + $0x48] sm:$0xff]
      %v8763 = vld [vmem:[#allocation2 + $0x50] sm:$0xff]
      %v8764 = vld [vmem:[#allocation2 + $0x58] sm:$0xff]
      %v8765 = vld [vmem:[#allocation2 + $0x60] sm:$0xff]
      %v8766 = vld [vmem:[#allocation2 + $0x68] sm:$0xff]
      %v8767 = vld [vmem:[#allocation2 + $0x70] sm:$0xff]
      %v8768 = vld [vmem:[#allocation2 + $0x78] sm:$0xff]
      %v8769 = vld [vmem:[#allocation2 + $0x80] sm:$0xff]
      %v8770 = vld [vmem:[#allocation2 + $0x88] sm:$0xff]
      %v8771 = vld [vmem:[#allocation2 + $0x90] sm:$0xff]
      %v8772 = vld [vmem:[#allocation2 + $0x98] sm:$0xff]
      %v8773 = vld [vmem:[#allocation2 + $0xa0] sm:$0xff]
      %v8774 = vld [vmem:[#allocation2 + $0xa8] sm:$0xff]
      %v8775 = vld [vmem:[#allocation2 + $0xb0] sm:$0xff]
      %v8776 = vld [vmem:[#allocation2 + $0xb8] sm:$0xff]
      %v8777 = vld [vmem:[#allocation2 + $0xc0] sm:$0xff]
      %v8778 = vld [vmem:[#allocation2 + $0xc8] sm:$0xff]
      %v8779 = vld [vmem:[#allocation2 + $0xd0] sm:$0xff]
      %v8780 = vld [vmem:[#allocation2 + $0xd8] sm:$0xff]
      %v8781 = vld [vmem:[#allocation2 + $0xe0] sm:$0xff]
      %v8782 = vld [vmem:[#allocation2 + $0xe8] sm:$0xff]
      %v8783 = vld [vmem:[#allocation2 + $0xf0] sm:$0xff]
      %v8784 = vld [vmem:[#allocation2 + $0xf8] sm:$0xff]
      %v8785 = vld [vmem:[#allocation2 + $0x100] sm:$0xff]
      %v8786 = vld [vmem:[#allocation2 + $0x108] sm:$0xff]
      %v8787 = vld [vmem:[#allocation2 + $0x110] sm:$0xff]
      %v8788 = vld [vmem:[#allocation2 + $0x118] sm:$0xff]
      %v8789 = vld [vmem:[#allocation2 + $0x120] sm:$0xff]
      %v8790 = vld [vmem:[#allocation2 + $0x128] sm:$0xff]
      %v8791 = vld [vmem:[#allocation2 + $0x130] sm:$0xff]
      %v8792 = vld [vmem:[#allocation2 + $0x138] sm:$0xff]
      %v8793 = vld [vmem:[#allocation2 + $0x140] sm:$0xff]
      %v8794 = vld [vmem:[#allocation2 + $0x148] sm:$0xff]
      %v8795 = vld [vmem:[#allocation2 + $0x150] sm:$0xff]
      %v8796 = vld [vmem:[#allocation2 + $0x158] sm:$0xff]
      %v8797 = vld [vmem:[#allocation2 + $0x160] sm:$0xff]
      %v8798 = vld [vmem:[#allocation2 + $0x168] sm:$0xff]
      %v8799 = vld [vmem:[#allocation2 + $0x170] sm:$0xff]
      %v8800 = vld [vmem:[#allocation2 + $0x178] sm:$0xff]
      %8849 = vrot.lane.b32.xlu0 %v8753, 124
      %v8850 = vpop.permute.xlu0 %8849
      %8851 = vrot.lane.b32.xlu0 %v8754, 124
      %v8852 = vpop.permute.xlu0 %8851
      %8853 = vrot.lane.b32.xlu0 %v8755, 124
      %v8854 = vpop.permute.xlu0 %8853
      %8855 = vrot.lane.b32.xlu0 %v8756, 124
      %v8856 = vpop.permute.xlu0 %8855
      %8857 = vrot.lane.b32.xlu0 %v8757, 124
      %v8858 = vpop.permute.xlu0 %8857
      %8859 = vrot.lane.b32.xlu0 %v8758, 124
      %v8860 = vpop.permute.xlu0 %8859
      %8861 = vrot.lane.b32.xlu0 %v8759, 124
      %v8862 = vpop.permute.xlu0 %8861
      %8863 = vrot.lane.b32.xlu0 %v8760, 124
      %v8864 = vpop.permute.xlu0 %8863
      %8865 = vrot.lane.b32.xlu0 %v8761, 124
      %v8866 = vpop.permute.xlu0 %8865
      %8867 = vrot.lane.b32.xlu0 %v8762, 124
      %v8868 = vpop.permute.xlu0 %8867
      %8869 = vrot.lane.b32.xlu0 %v8763, 124
      %v8870 = vpop.permute.xlu0 %8869
      %8871 = vrot.lane.b32.xlu0 %v8764, 124
      %v8872 = vpop.permute.xlu0 %8871
      %8873 = vrot.lane.b32.xlu0 %v8765, 124
      %v8874 = vpop.permute.xlu0 %8873
      %8875 = vrot.lane.b32.xlu0 %v8766, 124
      %v8876 = vpop.permute.xlu0 %8875
      %8877 = vrot.lane.b32.xlu0 %v8767, 124
      %v8878 = vpop.permute.xlu0 %8877
      %8879 = vrot.lane.b32.xlu0 %v8768, 124
      %v8880 = vpop.permute.xlu0 %8879
      %8881 = vrot.lane.b32.xlu0 %v8769, 124
      %v8882 = vpop.permute.xlu0 %8881
      %8883 = vrot.lane.b32.xlu0 %v8770, 124
      %v8884 = vpop.permute.xlu0 %8883
      %8885 = vrot.lane.b32.xlu0 %v8771, 124
      %v8886 = vpop.permute.xlu0 %8885
      %8887 = vrot.lane.b32.xlu0 %v8772, 124
      %v8888 = vpop.permute.xlu0 %8887
      %8889 = vrot.lane.b32.xlu0 %v8773, 124
      %v8890 = vpop.permute.xlu0 %8889
      %8891 = vrot.lane.b32.xlu0 %v8774, 124
      %v8892 = vpop.permute.xlu0 %8891
      %8893 = vrot.lane.b32.xlu0 %v8775, 124
      %v8894 = vpop.permute.xlu0 %8893
      %8895 = vrot.lane.b32.xlu0 %v8776, 124
      %v8896 = vpop.permute.xlu0 %8895
      %8897 = vrot.lane.b32.xlu0 %v8777, 124
      %v8898 = vpop.permute.xlu0 %8897
      %8899 = vrot.lane.b32.xlu0 %v8778, 124
      %v8900 = vpop.permute.xlu0 %8899
      %8901 = vrot.lane.b32.xlu0 %v8779, 124
      %v8902 = vpop.permute.xlu0 %8901
      %8903 = vrot.lane.b32.xlu0 %v8780, 124
      %v8904 = vpop.permute.xlu0 %8903
      %8905 = vrot.lane.b32.xlu0 %v8781, 124
      %v8906 = vpop.permute.xlu0 %8905
      %8907 = vrot.lane.b32.xlu0 %v8782, 124
      %v8908 = vpop.permute.xlu0 %8907
      %8909 = vrot.lane.b32.xlu0 %v8783, 124
      %v8910 = vpop.permute.xlu0 %8909
      %8911 = vrot.lane.b32.xlu0 %v8784, 124
      %v8912 = vpop.permute.xlu0 %8911
      %8913 = vrot.lane.b32.xlu0 %v8785, 124
      %v8914 = vpop.permute.xlu0 %8913
      %8915 = vrot.lane.b32.xlu0 %v8786, 124
      %v8916 = vpop.permute.xlu0 %8915
      %8917 = vrot.lane.b32.xlu0 %v8787, 124
      %v8918 = vpop.permute.xlu0 %8917
      %8919 = vrot.lane.b32.xlu0 %v8788, 124
      %v8920 = vpop.permute.xlu0 %8919
      %8921 = vrot.lane.b32.xlu0 %v8789, 124
      %v8922 = vpop.permute.xlu0 %8921
      %8923 = vrot.lane.b32.xlu0 %v8790, 124
      %v8924 = vpop.permute.xlu0 %8923
      %8925 = vrot.lane.b32.xlu0 %v8791, 124
      %v8926 = vpop.permute.xlu0 %8925
      %8927 = vrot.lane.b32.xlu0 %v8792, 124
      %v8928 = vpop.permute.xlu0 %8927
      %8929 = vrot.lane.b32.xlu0 %v8793, 124
      %v8930 = vpop.permute.xlu0 %8929
      %8931 = vrot.lane.b32.xlu0 %v8794, 124
      %v8932 = vpop.permute.xlu0 %8931
      %8933 = vrot.lane.b32.xlu0 %v8795, 124
      %v8934 = vpop.permute.xlu0 %8933
      %8935 = vrot.lane.b32.xlu0 %v8796, 124
      %v8936 = vpop.permute.xlu0 %8935
      %8937 = vrot.lane.b32.xlu0 %v8797, 124
      %v8938 = vpop.permute.xlu0 %8937
      %8939 = vrot.lane.b32.xlu0 %v8798, 124
      %v8940 = vpop.permute.xlu0 %8939
      %8941 = vrot.lane.b32.xlu0 %v8799, 124
      %v8942 = vpop.permute.xlu0 %8941
      %8943 = vrot.lane.b32.xlu0 %v8800, 124
      %v8944 = vpop.permute.xlu0 %8943
      %v8993 = vsel %vm6209, %v8850, 0.0
      %v8994 = vsel %vm6209, %v8852, 0.0
      %v8995 = vadd.f32 %v8993, %v8994
      %v8996 = vsel %vm6209, %v8854, 0.0
      %v8997 = vadd.f32 %v8995, %v8996
      %v8998 = vsel %vm6209, %v8856, 0.0
      %v8999 = vadd.f32 %v8997, %v8998
      %v9000 = vsel %vm6209, %v8858, 0.0
      %v9001 = vadd.f32 %v8999, %v9000
      %v9002 = vsel %vm6209, %v8860, 0.0
      %v9003 = vadd.f32 %v9001, %v9002
      %v9004 = vsel %vm6209, %v8862, 0.0
      %v9005 = vadd.f32 %v9003, %v9004
      %v9006 = vsel %vm6209, %v8864, 0.0
      %v9007 = vadd.f32 %v9005, %v9006
      %v9008 = vsel %vm6209, %v8866, 0.0
      %v9009 = vadd.f32 %v9007, %v9008
      %v9010 = vsel %vm6209, %v8868, 0.0
      %v9011 = vadd.f32 %v9009, %v9010
      %v9012 = vsel %vm6209, %v8870, 0.0
      %v9013 = vadd.f32 %v9011, %v9012
      %v9014 = vsel %vm6209, %v8872, 0.0
      %v9015 = vadd.f32 %v9013, %v9014
      %v9016 = vsel %vm6209, %v8874, 0.0
      %v9017 = vadd.f32 %v9015, %v9016
      %v9018 = vsel %vm6209, %v8876, 0.0
      %v9019 = vadd.f32 %v9017, %v9018
      %v9020 = vsel %vm6209, %v8878, 0.0
      %v9021 = vadd.f32 %v9019, %v9020
      %v9022 = vsel %vm6209, %v8880, 0.0
      %v9023 = vadd.f32 %v9021, %v9022
      %v9024 = vsel %vm6209, %v8882, 0.0
      %v9025 = vadd.f32 %v9023, %v9024
      %v9026 = vsel %vm6209, %v8884, 0.0
      %v9027 = vadd.f32 %v9025, %v9026
      %v9028 = vsel %vm6209, %v8886, 0.0
      %v9029 = vadd.f32 %v9027, %v9028
      %v9030 = vsel %vm6209, %v8888, 0.0
      %v9031 = vadd.f32 %v9029, %v9030
      %v9032 = vsel %vm6209, %v8890, 0.0
      %v9033 = vadd.f32 %v9031, %v9032
      %v9034 = vsel %vm6209, %v8892, 0.0
      %v9035 = vadd.f32 %v9033, %v9034
      %v9036 = vsel %vm6209, %v8894, 0.0
      %v9037 = vadd.f32 %v9035, %v9036
      %v9038 = vsel %vm6209, %v8896, 0.0
      %v9039 = vadd.f32 %v9037, %v9038
      %v9040 = vsel %vm6209, %v8898, 0.0
      %v9041 = vadd.f32 %v9039, %v9040
      %v9042 = vsel %vm6209, %v8900, 0.0
      %v9043 = vadd.f32 %v9041, %v9042
      %v9044 = vsel %vm6209, %v8902, 0.0
      %v9045 = vadd.f32 %v9043, %v9044
      %v9046 = vsel %vm6209, %v8904, 0.0
      %v9047 = vadd.f32 %v9045, %v9046
      %v9048 = vsel %vm6209, %v8906, 0.0
      %v9049 = vadd.f32 %v9047, %v9048
      %v9050 = vsel %vm6209, %v8908, 0.0
      %v9051 = vadd.f32 %v9049, %v9050
      %v9052 = vsel %vm6209, %v8910, 0.0
      %v9053 = vadd.f32 %v9051, %v9052
      %v9054 = vsel %vm6209, %v8912, 0.0
      %v9055 = vadd.f32 %v9053, %v9054
      %v9056 = vsel %vm6209, %v8914, 0.0
      %v9057 = vadd.f32 %v9055, %v9056
      %v9058 = vsel %vm6209, %v8916, 0.0
      %v9059 = vadd.f32 %v9057, %v9058
      %v9060 = vsel %vm6209, %v8918, 0.0
      %v9061 = vadd.f32 %v9059, %v9060
      %v9062 = vsel %vm6209, %v8920, 0.0
      %v9063 = vadd.f32 %v9061, %v9062
      %v9064 = vsel %vm6209, %v8922, 0.0
      %v9065 = vadd.f32 %v9063, %v9064
      %v9066 = vsel %vm6209, %v8924, 0.0
      %v9067 = vadd.f32 %v9065, %v9066
      %v9068 = vsel %vm6209, %v8926, 0.0
      %v9069 = vadd.f32 %v9067, %v9068
      %v9070 = vsel %vm6209, %v8928, 0.0
      %v9071 = vadd.f32 %v9069, %v9070
      %v9072 = vsel %vm6209, %v8930, 0.0
      %v9073 = vadd.f32 %v9071, %v9072
      %v9074 = vsel %vm6209, %v8932, 0.0
      %v9075 = vadd.f32 %v9073, %v9074
      %v9076 = vsel %vm6209, %v8934, 0.0
      %v9077 = vadd.f32 %v9075, %v9076
      %v9078 = vsel %vm6209, %v8936, 0.0
      %v9079 = vadd.f32 %v9077, %v9078
      %v9080 = vsel %vm6209, %v8938, 0.0
      %v9081 = vadd.f32 %v9079, %v9080
      %v9082 = vsel %vm6209, %v8940, 0.0
      %v9083 = vadd.f32 %v9081, %v9082
      %v9084 = vsel %vm6209, %v8942, 0.0
      %v9085 = vadd.f32 %v9083, %v9084
      %v9086 = vsel %vm6209, %v8944, 0.0
      %v9087 = vadd.f32 %v9085, %v9086
      %9088 = vadd.xlane.f32.xlu0 %v9087
      %v9089 = vpop.xlane.xlu0 %9088
      %v9090 = vrot.slane %v9089, 4
      %v9091 = vadd.f32 %v9089, %v9090
      %v9092 = vrot.slane %v9091, 2
      %v9093 = vadd.f32 %v9091, %v9092
      %v9094 = vrot.slane %v9093, 1
      %v9095 = vadd.f32 %v9093, %v9094
      %s9096 = vtos %v9095
      %s9097 = scalar_lea.smem [#allocation6], 4
      %9098 = sst [smem:[%s9097]] %s9096
      %s9099 = scalar_lea.smem [#allocation6], 5
      %9100 = sst [smem:[%s9099]] 0.0
      %s9101 = scalar_lea.smem [#allocation6], 6
      %9102 = sst [smem:[%s9101]] 0.0
      %s9103 = scalar_lea.smem [#allocation6], 7
      %9104 = sst [smem:[%s9103]] 0.0
    $region29: #{tpu_custom_call.1} parent=1 // pred_fallthru
      _
    // Predicated region
    $region30: #{tpu_custom_call.1} parent=1 // pred_check
      _
    $region31: #{tpu_custom_call.1} parent=1 // pred_check_branch
      %9106 = sbr.rel (0) target = $region33
    $region32: #{tpu_custom_call.1} parent=1 // pred_region
      %s9108 = ssub.s32 16, 16
      %9109 = vsyncadd [#allocation4], %s9108
      %9112 = dma.smem_to_hbm [#allocation6], 16, %s4, [#allocation4]
    $region33: #{tpu_custom_call.1} parent=1 // pred_fallthru
      _
    // Predicated region
    $region34: #{tpu_custom_call.1} parent=1 // pred_check
      _
    $region35: #{tpu_custom_call.1} parent=1 // pred_check_branch
      %9114 = sbr.rel (0) target = $region37
    $region36: #{tpu_custom_call.1} parent=1 // pred_region
      %9115 = dma.done [#allocation4], 16
    $region37: #{tpu_custom_call.1} parent=1 // pred_fallthru
      _
    %9116 = sfence
    %9117 = vsyncpa [#allocation4], 1
    %9118 = vsyncpa [#allocation5], 1

</llo_original>
